<compile_context>
chip_gen: v7x
topology: tpu7x:2x2x1
jax: 0.10.0
libtpu: 0.0.40
codegen_flags: <defaults>
</compile_context>

<pallas_src>
import jax
import jax.numpy as jnp
import numpy as np
from jax import lax
from jax.experimental import pallas as pl
from jax.experimental.pallas import tpu as pltpu

_EPS = 1e-5


# ---------------- in-kernel helpers (traced into the Pallas body) ----------------

def _conv3x3_folded(xpad, wfold):
    """xpad: (N, H+2, W+2, Cin) f32, wfold: (9*Cin, Cout) f32 -> (N, H, W, Cout).

    Single matmul with K = 9*Cin. Only the dx=1/2 W-slabs need a sublane
    relayout; dy slices are along a non-minor axis (free)."""
    N, Hp, Wp, Cin = xpad.shape
    H, W = Hp - 2, Wp - 2
    Cout = wfold.shape[-1]

    # 3 W-shifted slabs, reused across all dy taps (2 misaligned copies total).
    xw = [xpad[:, :, dx:dx + W, :] for dx in range(3)]
    # tap order must match the (dy, dx, ci) fold order of wfold.
    taps = [xw[dx][:, dy:dy + H, :, :] for dy in range(3) for dx in range(3)]
    patches = jnp.concatenate(taps, axis=-1)                  # (N, H, W, 9*Cin)
    lhs = patches.reshape(N * H * W, 9 * Cin)
    out = jnp.dot(lhs, wfold, preferred_element_type=jnp.float32)
    return out.reshape(N, H, W, Cout)


def _batchnorm_train(x, gamma, beta):
    """Training-mode BatchNorm2d over (N, H, W): one-pass stats, folded affine."""
    cnt = x.shape[0] * x.shape[1] * x.shape[2]
    inv_cnt = 1.0 / cnt
    s = jnp.sum(x, axis=(0, 1, 2), keepdims=True)
    ss = jnp.sum(x * x, axis=(0, 1, 2), keepdims=True)
    mean = s * inv_cnt
    var = ss * inv_cnt - mean * mean                          # biased variance
    scale = gamma * lax.rsqrt(var + _EPS)
    shift = beta - mean * scale
    return x * scale + shift


# ---------------- the fused Pallas kernel ----------------

def _basic_block_kernel(x_ref, w1_ref, w2_ref, g1_ref, b1_ref, g2_ref, b2_ref,
                        out_ref, pad_scr):
    N, H, W, C = x_ref.shape
    Hp, Wp = H + 2, W + 2

    # Zero only the halo slabs of the shared padded scratch (once per call);
    # the interior is fully overwritten before each conv.
    zrow = jnp.zeros((N, 1, Wp, C), jnp.float32)
    zcol = jnp.zeros((N, Hp, 1, C), jnp.float32)
    pad_scr[:, 0:1, :, :] = zrow
    pad_scr[:, Hp - 1:Hp, :, :] = zrow
    pad_scr[:, :, 0:1, :] = zcol
    pad_scr[:, :, Wp - 1:Wp, :] = zcol

    # conv1 -> bn1 -> relu
    pad_scr[:, 1:H + 1, 1:W + 1, :] = x_ref[...]
    out1 = _conv3x3_folded(pad_scr[...], w1_ref[...])
    out1 = _batchnorm_train(out1, g1_ref[...], b1_ref[...])
    out1 = jnp.maximum(out1, 0.0)

    # conv2 -> bn2 (reuse the same padded scratch; halos are still zero)
    pad_scr[:, 1:H + 1, 1:W + 1, :] = out1
    out2 = _conv3x3_folded(pad_scr[...], w2_ref[...])
    out2 = _batchnorm_train(out2, g2_ref[...], b2_ref[...])

    # residual add + relu
    out_ref[...] = jnp.maximum(out1 + out2, 0.0)


# ---------------- wrapper (layout plumbing + weight preprocessing in plain JAX) --

def _ternary_quantize(w):
    """tw = w - mean(w), then global min/max ternary thresholding."""
    w = w - jnp.mean(w)
    wmax, wmin = jnp.max(w), jnp.min(w)
    lo = wmin + (wmax - wmin) / 3.0
    hi = wmax - (wmax - wmin) / 3.0
    out = jnp.where(w < lo, -1.0, w)
    out = jnp.where(w > hi, 1.0, out)
    out = jnp.where((w >= lo) & (w <= hi), 0.0, out)
    return out


def basic_block_forward(x_nchw, w1_oihw, w2_oihw, g1, b1, g2, b2):
    N, C, H, W = x_nchw.shape
    x = jnp.transpose(x_nchw, (0, 2, 3, 1)).astype(jnp.float32)     # NCHW -> NHWC

    def prep_w(w):
        # quantize once (pure preprocessing), OIHW -> (dy, dx, Cin, Cout) -> (9*Cin, Cout)
        tw = _ternary_quantize(w.astype(jnp.float32))
        return jnp.transpose(tw, (2, 3, 1, 0)).reshape(9 * C, C)

    w1 = prep_w(w1_oihw)
    w2 = prep_w(w2_oihw)
    g1b = g1.reshape(1, 1, 1, C).astype(jnp.float32)
    b1b = b1.reshape(1, 1, 1, C).astype(jnp.float32)
    g2b = g2.reshape(1, 1, 1, C).astype(jnp.float32)
    b2b = b2.reshape(1, 1, 1, C).astype(jnp.float32)

    # advisory cost + VMEM sizing
    nhwc = N * H * W * C
    flops = int(2 * 2 * (N * H * W) * (9 * C) * C + 16 * nhwc)
    bytes_accessed = int(4 * (2 * nhwc + 2 * 9 * C * C + 4 * C))
    cost = pl.CostEstimate(flops=flops, transcendentals=int(2 * C),
                           bytes_accessed=bytes_accessed)

    scratch_bytes = 4 * N * (H + 2) * (W + 2) * C
    im2col_bytes = 4 * N * H * W * 9 * C
    vmem_need = 4 * (2 * nhwc * 2 + 2 * 9 * C * C) + scratch_bytes + 3 * im2col_bytes
    vmem_limit = int(min(max(vmem_need, 4 << 20), 64 << 20))

    vmem = pl.BlockSpec(memory_space=pltpu.MemorySpace.VMEM)
    out_nhwc = pl.pallas_call(
        _basic_block_kernel,
        out_shape=jax.ShapeDtypeStruct((N, H, W, C), jnp.float32),
        in_specs=[vmem] * 7,
        out_specs=vmem,
        scratch_shapes=[pltpu.VMEM((N, H + 2, W + 2, C), jnp.float32)],
        compiler_params=pltpu.CompilerParams(vmem_limit_bytes=vmem_limit),
        cost_estimate=cost,
    )(x, w1, w2, g1b, b1b, g2b, b2b)
    return jnp.transpose(out_nhwc, (0, 3, 1, 2))                    # NHWC -> NCHW


# ---------------- pure-JAX reference (NCHW, for correctness check) ----------------

def ref_basic_block(x, w1, w2, g1, b1, g2, b2):
    def conv(xx, ww):
        return lax.conv_general_dilated(xx, ww, (1, 1), ((1, 1), (1, 1)),
                                        dimension_numbers=('NCHW', 'OIHW', 'NCHW'))

    def bn(xx, g, b):
        m = jnp.mean(xx, axis=(0, 2, 3), keepdims=True)
        v = jnp.mean((xx - m) ** 2, axis=(0, 2, 3), keepdims=True)
        return (xx - m) / jnp.sqrt(v + _EPS) * g.reshape(1, -1, 1, 1) + b.reshape(1, -1, 1, 1)

    o1 = jnp.maximum(bn(conv(x, _ternary_quantize(w1)), g1, b1), 0.0)
    o2 = bn(conv(o1, _ternary_quantize(w2)), g2, b2)
    return jnp.maximum(o1 + o2, 0.0)


if __name__ == "__main__":
    N, C, H, W = 2, 4, 16, 16
    key = jax.random.PRNGKey(0)
    kx, kw1, kw2 = jax.random.split(key, 3)

    x = jax.random.normal(kx, (N, C, H, W), jnp.float32)
    # conv weights (OIHW); bias=False in the module
    w1 = 0.1 * jax.random.normal(kw1, (C, C, 3, 3), jnp.float32)
    w2 = 0.1 * jax.random.normal(kw2, (C, C, 3, 3), jnp.float32)
    # BatchNorm2d default affine init
    g1 = jnp.ones((C,), jnp.float32)
    b1 = jnp.zeros((C,), jnp.float32)
    g2 = jnp.ones((C,), jnp.float32)
    b2 = jnp.zeros((C,), jnp.float32)

    out = jax.block_until_ready(basic_block_forward(x, w1, w2, g1, b1, g2, b2))
    ref = jax.block_until_ready(ref_basic_block(x, w1, w2, g1, b1, g2, b2))
    np.testing.assert_allclose(np.asarray(out), np.asarray(ref), rtol=1e-4, atol=1e-4)

    print("KERNEL_OK")
</pallas_src>

<mosaic_0001>
module attributes {stable_mosaic.version = 11 : i64} {
  func.func @_basic_block_kernel(%arg0: memref<2x16x16x4xf32, #tpu.memory_space<vmem>>, %arg1: memref<36x4xf32, #tpu.memory_space<vmem>>, %arg2: memref<36x4xf32, #tpu.memory_space<vmem>>, %arg3: memref<1x1x1x4xf32, #tpu.memory_space<vmem>>, %arg4: memref<1x1x1x4xf32, #tpu.memory_space<vmem>>, %arg5: memref<1x1x1x4xf32, #tpu.memory_space<vmem>>, %arg6: memref<1x1x1x4xf32, #tpu.memory_space<vmem>>, %arg7: memref<2x16x16x4xf32, #tpu.memory_space<vmem>>, %arg8: memref<2x18x18x4xf32, #tpu.memory_space<vmem>>) attributes {dimension_semantics = [], scalar_prefetch = 0 : i64, scratch_operands = 1 : i64, tpu.core_type = #tpu.core_type<tc>} {
    %cst = arith.constant 0.000000e+00 : f32
    %0 = vector.broadcast %cst : f32 to vector<2x1x18x4xf32>
    %cst_0 = arith.constant 0.000000e+00 : f32
    %1 = vector.broadcast %cst_0 : f32 to vector<2x18x1x4xf32>
    %c0 = arith.constant 0 : index
    %c0_1 = arith.constant 0 : index
    %c0_2 = arith.constant 0 : index
    %c0_3 = arith.constant 0 : index
    %2 = vector.load %arg8[%c0, %c0_1, %c0_2, %c0_3] : memref<2x18x18x4xf32, #tpu.memory_space<vmem>>, vector<2x1x18x4xf32>
    tpu.vector_store %arg8[%c0, %c0_1, %c0_2, %c0_3], %0 {strides = array<i32>} : memref<2x18x18x4xf32, #tpu.memory_space<vmem>>, vector<2x1x18x4xf32>,
    %c0_4 = arith.constant 0 : index
    %c17 = arith.constant 17 : index
    %c0_5 = arith.constant 0 : index
    %c0_6 = arith.constant 0 : index
    %3 = vector.load %arg8[%c0_4, %c17, %c0_5, %c0_6] : memref<2x18x18x4xf32, #tpu.memory_space<vmem>>, vector<2x1x18x4xf32>
    tpu.vector_store %arg8[%c0_4, %c17, %c0_5, %c0_6], %0 {strides = array<i32>} : memref<2x18x18x4xf32, #tpu.memory_space<vmem>>, vector<2x1x18x4xf32>,
    %c0_7 = arith.constant 0 : index
    %c0_8 = arith.constant 0 : index
    %c0_9 = arith.constant 0 : index
    %c0_10 = arith.constant 0 : index
    %4 = vector.load %arg8[%c0_7, %c0_8, %c0_9, %c0_10] : memref<2x18x18x4xf32, #tpu.memory_space<vmem>>, vector<2x18x1x4xf32>
    tpu.vector_store %arg8[%c0_7, %c0_8, %c0_9, %c0_10], %1 {strides = array<i32>} : memref<2x18x18x4xf32, #tpu.memory_space<vmem>>, vector<2x18x1x4xf32>,
    %c0_11 = arith.constant 0 : index
    %c0_12 = arith.constant 0 : index
    %c17_13 = arith.constant 17 : index
    %c0_14 = arith.constant 0 : index
    %5 = vector.load %arg8[%c0_11, %c0_12, %c17_13, %c0_14] : memref<2x18x18x4xf32, #tpu.memory_space<vmem>>, vector<2x18x1x4xf32>
    tpu.vector_store %arg8[%c0_11, %c0_12, %c17_13, %c0_14], %1 {strides = array<i32>} : memref<2x18x18x4xf32, #tpu.memory_space<vmem>>, vector<2x18x1x4xf32>,
    %c0_15 = arith.constant 0 : index
    %c0_16 = arith.constant 0 : index
    %c0_17 = arith.constant 0 : index
    %c0_18 = arith.constant 0 : index
    %6 = vector.load %arg0[%c0_15, %c0_16, %c0_17, %c0_18] : memref<2x16x16x4xf32, #tpu.memory_space<vmem>>, vector<2x16x16x4xf32>
    %c0_19 = arith.constant 0 : index
    %c1 = arith.constant 1 : index
    %c1_20 = arith.constant 1 : index
    %c0_21 = arith.constant 0 : index
    %7 = vector.load %arg8[%c0_19, %c1, %c1_20, %c0_21] : memref<2x18x18x4xf32, #tpu.memory_space<vmem>>, vector<2x16x16x4xf32>
    tpu.vector_store %arg8[%c0_19, %c1, %c1_20, %c0_21], %6 {strides = array<i32>} : memref<2x18x18x4xf32, #tpu.memory_space<vmem>>, vector<2x16x16x4xf32>,
    %c0_22 = arith.constant 0 : index
    %c0_23 = arith.constant 0 : index
    %c0_24 = arith.constant 0 : index
    %c0_25 = arith.constant 0 : index
    %8 = vector.load %arg8[%c0_22, %c0_23, %c0_24, %c0_25] : memref<2x18x18x4xf32, #tpu.memory_space<vmem>>, vector<2x18x18x4xf32>
    %c0_26 = arith.constant 0 : index
    %c0_27 = arith.constant 0 : index
    %9 = vector.load %arg1[%c0_26, %c0_27] : memref<36x4xf32, #tpu.memory_space<vmem>>, vector<36x4xf32>
    %10 = vector.extract_strided_slice %8 {offsets = [0, 0, 0, 0], sizes = [2, 18, 16, 4], strides = [1, 1, 1, 1]} : vector<2x18x18x4xf32> to vector<2x18x16x4xf32>
    %11 = vector.extract_strided_slice %8 {offsets = [0, 0, 1, 0], sizes = [2, 18, 16, 4], strides = [1, 1, 1, 1]} : vector<2x18x18x4xf32> to vector<2x18x16x4xf32>
    %12 = vector.extract_strided_slice %8 {offsets = [0, 0, 2, 0], sizes = [2, 18, 16, 4], strides = [1, 1, 1, 1]} : vector<2x18x18x4xf32> to vector<2x18x16x4xf32>
    %13 = vector.extract_strided_slice %10 {offsets = [0, 0, 0, 0], sizes = [2, 16, 16, 4], strides = [1, 1, 1, 1]} : vector<2x18x16x4xf32> to vector<2x16x16x4xf32>
    %14 = vector.extract_strided_slice %11 {offsets = [0, 0, 0, 0], sizes = [2, 16, 16, 4], strides = [1, 1, 1, 1]} : vector<2x18x16x4xf32> to vector<2x16x16x4xf32>
    %15 = vector.extract_strided_slice %12 {offsets = [0, 0, 0, 0], sizes = [2, 16, 16, 4], strides = [1, 1, 1, 1]} : vector<2x18x16x4xf32> to vector<2x16x16x4xf32>
    %16 = vector.extract_strided_slice %10 {offsets = [0, 1, 0, 0], sizes = [2, 16, 16, 4], strides = [1, 1, 1, 1]} : vector<2x18x16x4xf32> to vector<2x16x16x4xf32>
    %17 = vector.extract_strided_slice %11 {offsets = [0, 1, 0, 0], sizes = [2, 16, 16, 4], strides = [1, 1, 1, 1]} : vector<2x18x16x4xf32> to vector<2x16x16x4xf32>
    %18 = vector.extract_strided_slice %12 {offsets = [0, 1, 0, 0], sizes = [2, 16, 16, 4], strides = [1, 1, 1, 1]} : vector<2x18x16x4xf32> to vector<2x16x16x4xf32>
    %19 = vector.extract_strided_slice %10 {offsets = [0, 2, 0, 0], sizes = [2, 16, 16, 4], strides = [1, 1, 1, 1]} : vector<2x18x16x4xf32> to vector<2x16x16x4xf32>
    %20 = vector.extract_strided_slice %11 {offsets = [0, 2, 0, 0], sizes = [2, 16, 16, 4], strides = [1, 1, 1, 1]} : vector<2x18x16x4xf32> to vector<2x16x16x4xf32>
    %21 = vector.extract_strided_slice %12 {offsets = [0, 2, 0, 0], sizes = [2, 16, 16, 4], strides = [1, 1, 1, 1]} : vector<2x18x16x4xf32> to vector<2x16x16x4xf32>
    %22 = tpu.concatenate %13, %14, %15, %16, %17, %18, %19, %20, %21 in 3 : vector<2x16x16x4xf32>, vector<2x16x16x4xf32>, vector<2x16x16x4xf32>, vector<2x16x16x4xf32>, vector<2x16x16x4xf32>, vector<2x16x16x4xf32>, vector<2x16x16x4xf32>, vector<2x16x16x4xf32>, vector<2x16x16x4xf32> -> vector<2x16x16x36xf32>
    %23 = vector.shape_cast %22 : vector<2x16x16x36xf32> to vector<512x36xf32>
    %cst_28 = arith.constant dense<0.000000e+00> : vector<512x4xf32>
    %24 = tpu.matmul %23, %9, %cst_28 {dimension_numbers = #tpu.dot_dimension_numbers<[1], [0], [0], [1], [0, 0, 1, 1], [], []>} : vector<512x36xf32>, vector<36x4xf32>, vector<512x4xf32> -> vector<512x4xf32>
    %25 = vector.shape_cast %24 : vector<512x4xf32> to vector<2x16x16x4xf32>
    %c0_29 = arith.constant 0 : index
    %c0_30 = arith.constant 0 : index
    %c0_31 = arith.constant 0 : index
    %c0_32 = arith.constant 0 : index
    %26 = vector.load %arg3[%c0_29, %c0_30, %c0_31, %c0_32] : memref<1x1x1x4xf32, #tpu.memory_space<vmem>>, vector<1x1x1x4xf32>
    %c0_33 = arith.constant 0 : index
    %c0_34 = arith.constant 0 : index
    %c0_35 = arith.constant 0 : index
    %c0_36 = arith.constant 0 : index
    %27 = vector.load %arg4[%c0_33, %c0_34, %c0_35, %c0_36] : memref<1x1x1x4xf32, #tpu.memory_space<vmem>>, vector<1x1x1x4xf32>
    %cst_37 = arith.constant dense<0.000000e+00> : vector<4xf32>
    %28 = vector.multi_reduction <add>, %25, %cst_37 [0, 1, 2] : vector<2x16x16x4xf32> to vector<4xf32>
    %29 = vector.shape_cast %28 : vector<4xf32> to vector<1x1x1x4xf32>
    %30 = arith.mulf %25, %25 : vector<2x16x16x4xf32>
    %cst_38 = arith.constant dense<0.000000e+00> : vector<4xf32>
    %31 = vector.multi_reduction <add>, %30, %cst_38 [0, 1, 2] : vector<2x16x16x4xf32> to vector<4xf32>
    %32 = vector.shape_cast %31 : vector<4xf32> to vector<1x1x1x4xf32>
    %cst_39 = arith.constant 0.001953125 : f32
    %33 = vector.broadcast %cst_39 : f32 to vector<1x1x1x4xf32>
    %34 = arith.mulf %29, %33 : vector<1x1x1x4xf32>
    %cst_40 = arith.constant 0.001953125 : f32
    %35 = vector.broadcast %cst_40 : f32 to vector<1x1x1x4xf32>
    %36 = arith.mulf %32, %35 : vector<1x1x1x4xf32>
    %37 = arith.mulf %34, %34 : vector<1x1x1x4xf32>
    %38 = arith.subf %36, %37 : vector<1x1x1x4xf32>
    %cst_41 = arith.constant 9.99999974E-6 : f32
    %39 = vector.broadcast %cst_41 : f32 to vector<1x1x1x4xf32>
    %40 = arith.addf %38, %39 : vector<1x1x1x4xf32>
    %41 = math.rsqrt %40 : vector<1x1x1x4xf32>
    %42 = arith.mulf %26, %41 : vector<1x1x1x4xf32>
    %43 = arith.mulf %34, %42 : vector<1x1x1x4xf32>
    %44 = arith.subf %27, %43 : vector<1x1x1x4xf32>
    %45 = vector.broadcast %42 : vector<1x1x1x4xf32> to vector<2x16x16x4xf32>
    %46 = arith.mulf %25, %45 : vector<2x16x16x4xf32>
    %47 = vector.broadcast %44 : vector<1x1x1x4xf32> to vector<2x16x16x4xf32>
    %48 = arith.addf %46, %47 : vector<2x16x16x4xf32>
    %cst_42 = arith.constant 0.000000e+00 : f32
    %49 = vector.broadcast %cst_42 : f32 to vector<2x16x16x4xf32>
    %50 = arith.maximumf %48, %49 : vector<2x16x16x4xf32>
    %c0_43 = arith.constant 0 : index
    %c1_44 = arith.constant 1 : index
    %c1_45 = arith.constant 1 : index
    %c0_46 = arith.constant 0 : index
    %51 = vector.load %arg8[%c0_43, %c1_44, %c1_45, %c0_46] : memref<2x18x18x4xf32, #tpu.memory_space<vmem>>, vector<2x16x16x4xf32>
    tpu.vector_store %arg8[%c0_43, %c1_44, %c1_45, %c0_46], %50 {strides = array<i32>} : memref<2x18x18x4xf32, #tpu.memory_space<vmem>>, vector<2x16x16x4xf32>,
    %c0_47 = arith.constant 0 : index
    %c0_48 = arith.constant 0 : index
    %c0_49 = arith.constant 0 : index
    %c0_50 = arith.constant 0 : index
    %52 = vector.load %arg8[%c0_47, %c0_48, %c0_49, %c0_50] : memref<2x18x18x4xf32, #tpu.memory_space<vmem>>, vector<2x18x18x4xf32>
    %c0_51 = arith.constant 0 : index
    %c0_52 = arith.constant 0 : index
    %53 = vector.load %arg2[%c0_51, %c0_52] : memref<36x4xf32, #tpu.memory_space<vmem>>, vector<36x4xf32>
    %54 = vector.extract_strided_slice %52 {offsets = [0, 0, 0, 0], sizes = [2, 18, 16, 4], strides = [1, 1, 1, 1]} : vector<2x18x18x4xf32> to vector<2x18x16x4xf32>
    %55 = vector.extract_strided_slice %52 {offsets = [0, 0, 1, 0], sizes = [2, 18, 16, 4], strides = [1, 1, 1, 1]} : vector<2x18x18x4xf32> to vector<2x18x16x4xf32>
    %56 = vector.extract_strided_slice %52 {offsets = [0, 0, 2, 0], sizes = [2, 18, 16, 4], strides = [1, 1, 1, 1]} : vector<2x18x18x4xf32> to vector<2x18x16x4xf32>
    %57 = vector.extract_strided_slice %54 {offsets = [0, 0, 0, 0], sizes = [2, 16, 16, 4], strides = [1, 1, 1, 1]} : vector<2x18x16x4xf32> to vector<2x16x16x4xf32>
    %58 = vector.extract_strided_slice %55 {offsets = [0, 0, 0, 0], sizes = [2, 16, 16, 4], strides = [1, 1, 1, 1]} : vector<2x18x16x4xf32> to vector<2x16x16x4xf32>
    %59 = vector.extract_strided_slice %56 {offsets = [0, 0, 0, 0], sizes = [2, 16, 16, 4], strides = [1, 1, 1, 1]} : vector<2x18x16x4xf32> to vector<2x16x16x4xf32>
    %60 = vector.extract_strided_slice %54 {offsets = [0, 1, 0, 0], sizes = [2, 16, 16, 4], strides = [1, 1, 1, 1]} : vector<2x18x16x4xf32> to vector<2x16x16x4xf32>
    %61 = vector.extract_strided_slice %55 {offsets = [0, 1, 0, 0], sizes = [2, 16, 16, 4], strides = [1, 1, 1, 1]} : vector<2x18x16x4xf32> to vector<2x16x16x4xf32>
    %62 = vector.extract_strided_slice %56 {offsets = [0, 1, 0, 0], sizes = [2, 16, 16, 4], strides = [1, 1, 1, 1]} : vector<2x18x16x4xf32> to vector<2x16x16x4xf32>
    %63 = vector.extract_strided_slice %54 {offsets = [0, 2, 0, 0], sizes = [2, 16, 16, 4], strides = [1, 1, 1, 1]} : vector<2x18x16x4xf32> to vector<2x16x16x4xf32>
    %64 = vector.extract_strided_slice %55 {offsets = [0, 2, 0, 0], sizes = [2, 16, 16, 4], strides = [1, 1, 1, 1]} : vector<2x18x16x4xf32> to vector<2x16x16x4xf32>
    %65 = vector.extract_strided_slice %56 {offsets = [0, 2, 0, 0], sizes = [2, 16, 16, 4], strides = [1, 1, 1, 1]} : vector<2x18x16x4xf32> to vector<2x16x16x4xf32>
    %66 = tpu.concatenate %57, %58, %59, %60, %61, %62, %63, %64, %65 in 3 : vector<2x16x16x4xf32>, vector<2x16x16x4xf32>, vector<2x16x16x4xf32>, vector<2x16x16x4xf32>, vector<2x16x16x4xf32>, vector<2x16x16x4xf32>, vector<2x16x16x4xf32>, vector<2x16x16x4xf32>, vector<2x16x16x4xf32> -> vector<2x16x16x36xf32>
    %67 = vector.shape_cast %66 : vector<2x16x16x36xf32> to vector<512x36xf32>
    %cst_53 = arith.constant dense<0.000000e+00> : vector<512x4xf32>
    %68 = tpu.matmul %67, %53, %cst_53 {dimension_numbers = #tpu.dot_dimension_numbers<[1], [0], [0], [1], [0, 0, 1, 1], [], []>} : vector<512x36xf32>, vector<36x4xf32>, vector<512x4xf32> -> vector<512x4xf32>
    %69 = vector.shape_cast %68 : vector<512x4xf32> to vector<2x16x16x4xf32>
    %c0_54 = arith.constant 0 : index
    %c0_55 = arith.constant 0 : index
    %c0_56 = arith.constant 0 : index
    %c0_57 = arith.constant 0 : index
    %70 = vector.load %arg5[%c0_54, %c0_55, %c0_56, %c0_57] : memref<1x1x1x4xf32, #tpu.memory_space<vmem>>, vector<1x1x1x4xf32>
    %c0_58 = arith.constant 0 : index
    %c0_59 = arith.constant 0 : index
    %c0_60 = arith.constant 0 : index
    %c0_61 = arith.constant 0 : index
    %71 = vector.load %arg6[%c0_58, %c0_59, %c0_60, %c0_61] : memref<1x1x1x4xf32, #tpu.memory_space<vmem>>, vector<1x1x1x4xf32>
    %cst_62 = arith.constant dense<0.000000e+00> : vector<4xf32>
    %72 = vector.multi_reduction <add>, %69, %cst_62 [0, 1, 2] : vector<2x16x16x4xf32> to vector<4xf32>
    %73 = vector.shape_cast %72 : vector<4xf32> to vector<1x1x1x4xf32>
    %74 = arith.mulf %69, %69 : vector<2x16x16x4xf32>
    %cst_63 = arith.constant dense<0.000000e+00> : vector<4xf32>
    %75 = vector.multi_reduction <add>, %74, %cst_63 [0, 1, 2] : vector<2x16x16x4xf32> to vector<4xf32>
    %76 = vector.shape_cast %75 : vector<4xf32> to vector<1x1x1x4xf32>
    %cst_64 = arith.constant 0.001953125 : f32
    %77 = vector.broadcast %cst_64 : f32 to vector<1x1x1x4xf32>
    %78 = arith.mulf %73, %77 : vector<1x1x1x4xf32>
    %cst_65 = arith.constant 0.001953125 : f32
    %79 = vector.broadcast %cst_65 : f32 to vector<1x1x1x4xf32>
    %80 = arith.mulf %76, %79 : vector<1x1x1x4xf32>
    %81 = arith.mulf %78, %78 : vector<1x1x1x4xf32>
    %82 = arith.subf %80, %81 : vector<1x1x1x4xf32>
    %cst_66 = arith.constant 9.99999974E-6 : f32
    %83 = vector.broadcast %cst_66 : f32 to vector<1x1x1x4xf32>
    %84 = arith.addf %82, %83 : vector<1x1x1x4xf32>
    %85 = math.rsqrt %84 : vector<1x1x1x4xf32>
    %86 = arith.mulf %70, %85 : vector<1x1x1x4xf32>
    %87 = arith.mulf %78, %86 : vector<1x1x1x4xf32>
    %88 = arith.subf %71, %87 : vector<1x1x1x4xf32>
    %89 = vector.broadcast %86 : vector<1x1x1x4xf32> to vector<2x16x16x4xf32>
    %90 = arith.mulf %69, %89 : vector<2x16x16x4xf32>
    %91 = vector.broadcast %88 : vector<1x1x1x4xf32> to vector<2x16x16x4xf32>
    %92 = arith.addf %90, %91 : vector<2x16x16x4xf32>
    %93 = arith.addf %50, %92 : vector<2x16x16x4xf32>
    %cst_67 = arith.constant 0.000000e+00 : f32
    %94 = vector.broadcast %cst_67 : f32 to vector<2x16x16x4xf32>
    %95 = arith.maximumf %93, %94 : vector<2x16x16x4xf32>
    %c0_68 = arith.constant 0 : index
    %c0_69 = arith.constant 0 : index
    %c0_70 = arith.constant 0 : index
    %c0_71 = arith.constant 0 : index
    %96 = vector.load %arg7[%c0_68, %c0_69, %c0_70, %c0_71] : memref<2x16x16x4xf32, #tpu.memory_space<vmem>>, vector<2x16x16x4xf32>
    tpu.vector_store %arg7[%c0_68, %c0_69, %c0_70, %c0_71], %95 {strides = array<i32>} : memref<2x16x16x4xf32, #tpu.memory_space<vmem>>, vector<2x16x16x4xf32>,
    return
  }
}

</mosaic_0001>

<llo_original>
// kernel: tpu_custom_call.1
$region0: #{tpu_custom_call.1}
  #allocation0 [shape = 'u32[]', space=smem, size = 0x4, offset = 0x4, fixed_abs, tag = 'smem constant byte address 0x4 - core index']
  #allocation1 [shape = 'u32[144,128]{1,0:T(1,128)}', space=vmem, size = 0x12000, scoped, tag = 'internal scratch']
  #allocation2 [shape = 'f32[2,18,18,4]{3,2,1,0:T(8,128)}', space=vmem, size = 0x6c000, scoped, tag = 'scratch operand']
  %s0 = inlined_call_operand.vmem [shape: f32[2,16,16,4], index: 0, kind: input, shape index: {}]
  %s1 = inlined_call_operand.vmem [shape: f32[36,4], index: 1, kind: input, shape index: {}]
  %s2 = inlined_call_operand.vmem [shape: f32[36,4], index: 2, kind: input, shape index: {}]
  %s3 = inlined_call_operand.vmem [shape: f32[1,1,1,4], index: 3, kind: input, shape index: {}]
  %s4 = inlined_call_operand.vmem [shape: f32[1,1,1,4], index: 4, kind: input, shape index: {}]
  %s5 = inlined_call_operand.vmem [shape: f32[1,1,1,4], index: 5, kind: input, shape index: {}]
  %s6 = inlined_call_operand.vmem [shape: f32[1,1,1,4], index: 6, kind: input, shape index: {}]
  %s7 = inlined_call_operand.vmem [shape: f32[2,16,16,4], index: 7, kind: output, shape index: {}]
  %s8 = sld [smem:[#allocation0]]
  $region38: #{tpu_custom_call.1} parent=0
    _
  %s10 = ssub.s32 1, %s8
  %s11 = scalar_select 0, %s10, %s8
  // Predicated region
  $region2: #{tpu_custom_call.1} parent=0 // pred_check
    _
  $region3: #{tpu_custom_call.1} parent=0 // pred_check_branch
    %13 = sbr.rel (0) target = $region5
  $region4: #{tpu_custom_call.1} parent=0 // pred_region
    _
  $region5: #{tpu_custom_call.1} parent=0 // pred_fallthru
    _
  // Predicated region
  $region6: #{tpu_custom_call.1} parent=0 // pred_check
    _
  $region7: #{tpu_custom_call.1} parent=0 // pred_check_branch
    %15 = sbr.rel (0) target = $region9
  $region8: #{tpu_custom_call.1} parent=0 // pred_region
    _
  $region9: #{tpu_custom_call.1} parent=0 // pred_fallthru
    _
  // Predicated region
  $region10: #{tpu_custom_call.1} parent=0 // pred_check
    _
  $region11: #{tpu_custom_call.1} parent=0 // pred_check_branch
    %17 = sbr.rel (0) target = $region13
  $region12: #{tpu_custom_call.1} parent=0 // pred_region
    _
  $region13: #{tpu_custom_call.1} parent=0 // pred_fallthru
    _
  // Predicated region
  $region14: #{tpu_custom_call.1} parent=0 // pred_check
    _
  $region15: #{tpu_custom_call.1} parent=0 // pred_check_branch
    %19 = sbr.rel (0) target = $region17
  $region16: #{tpu_custom_call.1} parent=0 // pred_region
    _
  $region17: #{tpu_custom_call.1} parent=0 // pred_fallthru
    _
  // Predicated region
  $region18: #{tpu_custom_call.1} parent=0 // pred_check
    _
  $region19: #{tpu_custom_call.1} parent=0 // pred_check_branch
    %21 = sbr.rel (0) target = $region21
  $region20: #{tpu_custom_call.1} parent=0 // pred_region
    _
  $region21: #{tpu_custom_call.1} parent=0 // pred_fallthru
    _
  // Predicated region
  $region22: #{tpu_custom_call.1} parent=0 // pred_check
    _
  $region23: #{tpu_custom_call.1} parent=0 // pred_check_branch
    %23 = sbr.rel (0) target = $region25
  $region24: #{tpu_custom_call.1} parent=0 // pred_region
    _
  $region25: #{tpu_custom_call.1} parent=0 // pred_fallthru
    _
  // Predicated region
  $region26: #{tpu_custom_call.1} parent=0 // pred_check
    _
  $region27: #{tpu_custom_call.1} parent=0 // pred_check_branch
    %25 = sbr.rel (0) target = $region29
  $region28: #{tpu_custom_call.1} parent=0 // pred_region
    _
  $region29: #{tpu_custom_call.1} parent=0 // pred_fallthru
    _
  %vm26 = vcmask 31744
  %27 = vst.msk [vmem:[#allocation2] sm:$0xff] %vm26, 0.0
  %28 = vst.msk [vmem:[#allocation2 + $0x8] sm:$0xff] %vm26, 0.0
  %vm29 = vcmask 25600
  %30 = vst.msk [vmem:[#allocation2 + $0x10] sm:$0x3] %vm29, 0.0
  %31 = vst.msk [vmem:[#allocation2 + $0x1b0] sm:$0xff] %vm26, 0.0
  %32 = vst.msk [vmem:[#allocation2 + $0x1b8] sm:$0xff] %vm26, 0.0
  %33 = vst.msk [vmem:[#allocation2 + $0x1c0] sm:$0x3] %vm29, 0.0
  %s34 = scalar_lea.vmem [#allocation2], 408
  %35 = vst.msk [vmem:[%s34] sm:$0xff] %vm26, 0.0
  %36 = vst.msk [vmem:[%s34 + $0x8] sm:$0xff] %vm26, 0.0
  %37 = vst.msk [vmem:[%s34 + $0x10] sm:$0x3] %vm29, 0.0
  %38 = vst.msk [vmem:[%s34 + $0x1b0] sm:$0xff] %vm26, 0.0
  %39 = vst.msk [vmem:[%s34 + $0x1b8] sm:$0xff] %vm26, 0.0
  %40 = vst.msk [vmem:[%s34 + $0x1c0] sm:$0x3] %vm29, 0.0
  %vm41 = vcmask 24576
  %42 = vst.msk [vmem:[#allocation2] sm:$0x1] %vm41, 0.0
  %43 = vst.msk [vmem:[#allocation2 + $0x18] sm:$0x1] %vm41, 0.0
  %44 = vst.msk [vmem:[#allocation2 + $0x30] sm:$0x1] %vm41, 0.0
  %45 = vst.msk [vmem:[#allocation2 + $0x48] sm:$0x1] %vm41, 0.0
  %46 = vst.msk [vmem:[#allocation2 + $0x60] sm:$0x1] %vm41, 0.0
  %47 = vst.msk [vmem:[#allocation2 + $0x78] sm:$0x1] %vm41, 0.0
  %48 = vst.msk [vmem:[#allocation2 + $0x90] sm:$0x1] %vm41, 0.0
  %49 = vst.msk [vmem:[#allocation2 + $0xa8] sm:$0x1] %vm41, 0.0
  %50 = vst.msk [vmem:[#allocation2 + $0xc0] sm:$0x1] %vm41, 0.0
  %51 = vst.msk [vmem:[#allocation2 + $0xd8] sm:$0x1] %vm41, 0.0
  %52 = vst.msk [vmem:[#allocation2 + $0xf0] sm:$0x1] %vm41, 0.0
  %53 = vst.msk [vmem:[#allocation2 + $0x108] sm:$0x1] %vm41, 0.0
  %54 = vst.msk [vmem:[#allocation2 + $0x120] sm:$0x1] %vm41, 0.0
  %55 = vst.msk [vmem:[#allocation2 + $0x138] sm:$0x1] %vm41, 0.0
  %56 = vst.msk [vmem:[#allocation2 + $0x150] sm:$0x1] %vm41, 0.0
  %57 = vst.msk [vmem:[#allocation2 + $0x168] sm:$0x1] %vm41, 0.0
  %58 = vst.msk [vmem:[#allocation2 + $0x180] sm:$0x1] %vm41, 0.0
  %59 = vst.msk [vmem:[#allocation2 + $0x198] sm:$0x1] %vm41, 0.0
  %60 = vst.msk [vmem:[#allocation2 + $0x1b0] sm:$0x1] %vm41, 0.0
  %61 = vst.msk [vmem:[#allocation2 + $0x1c8] sm:$0x1] %vm41, 0.0
  %62 = vst.msk [vmem:[#allocation2 + $0x1e0] sm:$0x1] %vm41, 0.0
  %63 = vst.msk [vmem:[#allocation2 + $0x1f8] sm:$0x1] %vm41, 0.0
  %64 = vst.msk [vmem:[#allocation2 + $0x210] sm:$0x1] %vm41, 0.0
  %65 = vst.msk [vmem:[#allocation2 + $0x228] sm:$0x1] %vm41, 0.0
  %66 = vst.msk [vmem:[#allocation2 + $0x240] sm:$0x1] %vm41, 0.0
  %67 = vst.msk [vmem:[#allocation2 + $0x258] sm:$0x1] %vm41, 0.0
  %68 = vst.msk [vmem:[#allocation2 + $0x270] sm:$0x1] %vm41, 0.0
  %69 = vst.msk [vmem:[#allocation2 + $0x288] sm:$0x1] %vm41, 0.0
  %70 = vst.msk [vmem:[#allocation2 + $0x2a0] sm:$0x1] %vm41, 0.0
  %71 = vst.msk [vmem:[#allocation2 + $0x2b8] sm:$0x1] %vm41, 0.0
  %72 = vst.msk [vmem:[#allocation2 + $0x2d0] sm:$0x1] %vm41, 0.0
  %73 = vst.msk [vmem:[#allocation2 + $0x2e8] sm:$0x1] %vm41, 0.0
  %74 = vst.msk [vmem:[#allocation2 + $0x300] sm:$0x1] %vm41, 0.0
  %75 = vst.msk [vmem:[#allocation2 + $0x318] sm:$0x1] %vm41, 0.0
  %76 = vst.msk [vmem:[#allocation2 + $0x330] sm:$0x1] %vm41, 0.0
  %77 = vst.msk [vmem:[#allocation2 + $0x348] sm:$0x1] %vm41, 0.0
  %78 = vst.msk [vmem:[#allocation2 + $0x11] sm:$0x1] %vm41, 0.0
  %79 = vst.msk [vmem:[#allocation2 + $0x29] sm:$0x1] %vm41, 0.0
  %80 = vst.msk [vmem:[#allocation2 + $0x41] sm:$0x1] %vm41, 0.0
  %81 = vst.msk [vmem:[#allocation2 + $0x59] sm:$0x1] %vm41, 0.0
  %82 = vst.msk [vmem:[#allocation2 + $0x71] sm:$0x1] %vm41, 0.0
  %83 = vst.msk [vmem:[#allocation2 + $0x89] sm:$0x1] %vm41, 0.0
  %84 = vst.msk [vmem:[#allocation2 + $0xa1] sm:$0x1] %vm41, 0.0
  %85 = vst.msk [vmem:[#allocation2 + $0xb9] sm:$0x1] %vm41, 0.0
  %86 = vst.msk [vmem:[#allocation2 + $0xd1] sm:$0x1] %vm41, 0.0
  %87 = vst.msk [vmem:[#allocation2 + $0xe9] sm:$0x1] %vm41, 0.0
  %88 = vst.msk [vmem:[#allocation2 + $0x101] sm:$0x1] %vm41, 0.0
  %89 = vst.msk [vmem:[#allocation2 + $0x119] sm:$0x1] %vm41, 0.0
  %90 = vst.msk [vmem:[#allocation2 + $0x131] sm:$0x1] %vm41, 0.0
  %91 = vst.msk [vmem:[#allocation2 + $0x149] sm:$0x1] %vm41, 0.0
  %92 = vst.msk [vmem:[#allocation2 + $0x161] sm:$0x1] %vm41, 0.0
  %93 = vst.msk [vmem:[#allocation2 + $0x179] sm:$0x1] %vm41, 0.0
  %94 = vst.msk [vmem:[#allocation2 + $0x191] sm:$0x1] %vm41, 0.0
  %95 = vst.msk [vmem:[#allocation2 + $0x1a9] sm:$0x1] %vm41, 0.0
  %96 = vst.msk [vmem:[#allocation2 + $0x1c1] sm:$0x1] %vm41, 0.0
  %97 = vst.msk [vmem:[#allocation2 + $0x1d9] sm:$0x1] %vm41, 0.0
  %98 = vst.msk [vmem:[#allocation2 + $0x1f1] sm:$0x1] %vm41, 0.0
  %99 = vst.msk [vmem:[#allocation2 + $0x209] sm:$0x1] %vm41, 0.0
  %100 = vst.msk [vmem:[#allocation2 + $0x221] sm:$0x1] %vm41, 0.0
  %101 = vst.msk [vmem:[#allocation2 + $0x239] sm:$0x1] %vm41, 0.0
  %102 = vst.msk [vmem:[#allocation2 + $0x251] sm:$0x1] %vm41, 0.0
  %103 = vst.msk [vmem:[#allocation2 + $0x269] sm:$0x1] %vm41, 0.0
  %104 = vst.msk [vmem:[#allocation2 + $0x281] sm:$0x1] %vm41, 0.0
  %105 = vst.msk [vmem:[#allocation2 + $0x299] sm:$0x1] %vm41, 0.0
  %106 = vst.msk [vmem:[#allocation2 + $0x2b1] sm:$0x1] %vm41, 0.0
  %107 = vst.msk [vmem:[#allocation2 + $0x2c9] sm:$0x1] %vm41, 0.0
  %108 = vst.msk [vmem:[#allocation2 + $0x2e1] sm:$0x1] %vm41, 0.0
  %109 = vst.msk [vmem:[#allocation2 + $0x2f9] sm:$0x1] %vm41, 0.0
  %110 = vst.msk [vmem:[#allocation2 + $0x311] sm:$0x1] %vm41, 0.0
  %111 = vst.msk [vmem:[#allocation2 + $0x329] sm:$0x1] %vm41, 0.0
  %112 = vst.msk [vmem:[#allocation2 + $0x341] sm:$0x1] %vm41, 0.0
  %113 = vst.msk [vmem:[#allocation2 + $0x359] sm:$0x1] %vm41, 0.0
  %v114 = vld [vmem:[%s0] sm:$0xff]
  %v115 = vld [vmem:[%s0 + $0x8] sm:$0xff]
  %v116 = vld [vmem:[%s0 + $0x10] sm:$0xff]
  %v117 = vld [vmem:[%s0 + $0x18] sm:$0xff]
  %v118 = vld [vmem:[%s0 + $0x20] sm:$0xff]
  %v119 = vld [vmem:[%s0 + $0x28] sm:$0xff]
  %v120 = vld [vmem:[%s0 + $0x30] sm:$0xff]
  %v121 = vld [vmem:[%s0 + $0x38] sm:$0xff]
  %v122 = vld [vmem:[%s0 + $0x40] sm:$0xff]
  %v123 = vld [vmem:[%s0 + $0x48] sm:$0xff]
  %v124 = vld [vmem:[%s0 + $0x50] sm:$0xff]
  %v125 = vld [vmem:[%s0 + $0x58] sm:$0xff]
  %v126 = vld [vmem:[%s0 + $0x60] sm:$0xff]
  %v127 = vld [vmem:[%s0 + $0x68] sm:$0xff]
  %v128 = vld [vmem:[%s0 + $0x70] sm:$0xff]
  %v129 = vld [vmem:[%s0 + $0x78] sm:$0xff]
  %v130 = vld [vmem:[%s0 + $0x80] sm:$0xff]
  %v131 = vld [vmem:[%s0 + $0x88] sm:$0xff]
  %v132 = vld [vmem:[%s0 + $0x90] sm:$0xff]
  %v133 = vld [vmem:[%s0 + $0x98] sm:$0xff]
  %v134 = vld [vmem:[%s0 + $0xa0] sm:$0xff]
  %v135 = vld [vmem:[%s0 + $0xa8] sm:$0xff]
  %v136 = vld [vmem:[%s0 + $0xb0] sm:$0xff]
  %v137 = vld [vmem:[%s0 + $0xb8] sm:$0xff]
  %v138 = vld [vmem:[%s0 + $0xc0] sm:$0xff]
  %v139 = vld [vmem:[%s0 + $0xc8] sm:$0xff]
  %v140 = vld [vmem:[%s0 + $0xd0] sm:$0xff]
  %v141 = vld [vmem:[%s0 + $0xd8] sm:$0xff]
  %v142 = vld [vmem:[%s0 + $0xe0] sm:$0xff]
  %v143 = vld [vmem:[%s0 + $0xe8] sm:$0xff]
  %v144 = vld [vmem:[%s0 + $0xf0] sm:$0xff]
  %v145 = vld [vmem:[%s0 + $0xf8] sm:$0xff]
  %v146 = vld [vmem:[%s0 + $0x100] sm:$0xff]
  %v147 = vld [vmem:[%s0 + $0x108] sm:$0xff]
  %v148 = vld [vmem:[%s0 + $0x110] sm:$0xff]
  %v149 = vld [vmem:[%s0 + $0x118] sm:$0xff]
  %v150 = vld [vmem:[%s0 + $0x120] sm:$0xff]
  %v151 = vld [vmem:[%s0 + $0x128] sm:$0xff]
  %v152 = vld [vmem:[%s0 + $0x130] sm:$0xff]
  %v153 = vld [vmem:[%s0 + $0x138] sm:$0xff]
  %v154 = vld [vmem:[%s0 + $0x140] sm:$0xff]
  %v155 = vld [vmem:[%s0 + $0x148] sm:$0xff]
  %v156 = vld [vmem:[%s0 + $0x150] sm:$0xff]
  %v157 = vld [vmem:[%s0 + $0x158] sm:$0xff]
  %v158 = vld [vmem:[%s0 + $0x160] sm:$0xff]
  %v159 = vld [vmem:[%s0 + $0x168] sm:$0xff]
  %v160 = vld [vmem:[%s0 + $0x170] sm:$0xff]
  %v161 = vld [vmem:[%s0 + $0x178] sm:$0xff]
  %v162 = vld [vmem:[%s0 + $0x180] sm:$0xff]
  %v163 = vld [vmem:[%s0 + $0x188] sm:$0xff]
  %v164 = vld [vmem:[%s0 + $0x190] sm:$0xff]
  %v165 = vld [vmem:[%s0 + $0x198] sm:$0xff]
  %v166 = vld [vmem:[%s0 + $0x1a0] sm:$0xff]
  %v167 = vld [vmem:[%s0 + $0x1a8] sm:$0xff]
  %v168 = vld [vmem:[%s0 + $0x1b0] sm:$0xff]
  %v169 = vld [vmem:[%s0 + $0x1b8] sm:$0xff]
  %v170 = vld [vmem:[%s0 + $0x1c0] sm:$0xff]
  %v171 = vld [vmem:[%s0 + $0x1c8] sm:$0xff]
  %v172 = vld [vmem:[%s0 + $0x1d0] sm:$0xff]
  %v173 = vld [vmem:[%s0 + $0x1d8] sm:$0xff]
  %v174 = vld [vmem:[%s0 + $0x1e0] sm:$0xff]
  %v175 = vld [vmem:[%s0 + $0x1e8] sm:$0xff]
  %v176 = vld [vmem:[%s0 + $0x1f0] sm:$0xff]
  %v177 = vld [vmem:[%s0 + $0x1f8] sm:$0xff]
  %s178 = scalar_lea.vmem [#allocation2], 24
  %179 = vst.msk [vmem:[%s178 + $0x1] sm:$0xff] %vm26, %v114
  %180 = vst.msk [vmem:[%s178 + $0x9] sm:$0xff] %vm26, %v115
  %181 = vst.msk [vmem:[%s178 + $0x19] sm:$0xff] %vm26, %v116
  %182 = vst.msk [vmem:[%s178 + $0x21] sm:$0xff] %vm26, %v117
  %183 = vst.msk [vmem:[%s178 + $0x31] sm:$0xff] %vm26, %v118
  %184 = vst.msk [vmem:[%s178 + $0x39] sm:$0xff] %vm26, %v119
  %185 = vst.msk [vmem:[%s178 + $0x49] sm:$0xff] %vm26, %v120
  %186 = vst.msk [vmem:[%s178 + $0x51] sm:$0xff] %vm26, %v121
  %187 = vst.msk [vmem:[%s178 + $0x61] sm:$0xff] %vm26, %v122
  %188 = vst.msk [vmem:[%s178 + $0x69] sm:$0xff] %vm26, %v123
  %189 = vst.msk [vmem:[%s178 + $0x79] sm:$0xff] %vm26, %v124
  %190 = vst.msk [vmem:[%s178 + $0x81] sm:$0xff] %vm26, %v125
  %191 = vst.msk [vmem:[%s178 + $0x91] sm:$0xff] %vm26, %v126
  %192 = vst.msk [vmem:[%s178 + $0x99] sm:$0xff] %vm26, %v127
  %193 = vst.msk [vmem:[%s178 + $0xa9] sm:$0xff] %vm26, %v128
  %194 = vst.msk [vmem:[%s178 + $0xb1] sm:$0xff] %vm26, %v129
  %195 = vst.msk [vmem:[%s178 + $0xc1] sm:$0xff] %vm26, %v130
  %196 = vst.msk [vmem:[%s178 + $0xc9] sm:$0xff] %vm26, %v131
  %197 = vst.msk [vmem:[%s178 + $0xd9] sm:$0xff] %vm26, %v132
  %198 = vst.msk [vmem:[%s178 + $0xe1] sm:$0xff] %vm26, %v133
  %199 = vst.msk [vmem:[%s178 + $0xf1] sm:$0xff] %vm26, %v134
  %200 = vst.msk [vmem:[%s178 + $0xf9] sm:$0xff] %vm26, %v135
  %201 = vst.msk [vmem:[%s178 + $0x109] sm:$0xff] %vm26, %v136
  %202 = vst.msk [vmem:[%s178 + $0x111] sm:$0xff] %vm26, %v137
  %203 = vst.msk [vmem:[%s178 + $0x121] sm:$0xff] %vm26, %v138
  %204 = vst.msk [vmem:[%s178 + $0x129] sm:$0xff] %vm26, %v139
  %205 = vst.msk [vmem:[%s178 + $0x139] sm:$0xff] %vm26, %v140
  %206 = vst.msk [vmem:[%s178 + $0x141] sm:$0xff] %vm26, %v141
  %207 = vst.msk [vmem:[%s178 + $0x151] sm:$0xff] %vm26, %v142
  %208 = vst.msk [vmem:[%s178 + $0x159] sm:$0xff] %vm26, %v143
  %209 = vst.msk [vmem:[%s178 + $0x169] sm:$0xff] %vm26, %v144
  %210 = vst.msk [vmem:[%s178 + $0x171] sm:$0xff] %vm26, %v145
  %211 = vst.msk [vmem:[%s178 + $0x1b1] sm:$0xff] %vm26, %v146
  %212 = vst.msk [vmem:[%s178 + $0x1b9] sm:$0xff] %vm26, %v147
  %213 = vst.msk [vmem:[%s178 + $0x1c9] sm:$0xff] %vm26, %v148
  %214 = vst.msk [vmem:[%s178 + $0x1d1] sm:$0xff] %vm26, %v149
  %215 = vst.msk [vmem:[%s178 + $0x1e1] sm:$0xff] %vm26, %v150
  %216 = vst.msk [vmem:[%s178 + $0x1e9] sm:$0xff] %vm26, %v151
  %217 = vst.msk [vmem:[%s178 + $0x1f9] sm:$0xff] %vm26, %v152
  %218 = vst.msk [vmem:[%s178 + $0x201] sm:$0xff] %vm26, %v153
  %219 = vst.msk [vmem:[%s178 + $0x211] sm:$0xff] %vm26, %v154
  %220 = vst.msk [vmem:[%s178 + $0x219] sm:$0xff] %vm26, %v155
  %221 = vst.msk [vmem:[%s178 + $0x229] sm:$0xff] %vm26, %v156
  %222 = vst.msk [vmem:[%s178 + $0x231] sm:$0xff] %vm26, %v157
  %223 = vst.msk [vmem:[%s178 + $0x241] sm:$0xff] %vm26, %v158
  %224 = vst.msk [vmem:[%s178 + $0x249] sm:$0xff] %vm26, %v159
  %225 = vst.msk [vmem:[%s178 + $0x259] sm:$0xff] %vm26, %v160
  %226 = vst.msk [vmem:[%s178 + $0x261] sm:$0xff] %vm26, %v161
  %227 = vst.msk [vmem:[%s178 + $0x271] sm:$0xff] %vm26, %v162
  %228 = vst.msk [vmem:[%s178 + $0x279] sm:$0xff] %vm26, %v163
  %229 = vst.msk [vmem:[%s178 + $0x289] sm:$0xff] %vm26, %v164
  %230 = vst.msk [vmem:[%s178 + $0x291] sm:$0xff] %vm26, %v165
  %231 = vst.msk [vmem:[%s178 + $0x2a1] sm:$0xff] %vm26, %v166
  %232 = vst.msk [vmem:[%s178 + $0x2a9] sm:$0xff] %vm26, %v167
  %233 = vst.msk [vmem:[%s178 + $0x2b9] sm:$0xff] %vm26, %v168
  %234 = vst.msk [vmem:[%s178 + $0x2c1] sm:$0xff] %vm26, %v169
  %235 = vst.msk [vmem:[%s178 + $0x2d1] sm:$0xff] %vm26, %v170
  %236 = vst.msk [vmem:[%s178 + $0x2d9] sm:$0xff] %vm26, %v171
  %237 = vst.msk [vmem:[%s178 + $0x2e9] sm:$0xff] %vm26, %v172
  %238 = vst.msk [vmem:[%s178 + $0x2f1] sm:$0xff] %vm26, %v173
  %239 = vst.msk [vmem:[%s178 + $0x301] sm:$0xff] %vm26, %v174
  %240 = vst.msk [vmem:[%s178 + $0x309] sm:$0xff] %vm26, %v175
  %241 = vst.msk [vmem:[%s178 + $0x319] sm:$0xff] %vm26, %v176
  %242 = vst.msk [vmem:[%s178 + $0x321] sm:$0xff] %vm26, %v177
  %v243 = vld [vmem:[#allocation2] sm:$0xff]
  %v244 = vld [vmem:[#allocation2 + $0x8] sm:$0xff]
  %v245 = vld [vmem:[#allocation2 + $0x10] sm:$0x3]
  %v246 = vld [vmem:[#allocation2 + $0x18] sm:$0xff]
  %v247 = vld [vmem:[#allocation2 + $0x20] sm:$0xff]
  %v248 = vld [vmem:[#allocation2 + $0x28] sm:$0x3]
  %v249 = vld [vmem:[#allocation2 + $0x30] sm:$0xff]
  %v250 = vld [vmem:[#allocation2 + $0x38] sm:$0xff]
  %v251 = vld [vmem:[#allocation2 + $0x40] sm:$0x3]
  %v252 = vld [vmem:[#allocation2 + $0x48] sm:$0xff]
  %v253 = vld [vmem:[#allocation2 + $0x50] sm:$0xff]
  %v254 = vld [vmem:[#allocation2 + $0x58] sm:$0x3]
  %v255 = vld [vmem:[#allocation2 + $0x60] sm:$0xff]
  %v256 = vld [vmem:[#allocation2 + $0x68] sm:$0xff]
  %v257 = vld [vmem:[#allocation2 + $0x70] sm:$0x3]
  %v258 = vld [vmem:[#allocation2 + $0x78] sm:$0xff]
  %v259 = vld [vmem:[#allocation2 + $0x80] sm:$0xff]
  %v260 = vld [vmem:[#allocation2 + $0x88] sm:$0x3]
  %v261 = vld [vmem:[#allocation2 + $0x90] sm:$0xff]
  %v262 = vld [vmem:[#allocation2 + $0x98] sm:$0xff]
  %v263 = vld [vmem:[#allocation2 + $0xa0] sm:$0x3]
  %v264 = vld [vmem:[#allocation2 + $0xa8] sm:$0xff]
  %v265 = vld [vmem:[#allocation2 + $0xb0] sm:$0xff]
  %v266 = vld [vmem:[#allocation2 + $0xb8] sm:$0x3]
  %v267 = vld [vmem:[#allocation2 + $0xc0] sm:$0xff]
  %v268 = vld [vmem:[#allocation2 + $0xc8] sm:$0xff]
  %v269 = vld [vmem:[#allocation2 + $0xd0] sm:$0x3]
  %v270 = vld [vmem:[#allocation2 + $0xd8] sm:$0xff]
  %v271 = vld [vmem:[#allocation2 + $0xe0] sm:$0xff]
  %v272 = vld [vmem:[#allocation2 + $0xe8] sm:$0x3]
  %v273 = vld [vmem:[#allocation2 + $0xf0] sm:$0xff]
  %v274 = vld [vmem:[#allocation2 + $0xf8] sm:$0xff]
  %v275 = vld [vmem:[#allocation2 + $0x100] sm:$0x3]
  %v276 = vld [vmem:[#allocation2 + $0x108] sm:$0xff]
  %v277 = vld [vmem:[#allocation2 + $0x110] sm:$0xff]
  %v278 = vld [vmem:[#allocation2 + $0x118] sm:$0x3]
  %v279 = vld [vmem:[#allocation2 + $0x120] sm:$0xff]
  %v280 = vld [vmem:[#allocation2 + $0x128] sm:$0xff]
  %v281 = vld [vmem:[#allocation2 + $0x130] sm:$0x3]
  %v282 = vld [vmem:[#allocation2 + $0x138] sm:$0xff]
  %v283 = vld [vmem:[#allocation2 + $0x140] sm:$0xff]
  %v284 = vld [vmem:[#allocation2 + $0x148] sm:$0x3]
  %v285 = vld [vmem:[#allocation2 + $0x150] sm:$0xff]
  %v286 = vld [vmem:[#allocation2 + $0x158] sm:$0xff]
  %v287 = vld [vmem:[#allocation2 + $0x160] sm:$0x3]
  %v288 = vld [vmem:[#allocation2 + $0x168] sm:$0xff]
  %v289 = vld [vmem:[#allocation2 + $0x170] sm:$0xff]
  %v290 = vld [vmem:[#allocation2 + $0x178] sm:$0x3]
  %v291 = vld [vmem:[#allocation2 + $0x180] sm:$0xff]
  %v292 = vld [vmem:[#allocation2 + $0x188] sm:$0xff]
  %v293 = vld [vmem:[#allocation2 + $0x190] sm:$0x3]
  %v294 = vld [vmem:[#allocation2 + $0x198] sm:$0xff]
  %v295 = vld [vmem:[#allocation2 + $0x1a0] sm:$0xff]
  %v296 = vld [vmem:[#allocation2 + $0x1a8] sm:$0x3]
  %v297 = vld [vmem:[#allocation2 + $0x1b0] sm:$0xff]
  %v298 = vld [vmem:[#allocation2 + $0x1b8] sm:$0xff]
  %v299 = vld [vmem:[#allocation2 + $0x1c0] sm:$0x3]
  %v300 = vld [vmem:[#allocation2 + $0x1c8] sm:$0xff]
  %v301 = vld [vmem:[#allocation2 + $0x1d0] sm:$0xff]
  %v302 = vld [vmem:[#allocation2 + $0x1d8] sm:$0x3]
  %v303 = vld [vmem:[#allocation2 + $0x1e0] sm:$0xff]
  %v304 = vld [vmem:[#allocation2 + $0x1e8] sm:$0xff]
  %v305 = vld [vmem:[#allocation2 + $0x1f0] sm:$0x3]
  %v306 = vld [vmem:[#allocation2 + $0x1f8] sm:$0xff]
  %v307 = vld [vmem:[#allocation2 + $0x200] sm:$0xff]
  %v308 = vld [vmem:[#allocation2 + $0x208] sm:$0x3]
  %v309 = vld [vmem:[#allocation2 + $0x210] sm:$0xff]
  %v310 = vld [vmem:[#allocation2 + $0x218] sm:$0xff]
  %v311 = vld [vmem:[#allocation2 + $0x220] sm:$0x3]
  %v312 = vld [vmem:[#allocation2 + $0x228] sm:$0xff]
  %v313 = vld [vmem:[#allocation2 + $0x230] sm:$0xff]
  %v314 = vld [vmem:[#allocation2 + $0x238] sm:$0x3]
  %v315 = vld [vmem:[#allocation2 + $0x240] sm:$0xff]
  %v316 = vld [vmem:[#allocation2 + $0x248] sm:$0xff]
  %v317 = vld [vmem:[#allocation2 + $0x250] sm:$0x3]
  %v318 = vld [vmem:[#allocation2 + $0x258] sm:$0xff]
  %v319 = vld [vmem:[#allocation2 + $0x260] sm:$0xff]
  %v320 = vld [vmem:[#allocation2 + $0x268] sm:$0x3]
  %v321 = vld [vmem:[#allocation2 + $0x270] sm:$0xff]
  %v322 = vld [vmem:[#allocation2 + $0x278] sm:$0xff]
  %v323 = vld [vmem:[#allocation2 + $0x280] sm:$0x3]
  %v324 = vld [vmem:[#allocation2 + $0x288] sm:$0xff]
  %v325 = vld [vmem:[#allocation2 + $0x290] sm:$0xff]
  %v326 = vld [vmem:[#allocation2 + $0x298] sm:$0x3]
  %v327 = vld [vmem:[#allocation2 + $0x2a0] sm:$0xff]
  %v328 = vld [vmem:[#allocation2 + $0x2a8] sm:$0xff]
  %v329 = vld [vmem:[#allocation2 + $0x2b0] sm:$0x3]
  %v330 = vld [vmem:[#allocation2 + $0x2b8] sm:$0xff]
  %v331 = vld [vmem:[#allocation2 + $0x2c0] sm:$0xff]
  %v332 = vld [vmem:[#allocation2 + $0x2c8] sm:$0x3]
  %v333 = vld [vmem:[#allocation2 + $0x2d0] sm:$0xff]
  %v334 = vld [vmem:[#allocation2 + $0x2d8] sm:$0xff]
  %v335 = vld [vmem:[#allocation2 + $0x2e0] sm:$0x3]
  %v336 = vld [vmem:[#allocation2 + $0x2e8] sm:$0xff]
  %v337 = vld [vmem:[#allocation2 + $0x2f0] sm:$0xff]
  %v338 = vld [vmem:[#allocation2 + $0x2f8] sm:$0x3]
  %v339 = vld [vmem:[#allocation2 + $0x300] sm:$0xff]
  %v340 = vld [vmem:[#allocation2 + $0x308] sm:$0xff]
  %v341 = vld [vmem:[#allocation2 + $0x310] sm:$0x3]
  %v342 = vld [vmem:[#allocation2 + $0x318] sm:$0xff]
  %v343 = vld [vmem:[#allocation2 + $0x320] sm:$0xff]
  %v344 = vld [vmem:[#allocation2 + $0x328] sm:$0x3]
  %v345 = vld [vmem:[#allocation2 + $0x330] sm:$0xff]
  %v346 = vld [vmem:[#allocation2 + $0x338] sm:$0xff]
  %v347 = vld [vmem:[#allocation2 + $0x340] sm:$0x3]
  %v348 = vld [vmem:[#allocation2 + $0x348] sm:$0xff]
  %v349 = vld [vmem:[#allocation2 + $0x350] sm:$0xff]
  %v350 = vld [vmem:[#allocation2 + $0x358] sm:$0x3]
  %v351 = vld [vmem:[%s1] sm:$0xff]
  %v352 = vld [vmem:[%s1 + $0x8] sm:$0xff]
  %v353 = vld [vmem:[%s1 + $0x10] sm:$0xff]
  %v354 = vld [vmem:[%s1 + $0x18] sm:$0xff]
  %v355 = vld [vmem:[%s1 + $0x20] sm:$0xf]
  %vm452 = vcmask 1046528
  %v453 = vrot.slane %v243, 1
  %v454 = vrot.slane %v244, 1
  %v455 = vsel %vm452, %v453, %v454
  %v456 = vrot.slane %v245, 1
  %v457 = vsel %vm452, %v454, %v456
  %v458 = vrot.slane %v246, 1
  %v459 = vrot.slane %v247, 1
  %v460 = vsel %vm452, %v458, %v459
  %v461 = vrot.slane %v248, 1
  %v462 = vsel %vm452, %v459, %v461
  %v463 = vrot.slane %v249, 1
  %v464 = vrot.slane %v250, 1
  %v465 = vsel %vm452, %v463, %v464
  %v466 = vrot.slane %v251, 1
  %v467 = vsel %vm452, %v464, %v466
  %v468 = vrot.slane %v252, 1
  %v469 = vrot.slane %v253, 1
  %v470 = vsel %vm452, %v468, %v469
  %v471 = vrot.slane %v254, 1
  %v472 = vsel %vm452, %v469, %v471
  %v473 = vrot.slane %v255, 1
  %v474 = vrot.slane %v256, 1
  %v475 = vsel %vm452, %v473, %v474
  %v476 = vrot.slane %v257, 1
  %v477 = vsel %vm452, %v474, %v476
  %v478 = vrot.slane %v258, 1
  %v479 = vrot.slane %v259, 1
  %v480 = vsel %vm452, %v478, %v479
  %v481 = vrot.slane %v260, 1
  %v482 = vsel %vm452, %v479, %v481
  %v483 = vrot.slane %v261, 1
  %v484 = vrot.slane %v262, 1
  %v485 = vsel %vm452, %v483, %v484
  %v486 = vrot.slane %v263, 1
  %v487 = vsel %vm452, %v484, %v486
  %v488 = vrot.slane %v264, 1
  %v489 = vrot.slane %v265, 1
  %v490 = vsel %vm452, %v488, %v489
  %v491 = vrot.slane %v266, 1
  %v492 = vsel %vm452, %v489, %v491
  %v493 = vrot.slane %v267, 1
  %v494 = vrot.slane %v268, 1
  %v495 = vsel %vm452, %v493, %v494
  %v496 = vrot.slane %v269, 1
  %v497 = vsel %vm452, %v494, %v496
  %v498 = vrot.slane %v270, 1
  %v499 = vrot.slane %v271, 1
  %v500 = vsel %vm452, %v498, %v499
  %v501 = vrot.slane %v272, 1
  %v502 = vsel %vm452, %v499, %v501
  %v503 = vrot.slane %v273, 1
  %v504 = vrot.slane %v274, 1
  %v505 = vsel %vm452, %v503, %v504
  %v506 = vrot.slane %v275, 1
  %v507 = vsel %vm452, %v504, %v506
  %v508 = vrot.slane %v276, 1
  %v509 = vrot.slane %v277, 1
  %v510 = vsel %vm452, %v508, %v509
  %v511 = vrot.slane %v278, 1
  %v512 = vsel %vm452, %v509, %v511
  %v513 = vrot.slane %v279, 1
  %v514 = vrot.slane %v280, 1
  %v515 = vsel %vm452, %v513, %v514
  %v516 = vrot.slane %v281, 1
  %v517 = vsel %vm452, %v514, %v516
  %v518 = vrot.slane %v282, 1
  %v519 = vrot.slane %v283, 1
  %v520 = vsel %vm452, %v518, %v519
  %v521 = vrot.slane %v284, 1
  %v522 = vsel %vm452, %v519, %v521
  %v523 = vrot.slane %v285, 1
  %v524 = vrot.slane %v286, 1
  %v525 = vsel %vm452, %v523, %v524
  %v526 = vrot.slane %v287, 1
  %v527 = vsel %vm452, %v524, %v526
  %v528 = vrot.slane %v288, 1
  %v529 = vrot.slane %v289, 1
  %v530 = vsel %vm452, %v528, %v529
  %v531 = vrot.slane %v290, 1
  %v532 = vsel %vm452, %v529, %v531
  %v533 = vrot.slane %v297, 1
  %v534 = vrot.slane %v298, 1
  %v535 = vsel %vm452, %v533, %v534
  %v536 = vrot.slane %v299, 1
  %v537 = vsel %vm452, %v534, %v536
  %v538 = vrot.slane %v300, 1
  %v539 = vrot.slane %v301, 1
  %v540 = vsel %vm452, %v538, %v539
  %v541 = vrot.slane %v302, 1
  %v542 = vsel %vm452, %v539, %v541
  %v543 = vrot.slane %v303, 1
  %v544 = vrot.slane %v304, 1
  %v545 = vsel %vm452, %v543, %v544
  %v546 = vrot.slane %v305, 1
  %v547 = vsel %vm452, %v544, %v546
  %v548 = vrot.slane %v306, 1
  %v549 = vrot.slane %v307, 1
  %v550 = vsel %vm452, %v548, %v549
  %v551 = vrot.slane %v308, 1
  %v552 = vsel %vm452, %v549, %v551
  %v553 = vrot.slane %v309, 1
  %v554 = vrot.slane %v310, 1
  %v555 = vsel %vm452, %v553, %v554
  %v556 = vrot.slane %v311, 1
  %v557 = vsel %vm452, %v554, %v556
  %v558 = vrot.slane %v312, 1
  %v559 = vrot.slane %v313, 1
  %v560 = vsel %vm452, %v558, %v559
  %v561 = vrot.slane %v314, 1
  %v562 = vsel %vm452, %v559, %v561
  %v563 = vrot.slane %v315, 1
  %v564 = vrot.slane %v316, 1
  %v565 = vsel %vm452, %v563, %v564
  %v566 = vrot.slane %v317, 1
  %v567 = vsel %vm452, %v564, %v566
  %v568 = vrot.slane %v318, 1
  %v569 = vrot.slane %v319, 1
  %v570 = vsel %vm452, %v568, %v569
  %v571 = vrot.slane %v320, 1
  %v572 = vsel %vm452, %v569, %v571
  %v573 = vrot.slane %v321, 1
  %v574 = vrot.slane %v322, 1
  %v575 = vsel %vm452, %v573, %v574
  %v576 = vrot.slane %v323, 1
  %v577 = vsel %vm452, %v574, %v576
  %v578 = vrot.slane %v324, 1
  %v579 = vrot.slane %v325, 1
  %v580 = vsel %vm452, %v578, %v579
  %v581 = vrot.slane %v326, 1
  %v582 = vsel %vm452, %v579, %v581
  %v583 = vrot.slane %v327, 1
  %v584 = vrot.slane %v328, 1
  %v585 = vsel %vm452, %v583, %v584
  %v586 = vrot.slane %v329, 1
  %v587 = vsel %vm452, %v584, %v586
  %v588 = vrot.slane %v330, 1
  %v589 = vrot.slane %v331, 1
  %v590 = vsel %vm452, %v588, %v589
  %v591 = vrot.slane %v332, 1
  %v592 = vsel %vm452, %v589, %v591
  %v593 = vrot.slane %v333, 1
  %v594 = vrot.slane %v334, 1
  %v595 = vsel %vm452, %v593, %v594
  %v596 = vrot.slane %v335, 1
  %v597 = vsel %vm452, %v594, %v596
  %v598 = vrot.slane %v336, 1
  %v599 = vrot.slane %v337, 1
  %v600 = vsel %vm452, %v598, %v599
  %v601 = vrot.slane %v338, 1
  %v602 = vsel %vm452, %v599, %v601
  %v603 = vrot.slane %v339, 1
  %v604 = vrot.slane %v340, 1
  %v605 = vsel %vm452, %v603, %v604
  %v606 = vrot.slane %v341, 1
  %v607 = vsel %vm452, %v604, %v606
  %v608 = vrot.slane %v342, 1
  %v609 = vrot.slane %v343, 1
  %v610 = vsel %vm452, %v608, %v609
  %v611 = vrot.slane %v344, 1
  %v612 = vsel %vm452, %v609, %v611
  %613 = vrot.lane.b32.xlu0 %v455, 4
  %v614 = vpop.permute.xlu0 %613
  %615 = vrot.lane.b32.xlu0 %v457, 4
  %v616 = vpop.permute.xlu0 %615
  %617 = vrot.lane.b32.xlu0 %v460, 4
  %v618 = vpop.permute.xlu0 %617
  %619 = vrot.lane.b32.xlu0 %v462, 4
  %v620 = vpop.permute.xlu0 %619
  %621 = vrot.lane.b32.xlu0 %v465, 4
  %v622 = vpop.permute.xlu0 %621
  %623 = vrot.lane.b32.xlu0 %v467, 4
  %v624 = vpop.permute.xlu0 %623
  %625 = vrot.lane.b32.xlu0 %v470, 4
  %v626 = vpop.permute.xlu0 %625
  %627 = vrot.lane.b32.xlu0 %v472, 4
  %v628 = vpop.permute.xlu0 %627
  %629 = vrot.lane.b32.xlu0 %v475, 4
  %v630 = vpop.permute.xlu0 %629
  %631 = vrot.lane.b32.xlu0 %v477, 4
  %v632 = vpop.permute.xlu0 %631
  %633 = vrot.lane.b32.xlu0 %v480, 4
  %v634 = vpop.permute.xlu0 %633
  %635 = vrot.lane.b32.xlu0 %v482, 4
  %v636 = vpop.permute.xlu0 %635
  %637 = vrot.lane.b32.xlu0 %v485, 4
  %v638 = vpop.permute.xlu0 %637
  %639 = vrot.lane.b32.xlu0 %v487, 4
  %v640 = vpop.permute.xlu0 %639
  %641 = vrot.lane.b32.xlu0 %v490, 4
  %v642 = vpop.permute.xlu0 %641
  %643 = vrot.lane.b32.xlu0 %v492, 4
  %v644 = vpop.permute.xlu0 %643
  %645 = vrot.lane.b32.xlu0 %v495, 4
  %v646 = vpop.permute.xlu0 %645
  %647 = vrot.lane.b32.xlu0 %v497, 4
  %v648 = vpop.permute.xlu0 %647
  %649 = vrot.lane.b32.xlu0 %v500, 4
  %v650 = vpop.permute.xlu0 %649
  %651 = vrot.lane.b32.xlu0 %v502, 4
  %v652 = vpop.permute.xlu0 %651
  %653 = vrot.lane.b32.xlu0 %v505, 4
  %v654 = vpop.permute.xlu0 %653
  %655 = vrot.lane.b32.xlu0 %v507, 4
  %v656 = vpop.permute.xlu0 %655
  %657 = vrot.lane.b32.xlu0 %v510, 4
  %v658 = vpop.permute.xlu0 %657
  %659 = vrot.lane.b32.xlu0 %v512, 4
  %v660 = vpop.permute.xlu0 %659
  %661 = vrot.lane.b32.xlu0 %v515, 4
  %v662 = vpop.permute.xlu0 %661
  %663 = vrot.lane.b32.xlu0 %v517, 4
  %v664 = vpop.permute.xlu0 %663
  %665 = vrot.lane.b32.xlu0 %v520, 4
  %v666 = vpop.permute.xlu0 %665
  %667 = vrot.lane.b32.xlu0 %v522, 4
  %v668 = vpop.permute.xlu0 %667
  %669 = vrot.lane.b32.xlu0 %v525, 4
  %v670 = vpop.permute.xlu0 %669
  %671 = vrot.lane.b32.xlu0 %v527, 4
  %v672 = vpop.permute.xlu0 %671
  %673 = vrot.lane.b32.xlu0 %v530, 4
  %v674 = vpop.permute.xlu0 %673
  %675 = vrot.lane.b32.xlu0 %v532, 4
  %v676 = vpop.permute.xlu0 %675
  %677 = vrot.lane.b32.xlu0 %v535, 4
  %v678 = vpop.permute.xlu0 %677
  %679 = vrot.lane.b32.xlu0 %v537, 4
  %v680 = vpop.permute.xlu0 %679
  %681 = vrot.lane.b32.xlu0 %v540, 4
  %v682 = vpop.permute.xlu0 %681
  %683 = vrot.lane.b32.xlu0 %v542, 4
  %v684 = vpop.permute.xlu0 %683
  %685 = vrot.lane.b32.xlu0 %v545, 4
  %v686 = vpop.permute.xlu0 %685
  %687 = vrot.lane.b32.xlu0 %v547, 4
  %v688 = vpop.permute.xlu0 %687
  %689 = vrot.lane.b32.xlu0 %v550, 4
  %v690 = vpop.permute.xlu0 %689
  %691 = vrot.lane.b32.xlu0 %v552, 4
  %v692 = vpop.permute.xlu0 %691
  %693 = vrot.lane.b32.xlu0 %v555, 4
  %v694 = vpop.permute.xlu0 %693
  %695 = vrot.lane.b32.xlu0 %v557, 4
  %v696 = vpop.permute.xlu0 %695
  %697 = vrot.lane.b32.xlu0 %v560, 4
  %v698 = vpop.permute.xlu0 %697
  %699 = vrot.lane.b32.xlu0 %v562, 4
  %v700 = vpop.permute.xlu0 %699
  %701 = vrot.lane.b32.xlu0 %v565, 4
  %v702 = vpop.permute.xlu0 %701
  %703 = vrot.lane.b32.xlu0 %v567, 4
  %v704 = vpop.permute.xlu0 %703
  %705 = vrot.lane.b32.xlu0 %v570, 4
  %v706 = vpop.permute.xlu0 %705
  %707 = vrot.lane.b32.xlu0 %v572, 4
  %v708 = vpop.permute.xlu0 %707
  %709 = vrot.lane.b32.xlu0 %v575, 4
  %v710 = vpop.permute.xlu0 %709
  %711 = vrot.lane.b32.xlu0 %v577, 4
  %v712 = vpop.permute.xlu0 %711
  %713 = vrot.lane.b32.xlu0 %v580, 4
  %v714 = vpop.permute.xlu0 %713
  %715 = vrot.lane.b32.xlu0 %v582, 4
  %v716 = vpop.permute.xlu0 %715
  %717 = vrot.lane.b32.xlu0 %v585, 4
  %v718 = vpop.permute.xlu0 %717
  %719 = vrot.lane.b32.xlu0 %v587, 4
  %v720 = vpop.permute.xlu0 %719
  %721 = vrot.lane.b32.xlu0 %v590, 4
  %v722 = vpop.permute.xlu0 %721
  %723 = vrot.lane.b32.xlu0 %v592, 4
  %v724 = vpop.permute.xlu0 %723
  %725 = vrot.lane.b32.xlu0 %v595, 4
  %v726 = vpop.permute.xlu0 %725
  %727 = vrot.lane.b32.xlu0 %v597, 4
  %v728 = vpop.permute.xlu0 %727
  %729 = vrot.lane.b32.xlu0 %v600, 4
  %v730 = vpop.permute.xlu0 %729
  %731 = vrot.lane.b32.xlu0 %v602, 4
  %v732 = vpop.permute.xlu0 %731
  %733 = vrot.lane.b32.xlu0 %v605, 4
  %v734 = vpop.permute.xlu0 %733
  %735 = vrot.lane.b32.xlu0 %v607, 4
  %v736 = vpop.permute.xlu0 %735
  %737 = vrot.lane.b32.xlu0 %v610, 4
  %v738 = vpop.permute.xlu0 %737
  %739 = vrot.lane.b32.xlu0 %v612, 4
  %v740 = vpop.permute.xlu0 %739
  %vm805 = vcmask 1045504
  %v806 = vrot.slane %v243, 2
  %v807 = vrot.slane %v244, 2
  %v808 = vsel %vm805, %v806, %v807
  %v809 = vrot.slane %v245, 2
  %v810 = vsel %vm805, %v807, %v809
  %v811 = vrot.slane %v246, 2
  %v812 = vrot.slane %v247, 2
  %v813 = vsel %vm805, %v811, %v812
  %v814 = vrot.slane %v248, 2
  %v815 = vsel %vm805, %v812, %v814
  %v816 = vrot.slane %v249, 2
  %v817 = vrot.slane %v250, 2
  %v818 = vsel %vm805, %v816, %v817
  %v819 = vrot.slane %v251, 2
  %v820 = vsel %vm805, %v817, %v819
  %v821 = vrot.slane %v252, 2
  %v822 = vrot.slane %v253, 2
  %v823 = vsel %vm805, %v821, %v822
  %v824 = vrot.slane %v254, 2
  %v825 = vsel %vm805, %v822, %v824
  %v826 = vrot.slane %v255, 2
  %v827 = vrot.slane %v256, 2
  %v828 = vsel %vm805, %v826, %v827
  %v829 = vrot.slane %v257, 2
  %v830 = vsel %vm805, %v827, %v829
  %v831 = vrot.slane %v258, 2
  %v832 = vrot.slane %v259, 2
  %v833 = vsel %vm805, %v831, %v832
  %v834 = vrot.slane %v260, 2
  %v835 = vsel %vm805, %v832, %v834
  %v836 = vrot.slane %v261, 2
  %v837 = vrot.slane %v262, 2
  %v838 = vsel %vm805, %v836, %v837
  %v839 = vrot.slane %v263, 2
  %v840 = vsel %vm805, %v837, %v839
  %v841 = vrot.slane %v264, 2
  %v842 = vrot.slane %v265, 2
  %v843 = vsel %vm805, %v841, %v842
  %v844 = vrot.slane %v266, 2
  %v845 = vsel %vm805, %v842, %v844
  %v846 = vrot.slane %v267, 2
  %v847 = vrot.slane %v268, 2
  %v848 = vsel %vm805, %v846, %v847
  %v849 = vrot.slane %v269, 2
  %v850 = vsel %vm805, %v847, %v849
  %v851 = vrot.slane %v270, 2
  %v852 = vrot.slane %v271, 2
  %v853 = vsel %vm805, %v851, %v852
  %v854 = vrot.slane %v272, 2
  %v855 = vsel %vm805, %v852, %v854
  %v856 = vrot.slane %v273, 2
  %v857 = vrot.slane %v274, 2
  %v858 = vsel %vm805, %v856, %v857
  %v859 = vrot.slane %v275, 2
  %v860 = vsel %vm805, %v857, %v859
  %v861 = vrot.slane %v276, 2
  %v862 = vrot.slane %v277, 2
  %v863 = vsel %vm805, %v861, %v862
  %v864 = vrot.slane %v278, 2
  %v865 = vsel %vm805, %v862, %v864
  %v866 = vrot.slane %v279, 2
  %v867 = vrot.slane %v280, 2
  %v868 = vsel %vm805, %v866, %v867
  %v869 = vrot.slane %v281, 2
  %v870 = vsel %vm805, %v867, %v869
  %v871 = vrot.slane %v282, 2
  %v872 = vrot.slane %v283, 2
  %v873 = vsel %vm805, %v871, %v872
  %v874 = vrot.slane %v284, 2
  %v875 = vsel %vm805, %v872, %v874
  %v876 = vrot.slane %v285, 2
  %v877 = vrot.slane %v286, 2
  %v878 = vsel %vm805, %v876, %v877
  %v879 = vrot.slane %v287, 2
  %v880 = vsel %vm805, %v877, %v879
  %v881 = vrot.slane %v288, 2
  %v882 = vrot.slane %v289, 2
  %v883 = vsel %vm805, %v881, %v882
  %v884 = vrot.slane %v290, 2
  %v885 = vsel %vm805, %v882, %v884
  %v886 = vrot.slane %v297, 2
  %v887 = vrot.slane %v298, 2
  %v888 = vsel %vm805, %v886, %v887
  %v889 = vrot.slane %v299, 2
  %v890 = vsel %vm805, %v887, %v889
  %v891 = vrot.slane %v300, 2
  %v892 = vrot.slane %v301, 2
  %v893 = vsel %vm805, %v891, %v892
  %v894 = vrot.slane %v302, 2
  %v895 = vsel %vm805, %v892, %v894
  %v896 = vrot.slane %v303, 2
  %v897 = vrot.slane %v304, 2
  %v898 = vsel %vm805, %v896, %v897
  %v899 = vrot.slane %v305, 2
  %v900 = vsel %vm805, %v897, %v899
  %v901 = vrot.slane %v306, 2
  %v902 = vrot.slane %v307, 2
  %v903 = vsel %vm805, %v901, %v902
  %v904 = vrot.slane %v308, 2
  %v905 = vsel %vm805, %v902, %v904
  %v906 = vrot.slane %v309, 2
  %v907 = vrot.slane %v310, 2
  %v908 = vsel %vm805, %v906, %v907
  %v909 = vrot.slane %v311, 2
  %v910 = vsel %vm805, %v907, %v909
  %v911 = vrot.slane %v312, 2
  %v912 = vrot.slane %v313, 2
  %v913 = vsel %vm805, %v911, %v912
  %v914 = vrot.slane %v314, 2
  %v915 = vsel %vm805, %v912, %v914
  %v916 = vrot.slane %v315, 2
  %v917 = vrot.slane %v316, 2
  %v918 = vsel %vm805, %v916, %v917
  %v919 = vrot.slane %v317, 2
  %v920 = vsel %vm805, %v917, %v919
  %v921 = vrot.slane %v318, 2
  %v922 = vrot.slane %v319, 2
  %v923 = vsel %vm805, %v921, %v922
  %v924 = vrot.slane %v320, 2
  %v925 = vsel %vm805, %v922, %v924
  %v926 = vrot.slane %v321, 2
  %v927 = vrot.slane %v322, 2
  %v928 = vsel %vm805, %v926, %v927
  %v929 = vrot.slane %v323, 2
  %v930 = vsel %vm805, %v927, %v929
  %v931 = vrot.slane %v324, 2
  %v932 = vrot.slane %v325, 2
  %v933 = vsel %vm805, %v931, %v932
  %v934 = vrot.slane %v326, 2
  %v935 = vsel %vm805, %v932, %v934
  %v936 = vrot.slane %v327, 2
  %v937 = vrot.slane %v328, 2
  %v938 = vsel %vm805, %v936, %v937
  %v939 = vrot.slane %v329, 2
  %v940 = vsel %vm805, %v937, %v939
  %v941 = vrot.slane %v330, 2
  %v942 = vrot.slane %v331, 2
  %v943 = vsel %vm805, %v941, %v942
  %v944 = vrot.slane %v332, 2
  %v945 = vsel %vm805, %v942, %v944
  %v946 = vrot.slane %v333, 2
  %v947 = vrot.slane %v334, 2
  %v948 = vsel %vm805, %v946, %v947
  %v949 = vrot.slane %v335, 2
  %v950 = vsel %vm805, %v947, %v949
  %v951 = vrot.slane %v336, 2
  %v952 = vrot.slane %v337, 2
  %v953 = vsel %vm805, %v951, %v952
  %v954 = vrot.slane %v338, 2
  %v955 = vsel %vm805, %v952, %v954
  %v956 = vrot.slane %v339, 2
  %v957 = vrot.slane %v340, 2
  %v958 = vsel %vm805, %v956, %v957
  %v959 = vrot.slane %v341, 2
  %v960 = vsel %vm805, %v957, %v959
  %v961 = vrot.slane %v342, 2
  %v962 = vrot.slane %v343, 2
  %v963 = vsel %vm805, %v961, %v962
  %v964 = vrot.slane %v344, 2
  %v965 = vsel %vm805, %v962, %v964
  %966 = vrot.lane.b32.xlu0 %v808, 8
  %v967 = vpop.permute.xlu0 %966
  %968 = vrot.lane.b32.xlu0 %v810, 8
  %v969 = vpop.permute.xlu0 %968
  %970 = vrot.lane.b32.xlu0 %v813, 8
  %v971 = vpop.permute.xlu0 %970
  %972 = vrot.lane.b32.xlu0 %v815, 8
  %v973 = vpop.permute.xlu0 %972
  %974 = vrot.lane.b32.xlu0 %v818, 8
  %v975 = vpop.permute.xlu0 %974
  %976 = vrot.lane.b32.xlu0 %v820, 8
  %v977 = vpop.permute.xlu0 %976
  %978 = vrot.lane.b32.xlu0 %v823, 8
  %v979 = vpop.permute.xlu0 %978
  %980 = vrot.lane.b32.xlu0 %v825, 8
  %v981 = vpop.permute.xlu0 %980
  %982 = vrot.lane.b32.xlu0 %v828, 8
  %v983 = vpop.permute.xlu0 %982
  %984 = vrot.lane.b32.xlu0 %v830, 8
  %v985 = vpop.permute.xlu0 %984
  %986 = vrot.lane.b32.xlu0 %v833, 8
  %v987 = vpop.permute.xlu0 %986
  %988 = vrot.lane.b32.xlu0 %v835, 8
  %v989 = vpop.permute.xlu0 %988
  %990 = vrot.lane.b32.xlu0 %v838, 8
  %v991 = vpop.permute.xlu0 %990
  %992 = vrot.lane.b32.xlu0 %v840, 8
  %v993 = vpop.permute.xlu0 %992
  %994 = vrot.lane.b32.xlu0 %v843, 8
  %v995 = vpop.permute.xlu0 %994
  %996 = vrot.lane.b32.xlu0 %v845, 8
  %v997 = vpop.permute.xlu0 %996
  %998 = vrot.lane.b32.xlu0 %v848, 8
  %v999 = vpop.permute.xlu0 %998
  %1000 = vrot.lane.b32.xlu0 %v850, 8
  %v1001 = vpop.permute.xlu0 %1000
  %1002 = vrot.lane.b32.xlu0 %v853, 8
  %v1003 = vpop.permute.xlu0 %1002
  %1004 = vrot.lane.b32.xlu0 %v855, 8
  %v1005 = vpop.permute.xlu0 %1004
  %1006 = vrot.lane.b32.xlu0 %v858, 8
  %v1007 = vpop.permute.xlu0 %1006
  %1008 = vrot.lane.b32.xlu0 %v860, 8
  %v1009 = vpop.permute.xlu0 %1008
  %1010 = vrot.lane.b32.xlu0 %v863, 8
  %v1011 = vpop.permute.xlu0 %1010
  %1012 = vrot.lane.b32.xlu0 %v865, 8
  %v1013 = vpop.permute.xlu0 %1012
  %1014 = vrot.lane.b32.xlu0 %v868, 8
  %v1015 = vpop.permute.xlu0 %1014
  %1016 = vrot.lane.b32.xlu0 %v870, 8
  %v1017 = vpop.permute.xlu0 %1016
  %1018 = vrot.lane.b32.xlu0 %v873, 8
  %v1019 = vpop.permute.xlu0 %1018
  %1020 = vrot.lane.b32.xlu0 %v875, 8
  %v1021 = vpop.permute.xlu0 %1020
  %1022 = vrot.lane.b32.xlu0 %v878, 8
  %v1023 = vpop.permute.xlu0 %1022
  %1024 = vrot.lane.b32.xlu0 %v880, 8
  %v1025 = vpop.permute.xlu0 %1024
  %1026 = vrot.lane.b32.xlu0 %v883, 8
  %v1027 = vpop.permute.xlu0 %1026
  %1028 = vrot.lane.b32.xlu0 %v885, 8
  %v1029 = vpop.permute.xlu0 %1028
  %1030 = vrot.lane.b32.xlu0 %v888, 8
  %v1031 = vpop.permute.xlu0 %1030
  %1032 = vrot.lane.b32.xlu0 %v890, 8
  %v1033 = vpop.permute.xlu0 %1032
  %1034 = vrot.lane.b32.xlu0 %v893, 8
  %v1035 = vpop.permute.xlu0 %1034
  %1036 = vrot.lane.b32.xlu0 %v895, 8
  %v1037 = vpop.permute.xlu0 %1036
  %1038 = vrot.lane.b32.xlu0 %v898, 8
  %v1039 = vpop.permute.xlu0 %1038
  %1040 = vrot.lane.b32.xlu0 %v900, 8
  %v1041 = vpop.permute.xlu0 %1040
  %1042 = vrot.lane.b32.xlu0 %v903, 8
  %v1043 = vpop.permute.xlu0 %1042
  %1044 = vrot.lane.b32.xlu0 %v905, 8
  %v1045 = vpop.permute.xlu0 %1044
  %1046 = vrot.lane.b32.xlu0 %v908, 8
  %v1047 = vpop.permute.xlu0 %1046
  %1048 = vrot.lane.b32.xlu0 %v910, 8
  %v1049 = vpop.permute.xlu0 %1048
  %1050 = vrot.lane.b32.xlu0 %v913, 8
  %v1051 = vpop.permute.xlu0 %1050
  %1052 = vrot.lane.b32.xlu0 %v915, 8
  %v1053 = vpop.permute.xlu0 %1052
  %1054 = vrot.lane.b32.xlu0 %v918, 8
  %v1055 = vpop.permute.xlu0 %1054
  %1056 = vrot.lane.b32.xlu0 %v920, 8
  %v1057 = vpop.permute.xlu0 %1056
  %1058 = vrot.lane.b32.xlu0 %v923, 8
  %v1059 = vpop.permute.xlu0 %1058
  %1060 = vrot.lane.b32.xlu0 %v925, 8
  %v1061 = vpop.permute.xlu0 %1060
  %1062 = vrot.lane.b32.xlu0 %v928, 8
  %v1063 = vpop.permute.xlu0 %1062
  %1064 = vrot.lane.b32.xlu0 %v930, 8
  %v1065 = vpop.permute.xlu0 %1064
  %1066 = vrot.lane.b32.xlu0 %v933, 8
  %v1067 = vpop.permute.xlu0 %1066
  %1068 = vrot.lane.b32.xlu0 %v935, 8
  %v1069 = vpop.permute.xlu0 %1068
  %1070 = vrot.lane.b32.xlu0 %v938, 8
  %v1071 = vpop.permute.xlu0 %1070
  %1072 = vrot.lane.b32.xlu0 %v940, 8
  %v1073 = vpop.permute.xlu0 %1072
  %1074 = vrot.lane.b32.xlu0 %v943, 8
  %v1075 = vpop.permute.xlu0 %1074
  %1076 = vrot.lane.b32.xlu0 %v945, 8
  %v1077 = vpop.permute.xlu0 %1076
  %1078 = vrot.lane.b32.xlu0 %v948, 8
  %v1079 = vpop.permute.xlu0 %1078
  %1080 = vrot.lane.b32.xlu0 %v950, 8
  %v1081 = vpop.permute.xlu0 %1080
  %1082 = vrot.lane.b32.xlu0 %v953, 8
  %v1083 = vpop.permute.xlu0 %1082
  %1084 = vrot.lane.b32.xlu0 %v955, 8
  %v1085 = vpop.permute.xlu0 %1084
  %1086 = vrot.lane.b32.xlu0 %v958, 8
  %v1087 = vpop.permute.xlu0 %1086
  %1088 = vrot.lane.b32.xlu0 %v960, 8
  %v1089 = vpop.permute.xlu0 %1088
  %1090 = vrot.lane.b32.xlu0 %v963, 8
  %v1091 = vpop.permute.xlu0 %1090
  %1092 = vrot.lane.b32.xlu0 %v965, 8
  %v1093 = vpop.permute.xlu0 %1092
  %1162 = vrot.lane.b32.xlu0 %v246, 12
  %v1163 = vpop.permute.xlu0 %1162
  %1164 = vrot.lane.b32.xlu0 %v247, 12
  %v1165 = vpop.permute.xlu0 %1164
  %1166 = vrot.lane.b32.xlu0 %v249, 12
  %v1167 = vpop.permute.xlu0 %1166
  %1168 = vrot.lane.b32.xlu0 %v250, 12
  %v1169 = vpop.permute.xlu0 %1168
  %1170 = vrot.lane.b32.xlu0 %v252, 12
  %v1171 = vpop.permute.xlu0 %1170
  %1172 = vrot.lane.b32.xlu0 %v253, 12
  %v1173 = vpop.permute.xlu0 %1172
  %1174 = vrot.lane.b32.xlu0 %v255, 12
  %v1175 = vpop.permute.xlu0 %1174
  %1176 = vrot.lane.b32.xlu0 %v256, 12
  %v1177 = vpop.permute.xlu0 %1176
  %1178 = vrot.lane.b32.xlu0 %v258, 12
  %v1179 = vpop.permute.xlu0 %1178
  %1180 = vrot.lane.b32.xlu0 %v259, 12
  %v1181 = vpop.permute.xlu0 %1180
  %1182 = vrot.lane.b32.xlu0 %v261, 12
  %v1183 = vpop.permute.xlu0 %1182
  %1184 = vrot.lane.b32.xlu0 %v262, 12
  %v1185 = vpop.permute.xlu0 %1184
  %1186 = vrot.lane.b32.xlu0 %v264, 12
  %v1187 = vpop.permute.xlu0 %1186
  %1188 = vrot.lane.b32.xlu0 %v265, 12
  %v1189 = vpop.permute.xlu0 %1188
  %1190 = vrot.lane.b32.xlu0 %v267, 12
  %v1191 = vpop.permute.xlu0 %1190
  %1192 = vrot.lane.b32.xlu0 %v268, 12
  %v1193 = vpop.permute.xlu0 %1192
  %1194 = vrot.lane.b32.xlu0 %v270, 12
  %v1195 = vpop.permute.xlu0 %1194
  %1196 = vrot.lane.b32.xlu0 %v271, 12
  %v1197 = vpop.permute.xlu0 %1196
  %1198 = vrot.lane.b32.xlu0 %v273, 12
  %v1199 = vpop.permute.xlu0 %1198
  %1200 = vrot.lane.b32.xlu0 %v274, 12
  %v1201 = vpop.permute.xlu0 %1200
  %1202 = vrot.lane.b32.xlu0 %v276, 12
  %v1203 = vpop.permute.xlu0 %1202
  %1204 = vrot.lane.b32.xlu0 %v277, 12
  %v1205 = vpop.permute.xlu0 %1204
  %1206 = vrot.lane.b32.xlu0 %v279, 12
  %v1207 = vpop.permute.xlu0 %1206
  %1208 = vrot.lane.b32.xlu0 %v280, 12
  %v1209 = vpop.permute.xlu0 %1208
  %1210 = vrot.lane.b32.xlu0 %v282, 12
  %v1211 = vpop.permute.xlu0 %1210
  %1212 = vrot.lane.b32.xlu0 %v283, 12
  %v1213 = vpop.permute.xlu0 %1212
  %1214 = vrot.lane.b32.xlu0 %v285, 12
  %v1215 = vpop.permute.xlu0 %1214
  %1216 = vrot.lane.b32.xlu0 %v286, 12
  %v1217 = vpop.permute.xlu0 %1216
  %1218 = vrot.lane.b32.xlu0 %v288, 12
  %v1219 = vpop.permute.xlu0 %1218
  %1220 = vrot.lane.b32.xlu0 %v289, 12
  %v1221 = vpop.permute.xlu0 %1220
  %1222 = vrot.lane.b32.xlu0 %v291, 12
  %v1223 = vpop.permute.xlu0 %1222
  %1224 = vrot.lane.b32.xlu0 %v292, 12
  %v1225 = vpop.permute.xlu0 %1224
  %1226 = vrot.lane.b32.xlu0 %v300, 12
  %v1227 = vpop.permute.xlu0 %1226
  %1228 = vrot.lane.b32.xlu0 %v301, 12
  %v1229 = vpop.permute.xlu0 %1228
  %1230 = vrot.lane.b32.xlu0 %v303, 12
  %v1231 = vpop.permute.xlu0 %1230
  %1232 = vrot.lane.b32.xlu0 %v304, 12
  %v1233 = vpop.permute.xlu0 %1232
  %1234 = vrot.lane.b32.xlu0 %v306, 12
  %v1235 = vpop.permute.xlu0 %1234
  %1236 = vrot.lane.b32.xlu0 %v307, 12
  %v1237 = vpop.permute.xlu0 %1236
  %1238 = vrot.lane.b32.xlu0 %v309, 12
  %v1239 = vpop.permute.xlu0 %1238
  %1240 = vrot.lane.b32.xlu0 %v310, 12
  %v1241 = vpop.permute.xlu0 %1240
  %1242 = vrot.lane.b32.xlu0 %v312, 12
  %v1243 = vpop.permute.xlu0 %1242
  %1244 = vrot.lane.b32.xlu0 %v313, 12
  %v1245 = vpop.permute.xlu0 %1244
  %1246 = vrot.lane.b32.xlu0 %v315, 12
  %v1247 = vpop.permute.xlu0 %1246
  %1248 = vrot.lane.b32.xlu0 %v316, 12
  %v1249 = vpop.permute.xlu0 %1248
  %1250 = vrot.lane.b32.xlu0 %v318, 12
  %v1251 = vpop.permute.xlu0 %1250
  %1252 = vrot.lane.b32.xlu0 %v319, 12
  %v1253 = vpop.permute.xlu0 %1252
  %1254 = vrot.lane.b32.xlu0 %v321, 12
  %v1255 = vpop.permute.xlu0 %1254
  %1256 = vrot.lane.b32.xlu0 %v322, 12
  %v1257 = vpop.permute.xlu0 %1256
  %1258 = vrot.lane.b32.xlu0 %v324, 12
  %v1259 = vpop.permute.xlu0 %1258
  %1260 = vrot.lane.b32.xlu0 %v325, 12
  %v1261 = vpop.permute.xlu0 %1260
  %1262 = vrot.lane.b32.xlu0 %v327, 12
  %v1263 = vpop.permute.xlu0 %1262
  %1264 = vrot.lane.b32.xlu0 %v328, 12
  %v1265 = vpop.permute.xlu0 %1264
  %1266 = vrot.lane.b32.xlu0 %v330, 12
  %v1267 = vpop.permute.xlu0 %1266
  %1268 = vrot.lane.b32.xlu0 %v331, 12
  %v1269 = vpop.permute.xlu0 %1268
  %1270 = vrot.lane.b32.xlu0 %v333, 12
  %v1271 = vpop.permute.xlu0 %1270
  %1272 = vrot.lane.b32.xlu0 %v334, 12
  %v1273 = vpop.permute.xlu0 %1272
  %1274 = vrot.lane.b32.xlu0 %v336, 12
  %v1275 = vpop.permute.xlu0 %1274
  %1276 = vrot.lane.b32.xlu0 %v337, 12
  %v1277 = vpop.permute.xlu0 %1276
  %1278 = vrot.lane.b32.xlu0 %v339, 12
  %v1279 = vpop.permute.xlu0 %1278
  %1280 = vrot.lane.b32.xlu0 %v340, 12
  %v1281 = vpop.permute.xlu0 %1280
  %1282 = vrot.lane.b32.xlu0 %v342, 12
  %v1283 = vpop.permute.xlu0 %1282
  %1284 = vrot.lane.b32.xlu0 %v343, 12
  %v1285 = vpop.permute.xlu0 %1284
  %1286 = vrot.lane.b32.xlu0 %v345, 12
  %v1287 = vpop.permute.xlu0 %1286
  %1288 = vrot.lane.b32.xlu0 %v346, 12
  %v1289 = vpop.permute.xlu0 %1288
  %v1356 = vrot.slane %v291, 1
  %v1357 = vrot.slane %v292, 1
  %v1358 = vsel %vm452, %v1356, %v1357
  %v1359 = vrot.slane %v293, 1
  %v1360 = vsel %vm452, %v1357, %v1359
  %v1361 = vrot.slane %v345, 1
  %v1362 = vrot.slane %v346, 1
  %v1363 = vsel %vm452, %v1361, %v1362
  %v1364 = vrot.slane %v347, 1
  %v1365 = vsel %vm452, %v1362, %v1364
  %1366 = vrot.lane.b32.xlu0 %v460, 16
  %v1367 = vpop.permute.xlu0 %1366
  %1368 = vrot.lane.b32.xlu0 %v462, 16
  %v1369 = vpop.permute.xlu0 %1368
  %1370 = vrot.lane.b32.xlu0 %v465, 16
  %v1371 = vpop.permute.xlu0 %1370
  %1372 = vrot.lane.b32.xlu0 %v467, 16
  %v1373 = vpop.permute.xlu0 %1372
  %1374 = vrot.lane.b32.xlu0 %v470, 16
  %v1375 = vpop.permute.xlu0 %1374
  %1376 = vrot.lane.b32.xlu0 %v472, 16
  %v1377 = vpop.permute.xlu0 %1376
  %1378 = vrot.lane.b32.xlu0 %v475, 16
  %v1379 = vpop.permute.xlu0 %1378
  %1380 = vrot.lane.b32.xlu0 %v477, 16
  %v1381 = vpop.permute.xlu0 %1380
  %1382 = vrot.lane.b32.xlu0 %v480, 16
  %v1383 = vpop.permute.xlu0 %1382
  %1384 = vrot.lane.b32.xlu0 %v482, 16
  %v1385 = vpop.permute.xlu0 %1384
  %1386 = vrot.lane.b32.xlu0 %v485, 16
  %v1387 = vpop.permute.xlu0 %1386
  %1388 = vrot.lane.b32.xlu0 %v487, 16
  %v1389 = vpop.permute.xlu0 %1388
  %1390 = vrot.lane.b32.xlu0 %v490, 16
  %v1391 = vpop.permute.xlu0 %1390
  %1392 = vrot.lane.b32.xlu0 %v492, 16
  %v1393 = vpop.permute.xlu0 %1392
  %1394 = vrot.lane.b32.xlu0 %v495, 16
  %v1395 = vpop.permute.xlu0 %1394
  %1396 = vrot.lane.b32.xlu0 %v497, 16
  %v1397 = vpop.permute.xlu0 %1396
  %1398 = vrot.lane.b32.xlu0 %v500, 16
  %v1399 = vpop.permute.xlu0 %1398
  %1400 = vrot.lane.b32.xlu0 %v502, 16
  %v1401 = vpop.permute.xlu0 %1400
  %1402 = vrot.lane.b32.xlu0 %v505, 16
  %v1403 = vpop.permute.xlu0 %1402
  %1404 = vrot.lane.b32.xlu0 %v507, 16
  %v1405 = vpop.permute.xlu0 %1404
  %1406 = vrot.lane.b32.xlu0 %v510, 16
  %v1407 = vpop.permute.xlu0 %1406
  %1408 = vrot.lane.b32.xlu0 %v512, 16
  %v1409 = vpop.permute.xlu0 %1408
  %1410 = vrot.lane.b32.xlu0 %v515, 16
  %v1411 = vpop.permute.xlu0 %1410
  %1412 = vrot.lane.b32.xlu0 %v517, 16
  %v1413 = vpop.permute.xlu0 %1412
  %1414 = vrot.lane.b32.xlu0 %v520, 16
  %v1415 = vpop.permute.xlu0 %1414
  %1416 = vrot.lane.b32.xlu0 %v522, 16
  %v1417 = vpop.permute.xlu0 %1416
  %1418 = vrot.lane.b32.xlu0 %v525, 16
  %v1419 = vpop.permute.xlu0 %1418
  %1420 = vrot.lane.b32.xlu0 %v527, 16
  %v1421 = vpop.permute.xlu0 %1420
  %1422 = vrot.lane.b32.xlu0 %v530, 16
  %v1423 = vpop.permute.xlu0 %1422
  %1424 = vrot.lane.b32.xlu0 %v532, 16
  %v1425 = vpop.permute.xlu0 %1424
  %1426 = vrot.lane.b32.xlu0 %v1358, 16
  %v1427 = vpop.permute.xlu0 %1426
  %1428 = vrot.lane.b32.xlu0 %v1360, 16
  %v1429 = vpop.permute.xlu0 %1428
  %1430 = vrot.lane.b32.xlu0 %v540, 16
  %v1431 = vpop.permute.xlu0 %1430
  %1432 = vrot.lane.b32.xlu0 %v542, 16
  %v1433 = vpop.permute.xlu0 %1432
  %1434 = vrot.lane.b32.xlu0 %v545, 16
  %v1435 = vpop.permute.xlu0 %1434
  %1436 = vrot.lane.b32.xlu0 %v547, 16
  %v1437 = vpop.permute.xlu0 %1436
  %1438 = vrot.lane.b32.xlu0 %v550, 16
  %v1439 = vpop.permute.xlu0 %1438
  %1440 = vrot.lane.b32.xlu0 %v552, 16
  %v1441 = vpop.permute.xlu0 %1440
  %1442 = vrot.lane.b32.xlu0 %v555, 16
  %v1443 = vpop.permute.xlu0 %1442
  %1444 = vrot.lane.b32.xlu0 %v557, 16
  %v1445 = vpop.permute.xlu0 %1444
  %1446 = vrot.lane.b32.xlu0 %v560, 16
  %v1447 = vpop.permute.xlu0 %1446
  %1448 = vrot.lane.b32.xlu0 %v562, 16
  %v1449 = vpop.permute.xlu0 %1448
  %1450 = vrot.lane.b32.xlu0 %v565, 16
  %v1451 = vpop.permute.xlu0 %1450
  %1452 = vrot.lane.b32.xlu0 %v567, 16
  %v1453 = vpop.permute.xlu0 %1452
  %1454 = vrot.lane.b32.xlu0 %v570, 16
  %v1455 = vpop.permute.xlu0 %1454
  %1456 = vrot.lane.b32.xlu0 %v572, 16
  %v1457 = vpop.permute.xlu0 %1456
  %1458 = vrot.lane.b32.xlu0 %v575, 16
  %v1459 = vpop.permute.xlu0 %1458
  %1460 = vrot.lane.b32.xlu0 %v577, 16
  %v1461 = vpop.permute.xlu0 %1460
  %1462 = vrot.lane.b32.xlu0 %v580, 16
  %v1463 = vpop.permute.xlu0 %1462
  %1464 = vrot.lane.b32.xlu0 %v582, 16
  %v1465 = vpop.permute.xlu0 %1464
  %1466 = vrot.lane.b32.xlu0 %v585, 16
  %v1467 = vpop.permute.xlu0 %1466
  %1468 = vrot.lane.b32.xlu0 %v587, 16
  %v1469 = vpop.permute.xlu0 %1468
  %1470 = vrot.lane.b32.xlu0 %v590, 16
  %v1471 = vpop.permute.xlu0 %1470
  %1472 = vrot.lane.b32.xlu0 %v592, 16
  %v1473 = vpop.permute.xlu0 %1472
  %1474 = vrot.lane.b32.xlu0 %v595, 16
  %v1475 = vpop.permute.xlu0 %1474
  %1476 = vrot.lane.b32.xlu0 %v597, 16
  %v1477 = vpop.permute.xlu0 %1476
  %1478 = vrot.lane.b32.xlu0 %v600, 16
  %v1479 = vpop.permute.xlu0 %1478
  %1480 = vrot.lane.b32.xlu0 %v602, 16
  %v1481 = vpop.permute.xlu0 %1480
  %1482 = vrot.lane.b32.xlu0 %v605, 16
  %v1483 = vpop.permute.xlu0 %1482
  %1484 = vrot.lane.b32.xlu0 %v607, 16
  %v1485 = vpop.permute.xlu0 %1484
  %1486 = vrot.lane.b32.xlu0 %v610, 16
  %v1487 = vpop.permute.xlu0 %1486
  %1488 = vrot.lane.b32.xlu0 %v612, 16
  %v1489 = vpop.permute.xlu0 %1488
  %1490 = vrot.lane.b32.xlu0 %v1363, 16
  %v1491 = vpop.permute.xlu0 %1490
  %1492 = vrot.lane.b32.xlu0 %v1365, 16
  %v1493 = vpop.permute.xlu0 %1492
  %v1558 = vrot.slane %v291, 2
  %v1559 = vrot.slane %v292, 2
  %v1560 = vsel %vm805, %v1558, %v1559
  %v1561 = vrot.slane %v293, 2
  %v1562 = vsel %vm805, %v1559, %v1561
  %v1563 = vrot.slane %v345, 2
  %v1564 = vrot.slane %v346, 2
  %v1565 = vsel %vm805, %v1563, %v1564
  %v1566 = vrot.slane %v347, 2
  %v1567 = vsel %vm805, %v1564, %v1566
  %1568 = vrot.lane.b32.xlu0 %v813, 20
  %v1569 = vpop.permute.xlu0 %1568
  %1570 = vrot.lane.b32.xlu0 %v815, 20
  %v1571 = vpop.permute.xlu0 %1570
  %1572 = vrot.lane.b32.xlu0 %v818, 20
  %v1573 = vpop.permute.xlu0 %1572
  %1574 = vrot.lane.b32.xlu0 %v820, 20
  %v1575 = vpop.permute.xlu0 %1574
  %1576 = vrot.lane.b32.xlu0 %v823, 20
  %v1577 = vpop.permute.xlu0 %1576
  %1578 = vrot.lane.b32.xlu0 %v825, 20
  %v1579 = vpop.permute.xlu0 %1578
  %1580 = vrot.lane.b32.xlu0 %v828, 20
  %v1581 = vpop.permute.xlu0 %1580
  %1582 = vrot.lane.b32.xlu0 %v830, 20
  %v1583 = vpop.permute.xlu0 %1582
  %1584 = vrot.lane.b32.xlu0 %v833, 20
  %v1585 = vpop.permute.xlu0 %1584
  %1586 = vrot.lane.b32.xlu0 %v835, 20
  %v1587 = vpop.permute.xlu0 %1586
  %1588 = vrot.lane.b32.xlu0 %v838, 20
  %v1589 = vpop.permute.xlu0 %1588
  %1590 = vrot.lane.b32.xlu0 %v840, 20
  %v1591 = vpop.permute.xlu0 %1590
  %1592 = vrot.lane.b32.xlu0 %v843, 20
  %v1593 = vpop.permute.xlu0 %1592
  %1594 = vrot.lane.b32.xlu0 %v845, 20
  %v1595 = vpop.permute.xlu0 %1594
  %1596 = vrot.lane.b32.xlu0 %v848, 20
  %v1597 = vpop.permute.xlu0 %1596
  %1598 = vrot.lane.b32.xlu0 %v850, 20
  %v1599 = vpop.permute.xlu0 %1598
  %1600 = vrot.lane.b32.xlu0 %v853, 20
  %v1601 = vpop.permute.xlu0 %1600
  %1602 = vrot.lane.b32.xlu0 %v855, 20
  %v1603 = vpop.permute.xlu0 %1602
  %1604 = vrot.lane.b32.xlu0 %v858, 20
  %v1605 = vpop.permute.xlu0 %1604
  %1606 = vrot.lane.b32.xlu0 %v860, 20
  %v1607 = vpop.permute.xlu0 %1606
  %1608 = vrot.lane.b32.xlu0 %v863, 20
  %v1609 = vpop.permute.xlu0 %1608
  %1610 = vrot.lane.b32.xlu0 %v865, 20
  %v1611 = vpop.permute.xlu0 %1610
  %1612 = vrot.lane.b32.xlu0 %v868, 20
  %v1613 = vpop.permute.xlu0 %1612
  %1614 = vrot.lane.b32.xlu0 %v870, 20
  %v1615 = vpop.permute.xlu0 %1614
  %1616 = vrot.lane.b32.xlu0 %v873, 20
  %v1617 = vpop.permute.xlu0 %1616
  %1618 = vrot.lane.b32.xlu0 %v875, 20
  %v1619 = vpop.permute.xlu0 %1618
  %1620 = vrot.lane.b32.xlu0 %v878, 20
  %v1621 = vpop.permute.xlu0 %1620
  %1622 = vrot.lane.b32.xlu0 %v880, 20
  %v1623 = vpop.permute.xlu0 %1622
  %1624 = vrot.lane.b32.xlu0 %v883, 20
  %v1625 = vpop.permute.xlu0 %1624
  %1626 = vrot.lane.b32.xlu0 %v885, 20
  %v1627 = vpop.permute.xlu0 %1626
  %1628 = vrot.lane.b32.xlu0 %v1560, 20
  %v1629 = vpop.permute.xlu0 %1628
  %1630 = vrot.lane.b32.xlu0 %v1562, 20
  %v1631 = vpop.permute.xlu0 %1630
  %1632 = vrot.lane.b32.xlu0 %v893, 20
  %v1633 = vpop.permute.xlu0 %1632
  %1634 = vrot.lane.b32.xlu0 %v895, 20
  %v1635 = vpop.permute.xlu0 %1634
  %1636 = vrot.lane.b32.xlu0 %v898, 20
  %v1637 = vpop.permute.xlu0 %1636
  %1638 = vrot.lane.b32.xlu0 %v900, 20
  %v1639 = vpop.permute.xlu0 %1638
  %1640 = vrot.lane.b32.xlu0 %v903, 20
  %v1641 = vpop.permute.xlu0 %1640
  %1642 = vrot.lane.b32.xlu0 %v905, 20
  %v1643 = vpop.permute.xlu0 %1642
  %1644 = vrot.lane.b32.xlu0 %v908, 20
  %v1645 = vpop.permute.xlu0 %1644
  %1646 = vrot.lane.b32.xlu0 %v910, 20
  %v1647 = vpop.permute.xlu0 %1646
  %1648 = vrot.lane.b32.xlu0 %v913, 20
  %v1649 = vpop.permute.xlu0 %1648
  %1650 = vrot.lane.b32.xlu0 %v915, 20
  %v1651 = vpop.permute.xlu0 %1650
  %1652 = vrot.lane.b32.xlu0 %v918, 20
  %v1653 = vpop.permute.xlu0 %1652
  %1654 = vrot.lane.b32.xlu0 %v920, 20
  %v1655 = vpop.permute.xlu0 %1654
  %1656 = vrot.lane.b32.xlu0 %v923, 20
  %v1657 = vpop.permute.xlu0 %1656
  %1658 = vrot.lane.b32.xlu0 %v925, 20
  %v1659 = vpop.permute.xlu0 %1658
  %1660 = vrot.lane.b32.xlu0 %v928, 20
  %v1661 = vpop.permute.xlu0 %1660
  %1662 = vrot.lane.b32.xlu0 %v930, 20
  %v1663 = vpop.permute.xlu0 %1662
  %1664 = vrot.lane.b32.xlu0 %v933, 20
  %v1665 = vpop.permute.xlu0 %1664
  %1666 = vrot.lane.b32.xlu0 %v935, 20
  %v1667 = vpop.permute.xlu0 %1666
  %1668 = vrot.lane.b32.xlu0 %v938, 20
  %v1669 = vpop.permute.xlu0 %1668
  %1670 = vrot.lane.b32.xlu0 %v940, 20
  %v1671 = vpop.permute.xlu0 %1670
  %1672 = vrot.lane.b32.xlu0 %v943, 20
  %v1673 = vpop.permute.xlu0 %1672
  %1674 = vrot.lane.b32.xlu0 %v945, 20
  %v1675 = vpop.permute.xlu0 %1674
  %1676 = vrot.lane.b32.xlu0 %v948, 20
  %v1677 = vpop.permute.xlu0 %1676
  %1678 = vrot.lane.b32.xlu0 %v950, 20
  %v1679 = vpop.permute.xlu0 %1678
  %1680 = vrot.lane.b32.xlu0 %v953, 20
  %v1681 = vpop.permute.xlu0 %1680
  %1682 = vrot.lane.b32.xlu0 %v955, 20
  %v1683 = vpop.permute.xlu0 %1682
  %1684 = vrot.lane.b32.xlu0 %v958, 20
  %v1685 = vpop.permute.xlu0 %1684
  %1686 = vrot.lane.b32.xlu0 %v960, 20
  %v1687 = vpop.permute.xlu0 %1686
  %1688 = vrot.lane.b32.xlu0 %v963, 20
  %v1689 = vpop.permute.xlu0 %1688
  %1690 = vrot.lane.b32.xlu0 %v965, 20
  %v1691 = vpop.permute.xlu0 %1690
  %1692 = vrot.lane.b32.xlu0 %v1565, 20
  %v1693 = vpop.permute.xlu0 %1692
  %1694 = vrot.lane.b32.xlu0 %v1567, 20
  %v1695 = vpop.permute.xlu0 %1694
  %1764 = vrot.lane.b32.xlu0 %v249, 24
  %v1765 = vpop.permute.xlu0 %1764
  %1766 = vrot.lane.b32.xlu0 %v250, 24
  %v1767 = vpop.permute.xlu0 %1766
  %1768 = vrot.lane.b32.xlu0 %v252, 24
  %v1769 = vpop.permute.xlu0 %1768
  %1770 = vrot.lane.b32.xlu0 %v253, 24
  %v1771 = vpop.permute.xlu0 %1770
  %1772 = vrot.lane.b32.xlu0 %v255, 24
  %v1773 = vpop.permute.xlu0 %1772
  %1774 = vrot.lane.b32.xlu0 %v256, 24
  %v1775 = vpop.permute.xlu0 %1774
  %1776 = vrot.lane.b32.xlu0 %v258, 24
  %v1777 = vpop.permute.xlu0 %1776
  %1778 = vrot.lane.b32.xlu0 %v259, 24
  %v1779 = vpop.permute.xlu0 %1778
  %1780 = vrot.lane.b32.xlu0 %v261, 24
  %v1781 = vpop.permute.xlu0 %1780
  %1782 = vrot.lane.b32.xlu0 %v262, 24
  %v1783 = vpop.permute.xlu0 %1782
  %1784 = vrot.lane.b32.xlu0 %v264, 24
  %v1785 = vpop.permute.xlu0 %1784
  %1786 = vrot.lane.b32.xlu0 %v265, 24
  %v1787 = vpop.permute.xlu0 %1786
  %1788 = vrot.lane.b32.xlu0 %v267, 24
  %v1789 = vpop.permute.xlu0 %1788
  %1790 = vrot.lane.b32.xlu0 %v268, 24
  %v1791 = vpop.permute.xlu0 %1790
  %1792 = vrot.lane.b32.xlu0 %v270, 24
  %v1793 = vpop.permute.xlu0 %1792
  %1794 = vrot.lane.b32.xlu0 %v271, 24
  %v1795 = vpop.permute.xlu0 %1794
  %1796 = vrot.lane.b32.xlu0 %v273, 24
  %v1797 = vpop.permute.xlu0 %1796
  %1798 = vrot.lane.b32.xlu0 %v274, 24
  %v1799 = vpop.permute.xlu0 %1798
  %1800 = vrot.lane.b32.xlu0 %v276, 24
  %v1801 = vpop.permute.xlu0 %1800
  %1802 = vrot.lane.b32.xlu0 %v277, 24
  %v1803 = vpop.permute.xlu0 %1802
  %1804 = vrot.lane.b32.xlu0 %v279, 24
  %v1805 = vpop.permute.xlu0 %1804
  %1806 = vrot.lane.b32.xlu0 %v280, 24
  %v1807 = vpop.permute.xlu0 %1806
  %1808 = vrot.lane.b32.xlu0 %v282, 24
  %v1809 = vpop.permute.xlu0 %1808
  %1810 = vrot.lane.b32.xlu0 %v283, 24
  %v1811 = vpop.permute.xlu0 %1810
  %1812 = vrot.lane.b32.xlu0 %v285, 24
  %v1813 = vpop.permute.xlu0 %1812
  %1814 = vrot.lane.b32.xlu0 %v286, 24
  %v1815 = vpop.permute.xlu0 %1814
  %1816 = vrot.lane.b32.xlu0 %v288, 24
  %v1817 = vpop.permute.xlu0 %1816
  %1818 = vrot.lane.b32.xlu0 %v289, 24
  %v1819 = vpop.permute.xlu0 %1818
  %1820 = vrot.lane.b32.xlu0 %v291, 24
  %v1821 = vpop.permute.xlu0 %1820
  %1822 = vrot.lane.b32.xlu0 %v292, 24
  %v1823 = vpop.permute.xlu0 %1822
  %1824 = vrot.lane.b32.xlu0 %v294, 24
  %v1825 = vpop.permute.xlu0 %1824
  %1826 = vrot.lane.b32.xlu0 %v295, 24
  %v1827 = vpop.permute.xlu0 %1826
  %1828 = vrot.lane.b32.xlu0 %v303, 24
  %v1829 = vpop.permute.xlu0 %1828
  %1830 = vrot.lane.b32.xlu0 %v304, 24
  %v1831 = vpop.permute.xlu0 %1830
  %1832 = vrot.lane.b32.xlu0 %v306, 24
  %v1833 = vpop.permute.xlu0 %1832
  %1834 = vrot.lane.b32.xlu0 %v307, 24
  %v1835 = vpop.permute.xlu0 %1834
  %1836 = vrot.lane.b32.xlu0 %v309, 24
  %v1837 = vpop.permute.xlu0 %1836
  %1838 = vrot.lane.b32.xlu0 %v310, 24
  %v1839 = vpop.permute.xlu0 %1838
  %1840 = vrot.lane.b32.xlu0 %v312, 24
  %v1841 = vpop.permute.xlu0 %1840
  %1842 = vrot.lane.b32.xlu0 %v313, 24
  %v1843 = vpop.permute.xlu0 %1842
  %1844 = vrot.lane.b32.xlu0 %v315, 24
  %v1845 = vpop.permute.xlu0 %1844
  %1846 = vrot.lane.b32.xlu0 %v316, 24
  %v1847 = vpop.permute.xlu0 %1846
  %1848 = vrot.lane.b32.xlu0 %v318, 24
  %v1849 = vpop.permute.xlu0 %1848
  %1850 = vrot.lane.b32.xlu0 %v319, 24
  %v1851 = vpop.permute.xlu0 %1850
  %1852 = vrot.lane.b32.xlu0 %v321, 24
  %v1853 = vpop.permute.xlu0 %1852
  %1854 = vrot.lane.b32.xlu0 %v322, 24
  %v1855 = vpop.permute.xlu0 %1854
  %1856 = vrot.lane.b32.xlu0 %v324, 24
  %v1857 = vpop.permute.xlu0 %1856
  %1858 = vrot.lane.b32.xlu0 %v325, 24
  %v1859 = vpop.permute.xlu0 %1858
  %1860 = vrot.lane.b32.xlu0 %v327, 24
  %v1861 = vpop.permute.xlu0 %1860
  %1862 = vrot.lane.b32.xlu0 %v328, 24
  %v1863 = vpop.permute.xlu0 %1862
  %1864 = vrot.lane.b32.xlu0 %v330, 24
  %v1865 = vpop.permute.xlu0 %1864
  %1866 = vrot.lane.b32.xlu0 %v331, 24
  %v1867 = vpop.permute.xlu0 %1866
  %1868 = vrot.lane.b32.xlu0 %v333, 24
  %v1869 = vpop.permute.xlu0 %1868
  %1870 = vrot.lane.b32.xlu0 %v334, 24
  %v1871 = vpop.permute.xlu0 %1870
  %1872 = vrot.lane.b32.xlu0 %v336, 24
  %v1873 = vpop.permute.xlu0 %1872
  %1874 = vrot.lane.b32.xlu0 %v337, 24
  %v1875 = vpop.permute.xlu0 %1874
  %1876 = vrot.lane.b32.xlu0 %v339, 24
  %v1877 = vpop.permute.xlu0 %1876
  %1878 = vrot.lane.b32.xlu0 %v340, 24
  %v1879 = vpop.permute.xlu0 %1878
  %1880 = vrot.lane.b32.xlu0 %v342, 24
  %v1881 = vpop.permute.xlu0 %1880
  %1882 = vrot.lane.b32.xlu0 %v343, 24
  %v1883 = vpop.permute.xlu0 %1882
  %1884 = vrot.lane.b32.xlu0 %v345, 24
  %v1885 = vpop.permute.xlu0 %1884
  %1886 = vrot.lane.b32.xlu0 %v346, 24
  %v1887 = vpop.permute.xlu0 %1886
  %1888 = vrot.lane.b32.xlu0 %v348, 24
  %v1889 = vpop.permute.xlu0 %1888
  %1890 = vrot.lane.b32.xlu0 %v349, 24
  %v1891 = vpop.permute.xlu0 %1890
  %v1958 = vrot.slane %v294, 1
  %v1959 = vrot.slane %v295, 1
  %v1960 = vsel %vm452, %v1958, %v1959
  %v1961 = vrot.slane %v296, 1
  %v1962 = vsel %vm452, %v1959, %v1961
  %v1963 = vrot.slane %v348, 1
  %v1964 = vrot.slane %v349, 1
  %v1965 = vsel %vm452, %v1963, %v1964
  %v1966 = vrot.slane %v350, 1
  %v1967 = vsel %vm452, %v1964, %v1966
  %1968 = vrot.lane.b32.xlu0 %v465, 28
  %v1969 = vpop.permute.xlu0 %1968
  %1970 = vrot.lane.b32.xlu0 %v467, 28
  %v1971 = vpop.permute.xlu0 %1970
  %1972 = vrot.lane.b32.xlu0 %v470, 28
  %v1973 = vpop.permute.xlu0 %1972
  %1974 = vrot.lane.b32.xlu0 %v472, 28
  %v1975 = vpop.permute.xlu0 %1974
  %1976 = vrot.lane.b32.xlu0 %v475, 28
  %v1977 = vpop.permute.xlu0 %1976
  %1978 = vrot.lane.b32.xlu0 %v477, 28
  %v1979 = vpop.permute.xlu0 %1978
  %1980 = vrot.lane.b32.xlu0 %v480, 28
  %v1981 = vpop.permute.xlu0 %1980
  %1982 = vrot.lane.b32.xlu0 %v482, 28
  %v1983 = vpop.permute.xlu0 %1982
  %1984 = vrot.lane.b32.xlu0 %v485, 28
  %v1985 = vpop.permute.xlu0 %1984
  %1986 = vrot.lane.b32.xlu0 %v487, 28
  %v1987 = vpop.permute.xlu0 %1986
  %1988 = vrot.lane.b32.xlu0 %v490, 28
  %v1989 = vpop.permute.xlu0 %1988
  %1990 = vrot.lane.b32.xlu0 %v492, 28
  %v1991 = vpop.permute.xlu0 %1990
  %1992 = vrot.lane.b32.xlu0 %v495, 28
  %v1993 = vpop.permute.xlu0 %1992
  %1994 = vrot.lane.b32.xlu0 %v497, 28
  %v1995 = vpop.permute.xlu0 %1994
  %1996 = vrot.lane.b32.xlu0 %v500, 28
  %v1997 = vpop.permute.xlu0 %1996
  %1998 = vrot.lane.b32.xlu0 %v502, 28
  %v1999 = vpop.permute.xlu0 %1998
  %2000 = vrot.lane.b32.xlu0 %v505, 28
  %v2001 = vpop.permute.xlu0 %2000
  %2002 = vrot.lane.b32.xlu0 %v507, 28
  %v2003 = vpop.permute.xlu0 %2002
  %2004 = vrot.lane.b32.xlu0 %v510, 28
  %v2005 = vpop.permute.xlu0 %2004
  %2006 = vrot.lane.b32.xlu0 %v512, 28
  %v2007 = vpop.permute.xlu0 %2006
  %2008 = vrot.lane.b32.xlu0 %v515, 28
  %v2009 = vpop.permute.xlu0 %2008
  %2010 = vrot.lane.b32.xlu0 %v517, 28
  %v2011 = vpop.permute.xlu0 %2010
  %2012 = vrot.lane.b32.xlu0 %v520, 28
  %v2013 = vpop.permute.xlu0 %2012
  %2014 = vrot.lane.b32.xlu0 %v522, 28
  %v2015 = vpop.permute.xlu0 %2014
  %2016 = vrot.lane.b32.xlu0 %v525, 28
  %v2017 = vpop.permute.xlu0 %2016
  %2018 = vrot.lane.b32.xlu0 %v527, 28
  %v2019 = vpop.permute.xlu0 %2018
  %2020 = vrot.lane.b32.xlu0 %v530, 28
  %v2021 = vpop.permute.xlu0 %2020
  %2022 = vrot.lane.b32.xlu0 %v532, 28
  %v2023 = vpop.permute.xlu0 %2022
  %2024 = vrot.lane.b32.xlu0 %v1358, 28
  %v2025 = vpop.permute.xlu0 %2024
  %2026 = vrot.lane.b32.xlu0 %v1360, 28
  %v2027 = vpop.permute.xlu0 %2026
  %2028 = vrot.lane.b32.xlu0 %v1960, 28
  %v2029 = vpop.permute.xlu0 %2028
  %2030 = vrot.lane.b32.xlu0 %v1962, 28
  %v2031 = vpop.permute.xlu0 %2030
  %2032 = vrot.lane.b32.xlu0 %v545, 28
  %v2033 = vpop.permute.xlu0 %2032
  %2034 = vrot.lane.b32.xlu0 %v547, 28
  %v2035 = vpop.permute.xlu0 %2034
  %2036 = vrot.lane.b32.xlu0 %v550, 28
  %v2037 = vpop.permute.xlu0 %2036
  %2038 = vrot.lane.b32.xlu0 %v552, 28
  %v2039 = vpop.permute.xlu0 %2038
  %2040 = vrot.lane.b32.xlu0 %v555, 28
  %v2041 = vpop.permute.xlu0 %2040
  %2042 = vrot.lane.b32.xlu0 %v557, 28
  %v2043 = vpop.permute.xlu0 %2042
  %2044 = vrot.lane.b32.xlu0 %v560, 28
  %v2045 = vpop.permute.xlu0 %2044
  %2046 = vrot.lane.b32.xlu0 %v562, 28
  %v2047 = vpop.permute.xlu0 %2046
  %2048 = vrot.lane.b32.xlu0 %v565, 28
  %v2049 = vpop.permute.xlu0 %2048
  %2050 = vrot.lane.b32.xlu0 %v567, 28
  %v2051 = vpop.permute.xlu0 %2050
  %2052 = vrot.lane.b32.xlu0 %v570, 28
  %v2053 = vpop.permute.xlu0 %2052
  %2054 = vrot.lane.b32.xlu0 %v572, 28
  %v2055 = vpop.permute.xlu0 %2054
  %2056 = vrot.lane.b32.xlu0 %v575, 28
  %v2057 = vpop.permute.xlu0 %2056
  %2058 = vrot.lane.b32.xlu0 %v577, 28
  %v2059 = vpop.permute.xlu0 %2058
  %2060 = vrot.lane.b32.xlu0 %v580, 28
  %v2061 = vpop.permute.xlu0 %2060
  %2062 = vrot.lane.b32.xlu0 %v582, 28
  %v2063 = vpop.permute.xlu0 %2062
  %2064 = vrot.lane.b32.xlu0 %v585, 28
  %v2065 = vpop.permute.xlu0 %2064
  %2066 = vrot.lane.b32.xlu0 %v587, 28
  %v2067 = vpop.permute.xlu0 %2066
  %2068 = vrot.lane.b32.xlu0 %v590, 28
  %v2069 = vpop.permute.xlu0 %2068
  %2070 = vrot.lane.b32.xlu0 %v592, 28
  %v2071 = vpop.permute.xlu0 %2070
  %2072 = vrot.lane.b32.xlu0 %v595, 28
  %v2073 = vpop.permute.xlu0 %2072
  %2074 = vrot.lane.b32.xlu0 %v597, 28
  %v2075 = vpop.permute.xlu0 %2074
  %2076 = vrot.lane.b32.xlu0 %v600, 28
  %v2077 = vpop.permute.xlu0 %2076
  %2078 = vrot.lane.b32.xlu0 %v602, 28
  %v2079 = vpop.permute.xlu0 %2078
  %2080 = vrot.lane.b32.xlu0 %v605, 28
  %v2081 = vpop.permute.xlu0 %2080
  %2082 = vrot.lane.b32.xlu0 %v607, 28
  %v2083 = vpop.permute.xlu0 %2082
  %2084 = vrot.lane.b32.xlu0 %v610, 28
  %v2085 = vpop.permute.xlu0 %2084
  %2086 = vrot.lane.b32.xlu0 %v612, 28
  %v2087 = vpop.permute.xlu0 %2086
  %2088 = vrot.lane.b32.xlu0 %v1363, 28
  %v2089 = vpop.permute.xlu0 %2088
  %2090 = vrot.lane.b32.xlu0 %v1365, 28
  %v2091 = vpop.permute.xlu0 %2090
  %2092 = vrot.lane.b32.xlu0 %v1965, 28
  %v2093 = vpop.permute.xlu0 %2092
  %2094 = vrot.lane.b32.xlu0 %v1967, 28
  %v2095 = vpop.permute.xlu0 %2094
  %v2160 = vrot.slane %v294, 2
  %v2161 = vrot.slane %v295, 2
  %v2162 = vsel %vm805, %v2160, %v2161
  %v2163 = vrot.slane %v296, 2
  %v2164 = vsel %vm805, %v2161, %v2163
  %v2165 = vrot.slane %v348, 2
  %v2166 = vrot.slane %v349, 2
  %v2167 = vsel %vm805, %v2165, %v2166
  %v2168 = vrot.slane %v350, 2
  %v2169 = vsel %vm805, %v2166, %v2168
  %2170 = vrot.lane.b32.xlu0 %v818, 32
  %v2171 = vpop.permute.xlu0 %2170
  %2172 = vrot.lane.b32.xlu0 %v820, 32
  %v2173 = vpop.permute.xlu0 %2172
  %2174 = vrot.lane.b32.xlu0 %v823, 32
  %v2175 = vpop.permute.xlu0 %2174
  %2176 = vrot.lane.b32.xlu0 %v825, 32
  %v2177 = vpop.permute.xlu0 %2176
  %2178 = vrot.lane.b32.xlu0 %v828, 32
  %v2179 = vpop.permute.xlu0 %2178
  %2180 = vrot.lane.b32.xlu0 %v830, 32
  %v2181 = vpop.permute.xlu0 %2180
  %2182 = vrot.lane.b32.xlu0 %v833, 32
  %v2183 = vpop.permute.xlu0 %2182
  %2184 = vrot.lane.b32.xlu0 %v835, 32
  %v2185 = vpop.permute.xlu0 %2184
  %2186 = vrot.lane.b32.xlu0 %v838, 32
  %v2187 = vpop.permute.xlu0 %2186
  %2188 = vrot.lane.b32.xlu0 %v840, 32
  %v2189 = vpop.permute.xlu0 %2188
  %2190 = vrot.lane.b32.xlu0 %v843, 32
  %v2191 = vpop.permute.xlu0 %2190
  %2192 = vrot.lane.b32.xlu0 %v845, 32
  %v2193 = vpop.permute.xlu0 %2192
  %2194 = vrot.lane.b32.xlu0 %v848, 32
  %v2195 = vpop.permute.xlu0 %2194
  %2196 = vrot.lane.b32.xlu0 %v850, 32
  %v2197 = vpop.permute.xlu0 %2196
  %2198 = vrot.lane.b32.xlu0 %v853, 32
  %v2199 = vpop.permute.xlu0 %2198
  %2200 = vrot.lane.b32.xlu0 %v855, 32
  %v2201 = vpop.permute.xlu0 %2200
  %2202 = vrot.lane.b32.xlu0 %v858, 32
  %v2203 = vpop.permute.xlu0 %2202
  %2204 = vrot.lane.b32.xlu0 %v860, 32
  %v2205 = vpop.permute.xlu0 %2204
  %2206 = vrot.lane.b32.xlu0 %v863, 32
  %v2207 = vpop.permute.xlu0 %2206
  %2208 = vrot.lane.b32.xlu0 %v865, 32
  %v2209 = vpop.permute.xlu0 %2208
  %2210 = vrot.lane.b32.xlu0 %v868, 32
  %v2211 = vpop.permute.xlu0 %2210
  %2212 = vrot.lane.b32.xlu0 %v870, 32
  %v2213 = vpop.permute.xlu0 %2212
  %2214 = vrot.lane.b32.xlu0 %v873, 32
  %v2215 = vpop.permute.xlu0 %2214
  %2216 = vrot.lane.b32.xlu0 %v875, 32
  %v2217 = vpop.permute.xlu0 %2216
  %2218 = vrot.lane.b32.xlu0 %v878, 32
  %v2219 = vpop.permute.xlu0 %2218
  %2220 = vrot.lane.b32.xlu0 %v880, 32
  %v2221 = vpop.permute.xlu0 %2220
  %2222 = vrot.lane.b32.xlu0 %v883, 32
  %v2223 = vpop.permute.xlu0 %2222
  %2224 = vrot.lane.b32.xlu0 %v885, 32
  %v2225 = vpop.permute.xlu0 %2224
  %2226 = vrot.lane.b32.xlu0 %v1560, 32
  %v2227 = vpop.permute.xlu0 %2226
  %2228 = vrot.lane.b32.xlu0 %v1562, 32
  %v2229 = vpop.permute.xlu0 %2228
  %2230 = vrot.lane.b32.xlu0 %v2162, 32
  %v2231 = vpop.permute.xlu0 %2230
  %2232 = vrot.lane.b32.xlu0 %v2164, 32
  %v2233 = vpop.permute.xlu0 %2232
  %2234 = vrot.lane.b32.xlu0 %v898, 32
  %v2235 = vpop.permute.xlu0 %2234
  %2236 = vrot.lane.b32.xlu0 %v900, 32
  %v2237 = vpop.permute.xlu0 %2236
  %2238 = vrot.lane.b32.xlu0 %v903, 32
  %v2239 = vpop.permute.xlu0 %2238
  %2240 = vrot.lane.b32.xlu0 %v905, 32
  %v2241 = vpop.permute.xlu0 %2240
  %2242 = vrot.lane.b32.xlu0 %v908, 32
  %v2243 = vpop.permute.xlu0 %2242
  %2244 = vrot.lane.b32.xlu0 %v910, 32
  %v2245 = vpop.permute.xlu0 %2244
  %2246 = vrot.lane.b32.xlu0 %v913, 32
  %v2247 = vpop.permute.xlu0 %2246
  %2248 = vrot.lane.b32.xlu0 %v915, 32
  %v2249 = vpop.permute.xlu0 %2248
  %2250 = vrot.lane.b32.xlu0 %v918, 32
  %v2251 = vpop.permute.xlu0 %2250
  %2252 = vrot.lane.b32.xlu0 %v920, 32
  %v2253 = vpop.permute.xlu0 %2252
  %2254 = vrot.lane.b32.xlu0 %v923, 32
  %v2255 = vpop.permute.xlu0 %2254
  %2256 = vrot.lane.b32.xlu0 %v925, 32
  %v2257 = vpop.permute.xlu0 %2256
  %2258 = vrot.lane.b32.xlu0 %v928, 32
  %v2259 = vpop.permute.xlu0 %2258
  %2260 = vrot.lane.b32.xlu0 %v930, 32
  %v2261 = vpop.permute.xlu0 %2260
  %2262 = vrot.lane.b32.xlu0 %v933, 32
  %v2263 = vpop.permute.xlu0 %2262
  %2264 = vrot.lane.b32.xlu0 %v935, 32
  %v2265 = vpop.permute.xlu0 %2264
  %2266 = vrot.lane.b32.xlu0 %v938, 32
  %v2267 = vpop.permute.xlu0 %2266
  %2268 = vrot.lane.b32.xlu0 %v940, 32
  %v2269 = vpop.permute.xlu0 %2268
  %2270 = vrot.lane.b32.xlu0 %v943, 32
  %v2271 = vpop.permute.xlu0 %2270
  %2272 = vrot.lane.b32.xlu0 %v945, 32
  %v2273 = vpop.permute.xlu0 %2272
  %2274 = vrot.lane.b32.xlu0 %v948, 32
  %v2275 = vpop.permute.xlu0 %2274
  %2276 = vrot.lane.b32.xlu0 %v950, 32
  %v2277 = vpop.permute.xlu0 %2276
  %2278 = vrot.lane.b32.xlu0 %v953, 32
  %v2279 = vpop.permute.xlu0 %2278
  %2280 = vrot.lane.b32.xlu0 %v955, 32
  %v2281 = vpop.permute.xlu0 %2280
  %2282 = vrot.lane.b32.xlu0 %v958, 32
  %v2283 = vpop.permute.xlu0 %2282
  %2284 = vrot.lane.b32.xlu0 %v960, 32
  %v2285 = vpop.permute.xlu0 %2284
  %2286 = vrot.lane.b32.xlu0 %v963, 32
  %v2287 = vpop.permute.xlu0 %2286
  %2288 = vrot.lane.b32.xlu0 %v965, 32
  %v2289 = vpop.permute.xlu0 %2288
  %2290 = vrot.lane.b32.xlu0 %v1565, 32
  %v2291 = vpop.permute.xlu0 %2290
  %2292 = vrot.lane.b32.xlu0 %v1567, 32
  %v2293 = vpop.permute.xlu0 %2292
  %2294 = vrot.lane.b32.xlu0 %v2167, 32
  %v2295 = vpop.permute.xlu0 %2294
  %2296 = vrot.lane.b32.xlu0 %v2169, 32
  %v2297 = vpop.permute.xlu0 %2296
  %v2362 = vsel %vm26, %v243, %v614
  %v2363 = vsel %vm26, %v244, %v616
  %v2364 = vsel %vm26, %v246, %v618
  %v2365 = vsel %vm26, %v247, %v620
  %v2366 = vsel %vm26, %v249, %v622
  %v2367 = vsel %vm26, %v250, %v624
  %v2368 = vsel %vm26, %v252, %v626
  %v2369 = vsel %vm26, %v253, %v628
  %v2370 = vsel %vm26, %v255, %v630
  %v2371 = vsel %vm26, %v256, %v632
  %v2372 = vsel %vm26, %v258, %v634
  %v2373 = vsel %vm26, %v259, %v636
  %v2374 = vsel %vm26, %v261, %v638
  %v2375 = vsel %vm26, %v262, %v640
  %v2376 = vsel %vm26, %v264, %v642
  %v2377 = vsel %vm26, %v265, %v644
  %v2378 = vsel %vm26, %v267, %v646
  %v2379 = vsel %vm26, %v268, %v648
  %v2380 = vsel %vm26, %v270, %v650
  %v2381 = vsel %vm26, %v271, %v652
  %v2382 = vsel %vm26, %v273, %v654
  %v2383 = vsel %vm26, %v274, %v656
  %v2384 = vsel %vm26, %v276, %v658
  %v2385 = vsel %vm26, %v277, %v660
  %v2386 = vsel %vm26, %v279, %v662
  %v2387 = vsel %vm26, %v280, %v664
  %v2388 = vsel %vm26, %v282, %v666
  %v2389 = vsel %vm26, %v283, %v668
  %v2390 = vsel %vm26, %v285, %v670
  %v2391 = vsel %vm26, %v286, %v672
  %v2392 = vsel %vm26, %v288, %v674
  %v2393 = vsel %vm26, %v289, %v676
  %v2394 = vsel %vm26, %v297, %v678
  %v2395 = vsel %vm26, %v298, %v680
  %v2396 = vsel %vm26, %v300, %v682
  %v2397 = vsel %vm26, %v301, %v684
  %v2398 = vsel %vm26, %v303, %v686
  %v2399 = vsel %vm26, %v304, %v688
  %v2400 = vsel %vm26, %v306, %v690
  %v2401 = vsel %vm26, %v307, %v692
  %v2402 = vsel %vm26, %v309, %v694
  %v2403 = vsel %vm26, %v310, %v696
  %v2404 = vsel %vm26, %v312, %v698
  %v2405 = vsel %vm26, %v313, %v700
  %v2406 = vsel %vm26, %v315, %v702
  %v2407 = vsel %vm26, %v316, %v704
  %v2408 = vsel %vm26, %v318, %v706
  %v2409 = vsel %vm26, %v319, %v708
  %v2410 = vsel %vm26, %v321, %v710
  %v2411 = vsel %vm26, %v322, %v712
  %v2412 = vsel %vm26, %v324, %v714
  %v2413 = vsel %vm26, %v325, %v716
  %v2414 = vsel %vm26, %v327, %v718
  %v2415 = vsel %vm26, %v328, %v720
  %v2416 = vsel %vm26, %v330, %v722
  %v2417 = vsel %vm26, %v331, %v724
  %v2418 = vsel %vm26, %v333, %v726
  %v2419 = vsel %vm26, %v334, %v728
  %v2420 = vsel %vm26, %v336, %v730
  %v2421 = vsel %vm26, %v337, %v732
  %v2422 = vsel %vm26, %v339, %v734
  %v2423 = vsel %vm26, %v340, %v736
  %v2424 = vsel %vm26, %v342, %v738
  %v2425 = vsel %vm26, %v343, %v740
  %vm2426 = vcmask 64512
  %v2427 = vsel %vm2426, %v2362, %v967
  %v2428 = vsel %vm2426, %v2363, %v969
  %v2429 = vsel %vm2426, %v2364, %v971
  %v2430 = vsel %vm2426, %v2365, %v973
  %v2431 = vsel %vm2426, %v2366, %v975
  %v2432 = vsel %vm2426, %v2367, %v977
  %v2433 = vsel %vm2426, %v2368, %v979
  %v2434 = vsel %vm2426, %v2369, %v981
  %v2435 = vsel %vm2426, %v2370, %v983
  %v2436 = vsel %vm2426, %v2371, %v985
  %v2437 = vsel %vm2426, %v2372, %v987
  %v2438 = vsel %vm2426, %v2373, %v989
  %v2439 = vsel %vm2426, %v2374, %v991
  %v2440 = vsel %vm2426, %v2375, %v993
  %v2441 = vsel %vm2426, %v2376, %v995
  %v2442 = vsel %vm2426, %v2377, %v997
  %v2443 = vsel %vm2426, %v2378, %v999
  %v2444 = vsel %vm2426, %v2379, %v1001
  %v2445 = vsel %vm2426, %v2380, %v1003
  %v2446 = vsel %vm2426, %v2381, %v1005
  %v2447 = vsel %vm2426, %v2382, %v1007
  %v2448 = vsel %vm2426, %v2383, %v1009
  %v2449 = vsel %vm2426, %v2384, %v1011
  %v2450 = vsel %vm2426, %v2385, %v1013
  %v2451 = vsel %vm2426, %v2386, %v1015
  %v2452 = vsel %vm2426, %v2387, %v1017
  %v2453 = vsel %vm2426, %v2388, %v1019
  %v2454 = vsel %vm2426, %v2389, %v1021
  %v2455 = vsel %vm2426, %v2390, %v1023
  %v2456 = vsel %vm2426, %v2391, %v1025
  %v2457 = vsel %vm2426, %v2392, %v1027
  %v2458 = vsel %vm2426, %v2393, %v1029
  %v2459 = vsel %vm2426, %v2394, %v1031
  %v2460 = vsel %vm2426, %v2395, %v1033
  %v2461 = vsel %vm2426, %v2396, %v1035
  %v2462 = vsel %vm2426, %v2397, %v1037
  %v2463 = vsel %vm2426, %v2398, %v1039
  %v2464 = vsel %vm2426, %v2399, %v1041
  %v2465 = vsel %vm2426, %v2400, %v1043
  %v2466 = vsel %vm2426, %v2401, %v1045
  %v2467 = vsel %vm2426, %v2402, %v1047
  %v2468 = vsel %vm2426, %v2403, %v1049
  %v2469 = vsel %vm2426, %v2404, %v1051
  %v2470 = vsel %vm2426, %v2405, %v1053
  %v2471 = vsel %vm2426, %v2406, %v1055
  %v2472 = vsel %vm2426, %v2407, %v1057
  %v2473 = vsel %vm2426, %v2408, %v1059
  %v2474 = vsel %vm2426, %v2409, %v1061
  %v2475 = vsel %vm2426, %v2410, %v1063
  %v2476 = vsel %vm2426, %v2411, %v1065
  %v2477 = vsel %vm2426, %v2412, %v1067
  %v2478 = vsel %vm2426, %v2413, %v1069
  %v2479 = vsel %vm2426, %v2414, %v1071
  %v2480 = vsel %vm2426, %v2415, %v1073
  %v2481 = vsel %vm2426, %v2416, %v1075
  %v2482 = vsel %vm2426, %v2417, %v1077
  %v2483 = vsel %vm2426, %v2418, %v1079
  %v2484 = vsel %vm2426, %v2419, %v1081
  %v2485 = vsel %vm2426, %v2420, %v1083
  %v2486 = vsel %vm2426, %v2421, %v1085
  %v2487 = vsel %vm2426, %v2422, %v1087
  %v2488 = vsel %vm2426, %v2423, %v1089
  %v2489 = vsel %vm2426, %v2424, %v1091
  %v2490 = vsel %vm2426, %v2425, %v1093
  %vm2491 = vcmask 97280
  %v2492 = vsel %vm2491, %v2427, %v1163
  %v2493 = vsel %vm2491, %v2428, %v1165
  %v2494 = vsel %vm2491, %v2429, %v1167
  %v2495 = vsel %vm2491, %v2430, %v1169
  %v2496 = vsel %vm2491, %v2431, %v1171
  %v2497 = vsel %vm2491, %v2432, %v1173
  %v2498 = vsel %vm2491, %v2433, %v1175
  %v2499 = vsel %vm2491, %v2434, %v1177
  %v2500 = vsel %vm2491, %v2435, %v1179
  %v2501 = vsel %vm2491, %v2436, %v1181
  %v2502 = vsel %vm2491, %v2437, %v1183
  %v2503 = vsel %vm2491, %v2438, %v1185
  %v2504 = vsel %vm2491, %v2439, %v1187
  %v2505 = vsel %vm2491, %v2440, %v1189
  %v2506 = vsel %vm2491, %v2441, %v1191
  %v2507 = vsel %vm2491, %v2442, %v1193
  %v2508 = vsel %vm2491, %v2443, %v1195
  %v2509 = vsel %vm2491, %v2444, %v1197
  %v2510 = vsel %vm2491, %v2445, %v1199
  %v2511 = vsel %vm2491, %v2446, %v1201
  %v2512 = vsel %vm2491, %v2447, %v1203
  %v2513 = vsel %vm2491, %v2448, %v1205
  %v2514 = vsel %vm2491, %v2449, %v1207
  %v2515 = vsel %vm2491, %v2450, %v1209
  %v2516 = vsel %vm2491, %v2451, %v1211
  %v2517 = vsel %vm2491, %v2452, %v1213
  %v2518 = vsel %vm2491, %v2453, %v1215
  %v2519 = vsel %vm2491, %v2454, %v1217
  %v2520 = vsel %vm2491, %v2455, %v1219
  %v2521 = vsel %vm2491, %v2456, %v1221
  %v2522 = vsel %vm2491, %v2457, %v1223
  %v2523 = vsel %vm2491, %v2458, %v1225
  %v2524 = vsel %vm2491, %v2459, %v1227
  %v2525 = vsel %vm2491, %v2460, %v1229
  %v2526 = vsel %vm2491, %v2461, %v1231
  %v2527 = vsel %vm2491, %v2462, %v1233
  %v2528 = vsel %vm2491, %v2463, %v1235
  %v2529 = vsel %vm2491, %v2464, %v1237
  %v2530 = vsel %vm2491, %v2465, %v1239
  %v2531 = vsel %vm2491, %v2466, %v1241
  %v2532 = vsel %vm2491, %v2467, %v1243
  %v2533 = vsel %vm2491, %v2468, %v1245
  %v2534 = vsel %vm2491, %v2469, %v1247
  %v2535 = vsel %vm2491, %v2470, %v1249
  %v2536 = vsel %vm2491, %v2471, %v1251
  %v2537 = vsel %vm2491, %v2472, %v1253
  %v2538 = vsel %vm2491, %v2473, %v1255
  %v2539 = vsel %vm2491, %v2474, %v1257
  %v2540 = vsel %vm2491, %v2475, %v1259
  %v2541 = vsel %vm2491, %v2476, %v1261
  %v2542 = vsel %vm2491, %v2477, %v1263
  %v2543 = vsel %vm2491, %v2478, %v1265
  %v2544 = vsel %vm2491, %v2479, %v1267
  %v2545 = vsel %vm2491, %v2480, %v1269
  %v2546 = vsel %vm2491, %v2481, %v1271
  %v2547 = vsel %vm2491, %v2482, %v1273
  %v2548 = vsel %vm2491, %v2483, %v1275
  %v2549 = vsel %vm2491, %v2484, %v1277
  %v2550 = vsel %vm2491, %v2485, %v1279
  %v2551 = vsel %vm2491, %v2486, %v1281
  %v2552 = vsel %vm2491, %v2487, %v1283
  %v2553 = vsel %vm2491, %v2488, %v1285
  %v2554 = vsel %vm2491, %v2489, %v1287
  %v2555 = vsel %vm2491, %v2490, %v1289
  %vm2556 = vcmask 130048
  %v2557 = vsel %vm2556, %v2492, %v1367
  %v2558 = vsel %vm2556, %v2493, %v1369
  %v2559 = vsel %vm2556, %v2494, %v1371
  %v2560 = vsel %vm2556, %v2495, %v1373
  %v2561 = vsel %vm2556, %v2496, %v1375
  %v2562 = vsel %vm2556, %v2497, %v1377
  %v2563 = vsel %vm2556, %v2498, %v1379
  %v2564 = vsel %vm2556, %v2499, %v1381
  %v2565 = vsel %vm2556, %v2500, %v1383
  %v2566 = vsel %vm2556, %v2501, %v1385
  %v2567 = vsel %vm2556, %v2502, %v1387
  %v2568 = vsel %vm2556, %v2503, %v1389
  %v2569 = vsel %vm2556, %v2504, %v1391
  %v2570 = vsel %vm2556, %v2505, %v1393
  %v2571 = vsel %vm2556, %v2506, %v1395
  %v2572 = vsel %vm2556, %v2507, %v1397
  %v2573 = vsel %vm2556, %v2508, %v1399
  %v2574 = vsel %vm2556, %v2509, %v1401
  %v2575 = vsel %vm2556, %v2510, %v1403
  %v2576 = vsel %vm2556, %v2511, %v1405
  %v2577 = vsel %vm2556, %v2512, %v1407
  %v2578 = vsel %vm2556, %v2513, %v1409
  %v2579 = vsel %vm2556, %v2514, %v1411
  %v2580 = vsel %vm2556, %v2515, %v1413
  %v2581 = vsel %vm2556, %v2516, %v1415
  %v2582 = vsel %vm2556, %v2517, %v1417
  %v2583 = vsel %vm2556, %v2518, %v1419
  %v2584 = vsel %vm2556, %v2519, %v1421
  %v2585 = vsel %vm2556, %v2520, %v1423
  %v2586 = vsel %vm2556, %v2521, %v1425
  %v2587 = vsel %vm2556, %v2522, %v1427
  %v2588 = vsel %vm2556, %v2523, %v1429
  %v2589 = vsel %vm2556, %v2524, %v1431
  %v2590 = vsel %vm2556, %v2525, %v1433
  %v2591 = vsel %vm2556, %v2526, %v1435
  %v2592 = vsel %vm2556, %v2527, %v1437
  %v2593 = vsel %vm2556, %v2528, %v1439
  %v2594 = vsel %vm2556, %v2529, %v1441
  %v2595 = vsel %vm2556, %v2530, %v1443
  %v2596 = vsel %vm2556, %v2531, %v1445
  %v2597 = vsel %vm2556, %v2532, %v1447
  %v2598 = vsel %vm2556, %v2533, %v1449
  %v2599 = vsel %vm2556, %v2534, %v1451
  %v2600 = vsel %vm2556, %v2535, %v1453
  %v2601 = vsel %vm2556, %v2536, %v1455
  %v2602 = vsel %vm2556, %v2537, %v1457
  %v2603 = vsel %vm2556, %v2538, %v1459
  %v2604 = vsel %vm2556, %v2539, %v1461
  %v2605 = vsel %vm2556, %v2540, %v1463
  %v2606 = vsel %vm2556, %v2541, %v1465
  %v2607 = vsel %vm2556, %v2542, %v1467
  %v2608 = vsel %vm2556, %v2543, %v1469
  %v2609 = vsel %vm2556, %v2544, %v1471
  %v2610 = vsel %vm2556, %v2545, %v1473
  %v2611 = vsel %vm2556, %v2546, %v1475
  %v2612 = vsel %vm2556, %v2547, %v1477
  %v2613 = vsel %vm2556, %v2548, %v1479
  %v2614 = vsel %vm2556, %v2549, %v1481
  %v2615 = vsel %vm2556, %v2550, %v1483
  %v2616 = vsel %vm2556, %v2551, %v1485
  %v2617 = vsel %vm2556, %v2552, %v1487
  %v2618 = vsel %vm2556, %v2553, %v1489
  %v2619 = vsel %vm2556, %v2554, %v1491
  %v2620 = vsel %vm2556, %v2555, %v1493
  %vm2621 = vcmask 162816
  %v2622 = vsel %vm2621, %v2557, %v1569
  %v2623 = vsel %vm2621, %v2558, %v1571
  %v2624 = vsel %vm2621, %v2559, %v1573
  %v2625 = vsel %vm2621, %v2560, %v1575
  %v2626 = vsel %vm2621, %v2561, %v1577
  %v2627 = vsel %vm2621, %v2562, %v1579
  %v2628 = vsel %vm2621, %v2563, %v1581
  %v2629 = vsel %vm2621, %v2564, %v1583
  %v2630 = vsel %vm2621, %v2565, %v1585
  %v2631 = vsel %vm2621, %v2566, %v1587
  %v2632 = vsel %vm2621, %v2567, %v1589
  %v2633 = vsel %vm2621, %v2568, %v1591
  %v2634 = vsel %vm2621, %v2569, %v1593
  %v2635 = vsel %vm2621, %v2570, %v1595
  %v2636 = vsel %vm2621, %v2571, %v1597
  %v2637 = vsel %vm2621, %v2572, %v1599
  %v2638 = vsel %vm2621, %v2573, %v1601
  %v2639 = vsel %vm2621, %v2574, %v1603
  %v2640 = vsel %vm2621, %v2575, %v1605
  %v2641 = vsel %vm2621, %v2576, %v1607
  %v2642 = vsel %vm2621, %v2577, %v1609
  %v2643 = vsel %vm2621, %v2578, %v1611
  %v2644 = vsel %vm2621, %v2579, %v1613
  %v2645 = vsel %vm2621, %v2580, %v1615
  %v2646 = vsel %vm2621, %v2581, %v1617
  %v2647 = vsel %vm2621, %v2582, %v1619
  %v2648 = vsel %vm2621, %v2583, %v1621
  %v2649 = vsel %vm2621, %v2584, %v1623
  %v2650 = vsel %vm2621, %v2585, %v1625
  %v2651 = vsel %vm2621, %v2586, %v1627
  %v2652 = vsel %vm2621, %v2587, %v1629
  %v2653 = vsel %vm2621, %v2588, %v1631
  %v2654 = vsel %vm2621, %v2589, %v1633
  %v2655 = vsel %vm2621, %v2590, %v1635
  %v2656 = vsel %vm2621, %v2591, %v1637
  %v2657 = vsel %vm2621, %v2592, %v1639
  %v2658 = vsel %vm2621, %v2593, %v1641
  %v2659 = vsel %vm2621, %v2594, %v1643
  %v2660 = vsel %vm2621, %v2595, %v1645
  %v2661 = vsel %vm2621, %v2596, %v1647
  %v2662 = vsel %vm2621, %v2597, %v1649
  %v2663 = vsel %vm2621, %v2598, %v1651
  %v2664 = vsel %vm2621, %v2599, %v1653
  %v2665 = vsel %vm2621, %v2600, %v1655
  %v2666 = vsel %vm2621, %v2601, %v1657
  %v2667 = vsel %vm2621, %v2602, %v1659
  %v2668 = vsel %vm2621, %v2603, %v1661
  %v2669 = vsel %vm2621, %v2604, %v1663
  %v2670 = vsel %vm2621, %v2605, %v1665
  %v2671 = vsel %vm2621, %v2606, %v1667
  %v2672 = vsel %vm2621, %v2607, %v1669
  %v2673 = vsel %vm2621, %v2608, %v1671
  %v2674 = vsel %vm2621, %v2609, %v1673
  %v2675 = vsel %vm2621, %v2610, %v1675
  %v2676 = vsel %vm2621, %v2611, %v1677
  %v2677 = vsel %vm2621, %v2612, %v1679
  %v2678 = vsel %vm2621, %v2613, %v1681
  %v2679 = vsel %vm2621, %v2614, %v1683
  %v2680 = vsel %vm2621, %v2615, %v1685
  %v2681 = vsel %vm2621, %v2616, %v1687
  %v2682 = vsel %vm2621, %v2617, %v1689
  %v2683 = vsel %vm2621, %v2618, %v1691
  %v2684 = vsel %vm2621, %v2619, %v1693
  %v2685 = vsel %vm2621, %v2620, %v1695
  %vm2686 = vcmask 195584
  %v2687 = vsel %vm2686, %v2622, %v1765
  %v2688 = vsel %vm2686, %v2623, %v1767
  %v2689 = vsel %vm2686, %v2624, %v1769
  %v2690 = vsel %vm2686, %v2625, %v1771
  %v2691 = vsel %vm2686, %v2626, %v1773
  %v2692 = vsel %vm2686, %v2627, %v1775
  %v2693 = vsel %vm2686, %v2628, %v1777
  %v2694 = vsel %vm2686, %v2629, %v1779
  %v2695 = vsel %vm2686, %v2630, %v1781
  %v2696 = vsel %vm2686, %v2631, %v1783
  %v2697 = vsel %vm2686, %v2632, %v1785
  %v2698 = vsel %vm2686, %v2633, %v1787
  %v2699 = vsel %vm2686, %v2634, %v1789
  %v2700 = vsel %vm2686, %v2635, %v1791
  %v2701 = vsel %vm2686, %v2636, %v1793
  %v2702 = vsel %vm2686, %v2637, %v1795
  %v2703 = vsel %vm2686, %v2638, %v1797
  %v2704 = vsel %vm2686, %v2639, %v1799
  %v2705 = vsel %vm2686, %v2640, %v1801
  %v2706 = vsel %vm2686, %v2641, %v1803
  %v2707 = vsel %vm2686, %v2642, %v1805
  %v2708 = vsel %vm2686, %v2643, %v1807
  %v2709 = vsel %vm2686, %v2644, %v1809
  %v2710 = vsel %vm2686, %v2645, %v1811
  %v2711 = vsel %vm2686, %v2646, %v1813
  %v2712 = vsel %vm2686, %v2647, %v1815
  %v2713 = vsel %vm2686, %v2648, %v1817
  %v2714 = vsel %vm2686, %v2649, %v1819
  %v2715 = vsel %vm2686, %v2650, %v1821
  %v2716 = vsel %vm2686, %v2651, %v1823
  %v2717 = vsel %vm2686, %v2652, %v1825
  %v2718 = vsel %vm2686, %v2653, %v1827
  %v2719 = vsel %vm2686, %v2654, %v1829
  %v2720 = vsel %vm2686, %v2655, %v1831
  %v2721 = vsel %vm2686, %v2656, %v1833
  %v2722 = vsel %vm2686, %v2657, %v1835
  %v2723 = vsel %vm2686, %v2658, %v1837
  %v2724 = vsel %vm2686, %v2659, %v1839
  %v2725 = vsel %vm2686, %v2660, %v1841
  %v2726 = vsel %vm2686, %v2661, %v1843
  %v2727 = vsel %vm2686, %v2662, %v1845
  %v2728 = vsel %vm2686, %v2663, %v1847
  %v2729 = vsel %vm2686, %v2664, %v1849
  %v2730 = vsel %vm2686, %v2665, %v1851
  %v2731 = vsel %vm2686, %v2666, %v1853
  %v2732 = vsel %vm2686, %v2667, %v1855
  %v2733 = vsel %vm2686, %v2668, %v1857
  %v2734 = vsel %vm2686, %v2669, %v1859
  %v2735 = vsel %vm2686, %v2670, %v1861
  %v2736 = vsel %vm2686, %v2671, %v1863
  %v2737 = vsel %vm2686, %v2672, %v1865
  %v2738 = vsel %vm2686, %v2673, %v1867
  %v2739 = vsel %vm2686, %v2674, %v1869
  %v2740 = vsel %vm2686, %v2675, %v1871
  %v2741 = vsel %vm2686, %v2676, %v1873
  %v2742 = vsel %vm2686, %v2677, %v1875
  %v2743 = vsel %vm2686, %v2678, %v1877
  %v2744 = vsel %vm2686, %v2679, %v1879
  %v2745 = vsel %vm2686, %v2680, %v1881
  %v2746 = vsel %vm2686, %v2681, %v1883
  %v2747 = vsel %vm2686, %v2682, %v1885
  %v2748 = vsel %vm2686, %v2683, %v1887
  %v2749 = vsel %vm2686, %v2684, %v1889
  %v2750 = vsel %vm2686, %v2685, %v1891
  %vm2751 = vcmask 228352
  %v2752 = vsel %vm2751, %v2687, %v1969
  %v2753 = vsel %vm2751, %v2688, %v1971
  %v2754 = vsel %vm2751, %v2689, %v1973
  %v2755 = vsel %vm2751, %v2690, %v1975
  %v2756 = vsel %vm2751, %v2691, %v1977
  %v2757 = vsel %vm2751, %v2692, %v1979
  %v2758 = vsel %vm2751, %v2693, %v1981
  %v2759 = vsel %vm2751, %v2694, %v1983
  %v2760 = vsel %vm2751, %v2695, %v1985
  %v2761 = vsel %vm2751, %v2696, %v1987
  %v2762 = vsel %vm2751, %v2697, %v1989
  %v2763 = vsel %vm2751, %v2698, %v1991
  %v2764 = vsel %vm2751, %v2699, %v1993
  %v2765 = vsel %vm2751, %v2700, %v1995
  %v2766 = vsel %vm2751, %v2701, %v1997
  %v2767 = vsel %vm2751, %v2702, %v1999
  %v2768 = vsel %vm2751, %v2703, %v2001
  %v2769 = vsel %vm2751, %v2704, %v2003
  %v2770 = vsel %vm2751, %v2705, %v2005
  %v2771 = vsel %vm2751, %v2706, %v2007
  %v2772 = vsel %vm2751, %v2707, %v2009
  %v2773 = vsel %vm2751, %v2708, %v2011
  %v2774 = vsel %vm2751, %v2709, %v2013
  %v2775 = vsel %vm2751, %v2710, %v2015
  %v2776 = vsel %vm2751, %v2711, %v2017
  %v2777 = vsel %vm2751, %v2712, %v2019
  %v2778 = vsel %vm2751, %v2713, %v2021
  %v2779 = vsel %vm2751, %v2714, %v2023
  %v2780 = vsel %vm2751, %v2715, %v2025
  %v2781 = vsel %vm2751, %v2716, %v2027
  %v2782 = vsel %vm2751, %v2717, %v2029
  %v2783 = vsel %vm2751, %v2718, %v2031
  %v2784 = vsel %vm2751, %v2719, %v2033
  %v2785 = vsel %vm2751, %v2720, %v2035
  %v2786 = vsel %vm2751, %v2721, %v2037
  %v2787 = vsel %vm2751, %v2722, %v2039
  %v2788 = vsel %vm2751, %v2723, %v2041
  %v2789 = vsel %vm2751, %v2724, %v2043
  %v2790 = vsel %vm2751, %v2725, %v2045
  %v2791 = vsel %vm2751, %v2726, %v2047
  %v2792 = vsel %vm2751, %v2727, %v2049
  %v2793 = vsel %vm2751, %v2728, %v2051
  %v2794 = vsel %vm2751, %v2729, %v2053
  %v2795 = vsel %vm2751, %v2730, %v2055
  %v2796 = vsel %vm2751, %v2731, %v2057
  %v2797 = vsel %vm2751, %v2732, %v2059
  %v2798 = vsel %vm2751, %v2733, %v2061
  %v2799 = vsel %vm2751, %v2734, %v2063
  %v2800 = vsel %vm2751, %v2735, %v2065
  %v2801 = vsel %vm2751, %v2736, %v2067
  %v2802 = vsel %vm2751, %v2737, %v2069
  %v2803 = vsel %vm2751, %v2738, %v2071
  %v2804 = vsel %vm2751, %v2739, %v2073
  %v2805 = vsel %vm2751, %v2740, %v2075
  %v2806 = vsel %vm2751, %v2741, %v2077
  %v2807 = vsel %vm2751, %v2742, %v2079
  %v2808 = vsel %vm2751, %v2743, %v2081
  %v2809 = vsel %vm2751, %v2744, %v2083
  %v2810 = vsel %vm2751, %v2745, %v2085
  %v2811 = vsel %vm2751, %v2746, %v2087
  %v2812 = vsel %vm2751, %v2747, %v2089
  %v2813 = vsel %vm2751, %v2748, %v2091
  %v2814 = vsel %vm2751, %v2749, %v2093
  %v2815 = vsel %vm2751, %v2750, %v2095
  %vm2816 = vcmask 261120
  %v2817 = vsel %vm2816, %v2752, %v2171
  %v2818 = vsel %vm2816, %v2753, %v2173
  %v2819 = vsel %vm2816, %v2754, %v2175
  %v2820 = vsel %vm2816, %v2755, %v2177
  %v2821 = vsel %vm2816, %v2756, %v2179
  %v2822 = vsel %vm2816, %v2757, %v2181
  %v2823 = vsel %vm2816, %v2758, %v2183
  %v2824 = vsel %vm2816, %v2759, %v2185
  %v2825 = vsel %vm2816, %v2760, %v2187
  %v2826 = vsel %vm2816, %v2761, %v2189
  %v2827 = vsel %vm2816, %v2762, %v2191
  %v2828 = vsel %vm2816, %v2763, %v2193
  %v2829 = vsel %vm2816, %v2764, %v2195
  %v2830 = vsel %vm2816, %v2765, %v2197
  %v2831 = vsel %vm2816, %v2766, %v2199
  %v2832 = vsel %vm2816, %v2767, %v2201
  %v2833 = vsel %vm2816, %v2768, %v2203
  %v2834 = vsel %vm2816, %v2769, %v2205
  %v2835 = vsel %vm2816, %v2770, %v2207
  %v2836 = vsel %vm2816, %v2771, %v2209
  %v2837 = vsel %vm2816, %v2772, %v2211
  %v2838 = vsel %vm2816, %v2773, %v2213
  %v2839 = vsel %vm2816, %v2774, %v2215
  %v2840 = vsel %vm2816, %v2775, %v2217
  %v2841 = vsel %vm2816, %v2776, %v2219
  %v2842 = vsel %vm2816, %v2777, %v2221
  %v2843 = vsel %vm2816, %v2778, %v2223
  %v2844 = vsel %vm2816, %v2779, %v2225
  %v2845 = vsel %vm2816, %v2780, %v2227
  %v2846 = vsel %vm2816, %v2781, %v2229
  %v2847 = vsel %vm2816, %v2782, %v2231
  %v2848 = vsel %vm2816, %v2783, %v2233
  %v2849 = vsel %vm2816, %v2784, %v2235
  %v2850 = vsel %vm2816, %v2785, %v2237
  %v2851 = vsel %vm2816, %v2786, %v2239
  %v2852 = vsel %vm2816, %v2787, %v2241
  %v2853 = vsel %vm2816, %v2788, %v2243
  %v2854 = vsel %vm2816, %v2789, %v2245
  %v2855 = vsel %vm2816, %v2790, %v2247
  %v2856 = vsel %vm2816, %v2791, %v2249
  %v2857 = vsel %vm2816, %v2792, %v2251
  %v2858 = vsel %vm2816, %v2793, %v2253
  %v2859 = vsel %vm2816, %v2794, %v2255
  %v2860 = vsel %vm2816, %v2795, %v2257
  %v2861 = vsel %vm2816, %v2796, %v2259
  %v2862 = vsel %vm2816, %v2797, %v2261
  %v2863 = vsel %vm2816, %v2798, %v2263
  %v2864 = vsel %vm2816, %v2799, %v2265
  %v2865 = vsel %vm2816, %v2800, %v2267
  %v2866 = vsel %vm2816, %v2801, %v2269
  %v2867 = vsel %vm2816, %v2802, %v2271
  %v2868 = vsel %vm2816, %v2803, %v2273
  %v2869 = vsel %vm2816, %v2804, %v2275
  %v2870 = vsel %vm2816, %v2805, %v2277
  %v2871 = vsel %vm2816, %v2806, %v2279
  %v2872 = vsel %vm2816, %v2807, %v2281
  %v2873 = vsel %vm2816, %v2808, %v2283
  %v2874 = vsel %vm2816, %v2809, %v2285
  %v2875 = vsel %vm2816, %v2810, %v2287
  %v2876 = vsel %vm2816, %v2811, %v2289
  %v2877 = vsel %vm2816, %v2812, %v2291
  %v2878 = vsel %vm2816, %v2813, %v2293
  %v2879 = vsel %vm2816, %v2814, %v2295
  %v2880 = vsel %vm2816, %v2815, %v2297
  %vm2881 = vcmask 293888
  %v2883 = vsel %vm2881, %v2817, 0
  %v2886 = vsel %vm2881, %v2818, 0
  %v2889 = vsel %vm2881, %v2819, 0
  %v2892 = vsel %vm2881, %v2820, 0
  %v2895 = vsel %vm2881, %v2821, 0
  %v2898 = vsel %vm2881, %v2822, 0
  %v2901 = vsel %vm2881, %v2823, 0
  %v2904 = vsel %vm2881, %v2824, 0
  %v2907 = vsel %vm2881, %v2825, 0
  %v2910 = vsel %vm2881, %v2826, 0
  %v2913 = vsel %vm2881, %v2827, 0
  %v2916 = vsel %vm2881, %v2828, 0
  %v2919 = vsel %vm2881, %v2829, 0
  %v2922 = vsel %vm2881, %v2830, 0
  %v2925 = vsel %vm2881, %v2831, 0
  %v2928 = vsel %vm2881, %v2832, 0
  %v2931 = vsel %vm2881, %v2833, 0
  %v2934 = vsel %vm2881, %v2834, 0
  %v2937 = vsel %vm2881, %v2835, 0
  %v2940 = vsel %vm2881, %v2836, 0
  %v2943 = vsel %vm2881, %v2837, 0
  %v2946 = vsel %vm2881, %v2838, 0
  %v2949 = vsel %vm2881, %v2839, 0
  %v2952 = vsel %vm2881, %v2840, 0
  %v2955 = vsel %vm2881, %v2841, 0
  %v2958 = vsel %vm2881, %v2842, 0
  %v2961 = vsel %vm2881, %v2843, 0
  %v2964 = vsel %vm2881, %v2844, 0
  %v2967 = vsel %vm2881, %v2845, 0
  %v2970 = vsel %vm2881, %v2846, 0
  %v2973 = vsel %vm2881, %v2847, 0
  %v2976 = vsel %vm2881, %v2848, 0
  %v2979 = vsel %vm2881, %v2849, 0
  %v2982 = vsel %vm2881, %v2850, 0
  %v2985 = vsel %vm2881, %v2851, 0
  %v2988 = vsel %vm2881, %v2852, 0
  %v2991 = vsel %vm2881, %v2853, 0
  %v2994 = vsel %vm2881, %v2854, 0
  %v2997 = vsel %vm2881, %v2855, 0
  %v3000 = vsel %vm2881, %v2856, 0
  %v3003 = vsel %vm2881, %v2857, 0
  %v3006 = vsel %vm2881, %v2858, 0
  %v3009 = vsel %vm2881, %v2859, 0
  %v3012 = vsel %vm2881, %v2860, 0
  %v3015 = vsel %vm2881, %v2861, 0
  %v3018 = vsel %vm2881, %v2862, 0
  %v3021 = vsel %vm2881, %v2863, 0
  %v3024 = vsel %vm2881, %v2864, 0
  %v3027 = vsel %vm2881, %v2865, 0
  %v3030 = vsel %vm2881, %v2866, 0
  %v3033 = vsel %vm2881, %v2867, 0
  %v3036 = vsel %vm2881, %v2868, 0
  %v3039 = vsel %vm2881, %v2869, 0
  %v3042 = vsel %vm2881, %v2870, 0
  %v3045 = vsel %vm2881, %v2871, 0
  %v3048 = vsel %vm2881, %v2872, 0
  %v3051 = vsel %vm2881, %v2873, 0
  %v3054 = vsel %vm2881, %v2874, 0
  %v3057 = vsel %vm2881, %v2875, 0
  %v3060 = vsel %vm2881, %v2876, 0
  %v3063 = vsel %vm2881, %v2877, 0
  %v3066 = vsel %vm2881, %v2878, 0
  %v3069 = vsel %vm2881, %v2879, 0
  %v3072 = vsel %vm2881, %v2880, 0
  %vm3074 = vcmask 1043456
  %v3076 = vsel %vm3074, %v355, 0
  %3078 = vmatprep.subr.mxu0 0.0
  %3079 = vmatpush1.msra.mxu0 %v351
  %3080 = vmatprep.subr.mxu0 0.0
  %3081 = vmatpush1.msra.mxu0 %v352
  %3082 = vmatprep.subr.mxu0 0.0
  %3083 = vmatpush1.msra.mxu0 %v353
  %3084 = vmatprep.subr.mxu0 0.0
  %3085 = vmatpush1.msra.mxu0 %v354
  %3086 = vmatprep.subr.mxu0 0.0
  %3087 = vmatpush1.msra.mxu0 %v3076
  %3088 = vmatprep.subr.mxu0 0.0
  %3089 = vmatpush1.msra.mxu0 0.0
  %3090 = vmatprep.subr.mxu0 0.0
  %3091 = vmatpush1.msra.mxu0 0.0
  %3092 = vmatprep.subr.mxu0 0.0
  %3093 = vmatpush1.msra.mxu0 0.0
  %3094 = vmatprep.subr.mxu0 0.0
  %3095 = vmatpush1.msra.mxu0 0.0
  %3096 = vmatprep.subr.mxu0 0.0
  %3097 = vmatpush1.msra.mxu0 0.0
  %3098 = vmatprep.subr.mxu0 0.0
  %3099 = vmatpush1.msra.mxu0 0.0
  %3100 = vmatprep.subr.mxu0 0.0
  %3101 = vmatpush1.msra.mxu0 0.0
  %3102 = vmatprep.subr.mxu0 0.0
  %3103 = vmatpush1.msra.mxu0 0.0
  %3104 = vmatprep.subr.mxu0 0.0
  %3105 = vmatpush1.msra.mxu0 0.0
  %3106 = vmatprep.subr.mxu0 0.0
  %3107 = vmatpush1.msra.mxu0 0.0
  %3108 = vmatprep.subr.mxu0 0.0
  %3109 = vmatpush1.msra.mxu0 0.0
  %3110 = vmatprep.subr.mxu0 0.0
  %3111 = vmatpush1.msra.mxu0 0.0
  %3112 = vmatprep.subr.mxu0 0.0
  %3113 = vmatpush1.msra.mxu0 0.0
  %3114 = vmatprep.subr.mxu0 0.0
  %3115 = vmatpush1.msra.mxu0 0.0
  %3116 = vmatprep.subr.mxu0 0.0
  %3117 = vmatpush1.msra.mxu0 0.0
  %3118 = vmatprep.subr.mxu0 0.0
  %3119 = vmatpush1.msra.mxu0 0.0
  %3120 = vmatprep.subr.mxu0 0.0
  %3121 = vmatpush1.msra.mxu0 0.0
  %3122 = vmatprep.subr.mxu0 0.0
  %3123 = vmatpush1.msra.mxu0 0.0
  %3124 = vmatprep.subr.mxu0 0.0
  %3125 = vmatpush1.msra.mxu0 0.0
  %3126 = vmatprep.subr.mxu0 0.0
  %3127 = vmatpush1.msra.mxu0 0.0
  %3128 = vmatprep.subr.mxu0 0.0
  %3129 = vmatpush1.msra.mxu0 0.0
  %3130 = vmatprep.subr.mxu0 0.0
  %3131 = vmatpush1.msra.mxu0 0.0
  %3132 = vmatprep.subr.mxu0 0.0
  %3133 = vmatpush1.msra.mxu0 0.0
  %3134 = vmatprep.subr.mxu0 0.0
  %3135 = vmatpush1.msra.mxu0 0.0
  %3136 = vmatprep.subr.mxu0 0.0
  %3137 = vmatpush1.msra.mxu0 0.0
  %3138 = vmatprep.subr.mxu0 0.0
  %3139 = vmatpush1.msra.mxu0 0.0
  %3140 = vmatprep.subr.mxu0 0.0
  %3141 = vmatpush1.msra.mxu0 0.0
  %3142 = vmatprep.mubr.f32.mxu0 0.0
  %3143 = vmatmul.mubr.f32.gmra.mrb[0].mxu0 %v2883
  %v3144 = vpop.f32.mrb[0].mxu0
  %v3145 = vadd.f32 0.0, %v3144
  %v3146 = vpop.f32.mrb[0].mxu0
  %3147 = vmatprep.mubr.f32.mxu0 0.0
  %3148 = vmatmul.mubr.f32.gmra.mrb[0].mxu0 %v2886
  %v3149 = vpop.f32.mrb[0].mxu0
  %v3150 = vadd.f32 0.0, %v3149
  %v3151 = vpop.f32.mrb[0].mxu0
  %3152 = vmatprep.mubr.f32.mxu0 0.0
  %3153 = vmatmul.mubr.f32.gmra.mrb[0].mxu0 %v2889
  %v3154 = vpop.f32.mrb[0].mxu0
  %v3155 = vadd.f32 0.0, %v3154
  %v3156 = vpop.f32.mrb[0].mxu0
  %3157 = vmatprep.mubr.f32.mxu0 0.0
  %3158 = vmatmul.mubr.f32.gmra.mrb[0].mxu0 %v2892
  %v3159 = vpop.f32.mrb[0].mxu0
  %v3160 = vadd.f32 0.0, %v3159
  %v3161 = vpop.f32.mrb[0].mxu0
  %3162 = vmatprep.mubr.f32.mxu0 0.0
  %3163 = vmatmul.mubr.f32.gmra.mrb[0].mxu0 %v2895
  %v3164 = vpop.f32.mrb[0].mxu0
  %v3165 = vadd.f32 0.0, %v3164
  %v3166 = vpop.f32.mrb[0].mxu0
  %3167 = vmatprep.mubr.f32.mxu0 0.0
  %3168 = vmatmul.mubr.f32.gmra.mrb[0].mxu0 %v2898
  %v3169 = vpop.f32.mrb[0].mxu0
  %v3170 = vadd.f32 0.0, %v3169
  %v3171 = vpop.f32.mrb[0].mxu0
  %3172 = vmatprep.mubr.f32.mxu0 0.0
  %3173 = vmatmul.mubr.f32.gmra.mrb[0].mxu0 %v2901
  %v3174 = vpop.f32.mrb[0].mxu0
  %v3175 = vadd.f32 0.0, %v3174
  %v3176 = vpop.f32.mrb[0].mxu0
  %3177 = vmatprep.mubr.f32.mxu0 0.0
  %3178 = vmatmul.mubr.f32.gmra.mrb[0].mxu0 %v2904
  %v3179 = vpop.f32.mrb[0].mxu0
  %v3180 = vadd.f32 0.0, %v3179
  %v3181 = vpop.f32.mrb[0].mxu0
  %3182 = vmatprep.mubr.f32.mxu0 0.0
  %3183 = vmatmul.mubr.f32.gmra.mrb[0].mxu0 %v2907
  %v3184 = vpop.f32.mrb[0].mxu0
  %v3185 = vadd.f32 0.0, %v3184
  %v3186 = vpop.f32.mrb[0].mxu0
  %3187 = vmatprep.mubr.f32.mxu0 0.0
  %3188 = vmatmul.mubr.f32.gmra.mrb[0].mxu0 %v2910
  %v3189 = vpop.f32.mrb[0].mxu0
  %v3190 = vadd.f32 0.0, %v3189
  %v3191 = vpop.f32.mrb[0].mxu0
  %3192 = vmatprep.mubr.f32.mxu0 0.0
  %3193 = vmatmul.mubr.f32.gmra.mrb[0].mxu0 %v2913
  %v3194 = vpop.f32.mrb[0].mxu0
  %v3195 = vadd.f32 0.0, %v3194
  %v3196 = vpop.f32.mrb[0].mxu0
  %3197 = vmatprep.mubr.f32.mxu0 0.0
  %3198 = vmatmul.mubr.f32.gmra.mrb[0].mxu0 %v2916
  %v3199 = vpop.f32.mrb[0].mxu0
  %v3200 = vadd.f32 0.0, %v3199
  %v3201 = vpop.f32.mrb[0].mxu0
  %3202 = vmatprep.mubr.f32.mxu0 0.0
  %3203 = vmatmul.mubr.f32.gmra.mrb[0].mxu0 %v2919
  %v3204 = vpop.f32.mrb[0].mxu0
  %v3205 = vadd.f32 0.0, %v3204
  %v3206 = vpop.f32.mrb[0].mxu0
  %3207 = vmatprep.mubr.f32.mxu0 0.0
  %3208 = vmatmul.mubr.f32.gmra.mrb[0].mxu0 %v2922
  %v3209 = vpop.f32.mrb[0].mxu0
  %v3210 = vadd.f32 0.0, %v3209
  %v3211 = vpop.f32.mrb[0].mxu0
  %3212 = vmatprep.mubr.f32.mxu0 0.0
  %3213 = vmatmul.mubr.f32.gmra.mrb[0].mxu0 %v2925
  %v3214 = vpop.f32.mrb[0].mxu0
  %v3215 = vadd.f32 0.0, %v3214
  %v3216 = vpop.f32.mrb[0].mxu0
  %3217 = vmatprep.mubr.f32.mxu0 0.0
  %3218 = vmatmul.mubr.f32.gmra.mrb[0].mxu0 %v2928
  %v3219 = vpop.f32.mrb[0].mxu0
  %v3220 = vadd.f32 0.0, %v3219
  %v3221 = vpop.f32.mrb[0].mxu0
  %3222 = vmatprep.mubr.f32.mxu0 0.0
  %3223 = vmatmul.mubr.f32.gmra.mrb[0].mxu0 %v2931
  %v3224 = vpop.f32.mrb[0].mxu0
  %v3225 = vadd.f32 0.0, %v3224
  %v3226 = vpop.f32.mrb[0].mxu0
  %3227 = vmatprep.mubr.f32.mxu0 0.0
  %3228 = vmatmul.mubr.f32.gmra.mrb[0].mxu0 %v2934
  %v3229 = vpop.f32.mrb[0].mxu0
  %v3230 = vadd.f32 0.0, %v3229
  %v3231 = vpop.f32.mrb[0].mxu0
  %3232 = vmatprep.mubr.f32.mxu0 0.0
  %3233 = vmatmul.mubr.f32.gmra.mrb[0].mxu0 %v2937
  %v3234 = vpop.f32.mrb[0].mxu0
  %v3235 = vadd.f32 0.0, %v3234
  %v3236 = vpop.f32.mrb[0].mxu0
  %3237 = vmatprep.mubr.f32.mxu0 0.0
  %3238 = vmatmul.mubr.f32.gmra.mrb[0].mxu0 %v2940
  %v3239 = vpop.f32.mrb[0].mxu0
  %v3240 = vadd.f32 0.0, %v3239
  %v3241 = vpop.f32.mrb[0].mxu0
  %3242 = vmatprep.mubr.f32.mxu0 0.0
  %3243 = vmatmul.mubr.f32.gmra.mrb[0].mxu0 %v2943
  %v3244 = vpop.f32.mrb[0].mxu0
  %v3245 = vadd.f32 0.0, %v3244
  %v3246 = vpop.f32.mrb[0].mxu0
  %3247 = vmatprep.mubr.f32.mxu0 0.0
  %3248 = vmatmul.mubr.f32.gmra.mrb[0].mxu0 %v2946
  %v3249 = vpop.f32.mrb[0].mxu0
  %v3250 = vadd.f32 0.0, %v3249
  %v3251 = vpop.f32.mrb[0].mxu0
  %3252 = vmatprep.mubr.f32.mxu0 0.0
  %3253 = vmatmul.mubr.f32.gmra.mrb[0].mxu0 %v2949
  %v3254 = vpop.f32.mrb[0].mxu0
  %v3255 = vadd.f32 0.0, %v3254
  %v3256 = vpop.f32.mrb[0].mxu0
  %3257 = vmatprep.mubr.f32.mxu0 0.0
  %3258 = vmatmul.mubr.f32.gmra.mrb[0].mxu0 %v2952
  %v3259 = vpop.f32.mrb[0].mxu0
  %v3260 = vadd.f32 0.0, %v3259
  %v3261 = vpop.f32.mrb[0].mxu0
  %3262 = vmatprep.mubr.f32.mxu0 0.0
  %3263 = vmatmul.mubr.f32.gmra.mrb[0].mxu0 %v2955
  %v3264 = vpop.f32.mrb[0].mxu0
  %v3265 = vadd.f32 0.0, %v3264
  %v3266 = vpop.f32.mrb[0].mxu0
  %3267 = vmatprep.mubr.f32.mxu0 0.0
  %3268 = vmatmul.mubr.f32.gmra.mrb[0].mxu0 %v2958
  %v3269 = vpop.f32.mrb[0].mxu0
  %v3270 = vadd.f32 0.0, %v3269
  %v3271 = vpop.f32.mrb[0].mxu0
  %3272 = vmatprep.mubr.f32.mxu0 0.0
  %3273 = vmatmul.mubr.f32.gmra.mrb[0].mxu0 %v2961
  %v3274 = vpop.f32.mrb[0].mxu0
  %v3275 = vadd.f32 0.0, %v3274
  %v3276 = vpop.f32.mrb[0].mxu0
  %3277 = vmatprep.mubr.f32.mxu0 0.0
  %3278 = vmatmul.mubr.f32.gmra.mrb[0].mxu0 %v2964
  %v3279 = vpop.f32.mrb[0].mxu0
  %v3280 = vadd.f32 0.0, %v3279
  %v3281 = vpop.f32.mrb[0].mxu0
  %3282 = vmatprep.mubr.f32.mxu0 0.0
  %3283 = vmatmul.mubr.f32.gmra.mrb[0].mxu0 %v2967
  %v3284 = vpop.f32.mrb[0].mxu0
  %v3285 = vadd.f32 0.0, %v3284
  %v3286 = vpop.f32.mrb[0].mxu0
  %3287 = vmatprep.mubr.f32.mxu0 0.0
  %3288 = vmatmul.mubr.f32.gmra.mrb[0].mxu0 %v2970
  %v3289 = vpop.f32.mrb[0].mxu0
  %v3290 = vadd.f32 0.0, %v3289
  %v3291 = vpop.f32.mrb[0].mxu0
  %3292 = vmatprep.mubr.f32.mxu0 0.0
  %3293 = vmatmul.mubr.f32.gmra.mrb[0].mxu0 %v2973
  %v3294 = vpop.f32.mrb[0].mxu0
  %v3295 = vadd.f32 0.0, %v3294
  %v3296 = vpop.f32.mrb[0].mxu0
  %3297 = vmatprep.mubr.f32.mxu0 0.0
  %3298 = vmatmul.mubr.f32.gmra.mrb[0].mxu0 %v2976
  %v3299 = vpop.f32.mrb[0].mxu0
  %v3300 = vadd.f32 0.0, %v3299
  %v3301 = vpop.f32.mrb[0].mxu0
  %3302 = vmatprep.mubr.f32.mxu0 0.0
  %3303 = vmatmul.mubr.f32.gmra.mrb[0].mxu0 %v2979
  %v3304 = vpop.f32.mrb[0].mxu0
  %v3305 = vadd.f32 0.0, %v3304
  %v3306 = vpop.f32.mrb[0].mxu0
  %3307 = vmatprep.mubr.f32.mxu0 0.0
  %3308 = vmatmul.mubr.f32.gmra.mrb[0].mxu0 %v2982
  %v3309 = vpop.f32.mrb[0].mxu0
  %v3310 = vadd.f32 0.0, %v3309
  %v3311 = vpop.f32.mrb[0].mxu0
  %3312 = vmatprep.mubr.f32.mxu0 0.0
  %3313 = vmatmul.mubr.f32.gmra.mrb[0].mxu0 %v2985
  %v3314 = vpop.f32.mrb[0].mxu0
  %v3315 = vadd.f32 0.0, %v3314
  %v3316 = vpop.f32.mrb[0].mxu0
  %3317 = vmatprep.mubr.f32.mxu0 0.0
  %3318 = vmatmul.mubr.f32.gmra.mrb[0].mxu0 %v2988
  %v3319 = vpop.f32.mrb[0].mxu0
  %v3320 = vadd.f32 0.0, %v3319
  %v3321 = vpop.f32.mrb[0].mxu0
  %3322 = vmatprep.mubr.f32.mxu0 0.0
  %3323 = vmatmul.mubr.f32.gmra.mrb[0].mxu0 %v2991
  %v3324 = vpop.f32.mrb[0].mxu0
  %v3325 = vadd.f32 0.0, %v3324
  %v3326 = vpop.f32.mrb[0].mxu0
  %3327 = vmatprep.mubr.f32.mxu0 0.0
  %3328 = vmatmul.mubr.f32.gmra.mrb[0].mxu0 %v2994
  %v3329 = vpop.f32.mrb[0].mxu0
  %v3330 = vadd.f32 0.0, %v3329
  %v3331 = vpop.f32.mrb[0].mxu0
  %3332 = vmatprep.mubr.f32.mxu0 0.0
  %3333 = vmatmul.mubr.f32.gmra.mrb[0].mxu0 %v2997
  %v3334 = vpop.f32.mrb[0].mxu0
  %v3335 = vadd.f32 0.0, %v3334
  %v3336 = vpop.f32.mrb[0].mxu0
  %3337 = vmatprep.mubr.f32.mxu0 0.0
  %3338 = vmatmul.mubr.f32.gmra.mrb[0].mxu0 %v3000
  %v3339 = vpop.f32.mrb[0].mxu0
  %v3340 = vadd.f32 0.0, %v3339
  %v3341 = vpop.f32.mrb[0].mxu0
  %3342 = vmatprep.mubr.f32.mxu0 0.0
  %3343 = vmatmul.mubr.f32.gmra.mrb[0].mxu0 %v3003
  %v3344 = vpop.f32.mrb[0].mxu0
  %v3345 = vadd.f32 0.0, %v3344
  %v3346 = vpop.f32.mrb[0].mxu0
  %3347 = vmatprep.mubr.f32.mxu0 0.0
  %3348 = vmatmul.mubr.f32.gmra.mrb[0].mxu0 %v3006
  %v3349 = vpop.f32.mrb[0].mxu0
  %v3350 = vadd.f32 0.0, %v3349
  %v3351 = vpop.f32.mrb[0].mxu0
  %3352 = vmatprep.mubr.f32.mxu0 0.0
  %3353 = vmatmul.mubr.f32.gmra.mrb[0].mxu0 %v3009
  %v3354 = vpop.f32.mrb[0].mxu0
  %v3355 = vadd.f32 0.0, %v3354
  %v3356 = vpop.f32.mrb[0].mxu0
  %3357 = vmatprep.mubr.f32.mxu0 0.0
  %3358 = vmatmul.mubr.f32.gmra.mrb[0].mxu0 %v3012
  %v3359 = vpop.f32.mrb[0].mxu0
  %v3360 = vadd.f32 0.0, %v3359
  %v3361 = vpop.f32.mrb[0].mxu0
  %3362 = vmatprep.mubr.f32.mxu0 0.0
  %3363 = vmatmul.mubr.f32.gmra.mrb[0].mxu0 %v3015
  %v3364 = vpop.f32.mrb[0].mxu0
  %v3365 = vadd.f32 0.0, %v3364
  %v3366 = vpop.f32.mrb[0].mxu0
  %3367 = vmatprep.mubr.f32.mxu0 0.0
  %3368 = vmatmul.mubr.f32.gmra.mrb[0].mxu0 %v3018
  %v3369 = vpop.f32.mrb[0].mxu0
  %v3370 = vadd.f32 0.0, %v3369
  %v3371 = vpop.f32.mrb[0].mxu0
  %3372 = vmatprep.mubr.f32.mxu0 0.0
  %3373 = vmatmul.mubr.f32.gmra.mrb[0].mxu0 %v3021
  %v3374 = vpop.f32.mrb[0].mxu0
  %v3375 = vadd.f32 0.0, %v3374
  %v3376 = vpop.f32.mrb[0].mxu0
  %3377 = vmatprep.mubr.f32.mxu0 0.0
  %3378 = vmatmul.mubr.f32.gmra.mrb[0].mxu0 %v3024
  %v3379 = vpop.f32.mrb[0].mxu0
  %v3380 = vadd.f32 0.0, %v3379
  %v3381 = vpop.f32.mrb[0].mxu0
  %3382 = vmatprep.mubr.f32.mxu0 0.0
  %3383 = vmatmul.mubr.f32.gmra.mrb[0].mxu0 %v3027
  %v3384 = vpop.f32.mrb[0].mxu0
  %v3385 = vadd.f32 0.0, %v3384
  %v3386 = vpop.f32.mrb[0].mxu0
  %3387 = vmatprep.mubr.f32.mxu0 0.0
  %3388 = vmatmul.mubr.f32.gmra.mrb[0].mxu0 %v3030
  %v3389 = vpop.f32.mrb[0].mxu0
  %v3390 = vadd.f32 0.0, %v3389
  %v3391 = vpop.f32.mrb[0].mxu0
  %3392 = vmatprep.mubr.f32.mxu0 0.0
  %3393 = vmatmul.mubr.f32.gmra.mrb[0].mxu0 %v3033
  %v3394 = vpop.f32.mrb[0].mxu0
  %v3395 = vadd.f32 0.0, %v3394
  %v3396 = vpop.f32.mrb[0].mxu0
  %3397 = vmatprep.mubr.f32.mxu0 0.0
  %3398 = vmatmul.mubr.f32.gmra.mrb[0].mxu0 %v3036
  %v3399 = vpop.f32.mrb[0].mxu0
  %v3400 = vadd.f32 0.0, %v3399
  %v3401 = vpop.f32.mrb[0].mxu0
  %3402 = vmatprep.mubr.f32.mxu0 0.0
  %3403 = vmatmul.mubr.f32.gmra.mrb[0].mxu0 %v3039
  %v3404 = vpop.f32.mrb[0].mxu0
  %v3405 = vadd.f32 0.0, %v3404
  %v3406 = vpop.f32.mrb[0].mxu0
  %3407 = vmatprep.mubr.f32.mxu0 0.0
  %3408 = vmatmul.mubr.f32.gmra.mrb[0].mxu0 %v3042
  %v3409 = vpop.f32.mrb[0].mxu0
  %v3410 = vadd.f32 0.0, %v3409
  %v3411 = vpop.f32.mrb[0].mxu0
  %3412 = vmatprep.mubr.f32.mxu0 0.0
  %3413 = vmatmul.mubr.f32.gmra.mrb[0].mxu0 %v3045
  %v3414 = vpop.f32.mrb[0].mxu0
  %v3415 = vadd.f32 0.0, %v3414
  %v3416 = vpop.f32.mrb[0].mxu0
  %3417 = vmatprep.mubr.f32.mxu0 0.0
  %3418 = vmatmul.mubr.f32.gmra.mrb[0].mxu0 %v3048
  %v3419 = vpop.f32.mrb[0].mxu0
  %v3420 = vadd.f32 0.0, %v3419
  %v3421 = vpop.f32.mrb[0].mxu0
  %3422 = vmatprep.mubr.f32.mxu0 0.0
  %3423 = vmatmul.mubr.f32.gmra.mrb[0].mxu0 %v3051
  %v3424 = vpop.f32.mrb[0].mxu0
  %v3425 = vadd.f32 0.0, %v3424
  %v3426 = vpop.f32.mrb[0].mxu0
  %3427 = vmatprep.mubr.f32.mxu0 0.0
  %3428 = vmatmul.mubr.f32.gmra.mrb[0].mxu0 %v3054
  %v3429 = vpop.f32.mrb[0].mxu0
  %v3430 = vadd.f32 0.0, %v3429
  %v3431 = vpop.f32.mrb[0].mxu0
  %3432 = vmatprep.mubr.f32.mxu0 0.0
  %3433 = vmatmul.mubr.f32.gmra.mrb[0].mxu0 %v3057
  %v3434 = vpop.f32.mrb[0].mxu0
  %v3435 = vadd.f32 0.0, %v3434
  %v3436 = vpop.f32.mrb[0].mxu0
  %3437 = vmatprep.mubr.f32.mxu0 0.0
  %3438 = vmatmul.mubr.f32.gmra.mrb[0].mxu0 %v3060
  %v3439 = vpop.f32.mrb[0].mxu0
  %v3440 = vadd.f32 0.0, %v3439
  %v3441 = vpop.f32.mrb[0].mxu0
  %3442 = vmatprep.mubr.f32.mxu0 0.0
  %3443 = vmatmul.mubr.f32.gmra.mrb[0].mxu0 %v3063
  %v3444 = vpop.f32.mrb[0].mxu0
  %v3445 = vadd.f32 0.0, %v3444
  %v3446 = vpop.f32.mrb[0].mxu0
  %3447 = vmatprep.mubr.f32.mxu0 0.0
  %3448 = vmatmul.mubr.f32.gmra.mrb[0].mxu0 %v3066
  %v3449 = vpop.f32.mrb[0].mxu0
  %v3450 = vadd.f32 0.0, %v3449
  %v3451 = vpop.f32.mrb[0].mxu0
  %3452 = vmatprep.mubr.f32.mxu0 0.0
  %3453 = vmatmul.mubr.f32.gmra.mrb[0].mxu0 %v3069
  %v3454 = vpop.f32.mrb[0].mxu0
  %v3455 = vadd.f32 0.0, %v3454
  %v3456 = vpop.f32.mrb[0].mxu0
  %3457 = vmatprep.mubr.f32.mxu0 0.0
  %3458 = vmatmul.mubr.f32.gmra.mrb[0].mxu0 %v3072
  %v3459 = vpop.f32.mrb[0].mxu0
  %v3460 = vadd.f32 0.0, %v3459
  %v3461 = vpop.f32.mrb[0].mxu0
  %3462 = vdwg.mxu0
  %v3463 = vld [vmem:[%s3] sm:$0x1]
  %v3464 = vld [vmem:[%s4] sm:$0x1]
  %v3465 = vsel %vm26, %v3145, 0.0
  %v3466 = vsel %vm26, %v3150, 0.0
  %v3467 = vadd.f32 %v3465, %v3466
  %v3468 = vsel %vm26, %v3155, 0.0
  %v3469 = vadd.f32 %v3467, %v3468
  %v3470 = vsel %vm26, %v3160, 0.0
  %v3471 = vadd.f32 %v3469, %v3470
  %v3472 = vsel %vm26, %v3165, 0.0
  %v3473 = vadd.f32 %v3471, %v3472
  %v3474 = vsel %vm26, %v3170, 0.0
  %v3475 = vadd.f32 %v3473, %v3474
  %v3476 = vsel %vm26, %v3175, 0.0
  %v3477 = vadd.f32 %v3475, %v3476
  %v3478 = vsel %vm26, %v3180, 0.0
  %v3479 = vadd.f32 %v3477, %v3478
  %v3480 = vsel %vm26, %v3185, 0.0
  %v3481 = vadd.f32 %v3479, %v3480
  %v3482 = vsel %vm26, %v3190, 0.0
  %v3483 = vadd.f32 %v3481, %v3482
  %v3484 = vsel %vm26, %v3195, 0.0
  %v3485 = vadd.f32 %v3483, %v3484
  %v3486 = vsel %vm26, %v3200, 0.0
  %v3487 = vadd.f32 %v3485, %v3486
  %v3488 = vsel %vm26, %v3205, 0.0
  %v3489 = vadd.f32 %v3487, %v3488
  %v3490 = vsel %vm26, %v3210, 0.0
  %v3491 = vadd.f32 %v3489, %v3490
  %v3492 = vsel %vm26, %v3215, 0.0
  %v3493 = vadd.f32 %v3491, %v3492
  %v3494 = vsel %vm26, %v3220, 0.0
  %v3495 = vadd.f32 %v3493, %v3494
  %v3496 = vsel %vm26, %v3225, 0.0
  %v3497 = vadd.f32 %v3495, %v3496
  %v3498 = vsel %vm26, %v3230, 0.0
  %v3499 = vadd.f32 %v3497, %v3498
  %v3500 = vsel %vm26, %v3235, 0.0
  %v3501 = vadd.f32 %v3499, %v3500
  %v3502 = vsel %vm26, %v3240, 0.0
  %v3503 = vadd.f32 %v3501, %v3502
  %v3504 = vsel %vm26, %v3245, 0.0
  %v3505 = vadd.f32 %v3503, %v3504
  %v3506 = vsel %vm26, %v3250, 0.0
  %v3507 = vadd.f32 %v3505, %v3506
  %v3508 = vsel %vm26, %v3255, 0.0
  %v3509 = vadd.f32 %v3507, %v3508
  %v3510 = vsel %vm26, %v3260, 0.0
  %v3511 = vadd.f32 %v3509, %v3510
  %v3512 = vsel %vm26, %v3265, 0.0
  %v3513 = vadd.f32 %v3511, %v3512
  %v3514 = vsel %vm26, %v3270, 0.0
  %v3515 = vadd.f32 %v3513, %v3514
  %v3516 = vsel %vm26, %v3275, 0.0
  %v3517 = vadd.f32 %v3515, %v3516
  %v3518 = vsel %vm26, %v3280, 0.0
  %v3519 = vadd.f32 %v3517, %v3518
  %v3520 = vsel %vm26, %v3285, 0.0
  %v3521 = vadd.f32 %v3519, %v3520
  %v3522 = vsel %vm26, %v3290, 0.0
  %v3523 = vadd.f32 %v3521, %v3522
  %v3524 = vsel %vm26, %v3295, 0.0
  %v3525 = vadd.f32 %v3523, %v3524
  %v3526 = vsel %vm26, %v3300, 0.0
  %v3527 = vadd.f32 %v3525, %v3526
  %v3528 = vsel %vm26, %v3305, 0.0
  %v3529 = vadd.f32 %v3527, %v3528
  %v3530 = vsel %vm26, %v3310, 0.0
  %v3531 = vadd.f32 %v3529, %v3530
  %v3532 = vsel %vm26, %v3315, 0.0
  %v3533 = vadd.f32 %v3531, %v3532
  %v3534 = vsel %vm26, %v3320, 0.0
  %v3535 = vadd.f32 %v3533, %v3534
  %v3536 = vsel %vm26, %v3325, 0.0
  %v3537 = vadd.f32 %v3535, %v3536
  %v3538 = vsel %vm26, %v3330, 0.0
  %v3539 = vadd.f32 %v3537, %v3538
  %v3540 = vsel %vm26, %v3335, 0.0
  %v3541 = vadd.f32 %v3539, %v3540
  %v3542 = vsel %vm26, %v3340, 0.0
  %v3543 = vadd.f32 %v3541, %v3542
  %v3544 = vsel %vm26, %v3345, 0.0
  %v3545 = vadd.f32 %v3543, %v3544
  %v3546 = vsel %vm26, %v3350, 0.0
  %v3547 = vadd.f32 %v3545, %v3546
  %v3548 = vsel %vm26, %v3355, 0.0
  %v3549 = vadd.f32 %v3547, %v3548
  %v3550 = vsel %vm26, %v3360, 0.0
  %v3551 = vadd.f32 %v3549, %v3550
  %v3552 = vsel %vm26, %v3365, 0.0
  %v3553 = vadd.f32 %v3551, %v3552
  %v3554 = vsel %vm26, %v3370, 0.0
  %v3555 = vadd.f32 %v3553, %v3554
  %v3556 = vsel %vm26, %v3375, 0.0
  %v3557 = vadd.f32 %v3555, %v3556
  %v3558 = vsel %vm26, %v3380, 0.0
  %v3559 = vadd.f32 %v3557, %v3558
  %v3560 = vsel %vm26, %v3385, 0.0
  %v3561 = vadd.f32 %v3559, %v3560
  %v3562 = vsel %vm26, %v3390, 0.0
  %v3563 = vadd.f32 %v3561, %v3562
  %v3564 = vsel %vm26, %v3395, 0.0
  %v3565 = vadd.f32 %v3563, %v3564
  %v3566 = vsel %vm26, %v3400, 0.0
  %v3567 = vadd.f32 %v3565, %v3566
  %v3568 = vsel %vm26, %v3405, 0.0
  %v3569 = vadd.f32 %v3567, %v3568
  %v3570 = vsel %vm26, %v3410, 0.0
  %v3571 = vadd.f32 %v3569, %v3570
  %v3572 = vsel %vm26, %v3415, 0.0
  %v3573 = vadd.f32 %v3571, %v3572
  %v3574 = vsel %vm26, %v3420, 0.0
  %v3575 = vadd.f32 %v3573, %v3574
  %v3576 = vsel %vm26, %v3425, 0.0
  %v3577 = vadd.f32 %v3575, %v3576
  %v3578 = vsel %vm26, %v3430, 0.0
  %v3579 = vadd.f32 %v3577, %v3578
  %v3580 = vsel %vm26, %v3435, 0.0
  %v3581 = vadd.f32 %v3579, %v3580
  %v3582 = vsel %vm26, %v3440, 0.0
  %v3583 = vadd.f32 %v3581, %v3582
  %v3584 = vsel %vm26, %v3445, 0.0
  %v3585 = vadd.f32 %v3583, %v3584
  %v3586 = vsel %vm26, %v3450, 0.0
  %v3587 = vadd.f32 %v3585, %v3586
  %v3588 = vsel %vm26, %v3455, 0.0
  %v3589 = vadd.f32 %v3587, %v3588
  %v3590 = vsel %vm26, %v3460, 0.0
  %v3591 = vadd.f32 %v3589, %v3590
  %v3592 = vrot.slane %v3591, 4
  %v3593 = vadd.f32 %v3591, %v3592
  %v3594 = vrot.slane %v3593, 2
  %v3595 = vadd.f32 %v3593, %v3594
  %v3596 = vrot.slane %v3595, 1
  %v3597 = vadd.f32 %v3595, %v3596
  %v3598 = vmul.f32 %v3145, %v3145
  %v3599 = vmul.f32 %v3150, %v3150
  %v3600 = vmul.f32 %v3155, %v3155
  %v3601 = vmul.f32 %v3160, %v3160
  %v3602 = vmul.f32 %v3165, %v3165
  %v3603 = vmul.f32 %v3170, %v3170
  %v3604 = vmul.f32 %v3175, %v3175
  %v3605 = vmul.f32 %v3180, %v3180
  %v3606 = vmul.f32 %v3185, %v3185
  %v3607 = vmul.f32 %v3190, %v3190
  %v3608 = vmul.f32 %v3195, %v3195
  %v3609 = vmul.f32 %v3200, %v3200
  %v3610 = vmul.f32 %v3205, %v3205
  %v3611 = vmul.f32 %v3210, %v3210
  %v3612 = vmul.f32 %v3215, %v3215
  %v3613 = vmul.f32 %v3220, %v3220
  %v3614 = vmul.f32 %v3225, %v3225
  %v3615 = vmul.f32 %v3230, %v3230
  %v3616 = vmul.f32 %v3235, %v3235
  %v3617 = vmul.f32 %v3240, %v3240
  %v3618 = vmul.f32 %v3245, %v3245
  %v3619 = vmul.f32 %v3250, %v3250
  %v3620 = vmul.f32 %v3255, %v3255
  %v3621 = vmul.f32 %v3260, %v3260
  %v3622 = vmul.f32 %v3265, %v3265
  %v3623 = vmul.f32 %v3270, %v3270
  %v3624 = vmul.f32 %v3275, %v3275
  %v3625 = vmul.f32 %v3280, %v3280
  %v3626 = vmul.f32 %v3285, %v3285
  %v3627 = vmul.f32 %v3290, %v3290
  %v3628 = vmul.f32 %v3295, %v3295
  %v3629 = vmul.f32 %v3300, %v3300
  %v3630 = vmul.f32 %v3305, %v3305
  %v3631 = vmul.f32 %v3310, %v3310
  %v3632 = vmul.f32 %v3315, %v3315
  %v3633 = vmul.f32 %v3320, %v3320
  %v3634 = vmul.f32 %v3325, %v3325
  %v3635 = vmul.f32 %v3330, %v3330
  %v3636 = vmul.f32 %v3335, %v3335
  %v3637 = vmul.f32 %v3340, %v3340
  %v3638 = vmul.f32 %v3345, %v3345
  %v3639 = vmul.f32 %v3350, %v3350
  %v3640 = vmul.f32 %v3355, %v3355
  %v3641 = vmul.f32 %v3360, %v3360
  %v3642 = vmul.f32 %v3365, %v3365
  %v3643 = vmul.f32 %v3370, %v3370
  %v3644 = vmul.f32 %v3375, %v3375
  %v3645 = vmul.f32 %v3380, %v3380
  %v3646 = vmul.f32 %v3385, %v3385
  %v3647 = vmul.f32 %v3390, %v3390
  %v3648 = vmul.f32 %v3395, %v3395
  %v3649 = vmul.f32 %v3400, %v3400
  %v3650 = vmul.f32 %v3405, %v3405
  %v3651 = vmul.f32 %v3410, %v3410
  %v3652 = vmul.f32 %v3415, %v3415
  %v3653 = vmul.f32 %v3420, %v3420
  %v3654 = vmul.f32 %v3425, %v3425
  %v3655 = vmul.f32 %v3430, %v3430
  %v3656 = vmul.f32 %v3435, %v3435
  %v3657 = vmul.f32 %v3440, %v3440
  %v3658 = vmul.f32 %v3445, %v3445
  %v3659 = vmul.f32 %v3450, %v3450
  %v3660 = vmul.f32 %v3455, %v3455
  %v3661 = vmul.f32 %v3460, %v3460
  %v3662 = vsel %vm26, %v3598, 0.0
  %v3663 = vsel %vm26, %v3599, 0.0
  %v3664 = vadd.f32 %v3662, %v3663
  %v3665 = vsel %vm26, %v3600, 0.0
  %v3666 = vadd.f32 %v3664, %v3665
  %v3667 = vsel %vm26, %v3601, 0.0
  %v3668 = vadd.f32 %v3666, %v3667
  %v3669 = vsel %vm26, %v3602, 0.0
  %v3670 = vadd.f32 %v3668, %v3669
  %v3671 = vsel %vm26, %v3603, 0.0
  %v3672 = vadd.f32 %v3670, %v3671
  %v3673 = vsel %vm26, %v3604, 0.0
  %v3674 = vadd.f32 %v3672, %v3673
  %v3675 = vsel %vm26, %v3605, 0.0
  %v3676 = vadd.f32 %v3674, %v3675
  %v3677 = vsel %vm26, %v3606, 0.0
  %v3678 = vadd.f32 %v3676, %v3677
  %v3679 = vsel %vm26, %v3607, 0.0
  %v3680 = vadd.f32 %v3678, %v3679
  %v3681 = vsel %vm26, %v3608, 0.0
  %v3682 = vadd.f32 %v3680, %v3681
  %v3683 = vsel %vm26, %v3609, 0.0
  %v3684 = vadd.f32 %v3682, %v3683
  %v3685 = vsel %vm26, %v3610, 0.0
  %v3686 = vadd.f32 %v3684, %v3685
  %v3687 = vsel %vm26, %v3611, 0.0
  %v3688 = vadd.f32 %v3686, %v3687
  %v3689 = vsel %vm26, %v3612, 0.0
  %v3690 = vadd.f32 %v3688, %v3689
  %v3691 = vsel %vm26, %v3613, 0.0
  %v3692 = vadd.f32 %v3690, %v3691
  %v3693 = vsel %vm26, %v3614, 0.0
  %v3694 = vadd.f32 %v3692, %v3693
  %v3695 = vsel %vm26, %v3615, 0.0
  %v3696 = vadd.f32 %v3694, %v3695
  %v3697 = vsel %vm26, %v3616, 0.0
  %v3698 = vadd.f32 %v3696, %v3697
  %v3699 = vsel %vm26, %v3617, 0.0
  %v3700 = vadd.f32 %v3698, %v3699
  %v3701 = vsel %vm26, %v3618, 0.0
  %v3702 = vadd.f32 %v3700, %v3701
  %v3703 = vsel %vm26, %v3619, 0.0
  %v3704 = vadd.f32 %v3702, %v3703
  %v3705 = vsel %vm26, %v3620, 0.0
  %v3706 = vadd.f32 %v3704, %v3705
  %v3707 = vsel %vm26, %v3621, 0.0
  %v3708 = vadd.f32 %v3706, %v3707
  %v3709 = vsel %vm26, %v3622, 0.0
  %v3710 = vadd.f32 %v3708, %v3709
  %v3711 = vsel %vm26, %v3623, 0.0
  %v3712 = vadd.f32 %v3710, %v3711
  %v3713 = vsel %vm26, %v3624, 0.0
  %v3714 = vadd.f32 %v3712, %v3713
  %v3715 = vsel %vm26, %v3625, 0.0
  %v3716 = vadd.f32 %v3714, %v3715
  %v3717 = vsel %vm26, %v3626, 0.0
  %v3718 = vadd.f32 %v3716, %v3717
  %v3719 = vsel %vm26, %v3627, 0.0
  %v3720 = vadd.f32 %v3718, %v3719
  %v3721 = vsel %vm26, %v3628, 0.0
  %v3722 = vadd.f32 %v3720, %v3721
  %v3723 = vsel %vm26, %v3629, 0.0
  %v3724 = vadd.f32 %v3722, %v3723
  %v3725 = vsel %vm26, %v3630, 0.0
  %v3726 = vadd.f32 %v3724, %v3725
  %v3727 = vsel %vm26, %v3631, 0.0
  %v3728 = vadd.f32 %v3726, %v3727
  %v3729 = vsel %vm26, %v3632, 0.0
  %v3730 = vadd.f32 %v3728, %v3729
  %v3731 = vsel %vm26, %v3633, 0.0
  %v3732 = vadd.f32 %v3730, %v3731
  %v3733 = vsel %vm26, %v3634, 0.0
  %v3734 = vadd.f32 %v3732, %v3733
  %v3735 = vsel %vm26, %v3635, 0.0
  %v3736 = vadd.f32 %v3734, %v3735
  %v3737 = vsel %vm26, %v3636, 0.0
  %v3738 = vadd.f32 %v3736, %v3737
  %v3739 = vsel %vm26, %v3637, 0.0
  %v3740 = vadd.f32 %v3738, %v3739
  %v3741 = vsel %vm26, %v3638, 0.0
  %v3742 = vadd.f32 %v3740, %v3741
  %v3743 = vsel %vm26, %v3639, 0.0
  %v3744 = vadd.f32 %v3742, %v3743
  %v3745 = vsel %vm26, %v3640, 0.0
  %v3746 = vadd.f32 %v3744, %v3745
  %v3747 = vsel %vm26, %v3641, 0.0
  %v3748 = vadd.f32 %v3746, %v3747
  %v3749 = vsel %vm26, %v3642, 0.0
  %v3750 = vadd.f32 %v3748, %v3749
  %v3751 = vsel %vm26, %v3643, 0.0
  %v3752 = vadd.f32 %v3750, %v3751
  %v3753 = vsel %vm26, %v3644, 0.0
  %v3754 = vadd.f32 %v3752, %v3753
  %v3755 = vsel %vm26, %v3645, 0.0
  %v3756 = vadd.f32 %v3754, %v3755
  %v3757 = vsel %vm26, %v3646, 0.0
  %v3758 = vadd.f32 %v3756, %v3757
  %v3759 = vsel %vm26, %v3647, 0.0
  %v3760 = vadd.f32 %v3758, %v3759
  %v3761 = vsel %vm26, %v3648, 0.0
  %v3762 = vadd.f32 %v3760, %v3761
  %v3763 = vsel %vm26, %v3649, 0.0
  %v3764 = vadd.f32 %v3762, %v3763
  %v3765 = vsel %vm26, %v3650, 0.0
  %v3766 = vadd.f32 %v3764, %v3765
  %v3767 = vsel %vm26, %v3651, 0.0
  %v3768 = vadd.f32 %v3766, %v3767
  %v3769 = vsel %vm26, %v3652, 0.0
  %v3770 = vadd.f32 %v3768, %v3769
  %v3771 = vsel %vm26, %v3653, 0.0
  %v3772 = vadd.f32 %v3770, %v3771
  %v3773 = vsel %vm26, %v3654, 0.0
  %v3774 = vadd.f32 %v3772, %v3773
  %v3775 = vsel %vm26, %v3655, 0.0
  %v3776 = vadd.f32 %v3774, %v3775
  %v3777 = vsel %vm26, %v3656, 0.0
  %v3778 = vadd.f32 %v3776, %v3777
  %v3779 = vsel %vm26, %v3657, 0.0
  %v3780 = vadd.f32 %v3778, %v3779
  %v3781 = vsel %vm26, %v3658, 0.0
  %v3782 = vadd.f32 %v3780, %v3781
  %v3783 = vsel %vm26, %v3659, 0.0
  %v3784 = vadd.f32 %v3782, %v3783
  %v3785 = vsel %vm26, %v3660, 0.0
  %v3786 = vadd.f32 %v3784, %v3785
  %v3787 = vsel %vm26, %v3661, 0.0
  %v3788 = vadd.f32 %v3786, %v3787
  %v3789 = vrot.slane %v3788, 4
  %v3790 = vadd.f32 %v3788, %v3789
  %v3791 = vrot.slane %v3790, 2
  %v3792 = vadd.f32 %v3790, %v3791
  %v3793 = vrot.slane %v3792, 1
  %v3794 = vadd.f32 %v3792, %v3793
  %v3795 = vmul.f32 %v3597, 0.001953125
  %v3796 = vmul.f32 %v3794, 0.001953125
  %v3797 = vmul.f32 %v3795, %v3795
  %v3798 = vsub.f32 %v3796, %v3797
  %v3799 = vadd.f32 %v3798, 1e-05
  %v3800 = vrsqrt.pop %v3799
  %v3801 = vmul.f32 %v3463, %v3800
  %v3802 = vmul.f32 %v3795, %v3801
  %v3803 = vsub.f32 %v3464, %v3802
  %v3805 = vlaneseq
  %v3806 = vshrl.u32 %v3805, 7
  %v3807 = vsub.s32 0, %v3806
  %v3808 = vrot.slane %v3801, %v3807
  %v3810 = vmul.f32 %v3145, %v3808
  %v3811 = vmul.f32 %v3150, %v3808
  %v3812 = vmul.f32 %v3155, %v3808
  %v3813 = vmul.f32 %v3160, %v3808
  %v3814 = vmul.f32 %v3165, %v3808
  %v3815 = vmul.f32 %v3170, %v3808
  %v3816 = vmul.f32 %v3175, %v3808
  %v3817 = vmul.f32 %v3180, %v3808
  %v3818 = vmul.f32 %v3185, %v3808
  %v3819 = vmul.f32 %v3190, %v3808
  %v3820 = vmul.f32 %v3195, %v3808
  %v3821 = vmul.f32 %v3200, %v3808
  %v3822 = vmul.f32 %v3205, %v3808
  %v3823 = vmul.f32 %v3210, %v3808
  %v3824 = vmul.f32 %v3215, %v3808
  %v3825 = vmul.f32 %v3220, %v3808
  %v3826 = vmul.f32 %v3225, %v3808
  %v3827 = vmul.f32 %v3230, %v3808
  %v3828 = vmul.f32 %v3235, %v3808
  %v3829 = vmul.f32 %v3240, %v3808
  %v3830 = vmul.f32 %v3245, %v3808
  %v3831 = vmul.f32 %v3250, %v3808
  %v3832 = vmul.f32 %v3255, %v3808
  %v3833 = vmul.f32 %v3260, %v3808
  %v3834 = vmul.f32 %v3265, %v3808
  %v3835 = vmul.f32 %v3270, %v3808
  %v3836 = vmul.f32 %v3275, %v3808
  %v3837 = vmul.f32 %v3280, %v3808
  %v3838 = vmul.f32 %v3285, %v3808
  %v3839 = vmul.f32 %v3290, %v3808
  %v3840 = vmul.f32 %v3295, %v3808
  %v3841 = vmul.f32 %v3300, %v3808
  %v3842 = vmul.f32 %v3305, %v3808
  %v3843 = vmul.f32 %v3310, %v3808
  %v3844 = vmul.f32 %v3315, %v3808
  %v3845 = vmul.f32 %v3320, %v3808
  %v3846 = vmul.f32 %v3325, %v3808
  %v3847 = vmul.f32 %v3330, %v3808
  %v3848 = vmul.f32 %v3335, %v3808
  %v3849 = vmul.f32 %v3340, %v3808
  %v3850 = vmul.f32 %v3345, %v3808
  %v3851 = vmul.f32 %v3350, %v3808
  %v3852 = vmul.f32 %v3355, %v3808
  %v3853 = vmul.f32 %v3360, %v3808
  %v3854 = vmul.f32 %v3365, %v3808
  %v3855 = vmul.f32 %v3370, %v3808
  %v3856 = vmul.f32 %v3375, %v3808
  %v3857 = vmul.f32 %v3380, %v3808
  %v3858 = vmul.f32 %v3385, %v3808
  %v3859 = vmul.f32 %v3390, %v3808
  %v3860 = vmul.f32 %v3395, %v3808
  %v3861 = vmul.f32 %v3400, %v3808
  %v3862 = vmul.f32 %v3405, %v3808
  %v3863 = vmul.f32 %v3410, %v3808
  %v3864 = vmul.f32 %v3415, %v3808
  %v3865 = vmul.f32 %v3420, %v3808
  %v3866 = vmul.f32 %v3425, %v3808
  %v3867 = vmul.f32 %v3430, %v3808
  %v3868 = vmul.f32 %v3435, %v3808
  %v3869 = vmul.f32 %v3440, %v3808
  %v3870 = vmul.f32 %v3445, %v3808
  %v3871 = vmul.f32 %v3450, %v3808
  %v3872 = vmul.f32 %v3455, %v3808
  %v3873 = vmul.f32 %v3460, %v3808
  %v3875 = vlaneseq
  %v3876 = vshrl.u32 %v3875, 7
  %v3877 = vsub.s32 0, %v3876
  %v3878 = vrot.slane %v3803, %v3877
  %v3880 = vadd.f32 %v3810, %v3878
  %v3881 = vadd.f32 %v3811, %v3878
  %v3882 = vadd.f32 %v3812, %v3878
  %v3883 = vadd.f32 %v3813, %v3878
  %v3884 = vadd.f32 %v3814, %v3878
  %v3885 = vadd.f32 %v3815, %v3878
  %v3886 = vadd.f32 %v3816, %v3878
  %v3887 = vadd.f32 %v3817, %v3878
  %v3888 = vadd.f32 %v3818, %v3878
  %v3889 = vadd.f32 %v3819, %v3878
  %v3890 = vadd.f32 %v3820, %v3878
  %v3891 = vadd.f32 %v3821, %v3878
  %v3892 = vadd.f32 %v3822, %v3878
  %v3893 = vadd.f32 %v3823, %v3878
  %v3894 = vadd.f32 %v3824, %v3878
  %v3895 = vadd.f32 %v3825, %v3878
  %v3896 = vadd.f32 %v3826, %v3878
  %v3897 = vadd.f32 %v3827, %v3878
  %v3898 = vadd.f32 %v3828, %v3878
  %v3899 = vadd.f32 %v3829, %v3878
  %v3900 = vadd.f32 %v3830, %v3878
  %v3901 = vadd.f32 %v3831, %v3878
  %v3902 = vadd.f32 %v3832, %v3878
  %v3903 = vadd.f32 %v3833, %v3878
  %v3904 = vadd.f32 %v3834, %v3878
  %v3905 = vadd.f32 %v3835, %v3878
  %v3906 = vadd.f32 %v3836, %v3878
  %v3907 = vadd.f32 %v3837, %v3878
  %v3908 = vadd.f32 %v3838, %v3878
  %v3909 = vadd.f32 %v3839, %v3878
  %v3910 = vadd.f32 %v3840, %v3878
  %v3911 = vadd.f32 %v3841, %v3878
  %v3912 = vadd.f32 %v3842, %v3878
  %v3913 = vadd.f32 %v3843, %v3878
  %v3914 = vadd.f32 %v3844, %v3878
  %v3915 = vadd.f32 %v3845, %v3878
  %v3916 = vadd.f32 %v3846, %v3878
  %v3917 = vadd.f32 %v3847, %v3878
  %v3918 = vadd.f32 %v3848, %v3878
  %v3919 = vadd.f32 %v3849, %v3878
  %v3920 = vadd.f32 %v3850, %v3878
  %v3921 = vadd.f32 %v3851, %v3878
  %v3922 = vadd.f32 %v3852, %v3878
  %v3923 = vadd.f32 %v3853, %v3878
  %v3924 = vadd.f32 %v3854, %v3878
  %v3925 = vadd.f32 %v3855, %v3878
  %v3926 = vadd.f32 %v3856, %v3878
  %v3927 = vadd.f32 %v3857, %v3878
  %v3928 = vadd.f32 %v3858, %v3878
  %v3929 = vadd.f32 %v3859, %v3878
  %v3930 = vadd.f32 %v3860, %v3878
  %v3931 = vadd.f32 %v3861, %v3878
  %v3932 = vadd.f32 %v3862, %v3878
  %v3933 = vadd.f32 %v3863, %v3878
  %v3934 = vadd.f32 %v3864, %v3878
  %v3935 = vadd.f32 %v3865, %v3878
  %v3936 = vadd.f32 %v3866, %v3878
  %v3937 = vadd.f32 %v3867, %v3878
  %v3938 = vadd.f32 %v3868, %v3878
  %v3939 = vadd.f32 %v3869, %v3878
  %v3940 = vadd.f32 %v3870, %v3878
  %v3941 = vadd.f32 %v3871, %v3878
  %v3942 = vadd.f32 %v3872, %v3878
  %v3943 = vadd.f32 %v3873, %v3878
  %v3944 = vmax.f32 %v3880, 0.0
  %v3945 = vmax.f32 %v3881, 0.0
  %v3946 = vmax.f32 %v3882, 0.0
  %v3947 = vmax.f32 %v3883, 0.0
  %v3948 = vmax.f32 %v3884, 0.0
  %v3949 = vmax.f32 %v3885, 0.0
  %v3950 = vmax.f32 %v3886, 0.0
  %v3951 = vmax.f32 %v3887, 0.0
  %v3952 = vmax.f32 %v3888, 0.0
  %v3953 = vmax.f32 %v3889, 0.0
  %v3954 = vmax.f32 %v3890, 0.0
  %v3955 = vmax.f32 %v3891, 0.0
  %v3956 = vmax.f32 %v3892, 0.0
  %v3957 = vmax.f32 %v3893, 0.0
  %v3958 = vmax.f32 %v3894, 0.0
  %v3959 = vmax.f32 %v3895, 0.0
  %v3960 = vmax.f32 %v3896, 0.0
  %v3961 = vmax.f32 %v3897, 0.0
  %v3962 = vmax.f32 %v3898, 0.0
  %v3963 = vmax.f32 %v3899, 0.0
  %v3964 = vmax.f32 %v3900, 0.0
  %v3965 = vmax.f32 %v3901, 0.0
  %v3966 = vmax.f32 %v3902, 0.0
  %v3967 = vmax.f32 %v3903, 0.0
  %v3968 = vmax.f32 %v3904, 0.0
  %v3969 = vmax.f32 %v3905, 0.0
  %v3970 = vmax.f32 %v3906, 0.0
  %v3971 = vmax.f32 %v3907, 0.0
  %v3972 = vmax.f32 %v3908, 0.0
  %v3973 = vmax.f32 %v3909, 0.0
  %v3974 = vmax.f32 %v3910, 0.0
  %v3975 = vmax.f32 %v3911, 0.0
  %v3976 = vmax.f32 %v3912, 0.0
  %v3977 = vmax.f32 %v3913, 0.0
  %v3978 = vmax.f32 %v3914, 0.0
  %v3979 = vmax.f32 %v3915, 0.0
  %v3980 = vmax.f32 %v3916, 0.0
  %v3981 = vmax.f32 %v3917, 0.0
  %v3982 = vmax.f32 %v3918, 0.0
  %v3983 = vmax.f32 %v3919, 0.0
  %v3984 = vmax.f32 %v3920, 0.0
  %v3985 = vmax.f32 %v3921, 0.0
  %v3986 = vmax.f32 %v3922, 0.0
  %v3987 = vmax.f32 %v3923, 0.0
  %v3988 = vmax.f32 %v3924, 0.0
  %v3989 = vmax.f32 %v3925, 0.0
  %v3990 = vmax.f32 %v3926, 0.0
  %v3991 = vmax.f32 %v3927, 0.0
  %v3992 = vmax.f32 %v3928, 0.0
  %v3993 = vmax.f32 %v3929, 0.0
  %v3994 = vmax.f32 %v3930, 0.0
  %v3995 = vmax.f32 %v3931, 0.0
  %v3996 = vmax.f32 %v3932, 0.0
  %v3997 = vmax.f32 %v3933, 0.0
  %v3998 = vmax.f32 %v3934, 0.0
  %v3999 = vmax.f32 %v3935, 0.0
  %v4000 = vmax.f32 %v3936, 0.0
  %v4001 = vmax.f32 %v3937, 0.0
  %v4002 = vmax.f32 %v3938, 0.0
  %v4003 = vmax.f32 %v3939, 0.0
  %v4004 = vmax.f32 %v3940, 0.0
  %v4005 = vmax.f32 %v3941, 0.0
  %v4006 = vmax.f32 %v3942, 0.0
  %v4007 = vmax.f32 %v3943, 0.0
  %4008 = vst.msk [vmem:[%s178 + $0x1] sm:$0xff] %vm26, %v3944
  %4009 = vst.msk [vmem:[%s178 + $0x9] sm:$0xff] %vm26, %v3945
  %4010 = vst.msk [vmem:[%s178 + $0x19] sm:$0xff] %vm26, %v3946
  %4011 = vst.msk [vmem:[%s178 + $0x21] sm:$0xff] %vm26, %v3947
  %4012 = vst.msk [vmem:[%s178 + $0x31] sm:$0xff] %vm26, %v3948
  %4013 = vst.msk [vmem:[%s178 + $0x39] sm:$0xff] %vm26, %v3949
  %4014 = vst.msk [vmem:[%s178 + $0x49] sm:$0xff] %vm26, %v3950
  %4015 = vst.msk [vmem:[%s178 + $0x51] sm:$0xff] %vm26, %v3951
  %4016 = vst.msk [vmem:[%s178 + $0x61] sm:$0xff] %vm26, %v3952
  %4017 = vst.msk [vmem:[%s178 + $0x69] sm:$0xff] %vm26, %v3953
  %4018 = vst.msk [vmem:[%s178 + $0x79] sm:$0xff] %vm26, %v3954
  %4019 = vst.msk [vmem:[%s178 + $0x81] sm:$0xff] %vm26, %v3955
  %4020 = vst.msk [vmem:[%s178 + $0x91] sm:$0xff] %vm26, %v3956
  %4021 = vst.msk [vmem:[%s178 + $0x99] sm:$0xff] %vm26, %v3957
  %4022 = vst.msk [vmem:[%s178 + $0xa9] sm:$0xff] %vm26, %v3958
  %4023 = vst.msk [vmem:[%s178 + $0xb1] sm:$0xff] %vm26, %v3959
  %4024 = vst.msk [vmem:[%s178 + $0xc1] sm:$0xff] %vm26, %v3960
  %4025 = vst.msk [vmem:[%s178 + $0xc9] sm:$0xff] %vm26, %v3961
  %4026 = vst.msk [vmem:[%s178 + $0xd9] sm:$0xff] %vm26, %v3962
  %4027 = vst.msk [vmem:[%s178 + $0xe1] sm:$0xff] %vm26, %v3963
  %4028 = vst.msk [vmem:[%s178 + $0xf1] sm:$0xff] %vm26, %v3964
  %4029 = vst.msk [vmem:[%s178 + $0xf9] sm:$0xff] %vm26, %v3965
  %4030 = vst.msk [vmem:[%s178 + $0x109] sm:$0xff] %vm26, %v3966
  %4031 = vst.msk [vmem:[%s178 + $0x111] sm:$0xff] %vm26, %v3967
  %4032 = vst.msk [vmem:[%s178 + $0x121] sm:$0xff] %vm26, %v3968
  %4033 = vst.msk [vmem:[%s178 + $0x129] sm:$0xff] %vm26, %v3969
  %4034 = vst.msk [vmem:[%s178 + $0x139] sm:$0xff] %vm26, %v3970
  %4035 = vst.msk [vmem:[%s178 + $0x141] sm:$0xff] %vm26, %v3971
  %4036 = vst.msk [vmem:[%s178 + $0x151] sm:$0xff] %vm26, %v3972
  %4037 = vst.msk [vmem:[%s178 + $0x159] sm:$0xff] %vm26, %v3973
  %4038 = vst.msk [vmem:[%s178 + $0x169] sm:$0xff] %vm26, %v3974
  %4039 = vst.msk [vmem:[%s178 + $0x171] sm:$0xff] %vm26, %v3975
  %4040 = vst.msk [vmem:[%s178 + $0x1b1] sm:$0xff] %vm26, %v3976
  %4041 = vst.msk [vmem:[%s178 + $0x1b9] sm:$0xff] %vm26, %v3977
  %4042 = vst.msk [vmem:[%s178 + $0x1c9] sm:$0xff] %vm26, %v3978
  %4043 = vst.msk [vmem:[%s178 + $0x1d1] sm:$0xff] %vm26, %v3979
  %4044 = vst.msk [vmem:[%s178 + $0x1e1] sm:$0xff] %vm26, %v3980
  %4045 = vst.msk [vmem:[%s178 + $0x1e9] sm:$0xff] %vm26, %v3981
  %4046 = vst.msk [vmem:[%s178 + $0x1f9] sm:$0xff] %vm26, %v3982
  %4047 = vst.msk [vmem:[%s178 + $0x201] sm:$0xff] %vm26, %v3983
  %4048 = vst.msk [vmem:[%s178 + $0x211] sm:$0xff] %vm26, %v3984
  %4049 = vst.msk [vmem:[%s178 + $0x219] sm:$0xff] %vm26, %v3985
  %4050 = vst.msk [vmem:[%s178 + $0x229] sm:$0xff] %vm26, %v3986
  %4051 = vst.msk [vmem:[%s178 + $0x231] sm:$0xff] %vm26, %v3987
  %4052 = vst.msk [vmem:[%s178 + $0x241] sm:$0xff] %vm26, %v3988
  %4053 = vst.msk [vmem:[%s178 + $0x249] sm:$0xff] %vm26, %v3989
  %4054 = vst.msk [vmem:[%s178 + $0x259] sm:$0xff] %vm26, %v3990
  %4055 = vst.msk [vmem:[%s178 + $0x261] sm:$0xff] %vm26, %v3991
  %4056 = vst.msk [vmem:[%s178 + $0x271] sm:$0xff] %vm26, %v3992
  %4057 = vst.msk [vmem:[%s178 + $0x279] sm:$0xff] %vm26, %v3993
  %4058 = vst.msk [vmem:[%s178 + $0x289] sm:$0xff] %vm26, %v3994
  %4059 = vst.msk [vmem:[%s178 + $0x291] sm:$0xff] %vm26, %v3995
  %4060 = vst.msk [vmem:[%s178 + $0x2a1] sm:$0xff] %vm26, %v3996
  %4061 = vst.msk [vmem:[%s178 + $0x2a9] sm:$0xff] %vm26, %v3997
  %4062 = vst.msk [vmem:[%s178 + $0x2b9] sm:$0xff] %vm26, %v3998
  %4063 = vst.msk [vmem:[%s178 + $0x2c1] sm:$0xff] %vm26, %v3999
  %4064 = vst.msk [vmem:[%s178 + $0x2d1] sm:$0xff] %vm26, %v4000
  %4065 = vst.msk [vmem:[%s178 + $0x2d9] sm:$0xff] %vm26, %v4001
  %4066 = vst.msk [vmem:[%s178 + $0x2e9] sm:$0xff] %vm26, %v4002
  %4067 = vst.msk [vmem:[%s178 + $0x2f1] sm:$0xff] %vm26, %v4003
  %4068 = vst.msk [vmem:[%s178 + $0x301] sm:$0xff] %vm26, %v4004
  %4069 = vst.msk [vmem:[%s178 + $0x309] sm:$0xff] %vm26, %v4005
  %4070 = vst.msk [vmem:[%s178 + $0x319] sm:$0xff] %vm26, %v4006
  %4071 = vst.msk [vmem:[%s178 + $0x321] sm:$0xff] %vm26, %v4007
  %v4072 = vld [vmem:[#allocation2] sm:$0xff]
  %v4073 = vld [vmem:[#allocation2 + $0x8] sm:$0xff]
  %v4074 = vld [vmem:[#allocation2 + $0x10] sm:$0x3]
  %v4075 = vld [vmem:[#allocation2 + $0x18] sm:$0xff]
  %v4076 = vld [vmem:[#allocation2 + $0x20] sm:$0xff]
  %v4077 = vld [vmem:[#allocation2 + $0x28] sm:$0x3]
  %v4078 = vld [vmem:[#allocation2 + $0x30] sm:$0xff]
  %v4079 = vld [vmem:[#allocation2 + $0x38] sm:$0xff]
  %v4080 = vld [vmem:[#allocation2 + $0x40] sm:$0x3]
  %v4081 = vld [vmem:[#allocation2 + $0x48] sm:$0xff]
  %v4082 = vld [vmem:[#allocation2 + $0x50] sm:$0xff]
  %v4083 = vld [vmem:[#allocation2 + $0x58] sm:$0x3]
  %v4084 = vld [vmem:[#allocation2 + $0x60] sm:$0xff]
  %v4085 = vld [vmem:[#allocation2 + $0x68] sm:$0xff]
  %v4086 = vld [vmem:[#allocation2 + $0x70] sm:$0x3]
  %v4087 = vld [vmem:[#allocation2 + $0x78] sm:$0xff]
  %v4088 = vld [vmem:[#allocation2 + $0x80] sm:$0xff]
  %v4089 = vld [vmem:[#allocation2 + $0x88] sm:$0x3]
  %v4090 = vld [vmem:[#allocation2 + $0x90] sm:$0xff]
  %v4091 = vld [vmem:[#allocation2 + $0x98] sm:$0xff]
  %v4092 = vld [vmem:[#allocation2 + $0xa0] sm:$0x3]
  %v4093 = vld [vmem:[#allocation2 + $0xa8] sm:$0xff]
  %v4094 = vld [vmem:[#allocation2 + $0xb0] sm:$0xff]
  %v4095 = vld [vmem:[#allocation2 + $0xb8] sm:$0x3]
  %v4096 = vld [vmem:[#allocation2 + $0xc0] sm:$0xff]
  %v4097 = vld [vmem:[#allocation2 + $0xc8] sm:$0xff]
  %v4098 = vld [vmem:[#allocation2 + $0xd0] sm:$0x3]
  %v4099 = vld [vmem:[#allocation2 + $0xd8] sm:$0xff]
  %v4100 = vld [vmem:[#allocation2 + $0xe0] sm:$0xff]
  %v4101 = vld [vmem:[#allocation2 + $0xe8] sm:$0x3]
  %v4102 = vld [vmem:[#allocation2 + $0xf0] sm:$0xff]
  %v4103 = vld [vmem:[#allocation2 + $0xf8] sm:$0xff]
  %v4104 = vld [vmem:[#allocation2 + $0x100] sm:$0x3]
  %v4105 = vld [vmem:[#allocation2 + $0x108] sm:$0xff]
  %v4106 = vld [vmem:[#allocation2 + $0x110] sm:$0xff]
  %v4107 = vld [vmem:[#allocation2 + $0x118] sm:$0x3]
  %v4108 = vld [vmem:[#allocation2 + $0x120] sm:$0xff]
  %v4109 = vld [vmem:[#allocation2 + $0x128] sm:$0xff]
  %v4110 = vld [vmem:[#allocation2 + $0x130] sm:$0x3]
  %v4111 = vld [vmem:[#allocation2 + $0x138] sm:$0xff]
  %v4112 = vld [vmem:[#allocation2 + $0x140] sm:$0xff]
  %v4113 = vld [vmem:[#allocation2 + $0x148] sm:$0x3]
  %v4114 = vld [vmem:[#allocation2 + $0x150] sm:$0xff]
  %v4115 = vld [vmem:[#allocation2 + $0x158] sm:$0xff]
  %v4116 = vld [vmem:[#allocation2 + $0x160] sm:$0x3]
  %v4117 = vld [vmem:[#allocation2 + $0x168] sm:$0xff]
  %v4118 = vld [vmem:[#allocation2 + $0x170] sm:$0xff]
  %v4119 = vld [vmem:[#allocation2 + $0x178] sm:$0x3]
  %v4120 = vld [vmem:[#allocation2 + $0x180] sm:$0xff]
  %v4121 = vld [vmem:[#allocation2 + $0x188] sm:$0xff]
  %v4122 = vld [vmem:[#allocation2 + $0x190] sm:$0x3]
  %v4123 = vld [vmem:[#allocation2 + $0x198] sm:$0xff]
  %v4124 = vld [vmem:[#allocation2 + $0x1a0] sm:$0xff]
  %v4125 = vld [vmem:[#allocation2 + $0x1a8] sm:$0x3]
  %v4126 = vld [vmem:[#allocation2 + $0x1b0] sm:$0xff]
  %v4127 = vld [vmem:[#allocation2 + $0x1b8] sm:$0xff]
  %v4128 = vld [vmem:[#allocation2 + $0x1c0] sm:$0x3]
  %v4129 = vld [vmem:[#allocation2 + $0x1c8] sm:$0xff]
  %v4130 = vld [vmem:[#allocation2 + $0x1d0] sm:$0xff]
  %v4131 = vld [vmem:[#allocation2 + $0x1d8] sm:$0x3]
  %v4132 = vld [vmem:[#allocation2 + $0x1e0] sm:$0xff]
  %v4133 = vld [vmem:[#allocation2 + $0x1e8] sm:$0xff]
  %v4134 = vld [vmem:[#allocation2 + $0x1f0] sm:$0x3]
  %v4135 = vld [vmem:[#allocation2 + $0x1f8] sm:$0xff]
  %v4136 = vld [vmem:[#allocation2 + $0x200] sm:$0xff]
  %v4137 = vld [vmem:[#allocation2 + $0x208] sm:$0x3]
  %v4138 = vld [vmem:[#allocation2 + $0x210] sm:$0xff]
  %v4139 = vld [vmem:[#allocation2 + $0x218] sm:$0xff]
  %v4140 = vld [vmem:[#allocation2 + $0x220] sm:$0x3]
  %v4141 = vld [vmem:[#allocation2 + $0x228] sm:$0xff]
  %v4142 = vld [vmem:[#allocation2 + $0x230] sm:$0xff]
  %v4143 = vld [vmem:[#allocation2 + $0x238] sm:$0x3]
  %v4144 = vld [vmem:[#allocation2 + $0x240] sm:$0xff]
  %v4145 = vld [vmem:[#allocation2 + $0x248] sm:$0xff]
  %v4146 = vld [vmem:[#allocation2 + $0x250] sm:$0x3]
  %v4147 = vld [vmem:[#allocation2 + $0x258] sm:$0xff]
  %v4148 = vld [vmem:[#allocation2 + $0x260] sm:$0xff]
  %v4149 = vld [vmem:[#allocation2 + $0x268] sm:$0x3]
  %v4150 = vld [vmem:[#allocation2 + $0x270] sm:$0xff]
  %v4151 = vld [vmem:[#allocation2 + $0x278] sm:$0xff]
  %v4152 = vld [vmem:[#allocation2 + $0x280] sm:$0x3]
  %v4153 = vld [vmem:[#allocation2 + $0x288] sm:$0xff]
  %v4154 = vld [vmem:[#allocation2 + $0x290] sm:$0xff]
  %v4155 = vld [vmem:[#allocation2 + $0x298] sm:$0x3]
  %v4156 = vld [vmem:[#allocation2 + $0x2a0] sm:$0xff]
  %v4157 = vld [vmem:[#allocation2 + $0x2a8] sm:$0xff]
  %v4158 = vld [vmem:[#allocation2 + $0x2b0] sm:$0x3]
  %v4159 = vld [vmem:[#allocation2 + $0x2b8] sm:$0xff]
  %v4160 = vld [vmem:[#allocation2 + $0x2c0] sm:$0xff]
  %v4161 = vld [vmem:[#allocation2 + $0x2c8] sm:$0x3]
  %v4162 = vld [vmem:[#allocation2 + $0x2d0] sm:$0xff]
  %v4163 = vld [vmem:[#allocation2 + $0x2d8] sm:$0xff]
  %v4164 = vld [vmem:[#allocation2 + $0x2e0] sm:$0x3]
  %v4165 = vld [vmem:[#allocation2 + $0x2e8] sm:$0xff]
  %v4166 = vld [vmem:[#allocation2 + $0x2f0] sm:$0xff]
  %v4167 = vld [vmem:[#allocation2 + $0x2f8] sm:$0x3]
  %v4168 = vld [vmem:[#allocation2 + $0x300] sm:$0xff]
  %v4169 = vld [vmem:[#allocation2 + $0x308] sm:$0xff]
  %v4170 = vld [vmem:[#allocation2 + $0x310] sm:$0x3]
  %v4171 = vld [vmem:[#allocation2 + $0x318] sm:$0xff]
  %v4172 = vld [vmem:[#allocation2 + $0x320] sm:$0xff]
  %v4173 = vld [vmem:[#allocation2 + $0x328] sm:$0x3]
  %v4174 = vld [vmem:[#allocation2 + $0x330] sm:$0xff]
  %v4175 = vld [vmem:[#allocation2 + $0x338] sm:$0xff]
  %v4176 = vld [vmem:[#allocation2 + $0x340] sm:$0x3]
  %v4177 = vld [vmem:[#allocation2 + $0x348] sm:$0xff]
  %v4178 = vld [vmem:[#allocation2 + $0x350] sm:$0xff]
  %v4179 = vld [vmem:[#allocation2 + $0x358] sm:$0x3]
  %v4180 = vld [vmem:[%s2] sm:$0xff]
  %v4181 = vld [vmem:[%s2 + $0x8] sm:$0xff]
  %v4182 = vld [vmem:[%s2 + $0x10] sm:$0xff]
  %v4183 = vld [vmem:[%s2 + $0x18] sm:$0xff]
  %v4184 = vld [vmem:[%s2 + $0x20] sm:$0xf]
  %v4281 = vrot.slane %v4072, 1
  %v4282 = vrot.slane %v4073, 1
  %v4283 = vsel %vm452, %v4281, %v4282
  %v4284 = vrot.slane %v4074, 1
  %v4285 = vsel %vm452, %v4282, %v4284
  %v4286 = vrot.slane %v4075, 1
  %v4287 = vrot.slane %v4076, 1
  %v4288 = vsel %vm452, %v4286, %v4287
  %v4289 = vrot.slane %v4077, 1
  %v4290 = vsel %vm452, %v4287, %v4289
  %v4291 = vrot.slane %v4078, 1
  %v4292 = vrot.slane %v4079, 1
  %v4293 = vsel %vm452, %v4291, %v4292
  %v4294 = vrot.slane %v4080, 1
  %v4295 = vsel %vm452, %v4292, %v4294
  %v4296 = vrot.slane %v4081, 1
  %v4297 = vrot.slane %v4082, 1
  %v4298 = vsel %vm452, %v4296, %v4297
  %v4299 = vrot.slane %v4083, 1
  %v4300 = vsel %vm452, %v4297, %v4299
  %v4301 = vrot.slane %v4084, 1
  %v4302 = vrot.slane %v4085, 1
  %v4303 = vsel %vm452, %v4301, %v4302
  %v4304 = vrot.slane %v4086, 1
  %v4305 = vsel %vm452, %v4302, %v4304
  %v4306 = vrot.slane %v4087, 1
  %v4307 = vrot.slane %v4088, 1
  %v4308 = vsel %vm452, %v4306, %v4307
  %v4309 = vrot.slane %v4089, 1
  %v4310 = vsel %vm452, %v4307, %v4309
  %v4311 = vrot.slane %v4090, 1
  %v4312 = vrot.slane %v4091, 1
  %v4313 = vsel %vm452, %v4311, %v4312
  %v4314 = vrot.slane %v4092, 1
  %v4315 = vsel %vm452, %v4312, %v4314
  %v4316 = vrot.slane %v4093, 1
  %v4317 = vrot.slane %v4094, 1
  %v4318 = vsel %vm452, %v4316, %v4317
  %v4319 = vrot.slane %v4095, 1
  %v4320 = vsel %vm452, %v4317, %v4319
  %v4321 = vrot.slane %v4096, 1
  %v4322 = vrot.slane %v4097, 1
  %v4323 = vsel %vm452, %v4321, %v4322
  %v4324 = vrot.slane %v4098, 1
  %v4325 = vsel %vm452, %v4322, %v4324
  %v4326 = vrot.slane %v4099, 1
  %v4327 = vrot.slane %v4100, 1
  %v4328 = vsel %vm452, %v4326, %v4327
  %v4329 = vrot.slane %v4101, 1
  %v4330 = vsel %vm452, %v4327, %v4329
  %v4331 = vrot.slane %v4102, 1
  %v4332 = vrot.slane %v4103, 1
  %v4333 = vsel %vm452, %v4331, %v4332
  %v4334 = vrot.slane %v4104, 1
  %v4335 = vsel %vm452, %v4332, %v4334
  %v4336 = vrot.slane %v4105, 1
  %v4337 = vrot.slane %v4106, 1
  %v4338 = vsel %vm452, %v4336, %v4337
  %v4339 = vrot.slane %v4107, 1
  %v4340 = vsel %vm452, %v4337, %v4339
  %v4341 = vrot.slane %v4108, 1
  %v4342 = vrot.slane %v4109, 1
  %v4343 = vsel %vm452, %v4341, %v4342
  %v4344 = vrot.slane %v4110, 1
  %v4345 = vsel %vm452, %v4342, %v4344
  %v4346 = vrot.slane %v4111, 1
  %v4347 = vrot.slane %v4112, 1
  %v4348 = vsel %vm452, %v4346, %v4347
  %v4349 = vrot.slane %v4113, 1
  %v4350 = vsel %vm452, %v4347, %v4349
  %v4351 = vrot.slane %v4114, 1
  %v4352 = vrot.slane %v4115, 1
  %v4353 = vsel %vm452, %v4351, %v4352
  %v4354 = vrot.slane %v4116, 1
  %v4355 = vsel %vm452, %v4352, %v4354
  %v4356 = vrot.slane %v4117, 1
  %v4357 = vrot.slane %v4118, 1
  %v4358 = vsel %vm452, %v4356, %v4357
  %v4359 = vrot.slane %v4119, 1
  %v4360 = vsel %vm452, %v4357, %v4359
  %v4361 = vrot.slane %v4126, 1
  %v4362 = vrot.slane %v4127, 1
  %v4363 = vsel %vm452, %v4361, %v4362
  %v4364 = vrot.slane %v4128, 1
  %v4365 = vsel %vm452, %v4362, %v4364
  %v4366 = vrot.slane %v4129, 1
  %v4367 = vrot.slane %v4130, 1
  %v4368 = vsel %vm452, %v4366, %v4367
  %v4369 = vrot.slane %v4131, 1
  %v4370 = vsel %vm452, %v4367, %v4369
  %v4371 = vrot.slane %v4132, 1
  %v4372 = vrot.slane %v4133, 1
  %v4373 = vsel %vm452, %v4371, %v4372
  %v4374 = vrot.slane %v4134, 1
  %v4375 = vsel %vm452, %v4372, %v4374
  %v4376 = vrot.slane %v4135, 1
  %v4377 = vrot.slane %v4136, 1
  %v4378 = vsel %vm452, %v4376, %v4377
  %v4379 = vrot.slane %v4137, 1
  %v4380 = vsel %vm452, %v4377, %v4379
  %v4381 = vrot.slane %v4138, 1
  %v4382 = vrot.slane %v4139, 1
  %v4383 = vsel %vm452, %v4381, %v4382
  %v4384 = vrot.slane %v4140, 1
  %v4385 = vsel %vm452, %v4382, %v4384
  %v4386 = vrot.slane %v4141, 1
  %v4387 = vrot.slane %v4142, 1
  %v4388 = vsel %vm452, %v4386, %v4387
  %v4389 = vrot.slane %v4143, 1
  %v4390 = vsel %vm452, %v4387, %v4389
  %v4391 = vrot.slane %v4144, 1
  %v4392 = vrot.slane %v4145, 1
  %v4393 = vsel %vm452, %v4391, %v4392
  %v4394 = vrot.slane %v4146, 1
  %v4395 = vsel %vm452, %v4392, %v4394
  %v4396 = vrot.slane %v4147, 1
  %v4397 = vrot.slane %v4148, 1
  %v4398 = vsel %vm452, %v4396, %v4397
  %v4399 = vrot.slane %v4149, 1
  %v4400 = vsel %vm452, %v4397, %v4399
  %v4401 = vrot.slane %v4150, 1
  %v4402 = vrot.slane %v4151, 1
  %v4403 = vsel %vm452, %v4401, %v4402
  %v4404 = vrot.slane %v4152, 1
  %v4405 = vsel %vm452, %v4402, %v4404
  %v4406 = vrot.slane %v4153, 1
  %v4407 = vrot.slane %v4154, 1
  %v4408 = vsel %vm452, %v4406, %v4407
  %v4409 = vrot.slane %v4155, 1
  %v4410 = vsel %vm452, %v4407, %v4409
  %v4411 = vrot.slane %v4156, 1
  %v4412 = vrot.slane %v4157, 1
  %v4413 = vsel %vm452, %v4411, %v4412
  %v4414 = vrot.slane %v4158, 1
  %v4415 = vsel %vm452, %v4412, %v4414
  %v4416 = vrot.slane %v4159, 1
  %v4417 = vrot.slane %v4160, 1
  %v4418 = vsel %vm452, %v4416, %v4417
  %v4419 = vrot.slane %v4161, 1
  %v4420 = vsel %vm452, %v4417, %v4419
  %v4421 = vrot.slane %v4162, 1
  %v4422 = vrot.slane %v4163, 1
  %v4423 = vsel %vm452, %v4421, %v4422
  %v4424 = vrot.slane %v4164, 1
  %v4425 = vsel %vm452, %v4422, %v4424
  %v4426 = vrot.slane %v4165, 1
  %v4427 = vrot.slane %v4166, 1
  %v4428 = vsel %vm452, %v4426, %v4427
  %v4429 = vrot.slane %v4167, 1
  %v4430 = vsel %vm452, %v4427, %v4429
  %v4431 = vrot.slane %v4168, 1
  %v4432 = vrot.slane %v4169, 1
  %v4433 = vsel %vm452, %v4431, %v4432
  %v4434 = vrot.slane %v4170, 1
  %v4435 = vsel %vm452, %v4432, %v4434
  %v4436 = vrot.slane %v4171, 1
  %v4437 = vrot.slane %v4172, 1
  %v4438 = vsel %vm452, %v4436, %v4437
  %v4439 = vrot.slane %v4173, 1
  %v4440 = vsel %vm452, %v4437, %v4439
  %4441 = vrot.lane.b32.xlu0 %v4283, 4
  %v4442 = vpop.permute.xlu0 %4441
  %4443 = vrot.lane.b32.xlu0 %v4285, 4
  %v4444 = vpop.permute.xlu0 %4443
  %4445 = vrot.lane.b32.xlu0 %v4288, 4
  %v4446 = vpop.permute.xlu0 %4445
  %4447 = vrot.lane.b32.xlu0 %v4290, 4
  %v4448 = vpop.permute.xlu0 %4447
  %4449 = vrot.lane.b32.xlu0 %v4293, 4
  %v4450 = vpop.permute.xlu0 %4449
  %4451 = vrot.lane.b32.xlu0 %v4295, 4
  %v4452 = vpop.permute.xlu0 %4451
  %4453 = vrot.lane.b32.xlu0 %v4298, 4
  %v4454 = vpop.permute.xlu0 %4453
  %4455 = vrot.lane.b32.xlu0 %v4300, 4
  %v4456 = vpop.permute.xlu0 %4455
  %4457 = vrot.lane.b32.xlu0 %v4303, 4
  %v4458 = vpop.permute.xlu0 %4457
  %4459 = vrot.lane.b32.xlu0 %v4305, 4
  %v4460 = vpop.permute.xlu0 %4459
  %4461 = vrot.lane.b32.xlu0 %v4308, 4
  %v4462 = vpop.permute.xlu0 %4461
  %4463 = vrot.lane.b32.xlu0 %v4310, 4
  %v4464 = vpop.permute.xlu0 %4463
  %4465 = vrot.lane.b32.xlu0 %v4313, 4
  %v4466 = vpop.permute.xlu0 %4465
  %4467 = vrot.lane.b32.xlu0 %v4315, 4
  %v4468 = vpop.permute.xlu0 %4467
  %4469 = vrot.lane.b32.xlu0 %v4318, 4
  %v4470 = vpop.permute.xlu0 %4469
  %4471 = vrot.lane.b32.xlu0 %v4320, 4
  %v4472 = vpop.permute.xlu0 %4471
  %4473 = vrot.lane.b32.xlu0 %v4323, 4
  %v4474 = vpop.permute.xlu0 %4473
  %4475 = vrot.lane.b32.xlu0 %v4325, 4
  %v4476 = vpop.permute.xlu0 %4475
  %4477 = vrot.lane.b32.xlu0 %v4328, 4
  %v4478 = vpop.permute.xlu0 %4477
  %4479 = vrot.lane.b32.xlu0 %v4330, 4
  %v4480 = vpop.permute.xlu0 %4479
  %4481 = vrot.lane.b32.xlu0 %v4333, 4
  %v4482 = vpop.permute.xlu0 %4481
  %4483 = vrot.lane.b32.xlu0 %v4335, 4
  %v4484 = vpop.permute.xlu0 %4483
  %4485 = vrot.lane.b32.xlu0 %v4338, 4
  %v4486 = vpop.permute.xlu0 %4485
  %4487 = vrot.lane.b32.xlu0 %v4340, 4
  %v4488 = vpop.permute.xlu0 %4487
  %4489 = vrot.lane.b32.xlu0 %v4343, 4
  %v4490 = vpop.permute.xlu0 %4489
  %4491 = vrot.lane.b32.xlu0 %v4345, 4
  %v4492 = vpop.permute.xlu0 %4491
  %4493 = vrot.lane.b32.xlu0 %v4348, 4
  %v4494 = vpop.permute.xlu0 %4493
  %4495 = vrot.lane.b32.xlu0 %v4350, 4
  %v4496 = vpop.permute.xlu0 %4495
  %4497 = vrot.lane.b32.xlu0 %v4353, 4
  %v4498 = vpop.permute.xlu0 %4497
  %4499 = vrot.lane.b32.xlu0 %v4355, 4
  %v4500 = vpop.permute.xlu0 %4499
  %4501 = vrot.lane.b32.xlu0 %v4358, 4
  %v4502 = vpop.permute.xlu0 %4501
  %4503 = vrot.lane.b32.xlu0 %v4360, 4
  %v4504 = vpop.permute.xlu0 %4503
  %4505 = vrot.lane.b32.xlu0 %v4363, 4
  %v4506 = vpop.permute.xlu0 %4505
  %4507 = vrot.lane.b32.xlu0 %v4365, 4
  %v4508 = vpop.permute.xlu0 %4507
  %4509 = vrot.lane.b32.xlu0 %v4368, 4
  %v4510 = vpop.permute.xlu0 %4509
  %4511 = vrot.lane.b32.xlu0 %v4370, 4
  %v4512 = vpop.permute.xlu0 %4511
  %4513 = vrot.lane.b32.xlu0 %v4373, 4
  %v4514 = vpop.permute.xlu0 %4513
  %4515 = vrot.lane.b32.xlu0 %v4375, 4
  %v4516 = vpop.permute.xlu0 %4515
  %4517 = vrot.lane.b32.xlu0 %v4378, 4
  %v4518 = vpop.permute.xlu0 %4517
  %4519 = vrot.lane.b32.xlu0 %v4380, 4
  %v4520 = vpop.permute.xlu0 %4519
  %4521 = vrot.lane.b32.xlu0 %v4383, 4
  %v4522 = vpop.permute.xlu0 %4521
  %4523 = vrot.lane.b32.xlu0 %v4385, 4
  %v4524 = vpop.permute.xlu0 %4523
  %4525 = vrot.lane.b32.xlu0 %v4388, 4
  %v4526 = vpop.permute.xlu0 %4525
  %4527 = vrot.lane.b32.xlu0 %v4390, 4
  %v4528 = vpop.permute.xlu0 %4527
  %4529 = vrot.lane.b32.xlu0 %v4393, 4
  %v4530 = vpop.permute.xlu0 %4529
  %4531 = vrot.lane.b32.xlu0 %v4395, 4
  %v4532 = vpop.permute.xlu0 %4531
  %4533 = vrot.lane.b32.xlu0 %v4398, 4
  %v4534 = vpop.permute.xlu0 %4533
  %4535 = vrot.lane.b32.xlu0 %v4400, 4
  %v4536 = vpop.permute.xlu0 %4535
  %4537 = vrot.lane.b32.xlu0 %v4403, 4
  %v4538 = vpop.permute.xlu0 %4537
  %4539 = vrot.lane.b32.xlu0 %v4405, 4
  %v4540 = vpop.permute.xlu0 %4539
  %4541 = vrot.lane.b32.xlu0 %v4408, 4
  %v4542 = vpop.permute.xlu0 %4541
  %4543 = vrot.lane.b32.xlu0 %v4410, 4
  %v4544 = vpop.permute.xlu0 %4543
  %4545 = vrot.lane.b32.xlu0 %v4413, 4
  %v4546 = vpop.permute.xlu0 %4545
  %4547 = vrot.lane.b32.xlu0 %v4415, 4
  %v4548 = vpop.permute.xlu0 %4547
  %4549 = vrot.lane.b32.xlu0 %v4418, 4
  %v4550 = vpop.permute.xlu0 %4549
  %4551 = vrot.lane.b32.xlu0 %v4420, 4
  %v4552 = vpop.permute.xlu0 %4551
  %4553 = vrot.lane.b32.xlu0 %v4423, 4
  %v4554 = vpop.permute.xlu0 %4553
  %4555 = vrot.lane.b32.xlu0 %v4425, 4
  %v4556 = vpop.permute.xlu0 %4555
  %4557 = vrot.lane.b32.xlu0 %v4428, 4
  %v4558 = vpop.permute.xlu0 %4557
  %4559 = vrot.lane.b32.xlu0 %v4430, 4
  %v4560 = vpop.permute.xlu0 %4559
  %4561 = vrot.lane.b32.xlu0 %v4433, 4
  %v4562 = vpop.permute.xlu0 %4561
  %4563 = vrot.lane.b32.xlu0 %v4435, 4
  %v4564 = vpop.permute.xlu0 %4563
  %4565 = vrot.lane.b32.xlu0 %v4438, 4
  %v4566 = vpop.permute.xlu0 %4565
  %4567 = vrot.lane.b32.xlu0 %v4440, 4
  %v4568 = vpop.permute.xlu0 %4567
  %v4633 = vrot.slane %v4072, 2
  %v4634 = vrot.slane %v4073, 2
  %v4635 = vsel %vm805, %v4633, %v4634
  %v4636 = vrot.slane %v4074, 2
  %v4637 = vsel %vm805, %v4634, %v4636
  %v4638 = vrot.slane %v4075, 2
  %v4639 = vrot.slane %v4076, 2
  %v4640 = vsel %vm805, %v4638, %v4639
  %v4641 = vrot.slane %v4077, 2
  %v4642 = vsel %vm805, %v4639, %v4641
  %v4643 = vrot.slane %v4078, 2
  %v4644 = vrot.slane %v4079, 2
  %v4645 = vsel %vm805, %v4643, %v4644
  %v4646 = vrot.slane %v4080, 2
  %v4647 = vsel %vm805, %v4644, %v4646
  %v4648 = vrot.slane %v4081, 2
  %v4649 = vrot.slane %v4082, 2
  %v4650 = vsel %vm805, %v4648, %v4649
  %v4651 = vrot.slane %v4083, 2
  %v4652 = vsel %vm805, %v4649, %v4651
  %v4653 = vrot.slane %v4084, 2
  %v4654 = vrot.slane %v4085, 2
  %v4655 = vsel %vm805, %v4653, %v4654
  %v4656 = vrot.slane %v4086, 2
  %v4657 = vsel %vm805, %v4654, %v4656
  %v4658 = vrot.slane %v4087, 2
  %v4659 = vrot.slane %v4088, 2
  %v4660 = vsel %vm805, %v4658, %v4659
  %v4661 = vrot.slane %v4089, 2
  %v4662 = vsel %vm805, %v4659, %v4661
  %v4663 = vrot.slane %v4090, 2
  %v4664 = vrot.slane %v4091, 2
  %v4665 = vsel %vm805, %v4663, %v4664
  %v4666 = vrot.slane %v4092, 2
  %v4667 = vsel %vm805, %v4664, %v4666
  %v4668 = vrot.slane %v4093, 2
  %v4669 = vrot.slane %v4094, 2
  %v4670 = vsel %vm805, %v4668, %v4669
  %v4671 = vrot.slane %v4095, 2
  %v4672 = vsel %vm805, %v4669, %v4671
  %v4673 = vrot.slane %v4096, 2
  %v4674 = vrot.slane %v4097, 2
  %v4675 = vsel %vm805, %v4673, %v4674
  %v4676 = vrot.slane %v4098, 2
  %v4677 = vsel %vm805, %v4674, %v4676
  %v4678 = vrot.slane %v4099, 2
  %v4679 = vrot.slane %v4100, 2
  %v4680 = vsel %vm805, %v4678, %v4679
  %v4681 = vrot.slane %v4101, 2
  %v4682 = vsel %vm805, %v4679, %v4681
  %v4683 = vrot.slane %v4102, 2
  %v4684 = vrot.slane %v4103, 2
  %v4685 = vsel %vm805, %v4683, %v4684
  %v4686 = vrot.slane %v4104, 2
  %v4687 = vsel %vm805, %v4684, %v4686
  %v4688 = vrot.slane %v4105, 2
  %v4689 = vrot.slane %v4106, 2
  %v4690 = vsel %vm805, %v4688, %v4689
  %v4691 = vrot.slane %v4107, 2
  %v4692 = vsel %vm805, %v4689, %v4691
  %v4693 = vrot.slane %v4108, 2
  %v4694 = vrot.slane %v4109, 2
  %v4695 = vsel %vm805, %v4693, %v4694
  %v4696 = vrot.slane %v4110, 2
  %v4697 = vsel %vm805, %v4694, %v4696
  %v4698 = vrot.slane %v4111, 2
  %v4699 = vrot.slane %v4112, 2
  %v4700 = vsel %vm805, %v4698, %v4699
  %v4701 = vrot.slane %v4113, 2
  %v4702 = vsel %vm805, %v4699, %v4701
  %v4703 = vrot.slane %v4114, 2
  %v4704 = vrot.slane %v4115, 2
  %v4705 = vsel %vm805, %v4703, %v4704
  %v4706 = vrot.slane %v4116, 2
  %v4707 = vsel %vm805, %v4704, %v4706
  %v4708 = vrot.slane %v4117, 2
  %v4709 = vrot.slane %v4118, 2
  %v4710 = vsel %vm805, %v4708, %v4709
  %v4711 = vrot.slane %v4119, 2
  %v4712 = vsel %vm805, %v4709, %v4711
  %v4713 = vrot.slane %v4126, 2
  %v4714 = vrot.slane %v4127, 2
  %v4715 = vsel %vm805, %v4713, %v4714
  %v4716 = vrot.slane %v4128, 2
  %v4717 = vsel %vm805, %v4714, %v4716
  %v4718 = vrot.slane %v4129, 2
  %v4719 = vrot.slane %v4130, 2
  %v4720 = vsel %vm805, %v4718, %v4719
  %v4721 = vrot.slane %v4131, 2
  %v4722 = vsel %vm805, %v4719, %v4721
  %v4723 = vrot.slane %v4132, 2
  %v4724 = vrot.slane %v4133, 2
  %v4725 = vsel %vm805, %v4723, %v4724
  %v4726 = vrot.slane %v4134, 2
  %v4727 = vsel %vm805, %v4724, %v4726
  %v4728 = vrot.slane %v4135, 2
  %v4729 = vrot.slane %v4136, 2
  %v4730 = vsel %vm805, %v4728, %v4729
  %v4731 = vrot.slane %v4137, 2
  %v4732 = vsel %vm805, %v4729, %v4731
  %v4733 = vrot.slane %v4138, 2
  %v4734 = vrot.slane %v4139, 2
  %v4735 = vsel %vm805, %v4733, %v4734
  %v4736 = vrot.slane %v4140, 2
  %v4737 = vsel %vm805, %v4734, %v4736
  %v4738 = vrot.slane %v4141, 2
  %v4739 = vrot.slane %v4142, 2
  %v4740 = vsel %vm805, %v4738, %v4739
  %v4741 = vrot.slane %v4143, 2
  %v4742 = vsel %vm805, %v4739, %v4741
  %v4743 = vrot.slane %v4144, 2
  %v4744 = vrot.slane %v4145, 2
  %v4745 = vsel %vm805, %v4743, %v4744
  %v4746 = vrot.slane %v4146, 2
  %v4747 = vsel %vm805, %v4744, %v4746
  %v4748 = vrot.slane %v4147, 2
  %v4749 = vrot.slane %v4148, 2
  %v4750 = vsel %vm805, %v4748, %v4749
  %v4751 = vrot.slane %v4149, 2
  %v4752 = vsel %vm805, %v4749, %v4751
  %v4753 = vrot.slane %v4150, 2
  %v4754 = vrot.slane %v4151, 2
  %v4755 = vsel %vm805, %v4753, %v4754
  %v4756 = vrot.slane %v4152, 2
  %v4757 = vsel %vm805, %v4754, %v4756
  %v4758 = vrot.slane %v4153, 2
  %v4759 = vrot.slane %v4154, 2
  %v4760 = vsel %vm805, %v4758, %v4759
  %v4761 = vrot.slane %v4155, 2
  %v4762 = vsel %vm805, %v4759, %v4761
  %v4763 = vrot.slane %v4156, 2
  %v4764 = vrot.slane %v4157, 2
  %v4765 = vsel %vm805, %v4763, %v4764
  %v4766 = vrot.slane %v4158, 2
  %v4767 = vsel %vm805, %v4764, %v4766
  %v4768 = vrot.slane %v4159, 2
  %v4769 = vrot.slane %v4160, 2
  %v4770 = vsel %vm805, %v4768, %v4769
  %v4771 = vrot.slane %v4161, 2
  %v4772 = vsel %vm805, %v4769, %v4771
  %v4773 = vrot.slane %v4162, 2
  %v4774 = vrot.slane %v4163, 2
  %v4775 = vsel %vm805, %v4773, %v4774
  %v4776 = vrot.slane %v4164, 2
  %v4777 = vsel %vm805, %v4774, %v4776
  %v4778 = vrot.slane %v4165, 2
  %v4779 = vrot.slane %v4166, 2
  %v4780 = vsel %vm805, %v4778, %v4779
  %v4781 = vrot.slane %v4167, 2
  %v4782 = vsel %vm805, %v4779, %v4781
  %v4783 = vrot.slane %v4168, 2
  %v4784 = vrot.slane %v4169, 2
  %v4785 = vsel %vm805, %v4783, %v4784
  %v4786 = vrot.slane %v4170, 2
  %v4787 = vsel %vm805, %v4784, %v4786
  %v4788 = vrot.slane %v4171, 2
  %v4789 = vrot.slane %v4172, 2
  %v4790 = vsel %vm805, %v4788, %v4789
  %v4791 = vrot.slane %v4173, 2
  %v4792 = vsel %vm805, %v4789, %v4791
  %4793 = vrot.lane.b32.xlu0 %v4635, 8
  %v4794 = vpop.permute.xlu0 %4793
  %4795 = vrot.lane.b32.xlu0 %v4637, 8
  %v4796 = vpop.permute.xlu0 %4795
  %4797 = vrot.lane.b32.xlu0 %v4640, 8
  %v4798 = vpop.permute.xlu0 %4797
  %4799 = vrot.lane.b32.xlu0 %v4642, 8
  %v4800 = vpop.permute.xlu0 %4799
  %4801 = vrot.lane.b32.xlu0 %v4645, 8
  %v4802 = vpop.permute.xlu0 %4801
  %4803 = vrot.lane.b32.xlu0 %v4647, 8
  %v4804 = vpop.permute.xlu0 %4803
  %4805 = vrot.lane.b32.xlu0 %v4650, 8
  %v4806 = vpop.permute.xlu0 %4805
  %4807 = vrot.lane.b32.xlu0 %v4652, 8
  %v4808 = vpop.permute.xlu0 %4807
  %4809 = vrot.lane.b32.xlu0 %v4655, 8
  %v4810 = vpop.permute.xlu0 %4809
  %4811 = vrot.lane.b32.xlu0 %v4657, 8
  %v4812 = vpop.permute.xlu0 %4811
  %4813 = vrot.lane.b32.xlu0 %v4660, 8
  %v4814 = vpop.permute.xlu0 %4813
  %4815 = vrot.lane.b32.xlu0 %v4662, 8
  %v4816 = vpop.permute.xlu0 %4815
  %4817 = vrot.lane.b32.xlu0 %v4665, 8
  %v4818 = vpop.permute.xlu0 %4817
  %4819 = vrot.lane.b32.xlu0 %v4667, 8
  %v4820 = vpop.permute.xlu0 %4819
  %4821 = vrot.lane.b32.xlu0 %v4670, 8
  %v4822 = vpop.permute.xlu0 %4821
  %4823 = vrot.lane.b32.xlu0 %v4672, 8
  %v4824 = vpop.permute.xlu0 %4823
  %4825 = vrot.lane.b32.xlu0 %v4675, 8
  %v4826 = vpop.permute.xlu0 %4825
  %4827 = vrot.lane.b32.xlu0 %v4677, 8
  %v4828 = vpop.permute.xlu0 %4827
  %4829 = vrot.lane.b32.xlu0 %v4680, 8
  %v4830 = vpop.permute.xlu0 %4829
  %4831 = vrot.lane.b32.xlu0 %v4682, 8
  %v4832 = vpop.permute.xlu0 %4831
  %4833 = vrot.lane.b32.xlu0 %v4685, 8
  %v4834 = vpop.permute.xlu0 %4833
  %4835 = vrot.lane.b32.xlu0 %v4687, 8
  %v4836 = vpop.permute.xlu0 %4835
  %4837 = vrot.lane.b32.xlu0 %v4690, 8
  %v4838 = vpop.permute.xlu0 %4837
  %4839 = vrot.lane.b32.xlu0 %v4692, 8
  %v4840 = vpop.permute.xlu0 %4839
  %4841 = vrot.lane.b32.xlu0 %v4695, 8
  %v4842 = vpop.permute.xlu0 %4841
  %4843 = vrot.lane.b32.xlu0 %v4697, 8
  %v4844 = vpop.permute.xlu0 %4843
  %4845 = vrot.lane.b32.xlu0 %v4700, 8
  %v4846 = vpop.permute.xlu0 %4845
  %4847 = vrot.lane.b32.xlu0 %v4702, 8
  %v4848 = vpop.permute.xlu0 %4847
  %4849 = vrot.lane.b32.xlu0 %v4705, 8
  %v4850 = vpop.permute.xlu0 %4849
  %4851 = vrot.lane.b32.xlu0 %v4707, 8
  %v4852 = vpop.permute.xlu0 %4851
  %4853 = vrot.lane.b32.xlu0 %v4710, 8
  %v4854 = vpop.permute.xlu0 %4853
  %4855 = vrot.lane.b32.xlu0 %v4712, 8
  %v4856 = vpop.permute.xlu0 %4855
  %4857 = vrot.lane.b32.xlu0 %v4715, 8
  %v4858 = vpop.permute.xlu0 %4857
  %4859 = vrot.lane.b32.xlu0 %v4717, 8
  %v4860 = vpop.permute.xlu0 %4859
  %4861 = vrot.lane.b32.xlu0 %v4720, 8
  %v4862 = vpop.permute.xlu0 %4861
  %4863 = vrot.lane.b32.xlu0 %v4722, 8
  %v4864 = vpop.permute.xlu0 %4863
  %4865 = vrot.lane.b32.xlu0 %v4725, 8
  %v4866 = vpop.permute.xlu0 %4865
  %4867 = vrot.lane.b32.xlu0 %v4727, 8
  %v4868 = vpop.permute.xlu0 %4867
  %4869 = vrot.lane.b32.xlu0 %v4730, 8
  %v4870 = vpop.permute.xlu0 %4869
  %4871 = vrot.lane.b32.xlu0 %v4732, 8
  %v4872 = vpop.permute.xlu0 %4871
  %4873 = vrot.lane.b32.xlu0 %v4735, 8
  %v4874 = vpop.permute.xlu0 %4873
  %4875 = vrot.lane.b32.xlu0 %v4737, 8
  %v4876 = vpop.permute.xlu0 %4875
  %4877 = vrot.lane.b32.xlu0 %v4740, 8
  %v4878 = vpop.permute.xlu0 %4877
  %4879 = vrot.lane.b32.xlu0 %v4742, 8
  %v4880 = vpop.permute.xlu0 %4879
  %4881 = vrot.lane.b32.xlu0 %v4745, 8
  %v4882 = vpop.permute.xlu0 %4881
  %4883 = vrot.lane.b32.xlu0 %v4747, 8
  %v4884 = vpop.permute.xlu0 %4883
  %4885 = vrot.lane.b32.xlu0 %v4750, 8
  %v4886 = vpop.permute.xlu0 %4885
  %4887 = vrot.lane.b32.xlu0 %v4752, 8
  %v4888 = vpop.permute.xlu0 %4887
  %4889 = vrot.lane.b32.xlu0 %v4755, 8
  %v4890 = vpop.permute.xlu0 %4889
  %4891 = vrot.lane.b32.xlu0 %v4757, 8
  %v4892 = vpop.permute.xlu0 %4891
  %4893 = vrot.lane.b32.xlu0 %v4760, 8
  %v4894 = vpop.permute.xlu0 %4893
  %4895 = vrot.lane.b32.xlu0 %v4762, 8
  %v4896 = vpop.permute.xlu0 %4895
  %4897 = vrot.lane.b32.xlu0 %v4765, 8
  %v4898 = vpop.permute.xlu0 %4897
  %4899 = vrot.lane.b32.xlu0 %v4767, 8
  %v4900 = vpop.permute.xlu0 %4899
  %4901 = vrot.lane.b32.xlu0 %v4770, 8
  %v4902 = vpop.permute.xlu0 %4901
  %4903 = vrot.lane.b32.xlu0 %v4772, 8
  %v4904 = vpop.permute.xlu0 %4903
  %4905 = vrot.lane.b32.xlu0 %v4775, 8
  %v4906 = vpop.permute.xlu0 %4905
  %4907 = vrot.lane.b32.xlu0 %v4777, 8
  %v4908 = vpop.permute.xlu0 %4907
  %4909 = vrot.lane.b32.xlu0 %v4780, 8
  %v4910 = vpop.permute.xlu0 %4909
  %4911 = vrot.lane.b32.xlu0 %v4782, 8
  %v4912 = vpop.permute.xlu0 %4911
  %4913 = vrot.lane.b32.xlu0 %v4785, 8
  %v4914 = vpop.permute.xlu0 %4913
  %4915 = vrot.lane.b32.xlu0 %v4787, 8
  %v4916 = vpop.permute.xlu0 %4915
  %4917 = vrot.lane.b32.xlu0 %v4790, 8
  %v4918 = vpop.permute.xlu0 %4917
  %4919 = vrot.lane.b32.xlu0 %v4792, 8
  %v4920 = vpop.permute.xlu0 %4919
  %4989 = vrot.lane.b32.xlu0 %v4075, 12
  %v4990 = vpop.permute.xlu0 %4989
  %4991 = vrot.lane.b32.xlu0 %v4076, 12
  %v4992 = vpop.permute.xlu0 %4991
  %4993 = vrot.lane.b32.xlu0 %v4078, 12
  %v4994 = vpop.permute.xlu0 %4993
  %4995 = vrot.lane.b32.xlu0 %v4079, 12
  %v4996 = vpop.permute.xlu0 %4995
  %4997 = vrot.lane.b32.xlu0 %v4081, 12
  %v4998 = vpop.permute.xlu0 %4997
  %4999 = vrot.lane.b32.xlu0 %v4082, 12
  %v5000 = vpop.permute.xlu0 %4999
  %5001 = vrot.lane.b32.xlu0 %v4084, 12
  %v5002 = vpop.permute.xlu0 %5001
  %5003 = vrot.lane.b32.xlu0 %v4085, 12
  %v5004 = vpop.permute.xlu0 %5003
  %5005 = vrot.lane.b32.xlu0 %v4087, 12
  %v5006 = vpop.permute.xlu0 %5005
  %5007 = vrot.lane.b32.xlu0 %v4088, 12
  %v5008 = vpop.permute.xlu0 %5007
  %5009 = vrot.lane.b32.xlu0 %v4090, 12
  %v5010 = vpop.permute.xlu0 %5009
  %5011 = vrot.lane.b32.xlu0 %v4091, 12
  %v5012 = vpop.permute.xlu0 %5011
  %5013 = vrot.lane.b32.xlu0 %v4093, 12
  %v5014 = vpop.permute.xlu0 %5013
  %5015 = vrot.lane.b32.xlu0 %v4094, 12
  %v5016 = vpop.permute.xlu0 %5015
  %5017 = vrot.lane.b32.xlu0 %v4096, 12
  %v5018 = vpop.permute.xlu0 %5017
  %5019 = vrot.lane.b32.xlu0 %v4097, 12
  %v5020 = vpop.permute.xlu0 %5019
  %5021 = vrot.lane.b32.xlu0 %v4099, 12
  %v5022 = vpop.permute.xlu0 %5021
  %5023 = vrot.lane.b32.xlu0 %v4100, 12
  %v5024 = vpop.permute.xlu0 %5023
  %5025 = vrot.lane.b32.xlu0 %v4102, 12
  %v5026 = vpop.permute.xlu0 %5025
  %5027 = vrot.lane.b32.xlu0 %v4103, 12
  %v5028 = vpop.permute.xlu0 %5027
  %5029 = vrot.lane.b32.xlu0 %v4105, 12
  %v5030 = vpop.permute.xlu0 %5029
  %5031 = vrot.lane.b32.xlu0 %v4106, 12
  %v5032 = vpop.permute.xlu0 %5031
  %5033 = vrot.lane.b32.xlu0 %v4108, 12
  %v5034 = vpop.permute.xlu0 %5033
  %5035 = vrot.lane.b32.xlu0 %v4109, 12
  %v5036 = vpop.permute.xlu0 %5035
  %5037 = vrot.lane.b32.xlu0 %v4111, 12
  %v5038 = vpop.permute.xlu0 %5037
  %5039 = vrot.lane.b32.xlu0 %v4112, 12
  %v5040 = vpop.permute.xlu0 %5039
  %5041 = vrot.lane.b32.xlu0 %v4114, 12
  %v5042 = vpop.permute.xlu0 %5041
  %5043 = vrot.lane.b32.xlu0 %v4115, 12
  %v5044 = vpop.permute.xlu0 %5043
  %5045 = vrot.lane.b32.xlu0 %v4117, 12
  %v5046 = vpop.permute.xlu0 %5045
  %5047 = vrot.lane.b32.xlu0 %v4118, 12
  %v5048 = vpop.permute.xlu0 %5047
  %5049 = vrot.lane.b32.xlu0 %v4120, 12
  %v5050 = vpop.permute.xlu0 %5049
  %5051 = vrot.lane.b32.xlu0 %v4121, 12
  %v5052 = vpop.permute.xlu0 %5051
  %5053 = vrot.lane.b32.xlu0 %v4129, 12
  %v5054 = vpop.permute.xlu0 %5053
  %5055 = vrot.lane.b32.xlu0 %v4130, 12
  %v5056 = vpop.permute.xlu0 %5055
  %5057 = vrot.lane.b32.xlu0 %v4132, 12
  %v5058 = vpop.permute.xlu0 %5057
  %5059 = vrot.lane.b32.xlu0 %v4133, 12
  %v5060 = vpop.permute.xlu0 %5059
  %5061 = vrot.lane.b32.xlu0 %v4135, 12
  %v5062 = vpop.permute.xlu0 %5061
  %5063 = vrot.lane.b32.xlu0 %v4136, 12
  %v5064 = vpop.permute.xlu0 %5063
  %5065 = vrot.lane.b32.xlu0 %v4138, 12
  %v5066 = vpop.permute.xlu0 %5065
  %5067 = vrot.lane.b32.xlu0 %v4139, 12
  %v5068 = vpop.permute.xlu0 %5067
  %5069 = vrot.lane.b32.xlu0 %v4141, 12
  %v5070 = vpop.permute.xlu0 %5069
  %5071 = vrot.lane.b32.xlu0 %v4142, 12
  %v5072 = vpop.permute.xlu0 %5071
  %5073 = vrot.lane.b32.xlu0 %v4144, 12
  %v5074 = vpop.permute.xlu0 %5073
  %5075 = vrot.lane.b32.xlu0 %v4145, 12
  %v5076 = vpop.permute.xlu0 %5075
  %5077 = vrot.lane.b32.xlu0 %v4147, 12
  %v5078 = vpop.permute.xlu0 %5077
  %5079 = vrot.lane.b32.xlu0 %v4148, 12
  %v5080 = vpop.permute.xlu0 %5079
  %5081 = vrot.lane.b32.xlu0 %v4150, 12
  %v5082 = vpop.permute.xlu0 %5081
  %5083 = vrot.lane.b32.xlu0 %v4151, 12
  %v5084 = vpop.permute.xlu0 %5083
  %5085 = vrot.lane.b32.xlu0 %v4153, 12
  %v5086 = vpop.permute.xlu0 %5085
  %5087 = vrot.lane.b32.xlu0 %v4154, 12
  %v5088 = vpop.permute.xlu0 %5087
  %5089 = vrot.lane.b32.xlu0 %v4156, 12
  %v5090 = vpop.permute.xlu0 %5089
  %5091 = vrot.lane.b32.xlu0 %v4157, 12
  %v5092 = vpop.permute.xlu0 %5091
  %5093 = vrot.lane.b32.xlu0 %v4159, 12
  %v5094 = vpop.permute.xlu0 %5093
  %5095 = vrot.lane.b32.xlu0 %v4160, 12
  %v5096 = vpop.permute.xlu0 %5095
  %5097 = vrot.lane.b32.xlu0 %v4162, 12
  %v5098 = vpop.permute.xlu0 %5097
  %5099 = vrot.lane.b32.xlu0 %v4163, 12
  %v5100 = vpop.permute.xlu0 %5099
  %5101 = vrot.lane.b32.xlu0 %v4165, 12
  %v5102 = vpop.permute.xlu0 %5101
  %5103 = vrot.lane.b32.xlu0 %v4166, 12
  %v5104 = vpop.permute.xlu0 %5103
  %5105 = vrot.lane.b32.xlu0 %v4168, 12
  %v5106 = vpop.permute.xlu0 %5105
  %5107 = vrot.lane.b32.xlu0 %v4169, 12
  %v5108 = vpop.permute.xlu0 %5107
  %5109 = vrot.lane.b32.xlu0 %v4171, 12
  %v5110 = vpop.permute.xlu0 %5109
  %5111 = vrot.lane.b32.xlu0 %v4172, 12
  %v5112 = vpop.permute.xlu0 %5111
  %5113 = vrot.lane.b32.xlu0 %v4174, 12
  %v5114 = vpop.permute.xlu0 %5113
  %5115 = vrot.lane.b32.xlu0 %v4175, 12
  %v5116 = vpop.permute.xlu0 %5115
  %v5183 = vrot.slane %v4120, 1
  %v5184 = vrot.slane %v4121, 1
  %v5185 = vsel %vm452, %v5183, %v5184
  %v5186 = vrot.slane %v4122, 1
  %v5187 = vsel %vm452, %v5184, %v5186
  %v5188 = vrot.slane %v4174, 1
  %v5189 = vrot.slane %v4175, 1
  %v5190 = vsel %vm452, %v5188, %v5189
  %v5191 = vrot.slane %v4176, 1
  %v5192 = vsel %vm452, %v5189, %v5191
  %5193 = vrot.lane.b32.xlu0 %v4288, 16
  %v5194 = vpop.permute.xlu0 %5193
  %5195 = vrot.lane.b32.xlu0 %v4290, 16
  %v5196 = vpop.permute.xlu0 %5195
  %5197 = vrot.lane.b32.xlu0 %v4293, 16
  %v5198 = vpop.permute.xlu0 %5197
  %5199 = vrot.lane.b32.xlu0 %v4295, 16
  %v5200 = vpop.permute.xlu0 %5199
  %5201 = vrot.lane.b32.xlu0 %v4298, 16
  %v5202 = vpop.permute.xlu0 %5201
  %5203 = vrot.lane.b32.xlu0 %v4300, 16
  %v5204 = vpop.permute.xlu0 %5203
  %5205 = vrot.lane.b32.xlu0 %v4303, 16
  %v5206 = vpop.permute.xlu0 %5205
  %5207 = vrot.lane.b32.xlu0 %v4305, 16
  %v5208 = vpop.permute.xlu0 %5207
  %5209 = vrot.lane.b32.xlu0 %v4308, 16
  %v5210 = vpop.permute.xlu0 %5209
  %5211 = vrot.lane.b32.xlu0 %v4310, 16
  %v5212 = vpop.permute.xlu0 %5211
  %5213 = vrot.lane.b32.xlu0 %v4313, 16
  %v5214 = vpop.permute.xlu0 %5213
  %5215 = vrot.lane.b32.xlu0 %v4315, 16
  %v5216 = vpop.permute.xlu0 %5215
  %5217 = vrot.lane.b32.xlu0 %v4318, 16
  %v5218 = vpop.permute.xlu0 %5217
  %5219 = vrot.lane.b32.xlu0 %v4320, 16
  %v5220 = vpop.permute.xlu0 %5219
  %5221 = vrot.lane.b32.xlu0 %v4323, 16
  %v5222 = vpop.permute.xlu0 %5221
  %5223 = vrot.lane.b32.xlu0 %v4325, 16
  %v5224 = vpop.permute.xlu0 %5223
  %5225 = vrot.lane.b32.xlu0 %v4328, 16
  %v5226 = vpop.permute.xlu0 %5225
  %5227 = vrot.lane.b32.xlu0 %v4330, 16
  %v5228 = vpop.permute.xlu0 %5227
  %5229 = vrot.lane.b32.xlu0 %v4333, 16
  %v5230 = vpop.permute.xlu0 %5229
  %5231 = vrot.lane.b32.xlu0 %v4335, 16
  %v5232 = vpop.permute.xlu0 %5231
  %5233 = vrot.lane.b32.xlu0 %v4338, 16
  %v5234 = vpop.permute.xlu0 %5233
  %5235 = vrot.lane.b32.xlu0 %v4340, 16
  %v5236 = vpop.permute.xlu0 %5235
  %5237 = vrot.lane.b32.xlu0 %v4343, 16
  %v5238 = vpop.permute.xlu0 %5237
  %5239 = vrot.lane.b32.xlu0 %v4345, 16
  %v5240 = vpop.permute.xlu0 %5239
  %5241 = vrot.lane.b32.xlu0 %v4348, 16
  %v5242 = vpop.permute.xlu0 %5241
  %5243 = vrot.lane.b32.xlu0 %v4350, 16
  %v5244 = vpop.permute.xlu0 %5243
  %5245 = vrot.lane.b32.xlu0 %v4353, 16
  %v5246 = vpop.permute.xlu0 %5245
  %5247 = vrot.lane.b32.xlu0 %v4355, 16
  %v5248 = vpop.permute.xlu0 %5247
  %5249 = vrot.lane.b32.xlu0 %v4358, 16
  %v5250 = vpop.permute.xlu0 %5249
  %5251 = vrot.lane.b32.xlu0 %v4360, 16
  %v5252 = vpop.permute.xlu0 %5251
  %5253 = vrot.lane.b32.xlu0 %v5185, 16
  %v5254 = vpop.permute.xlu0 %5253
  %5255 = vrot.lane.b32.xlu0 %v5187, 16
  %v5256 = vpop.permute.xlu0 %5255
  %5257 = vrot.lane.b32.xlu0 %v4368, 16
  %v5258 = vpop.permute.xlu0 %5257
  %5259 = vrot.lane.b32.xlu0 %v4370, 16
  %v5260 = vpop.permute.xlu0 %5259
  %5261 = vrot.lane.b32.xlu0 %v4373, 16
  %v5262 = vpop.permute.xlu0 %5261
  %5263 = vrot.lane.b32.xlu0 %v4375, 16
  %v5264 = vpop.permute.xlu0 %5263
  %5265 = vrot.lane.b32.xlu0 %v4378, 16
  %v5266 = vpop.permute.xlu0 %5265
  %5267 = vrot.lane.b32.xlu0 %v4380, 16
  %v5268 = vpop.permute.xlu0 %5267
  %5269 = vrot.lane.b32.xlu0 %v4383, 16
  %v5270 = vpop.permute.xlu0 %5269
  %5271 = vrot.lane.b32.xlu0 %v4385, 16
  %v5272 = vpop.permute.xlu0 %5271
  %5273 = vrot.lane.b32.xlu0 %v4388, 16
  %v5274 = vpop.permute.xlu0 %5273
  %5275 = vrot.lane.b32.xlu0 %v4390, 16
  %v5276 = vpop.permute.xlu0 %5275
  %5277 = vrot.lane.b32.xlu0 %v4393, 16
  %v5278 = vpop.permute.xlu0 %5277
  %5279 = vrot.lane.b32.xlu0 %v4395, 16
  %v5280 = vpop.permute.xlu0 %5279
  %5281 = vrot.lane.b32.xlu0 %v4398, 16
  %v5282 = vpop.permute.xlu0 %5281
  %5283 = vrot.lane.b32.xlu0 %v4400, 16
  %v5284 = vpop.permute.xlu0 %5283
  %5285 = vrot.lane.b32.xlu0 %v4403, 16
  %v5286 = vpop.permute.xlu0 %5285
  %5287 = vrot.lane.b32.xlu0 %v4405, 16
  %v5288 = vpop.permute.xlu0 %5287
  %5289 = vrot.lane.b32.xlu0 %v4408, 16
  %v5290 = vpop.permute.xlu0 %5289
  %5291 = vrot.lane.b32.xlu0 %v4410, 16
  %v5292 = vpop.permute.xlu0 %5291
  %5293 = vrot.lane.b32.xlu0 %v4413, 16
  %v5294 = vpop.permute.xlu0 %5293
  %5295 = vrot.lane.b32.xlu0 %v4415, 16
  %v5296 = vpop.permute.xlu0 %5295
  %5297 = vrot.lane.b32.xlu0 %v4418, 16
  %v5298 = vpop.permute.xlu0 %5297
  %5299 = vrot.lane.b32.xlu0 %v4420, 16
  %v5300 = vpop.permute.xlu0 %5299
  %5301 = vrot.lane.b32.xlu0 %v4423, 16
  %v5302 = vpop.permute.xlu0 %5301
  %5303 = vrot.lane.b32.xlu0 %v4425, 16
  %v5304 = vpop.permute.xlu0 %5303
  %5305 = vrot.lane.b32.xlu0 %v4428, 16
  %v5306 = vpop.permute.xlu0 %5305
  %5307 = vrot.lane.b32.xlu0 %v4430, 16
  %v5308 = vpop.permute.xlu0 %5307
  %5309 = vrot.lane.b32.xlu0 %v4433, 16
  %v5310 = vpop.permute.xlu0 %5309
  %5311 = vrot.lane.b32.xlu0 %v4435, 16
  %v5312 = vpop.permute.xlu0 %5311
  %5313 = vrot.lane.b32.xlu0 %v4438, 16
  %v5314 = vpop.permute.xlu0 %5313
  %5315 = vrot.lane.b32.xlu0 %v4440, 16
  %v5316 = vpop.permute.xlu0 %5315
  %5317 = vrot.lane.b32.xlu0 %v5190, 16
  %v5318 = vpop.permute.xlu0 %5317
  %5319 = vrot.lane.b32.xlu0 %v5192, 16
  %v5320 = vpop.permute.xlu0 %5319
  %v5385 = vrot.slane %v4120, 2
  %v5386 = vrot.slane %v4121, 2
  %v5387 = vsel %vm805, %v5385, %v5386
  %v5388 = vrot.slane %v4122, 2
  %v5389 = vsel %vm805, %v5386, %v5388
  %v5390 = vrot.slane %v4174, 2
  %v5391 = vrot.slane %v4175, 2
  %v5392 = vsel %vm805, %v5390, %v5391
  %v5393 = vrot.slane %v4176, 2
  %v5394 = vsel %vm805, %v5391, %v5393
  %5395 = vrot.lane.b32.xlu0 %v4640, 20
  %v5396 = vpop.permute.xlu0 %5395
  %5397 = vrot.lane.b32.xlu0 %v4642, 20
  %v5398 = vpop.permute.xlu0 %5397
  %5399 = vrot.lane.b32.xlu0 %v4645, 20
  %v5400 = vpop.permute.xlu0 %5399
  %5401 = vrot.lane.b32.xlu0 %v4647, 20
  %v5402 = vpop.permute.xlu0 %5401
  %5403 = vrot.lane.b32.xlu0 %v4650, 20
  %v5404 = vpop.permute.xlu0 %5403
  %5405 = vrot.lane.b32.xlu0 %v4652, 20
  %v5406 = vpop.permute.xlu0 %5405
  %5407 = vrot.lane.b32.xlu0 %v4655, 20
  %v5408 = vpop.permute.xlu0 %5407
  %5409 = vrot.lane.b32.xlu0 %v4657, 20
  %v5410 = vpop.permute.xlu0 %5409
  %5411 = vrot.lane.b32.xlu0 %v4660, 20
  %v5412 = vpop.permute.xlu0 %5411
  %5413 = vrot.lane.b32.xlu0 %v4662, 20
  %v5414 = vpop.permute.xlu0 %5413
  %5415 = vrot.lane.b32.xlu0 %v4665, 20
  %v5416 = vpop.permute.xlu0 %5415
  %5417 = vrot.lane.b32.xlu0 %v4667, 20
  %v5418 = vpop.permute.xlu0 %5417
  %5419 = vrot.lane.b32.xlu0 %v4670, 20
  %v5420 = vpop.permute.xlu0 %5419
  %5421 = vrot.lane.b32.xlu0 %v4672, 20
  %v5422 = vpop.permute.xlu0 %5421
  %5423 = vrot.lane.b32.xlu0 %v4675, 20
  %v5424 = vpop.permute.xlu0 %5423
  %5425 = vrot.lane.b32.xlu0 %v4677, 20
  %v5426 = vpop.permute.xlu0 %5425
  %5427 = vrot.lane.b32.xlu0 %v4680, 20
  %v5428 = vpop.permute.xlu0 %5427
  %5429 = vrot.lane.b32.xlu0 %v4682, 20
  %v5430 = vpop.permute.xlu0 %5429
  %5431 = vrot.lane.b32.xlu0 %v4685, 20
  %v5432 = vpop.permute.xlu0 %5431
  %5433 = vrot.lane.b32.xlu0 %v4687, 20
  %v5434 = vpop.permute.xlu0 %5433
  %5435 = vrot.lane.b32.xlu0 %v4690, 20
  %v5436 = vpop.permute.xlu0 %5435
  %5437 = vrot.lane.b32.xlu0 %v4692, 20
  %v5438 = vpop.permute.xlu0 %5437
  %5439 = vrot.lane.b32.xlu0 %v4695, 20
  %v5440 = vpop.permute.xlu0 %5439
  %5441 = vrot.lane.b32.xlu0 %v4697, 20
  %v5442 = vpop.permute.xlu0 %5441
  %5443 = vrot.lane.b32.xlu0 %v4700, 20
  %v5444 = vpop.permute.xlu0 %5443
  %5445 = vrot.lane.b32.xlu0 %v4702, 20
  %v5446 = vpop.permute.xlu0 %5445
  %5447 = vrot.lane.b32.xlu0 %v4705, 20
  %v5448 = vpop.permute.xlu0 %5447
  %5449 = vrot.lane.b32.xlu0 %v4707, 20
  %v5450 = vpop.permute.xlu0 %5449
  %5451 = vrot.lane.b32.xlu0 %v4710, 20
  %v5452 = vpop.permute.xlu0 %5451
  %5453 = vrot.lane.b32.xlu0 %v4712, 20
  %v5454 = vpop.permute.xlu0 %5453
  %5455 = vrot.lane.b32.xlu0 %v5387, 20
  %v5456 = vpop.permute.xlu0 %5455
  %5457 = vrot.lane.b32.xlu0 %v5389, 20
  %v5458 = vpop.permute.xlu0 %5457
  %5459 = vrot.lane.b32.xlu0 %v4720, 20
  %v5460 = vpop.permute.xlu0 %5459
  %5461 = vrot.lane.b32.xlu0 %v4722, 20
  %v5462 = vpop.permute.xlu0 %5461
  %5463 = vrot.lane.b32.xlu0 %v4725, 20
  %v5464 = vpop.permute.xlu0 %5463
  %5465 = vrot.lane.b32.xlu0 %v4727, 20
  %v5466 = vpop.permute.xlu0 %5465
  %5467 = vrot.lane.b32.xlu0 %v4730, 20
  %v5468 = vpop.permute.xlu0 %5467
  %5469 = vrot.lane.b32.xlu0 %v4732, 20
  %v5470 = vpop.permute.xlu0 %5469
  %5471 = vrot.lane.b32.xlu0 %v4735, 20
  %v5472 = vpop.permute.xlu0 %5471
  %5473 = vrot.lane.b32.xlu0 %v4737, 20
  %v5474 = vpop.permute.xlu0 %5473
  %5475 = vrot.lane.b32.xlu0 %v4740, 20
  %v5476 = vpop.permute.xlu0 %5475
  %5477 = vrot.lane.b32.xlu0 %v4742, 20
  %v5478 = vpop.permute.xlu0 %5477
  %5479 = vrot.lane.b32.xlu0 %v4745, 20
  %v5480 = vpop.permute.xlu0 %5479
  %5481 = vrot.lane.b32.xlu0 %v4747, 20
  %v5482 = vpop.permute.xlu0 %5481
  %5483 = vrot.lane.b32.xlu0 %v4750, 20
  %v5484 = vpop.permute.xlu0 %5483
  %5485 = vrot.lane.b32.xlu0 %v4752, 20
  %v5486 = vpop.permute.xlu0 %5485
  %5487 = vrot.lane.b32.xlu0 %v4755, 20
  %v5488 = vpop.permute.xlu0 %5487
  %5489 = vrot.lane.b32.xlu0 %v4757, 20
  %v5490 = vpop.permute.xlu0 %5489
  %5491 = vrot.lane.b32.xlu0 %v4760, 20
  %v5492 = vpop.permute.xlu0 %5491
  %5493 = vrot.lane.b32.xlu0 %v4762, 20
  %v5494 = vpop.permute.xlu0 %5493
  %5495 = vrot.lane.b32.xlu0 %v4765, 20
  %v5496 = vpop.permute.xlu0 %5495
  %5497 = vrot.lane.b32.xlu0 %v4767, 20
  %v5498 = vpop.permute.xlu0 %5497
  %5499 = vrot.lane.b32.xlu0 %v4770, 20
  %v5500 = vpop.permute.xlu0 %5499
  %5501 = vrot.lane.b32.xlu0 %v4772, 20
  %v5502 = vpop.permute.xlu0 %5501
  %5503 = vrot.lane.b32.xlu0 %v4775, 20
  %v5504 = vpop.permute.xlu0 %5503
  %5505 = vrot.lane.b32.xlu0 %v4777, 20
  %v5506 = vpop.permute.xlu0 %5505
  %5507 = vrot.lane.b32.xlu0 %v4780, 20
  %v5508 = vpop.permute.xlu0 %5507
  %5509 = vrot.lane.b32.xlu0 %v4782, 20
  %v5510 = vpop.permute.xlu0 %5509
  %5511 = vrot.lane.b32.xlu0 %v4785, 20
  %v5512 = vpop.permute.xlu0 %5511
  %5513 = vrot.lane.b32.xlu0 %v4787, 20
  %v5514 = vpop.permute.xlu0 %5513
  %5515 = vrot.lane.b32.xlu0 %v4790, 20
  %v5516 = vpop.permute.xlu0 %5515
  %5517 = vrot.lane.b32.xlu0 %v4792, 20
  %v5518 = vpop.permute.xlu0 %5517
  %5519 = vrot.lane.b32.xlu0 %v5392, 20
  %v5520 = vpop.permute.xlu0 %5519
  %5521 = vrot.lane.b32.xlu0 %v5394, 20
  %v5522 = vpop.permute.xlu0 %5521
  %5591 = vrot.lane.b32.xlu0 %v4078, 24
  %v5592 = vpop.permute.xlu0 %5591
  %5593 = vrot.lane.b32.xlu0 %v4079, 24
  %v5594 = vpop.permute.xlu0 %5593
  %5595 = vrot.lane.b32.xlu0 %v4081, 24
  %v5596 = vpop.permute.xlu0 %5595
  %5597 = vrot.lane.b32.xlu0 %v4082, 24
  %v5598 = vpop.permute.xlu0 %5597
  %5599 = vrot.lane.b32.xlu0 %v4084, 24
  %v5600 = vpop.permute.xlu0 %5599
  %5601 = vrot.lane.b32.xlu0 %v4085, 24
  %v5602 = vpop.permute.xlu0 %5601
  %5603 = vrot.lane.b32.xlu0 %v4087, 24
  %v5604 = vpop.permute.xlu0 %5603
  %5605 = vrot.lane.b32.xlu0 %v4088, 24
  %v5606 = vpop.permute.xlu0 %5605
  %5607 = vrot.lane.b32.xlu0 %v4090, 24
  %v5608 = vpop.permute.xlu0 %5607
  %5609 = vrot.lane.b32.xlu0 %v4091, 24
  %v5610 = vpop.permute.xlu0 %5609
  %5611 = vrot.lane.b32.xlu0 %v4093, 24
  %v5612 = vpop.permute.xlu0 %5611
  %5613 = vrot.lane.b32.xlu0 %v4094, 24
  %v5614 = vpop.permute.xlu0 %5613
  %5615 = vrot.lane.b32.xlu0 %v4096, 24
  %v5616 = vpop.permute.xlu0 %5615
  %5617 = vrot.lane.b32.xlu0 %v4097, 24
  %v5618 = vpop.permute.xlu0 %5617
  %5619 = vrot.lane.b32.xlu0 %v4099, 24
  %v5620 = vpop.permute.xlu0 %5619
  %5621 = vrot.lane.b32.xlu0 %v4100, 24
  %v5622 = vpop.permute.xlu0 %5621
  %5623 = vrot.lane.b32.xlu0 %v4102, 24
  %v5624 = vpop.permute.xlu0 %5623
  %5625 = vrot.lane.b32.xlu0 %v4103, 24
  %v5626 = vpop.permute.xlu0 %5625
  %5627 = vrot.lane.b32.xlu0 %v4105, 24
  %v5628 = vpop.permute.xlu0 %5627
  %5629 = vrot.lane.b32.xlu0 %v4106, 24
  %v5630 = vpop.permute.xlu0 %5629
  %5631 = vrot.lane.b32.xlu0 %v4108, 24
  %v5632 = vpop.permute.xlu0 %5631
  %5633 = vrot.lane.b32.xlu0 %v4109, 24
  %v5634 = vpop.permute.xlu0 %5633
  %5635 = vrot.lane.b32.xlu0 %v4111, 24
  %v5636 = vpop.permute.xlu0 %5635
  %5637 = vrot.lane.b32.xlu0 %v4112, 24
  %v5638 = vpop.permute.xlu0 %5637
  %5639 = vrot.lane.b32.xlu0 %v4114, 24
  %v5640 = vpop.permute.xlu0 %5639
  %5641 = vrot.lane.b32.xlu0 %v4115, 24
  %v5642 = vpop.permute.xlu0 %5641
  %5643 = vrot.lane.b32.xlu0 %v4117, 24
  %v5644 = vpop.permute.xlu0 %5643
  %5645 = vrot.lane.b32.xlu0 %v4118, 24
  %v5646 = vpop.permute.xlu0 %5645
  %5647 = vrot.lane.b32.xlu0 %v4120, 24
  %v5648 = vpop.permute.xlu0 %5647
  %5649 = vrot.lane.b32.xlu0 %v4121, 24
  %v5650 = vpop.permute.xlu0 %5649
  %5651 = vrot.lane.b32.xlu0 %v4123, 24
  %v5652 = vpop.permute.xlu0 %5651
  %5653 = vrot.lane.b32.xlu0 %v4124, 24
  %v5654 = vpop.permute.xlu0 %5653
  %5655 = vrot.lane.b32.xlu0 %v4132, 24
  %v5656 = vpop.permute.xlu0 %5655
  %5657 = vrot.lane.b32.xlu0 %v4133, 24
  %v5658 = vpop.permute.xlu0 %5657
  %5659 = vrot.lane.b32.xlu0 %v4135, 24
  %v5660 = vpop.permute.xlu0 %5659
  %5661 = vrot.lane.b32.xlu0 %v4136, 24
  %v5662 = vpop.permute.xlu0 %5661
  %5663 = vrot.lane.b32.xlu0 %v4138, 24
  %v5664 = vpop.permute.xlu0 %5663
  %5665 = vrot.lane.b32.xlu0 %v4139, 24
  %v5666 = vpop.permute.xlu0 %5665
  %5667 = vrot.lane.b32.xlu0 %v4141, 24
  %v5668 = vpop.permute.xlu0 %5667
  %5669 = vrot.lane.b32.xlu0 %v4142, 24
  %v5670 = vpop.permute.xlu0 %5669
  %5671 = vrot.lane.b32.xlu0 %v4144, 24
  %v5672 = vpop.permute.xlu0 %5671
  %5673 = vrot.lane.b32.xlu0 %v4145, 24
  %v5674 = vpop.permute.xlu0 %5673
  %5675 = vrot.lane.b32.xlu0 %v4147, 24
  %v5676 = vpop.permute.xlu0 %5675
  %5677 = vrot.lane.b32.xlu0 %v4148, 24
  %v5678 = vpop.permute.xlu0 %5677
  %5679 = vrot.lane.b32.xlu0 %v4150, 24
  %v5680 = vpop.permute.xlu0 %5679
  %5681 = vrot.lane.b32.xlu0 %v4151, 24
  %v5682 = vpop.permute.xlu0 %5681
  %5683 = vrot.lane.b32.xlu0 %v4153, 24
  %v5684 = vpop.permute.xlu0 %5683
  %5685 = vrot.lane.b32.xlu0 %v4154, 24
  %v5686 = vpop.permute.xlu0 %5685
  %5687 = vrot.lane.b32.xlu0 %v4156, 24
  %v5688 = vpop.permute.xlu0 %5687
  %5689 = vrot.lane.b32.xlu0 %v4157, 24
  %v5690 = vpop.permute.xlu0 %5689
  %5691 = vrot.lane.b32.xlu0 %v4159, 24
  %v5692 = vpop.permute.xlu0 %5691
  %5693 = vrot.lane.b32.xlu0 %v4160, 24
  %v5694 = vpop.permute.xlu0 %5693
  %5695 = vrot.lane.b32.xlu0 %v4162, 24
  %v5696 = vpop.permute.xlu0 %5695
  %5697 = vrot.lane.b32.xlu0 %v4163, 24
  %v5698 = vpop.permute.xlu0 %5697
  %5699 = vrot.lane.b32.xlu0 %v4165, 24
  %v5700 = vpop.permute.xlu0 %5699
  %5701 = vrot.lane.b32.xlu0 %v4166, 24
  %v5702 = vpop.permute.xlu0 %5701
  %5703 = vrot.lane.b32.xlu0 %v4168, 24
  %v5704 = vpop.permute.xlu0 %5703
  %5705 = vrot.lane.b32.xlu0 %v4169, 24
  %v5706 = vpop.permute.xlu0 %5705
  %5707 = vrot.lane.b32.xlu0 %v4171, 24
  %v5708 = vpop.permute.xlu0 %5707
  %5709 = vrot.lane.b32.xlu0 %v4172, 24
  %v5710 = vpop.permute.xlu0 %5709
  %5711 = vrot.lane.b32.xlu0 %v4174, 24
  %v5712 = vpop.permute.xlu0 %5711
  %5713 = vrot.lane.b32.xlu0 %v4175, 24
  %v5714 = vpop.permute.xlu0 %5713
  %5715 = vrot.lane.b32.xlu0 %v4177, 24
  %v5716 = vpop.permute.xlu0 %5715
  %5717 = vrot.lane.b32.xlu0 %v4178, 24
  %v5718 = vpop.permute.xlu0 %5717
  %v5785 = vrot.slane %v4123, 1
  %v5786 = vrot.slane %v4124, 1
  %v5787 = vsel %vm452, %v5785, %v5786
  %v5788 = vrot.slane %v4125, 1
  %v5789 = vsel %vm452, %v5786, %v5788
  %v5790 = vrot.slane %v4177, 1
  %v5791 = vrot.slane %v4178, 1
  %v5792 = vsel %vm452, %v5790, %v5791
  %v5793 = vrot.slane %v4179, 1
  %v5794 = vsel %vm452, %v5791, %v5793
  %5795 = vrot.lane.b32.xlu0 %v4293, 28
  %v5796 = vpop.permute.xlu0 %5795
  %5797 = vrot.lane.b32.xlu0 %v4295, 28
  %v5798 = vpop.permute.xlu0 %5797
  %5799 = vrot.lane.b32.xlu0 %v4298, 28
  %v5800 = vpop.permute.xlu0 %5799
  %5801 = vrot.lane.b32.xlu0 %v4300, 28
  %v5802 = vpop.permute.xlu0 %5801
  %5803 = vrot.lane.b32.xlu0 %v4303, 28
  %v5804 = vpop.permute.xlu0 %5803
  %5805 = vrot.lane.b32.xlu0 %v4305, 28
  %v5806 = vpop.permute.xlu0 %5805
  %5807 = vrot.lane.b32.xlu0 %v4308, 28
  %v5808 = vpop.permute.xlu0 %5807
  %5809 = vrot.lane.b32.xlu0 %v4310, 28
  %v5810 = vpop.permute.xlu0 %5809
  %5811 = vrot.lane.b32.xlu0 %v4313, 28
  %v5812 = vpop.permute.xlu0 %5811
  %5813 = vrot.lane.b32.xlu0 %v4315, 28
  %v5814 = vpop.permute.xlu0 %5813
  %5815 = vrot.lane.b32.xlu0 %v4318, 28
  %v5816 = vpop.permute.xlu0 %5815
  %5817 = vrot.lane.b32.xlu0 %v4320, 28
  %v5818 = vpop.permute.xlu0 %5817
  %5819 = vrot.lane.b32.xlu0 %v4323, 28
  %v5820 = vpop.permute.xlu0 %5819
  %5821 = vrot.lane.b32.xlu0 %v4325, 28
  %v5822 = vpop.permute.xlu0 %5821
  %5823 = vrot.lane.b32.xlu0 %v4328, 28
  %v5824 = vpop.permute.xlu0 %5823
  %5825 = vrot.lane.b32.xlu0 %v4330, 28
  %v5826 = vpop.permute.xlu0 %5825
  %5827 = vrot.lane.b32.xlu0 %v4333, 28
  %v5828 = vpop.permute.xlu0 %5827
  %5829 = vrot.lane.b32.xlu0 %v4335, 28
  %v5830 = vpop.permute.xlu0 %5829
  %5831 = vrot.lane.b32.xlu0 %v4338, 28
  %v5832 = vpop.permute.xlu0 %5831
  %5833 = vrot.lane.b32.xlu0 %v4340, 28
  %v5834 = vpop.permute.xlu0 %5833
  %5835 = vrot.lane.b32.xlu0 %v4343, 28
  %v5836 = vpop.permute.xlu0 %5835
  %5837 = vrot.lane.b32.xlu0 %v4345, 28
  %v5838 = vpop.permute.xlu0 %5837
  %5839 = vrot.lane.b32.xlu0 %v4348, 28
  %v5840 = vpop.permute.xlu0 %5839
  %5841 = vrot.lane.b32.xlu0 %v4350, 28
  %v5842 = vpop.permute.xlu0 %5841
  %5843 = vrot.lane.b32.xlu0 %v4353, 28
  %v5844 = vpop.permute.xlu0 %5843
  %5845 = vrot.lane.b32.xlu0 %v4355, 28
  %v5846 = vpop.permute.xlu0 %5845
  %5847 = vrot.lane.b32.xlu0 %v4358, 28
  %v5848 = vpop.permute.xlu0 %5847
  %5849 = vrot.lane.b32.xlu0 %v4360, 28
  %v5850 = vpop.permute.xlu0 %5849
  %5851 = vrot.lane.b32.xlu0 %v5185, 28
  %v5852 = vpop.permute.xlu0 %5851
  %5853 = vrot.lane.b32.xlu0 %v5187, 28
  %v5854 = vpop.permute.xlu0 %5853
  %5855 = vrot.lane.b32.xlu0 %v5787, 28
  %v5856 = vpop.permute.xlu0 %5855
  %5857 = vrot.lane.b32.xlu0 %v5789, 28
  %v5858 = vpop.permute.xlu0 %5857
  %5859 = vrot.lane.b32.xlu0 %v4373, 28
  %v5860 = vpop.permute.xlu0 %5859
  %5861 = vrot.lane.b32.xlu0 %v4375, 28
  %v5862 = vpop.permute.xlu0 %5861
  %5863 = vrot.lane.b32.xlu0 %v4378, 28
  %v5864 = vpop.permute.xlu0 %5863
  %5865 = vrot.lane.b32.xlu0 %v4380, 28
  %v5866 = vpop.permute.xlu0 %5865
  %5867 = vrot.lane.b32.xlu0 %v4383, 28
  %v5868 = vpop.permute.xlu0 %5867
  %5869 = vrot.lane.b32.xlu0 %v4385, 28
  %v5870 = vpop.permute.xlu0 %5869
  %5871 = vrot.lane.b32.xlu0 %v4388, 28
  %v5872 = vpop.permute.xlu0 %5871
  %5873 = vrot.lane.b32.xlu0 %v4390, 28
  %v5874 = vpop.permute.xlu0 %5873
  %5875 = vrot.lane.b32.xlu0 %v4393, 28
  %v5876 = vpop.permute.xlu0 %5875
  %5877 = vrot.lane.b32.xlu0 %v4395, 28
  %v5878 = vpop.permute.xlu0 %5877
  %5879 = vrot.lane.b32.xlu0 %v4398, 28
  %v5880 = vpop.permute.xlu0 %5879
  %5881 = vrot.lane.b32.xlu0 %v4400, 28
  %v5882 = vpop.permute.xlu0 %5881
  %5883 = vrot.lane.b32.xlu0 %v4403, 28
  %v5884 = vpop.permute.xlu0 %5883
  %5885 = vrot.lane.b32.xlu0 %v4405, 28
  %v5886 = vpop.permute.xlu0 %5885
  %5887 = vrot.lane.b32.xlu0 %v4408, 28
  %v5888 = vpop.permute.xlu0 %5887
  %5889 = vrot.lane.b32.xlu0 %v4410, 28
  %v5890 = vpop.permute.xlu0 %5889
  %5891 = vrot.lane.b32.xlu0 %v4413, 28
  %v5892 = vpop.permute.xlu0 %5891
  %5893 = vrot.lane.b32.xlu0 %v4415, 28
  %v5894 = vpop.permute.xlu0 %5893
  %5895 = vrot.lane.b32.xlu0 %v4418, 28
  %v5896 = vpop.permute.xlu0 %5895
  %5897 = vrot.lane.b32.xlu0 %v4420, 28
  %v5898 = vpop.permute.xlu0 %5897
  %5899 = vrot.lane.b32.xlu0 %v4423, 28
  %v5900 = vpop.permute.xlu0 %5899
  %5901 = vrot.lane.b32.xlu0 %v4425, 28
  %v5902 = vpop.permute.xlu0 %5901
  %5903 = vrot.lane.b32.xlu0 %v4428, 28
  %v5904 = vpop.permute.xlu0 %5903
  %5905 = vrot.lane.b32.xlu0 %v4430, 28
  %v5906 = vpop.permute.xlu0 %5905
  %5907 = vrot.lane.b32.xlu0 %v4433, 28
  %v5908 = vpop.permute.xlu0 %5907
  %5909 = vrot.lane.b32.xlu0 %v4435, 28
  %v5910 = vpop.permute.xlu0 %5909
  %5911 = vrot.lane.b32.xlu0 %v4438, 28
  %v5912 = vpop.permute.xlu0 %5911
  %5913 = vrot.lane.b32.xlu0 %v4440, 28
  %v5914 = vpop.permute.xlu0 %5913
  %5915 = vrot.lane.b32.xlu0 %v5190, 28
  %v5916 = vpop.permute.xlu0 %5915
  %5917 = vrot.lane.b32.xlu0 %v5192, 28
  %v5918 = vpop.permute.xlu0 %5917
  %5919 = vrot.lane.b32.xlu0 %v5792, 28
  %v5920 = vpop.permute.xlu0 %5919
  %5921 = vrot.lane.b32.xlu0 %v5794, 28
  %v5922 = vpop.permute.xlu0 %5921
  %v5987 = vrot.slane %v4123, 2
  %v5988 = vrot.slane %v4124, 2
  %v5989 = vsel %vm805, %v5987, %v5988
  %v5990 = vrot.slane %v4125, 2
  %v5991 = vsel %vm805, %v5988, %v5990
  %v5992 = vrot.slane %v4177, 2
  %v5993 = vrot.slane %v4178, 2
  %v5994 = vsel %vm805, %v5992, %v5993
  %v5995 = vrot.slane %v4179, 2
  %v5996 = vsel %vm805, %v5993, %v5995
  %5997 = vrot.lane.b32.xlu0 %v4645, 32
  %v5998 = vpop.permute.xlu0 %5997
  %5999 = vrot.lane.b32.xlu0 %v4647, 32
  %v6000 = vpop.permute.xlu0 %5999
  %6001 = vrot.lane.b32.xlu0 %v4650, 32
  %v6002 = vpop.permute.xlu0 %6001
  %6003 = vrot.lane.b32.xlu0 %v4652, 32
  %v6004 = vpop.permute.xlu0 %6003
  %6005 = vrot.lane.b32.xlu0 %v4655, 32
  %v6006 = vpop.permute.xlu0 %6005
  %6007 = vrot.lane.b32.xlu0 %v4657, 32
  %v6008 = vpop.permute.xlu0 %6007
  %6009 = vrot.lane.b32.xlu0 %v4660, 32
  %v6010 = vpop.permute.xlu0 %6009
  %6011 = vrot.lane.b32.xlu0 %v4662, 32
  %v6012 = vpop.permute.xlu0 %6011
  %6013 = vrot.lane.b32.xlu0 %v4665, 32
  %v6014 = vpop.permute.xlu0 %6013
  %6015 = vrot.lane.b32.xlu0 %v4667, 32
  %v6016 = vpop.permute.xlu0 %6015
  %6017 = vrot.lane.b32.xlu0 %v4670, 32
  %v6018 = vpop.permute.xlu0 %6017
  %6019 = vrot.lane.b32.xlu0 %v4672, 32
  %v6020 = vpop.permute.xlu0 %6019
  %6021 = vrot.lane.b32.xlu0 %v4675, 32
  %v6022 = vpop.permute.xlu0 %6021
  %6023 = vrot.lane.b32.xlu0 %v4677, 32
  %v6024 = vpop.permute.xlu0 %6023
  %6025 = vrot.lane.b32.xlu0 %v4680, 32
  %v6026 = vpop.permute.xlu0 %6025
  %6027 = vrot.lane.b32.xlu0 %v4682, 32
  %v6028 = vpop.permute.xlu0 %6027
  %6029 = vrot.lane.b32.xlu0 %v4685, 32
  %v6030 = vpop.permute.xlu0 %6029
  %6031 = vrot.lane.b32.xlu0 %v4687, 32
  %v6032 = vpop.permute.xlu0 %6031
  %6033 = vrot.lane.b32.xlu0 %v4690, 32
  %v6034 = vpop.permute.xlu0 %6033
  %6035 = vrot.lane.b32.xlu0 %v4692, 32
  %v6036 = vpop.permute.xlu0 %6035
  %6037 = vrot.lane.b32.xlu0 %v4695, 32
  %v6038 = vpop.permute.xlu0 %6037
  %6039 = vrot.lane.b32.xlu0 %v4697, 32
  %v6040 = vpop.permute.xlu0 %6039
  %6041 = vrot.lane.b32.xlu0 %v4700, 32
  %v6042 = vpop.permute.xlu0 %6041
  %6043 = vrot.lane.b32.xlu0 %v4702, 32
  %v6044 = vpop.permute.xlu0 %6043
  %6045 = vrot.lane.b32.xlu0 %v4705, 32
  %v6046 = vpop.permute.xlu0 %6045
  %6047 = vrot.lane.b32.xlu0 %v4707, 32
  %v6048 = vpop.permute.xlu0 %6047
  %6049 = vrot.lane.b32.xlu0 %v4710, 32
  %v6050 = vpop.permute.xlu0 %6049
  %6051 = vrot.lane.b32.xlu0 %v4712, 32
  %v6052 = vpop.permute.xlu0 %6051
  %6053 = vrot.lane.b32.xlu0 %v5387, 32
  %v6054 = vpop.permute.xlu0 %6053
  %6055 = vrot.lane.b32.xlu0 %v5389, 32
  %v6056 = vpop.permute.xlu0 %6055
  %6057 = vrot.lane.b32.xlu0 %v5989, 32
  %v6058 = vpop.permute.xlu0 %6057
  %6059 = vrot.lane.b32.xlu0 %v5991, 32
  %v6060 = vpop.permute.xlu0 %6059
  %6061 = vrot.lane.b32.xlu0 %v4725, 32
  %v6062 = vpop.permute.xlu0 %6061
  %6063 = vrot.lane.b32.xlu0 %v4727, 32
  %v6064 = vpop.permute.xlu0 %6063
  %6065 = vrot.lane.b32.xlu0 %v4730, 32
  %v6066 = vpop.permute.xlu0 %6065
  %6067 = vrot.lane.b32.xlu0 %v4732, 32
  %v6068 = vpop.permute.xlu0 %6067
  %6069 = vrot.lane.b32.xlu0 %v4735, 32
  %v6070 = vpop.permute.xlu0 %6069
  %6071 = vrot.lane.b32.xlu0 %v4737, 32
  %v6072 = vpop.permute.xlu0 %6071
  %6073 = vrot.lane.b32.xlu0 %v4740, 32
  %v6074 = vpop.permute.xlu0 %6073
  %6075 = vrot.lane.b32.xlu0 %v4742, 32
  %v6076 = vpop.permute.xlu0 %6075
  %6077 = vrot.lane.b32.xlu0 %v4745, 32
  %v6078 = vpop.permute.xlu0 %6077
  %6079 = vrot.lane.b32.xlu0 %v4747, 32
  %v6080 = vpop.permute.xlu0 %6079
  %6081 = vrot.lane.b32.xlu0 %v4750, 32
  %v6082 = vpop.permute.xlu0 %6081
  %6083 = vrot.lane.b32.xlu0 %v4752, 32
  %v6084 = vpop.permute.xlu0 %6083
  %6085 = vrot.lane.b32.xlu0 %v4755, 32
  %v6086 = vpop.permute.xlu0 %6085
  %6087 = vrot.lane.b32.xlu0 %v4757, 32
  %v6088 = vpop.permute.xlu0 %6087
  %6089 = vrot.lane.b32.xlu0 %v4760, 32
  %v6090 = vpop.permute.xlu0 %6089
  %6091 = vrot.lane.b32.xlu0 %v4762, 32
  %v6092 = vpop.permute.xlu0 %6091
  %6093 = vrot.lane.b32.xlu0 %v4765, 32
  %v6094 = vpop.permute.xlu0 %6093
  %6095 = vrot.lane.b32.xlu0 %v4767, 32
  %v6096 = vpop.permute.xlu0 %6095
  %6097 = vrot.lane.b32.xlu0 %v4770, 32
  %v6098 = vpop.permute.xlu0 %6097
  %6099 = vrot.lane.b32.xlu0 %v4772, 32
  %v6100 = vpop.permute.xlu0 %6099
  %6101 = vrot.lane.b32.xlu0 %v4775, 32
  %v6102 = vpop.permute.xlu0 %6101
  %6103 = vrot.lane.b32.xlu0 %v4777, 32
  %v6104 = vpop.permute.xlu0 %6103
  %6105 = vrot.lane.b32.xlu0 %v4780, 32
  %v6106 = vpop.permute.xlu0 %6105
  %6107 = vrot.lane.b32.xlu0 %v4782, 32
  %v6108 = vpop.permute.xlu0 %6107
  %6109 = vrot.lane.b32.xlu0 %v4785, 32
  %v6110 = vpop.permute.xlu0 %6109
  %6111 = vrot.lane.b32.xlu0 %v4787, 32
  %v6112 = vpop.permute.xlu0 %6111
  %6113 = vrot.lane.b32.xlu0 %v4790, 32
  %v6114 = vpop.permute.xlu0 %6113
  %6115 = vrot.lane.b32.xlu0 %v4792, 32
  %v6116 = vpop.permute.xlu0 %6115
  %6117 = vrot.lane.b32.xlu0 %v5392, 32
  %v6118 = vpop.permute.xlu0 %6117
  %6119 = vrot.lane.b32.xlu0 %v5394, 32
  %v6120 = vpop.permute.xlu0 %6119
  %6121 = vrot.lane.b32.xlu0 %v5994, 32
  %v6122 = vpop.permute.xlu0 %6121
  %6123 = vrot.lane.b32.xlu0 %v5996, 32
  %v6124 = vpop.permute.xlu0 %6123
  %v6189 = vsel %vm26, %v4072, %v4442
  %v6190 = vsel %vm26, %v4073, %v4444
  %v6191 = vsel %vm26, %v4075, %v4446
  %v6192 = vsel %vm26, %v4076, %v4448
  %v6193 = vsel %vm26, %v4078, %v4450
  %v6194 = vsel %vm26, %v4079, %v4452
  %v6195 = vsel %vm26, %v4081, %v4454
  %v6196 = vsel %vm26, %v4082, %v4456
  %v6197 = vsel %vm26, %v4084, %v4458
  %v6198 = vsel %vm26, %v4085, %v4460
  %v6199 = vsel %vm26, %v4087, %v4462
  %v6200 = vsel %vm26, %v4088, %v4464
  %v6201 = vsel %vm26, %v4090, %v4466
  %v6202 = vsel %vm26, %v4091, %v4468
  %v6203 = vsel %vm26, %v4093, %v4470
  %v6204 = vsel %vm26, %v4094, %v4472
  %v6205 = vsel %vm26, %v4096, %v4474
  %v6206 = vsel %vm26, %v4097, %v4476
  %v6207 = vsel %vm26, %v4099, %v4478
  %v6208 = vsel %vm26, %v4100, %v4480
  %v6209 = vsel %vm26, %v4102, %v4482
  %v6210 = vsel %vm26, %v4103, %v4484
  %v6211 = vsel %vm26, %v4105, %v4486
  %v6212 = vsel %vm26, %v4106, %v4488
  %v6213 = vsel %vm26, %v4108, %v4490
  %v6214 = vsel %vm26, %v4109, %v4492
  %v6215 = vsel %vm26, %v4111, %v4494
  %v6216 = vsel %vm26, %v4112, %v4496
  %v6217 = vsel %vm26, %v4114, %v4498
  %v6218 = vsel %vm26, %v4115, %v4500
  %v6219 = vsel %vm26, %v4117, %v4502
  %v6220 = vsel %vm26, %v4118, %v4504
  %v6221 = vsel %vm26, %v4126, %v4506
  %v6222 = vsel %vm26, %v4127, %v4508
  %v6223 = vsel %vm26, %v4129, %v4510
  %v6224 = vsel %vm26, %v4130, %v4512
  %v6225 = vsel %vm26, %v4132, %v4514
  %v6226 = vsel %vm26, %v4133, %v4516
  %v6227 = vsel %vm26, %v4135, %v4518
  %v6228 = vsel %vm26, %v4136, %v4520
  %v6229 = vsel %vm26, %v4138, %v4522
  %v6230 = vsel %vm26, %v4139, %v4524
  %v6231 = vsel %vm26, %v4141, %v4526
  %v6232 = vsel %vm26, %v4142, %v4528
  %v6233 = vsel %vm26, %v4144, %v4530
  %v6234 = vsel %vm26, %v4145, %v4532
  %v6235 = vsel %vm26, %v4147, %v4534
  %v6236 = vsel %vm26, %v4148, %v4536
  %v6237 = vsel %vm26, %v4150, %v4538
  %v6238 = vsel %vm26, %v4151, %v4540
  %v6239 = vsel %vm26, %v4153, %v4542
  %v6240 = vsel %vm26, %v4154, %v4544
  %v6241 = vsel %vm26, %v4156, %v4546
  %v6242 = vsel %vm26, %v4157, %v4548
  %v6243 = vsel %vm26, %v4159, %v4550
  %v6244 = vsel %vm26, %v4160, %v4552
  %v6245 = vsel %vm26, %v4162, %v4554
  %v6246 = vsel %vm26, %v4163, %v4556
  %v6247 = vsel %vm26, %v4165, %v4558
  %v6248 = vsel %vm26, %v4166, %v4560
  %v6249 = vsel %vm26, %v4168, %v4562
  %v6250 = vsel %vm26, %v4169, %v4564
  %v6251 = vsel %vm26, %v4171, %v4566
  %v6252 = vsel %vm26, %v4172, %v4568
  %v6253 = vsel %vm2426, %v6189, %v4794
  %v6254 = vsel %vm2426, %v6190, %v4796
  %v6255 = vsel %vm2426, %v6191, %v4798
  %v6256 = vsel %vm2426, %v6192, %v4800
  %v6257 = vsel %vm2426, %v6193, %v4802
  %v6258 = vsel %vm2426, %v6194, %v4804
  %v6259 = vsel %vm2426, %v6195, %v4806
  %v6260 = vsel %vm2426, %v6196, %v4808
  %v6261 = vsel %vm2426, %v6197, %v4810
  %v6262 = vsel %vm2426, %v6198, %v4812
  %v6263 = vsel %vm2426, %v6199, %v4814
  %v6264 = vsel %vm2426, %v6200, %v4816
  %v6265 = vsel %vm2426, %v6201, %v4818
  %v6266 = vsel %vm2426, %v6202, %v4820
  %v6267 = vsel %vm2426, %v6203, %v4822
  %v6268 = vsel %vm2426, %v6204, %v4824
  %v6269 = vsel %vm2426, %v6205, %v4826
  %v6270 = vsel %vm2426, %v6206, %v4828
  %v6271 = vsel %vm2426, %v6207, %v4830
  %v6272 = vsel %vm2426, %v6208, %v4832
  %v6273 = vsel %vm2426, %v6209, %v4834
  %v6274 = vsel %vm2426, %v6210, %v4836
  %v6275 = vsel %vm2426, %v6211, %v4838
  %v6276 = vsel %vm2426, %v6212, %v4840
  %v6277 = vsel %vm2426, %v6213, %v4842
  %v6278 = vsel %vm2426, %v6214, %v4844
  %v6279 = vsel %vm2426, %v6215, %v4846
  %v6280 = vsel %vm2426, %v6216, %v4848
  %v6281 = vsel %vm2426, %v6217, %v4850
  %v6282 = vsel %vm2426, %v6218, %v4852
  %v6283 = vsel %vm2426, %v6219, %v4854
  %v6284 = vsel %vm2426, %v6220, %v4856
  %v6285 = vsel %vm2426, %v6221, %v4858
  %v6286 = vsel %vm2426, %v6222, %v4860
  %v6287 = vsel %vm2426, %v6223, %v4862
  %v6288 = vsel %vm2426, %v6224, %v4864
  %v6289 = vsel %vm2426, %v6225, %v4866
  %v6290 = vsel %vm2426, %v6226, %v4868
  %v6291 = vsel %vm2426, %v6227, %v4870
  %v6292 = vsel %vm2426, %v6228, %v4872
  %v6293 = vsel %vm2426, %v6229, %v4874
  %v6294 = vsel %vm2426, %v6230, %v4876
  %v6295 = vsel %vm2426, %v6231, %v4878
  %v6296 = vsel %vm2426, %v6232, %v4880
  %v6297 = vsel %vm2426, %v6233, %v4882
  %v6298 = vsel %vm2426, %v6234, %v4884
  %v6299 = vsel %vm2426, %v6235, %v4886
  %v6300 = vsel %vm2426, %v6236, %v4888
  %v6301 = vsel %vm2426, %v6237, %v4890
  %v6302 = vsel %vm2426, %v6238, %v4892
  %v6303 = vsel %vm2426, %v6239, %v4894
  %v6304 = vsel %vm2426, %v6240, %v4896
  %v6305 = vsel %vm2426, %v6241, %v4898
  %v6306 = vsel %vm2426, %v6242, %v4900
  %v6307 = vsel %vm2426, %v6243, %v4902
  %v6308 = vsel %vm2426, %v6244, %v4904
  %v6309 = vsel %vm2426, %v6245, %v4906
  %v6310 = vsel %vm2426, %v6246, %v4908
  %v6311 = vsel %vm2426, %v6247, %v4910
  %v6312 = vsel %vm2426, %v6248, %v4912
  %v6313 = vsel %vm2426, %v6249, %v4914
  %v6314 = vsel %vm2426, %v6250, %v4916
  %v6315 = vsel %vm2426, %v6251, %v4918
  %v6316 = vsel %vm2426, %v6252, %v4920
  %v6317 = vsel %vm2491, %v6253, %v4990
  %v6318 = vsel %vm2491, %v6254, %v4992
  %v6319 = vsel %vm2491, %v6255, %v4994
  %v6320 = vsel %vm2491, %v6256, %v4996
  %v6321 = vsel %vm2491, %v6257, %v4998
  %v6322 = vsel %vm2491, %v6258, %v5000
  %v6323 = vsel %vm2491, %v6259, %v5002
  %v6324 = vsel %vm2491, %v6260, %v5004
  %v6325 = vsel %vm2491, %v6261, %v5006
  %v6326 = vsel %vm2491, %v6262, %v5008
  %v6327 = vsel %vm2491, %v6263, %v5010
  %v6328 = vsel %vm2491, %v6264, %v5012
  %v6329 = vsel %vm2491, %v6265, %v5014
  %v6330 = vsel %vm2491, %v6266, %v5016
  %v6331 = vsel %vm2491, %v6267, %v5018
  %v6332 = vsel %vm2491, %v6268, %v5020
  %v6333 = vsel %vm2491, %v6269, %v5022
  %v6334 = vsel %vm2491, %v6270, %v5024
  %v6335 = vsel %vm2491, %v6271, %v5026
  %v6336 = vsel %vm2491, %v6272, %v5028
  %v6337 = vsel %vm2491, %v6273, %v5030
  %v6338 = vsel %vm2491, %v6274, %v5032
  %v6339 = vsel %vm2491, %v6275, %v5034
  %v6340 = vsel %vm2491, %v6276, %v5036
  %v6341 = vsel %vm2491, %v6277, %v5038
  %v6342 = vsel %vm2491, %v6278, %v5040
  %v6343 = vsel %vm2491, %v6279, %v5042
  %v6344 = vsel %vm2491, %v6280, %v5044
  %v6345 = vsel %vm2491, %v6281, %v5046
  %v6346 = vsel %vm2491, %v6282, %v5048
  %v6347 = vsel %vm2491, %v6283, %v5050
  %v6348 = vsel %vm2491, %v6284, %v5052
  %v6349 = vsel %vm2491, %v6285, %v5054
  %v6350 = vsel %vm2491, %v6286, %v5056
  %v6351 = vsel %vm2491, %v6287, %v5058
  %v6352 = vsel %vm2491, %v6288, %v5060
  %v6353 = vsel %vm2491, %v6289, %v5062
  %v6354 = vsel %vm2491, %v6290, %v5064
  %v6355 = vsel %vm2491, %v6291, %v5066
  %v6356 = vsel %vm2491, %v6292, %v5068
  %v6357 = vsel %vm2491, %v6293, %v5070
  %v6358 = vsel %vm2491, %v6294, %v5072
  %v6359 = vsel %vm2491, %v6295, %v5074
  %v6360 = vsel %vm2491, %v6296, %v5076
  %v6361 = vsel %vm2491, %v6297, %v5078
  %v6362 = vsel %vm2491, %v6298, %v5080
  %v6363 = vsel %vm2491, %v6299, %v5082
  %v6364 = vsel %vm2491, %v6300, %v5084
  %v6365 = vsel %vm2491, %v6301, %v5086
  %v6366 = vsel %vm2491, %v6302, %v5088
  %v6367 = vsel %vm2491, %v6303, %v5090
  %v6368 = vsel %vm2491, %v6304, %v5092
  %v6369 = vsel %vm2491, %v6305, %v5094
  %v6370 = vsel %vm2491, %v6306, %v5096
  %v6371 = vsel %vm2491, %v6307, %v5098
  %v6372 = vsel %vm2491, %v6308, %v5100
  %v6373 = vsel %vm2491, %v6309, %v5102
  %v6374 = vsel %vm2491, %v6310, %v5104
  %v6375 = vsel %vm2491, %v6311, %v5106
  %v6376 = vsel %vm2491, %v6312, %v5108
  %v6377 = vsel %vm2491, %v6313, %v5110
  %v6378 = vsel %vm2491, %v6314, %v5112
  %v6379 = vsel %vm2491, %v6315, %v5114
  %v6380 = vsel %vm2491, %v6316, %v5116
  %v6381 = vsel %vm2556, %v6317, %v5194
  %v6382 = vsel %vm2556, %v6318, %v5196
  %v6383 = vsel %vm2556, %v6319, %v5198
  %v6384 = vsel %vm2556, %v6320, %v5200
  %v6385 = vsel %vm2556, %v6321, %v5202
  %v6386 = vsel %vm2556, %v6322, %v5204
  %v6387 = vsel %vm2556, %v6323, %v5206
  %v6388 = vsel %vm2556, %v6324, %v5208
  %v6389 = vsel %vm2556, %v6325, %v5210
  %v6390 = vsel %vm2556, %v6326, %v5212
  %v6391 = vsel %vm2556, %v6327, %v5214
  %v6392 = vsel %vm2556, %v6328, %v5216
  %v6393 = vsel %vm2556, %v6329, %v5218
  %v6394 = vsel %vm2556, %v6330, %v5220
  %v6395 = vsel %vm2556, %v6331, %v5222
  %v6396 = vsel %vm2556, %v6332, %v5224
  %v6397 = vsel %vm2556, %v6333, %v5226
  %v6398 = vsel %vm2556, %v6334, %v5228
  %v6399 = vsel %vm2556, %v6335, %v5230
  %v6400 = vsel %vm2556, %v6336, %v5232
  %v6401 = vsel %vm2556, %v6337, %v5234
  %v6402 = vsel %vm2556, %v6338, %v5236
  %v6403 = vsel %vm2556, %v6339, %v5238
  %v6404 = vsel %vm2556, %v6340, %v5240
  %v6405 = vsel %vm2556, %v6341, %v5242
  %v6406 = vsel %vm2556, %v6342, %v5244
  %v6407 = vsel %vm2556, %v6343, %v5246
  %v6408 = vsel %vm2556, %v6344, %v5248
  %v6409 = vsel %vm2556, %v6345, %v5250
  %v6410 = vsel %vm2556, %v6346, %v5252
  %v6411 = vsel %vm2556, %v6347, %v5254
  %v6412 = vsel %vm2556, %v6348, %v5256
  %v6413 = vsel %vm2556, %v6349, %v5258
  %v6414 = vsel %vm2556, %v6350, %v5260
  %v6415 = vsel %vm2556, %v6351, %v5262
  %v6416 = vsel %vm2556, %v6352, %v5264
  %v6417 = vsel %vm2556, %v6353, %v5266
  %v6418 = vsel %vm2556, %v6354, %v5268
  %v6419 = vsel %vm2556, %v6355, %v5270
  %v6420 = vsel %vm2556, %v6356, %v5272
  %v6421 = vsel %vm2556, %v6357, %v5274
  %v6422 = vsel %vm2556, %v6358, %v5276
  %v6423 = vsel %vm2556, %v6359, %v5278
  %v6424 = vsel %vm2556, %v6360, %v5280
  %v6425 = vsel %vm2556, %v6361, %v5282
  %v6426 = vsel %vm2556, %v6362, %v5284
  %v6427 = vsel %vm2556, %v6363, %v5286
  %v6428 = vsel %vm2556, %v6364, %v5288
  %v6429 = vsel %vm2556, %v6365, %v5290
  %v6430 = vsel %vm2556, %v6366, %v5292
  %v6431 = vsel %vm2556, %v6367, %v5294
  %v6432 = vsel %vm2556, %v6368, %v5296
  %v6433 = vsel %vm2556, %v6369, %v5298
  %v6434 = vsel %vm2556, %v6370, %v5300
  %v6435 = vsel %vm2556, %v6371, %v5302
  %v6436 = vsel %vm2556, %v6372, %v5304
  %v6437 = vsel %vm2556, %v6373, %v5306
  %v6438 = vsel %vm2556, %v6374, %v5308
  %v6439 = vsel %vm2556, %v6375, %v5310
  %v6440 = vsel %vm2556, %v6376, %v5312
  %v6441 = vsel %vm2556, %v6377, %v5314
  %v6442 = vsel %vm2556, %v6378, %v5316
  %v6443 = vsel %vm2556, %v6379, %v5318
  %v6444 = vsel %vm2556, %v6380, %v5320
  %v6445 = vsel %vm2621, %v6381, %v5396
  %v6446 = vsel %vm2621, %v6382, %v5398
  %v6447 = vsel %vm2621, %v6383, %v5400
  %v6448 = vsel %vm2621, %v6384, %v5402
  %v6449 = vsel %vm2621, %v6385, %v5404
  %v6450 = vsel %vm2621, %v6386, %v5406
  %v6451 = vsel %vm2621, %v6387, %v5408
  %v6452 = vsel %vm2621, %v6388, %v5410
  %v6453 = vsel %vm2621, %v6389, %v5412
  %v6454 = vsel %vm2621, %v6390, %v5414
  %v6455 = vsel %vm2621, %v6391, %v5416
  %v6456 = vsel %vm2621, %v6392, %v5418
  %v6457 = vsel %vm2621, %v6393, %v5420
  %v6458 = vsel %vm2621, %v6394, %v5422
  %v6459 = vsel %vm2621, %v6395, %v5424
  %v6460 = vsel %vm2621, %v6396, %v5426
  %v6461 = vsel %vm2621, %v6397, %v5428
  %v6462 = vsel %vm2621, %v6398, %v5430
  %v6463 = vsel %vm2621, %v6399, %v5432
  %v6464 = vsel %vm2621, %v6400, %v5434
  %v6465 = vsel %vm2621, %v6401, %v5436
  %v6466 = vsel %vm2621, %v6402, %v5438
  %v6467 = vsel %vm2621, %v6403, %v5440
  %v6468 = vsel %vm2621, %v6404, %v5442
  %v6469 = vsel %vm2621, %v6405, %v5444
  %v6470 = vsel %vm2621, %v6406, %v5446
  %v6471 = vsel %vm2621, %v6407, %v5448
  %v6472 = vsel %vm2621, %v6408, %v5450
  %v6473 = vsel %vm2621, %v6409, %v5452
  %v6474 = vsel %vm2621, %v6410, %v5454
  %v6475 = vsel %vm2621, %v6411, %v5456
  %v6476 = vsel %vm2621, %v6412, %v5458
  %v6477 = vsel %vm2621, %v6413, %v5460
  %v6478 = vsel %vm2621, %v6414, %v5462
  %v6479 = vsel %vm2621, %v6415, %v5464
  %v6480 = vsel %vm2621, %v6416, %v5466
  %v6481 = vsel %vm2621, %v6417, %v5468
  %v6482 = vsel %vm2621, %v6418, %v5470
  %v6483 = vsel %vm2621, %v6419, %v5472
  %v6484 = vsel %vm2621, %v6420, %v5474
  %v6485 = vsel %vm2621, %v6421, %v5476
  %v6486 = vsel %vm2621, %v6422, %v5478
  %v6487 = vsel %vm2621, %v6423, %v5480
  %v6488 = vsel %vm2621, %v6424, %v5482
  %v6489 = vsel %vm2621, %v6425, %v5484
  %v6490 = vsel %vm2621, %v6426, %v5486
  %v6491 = vsel %vm2621, %v6427, %v5488
  %v6492 = vsel %vm2621, %v6428, %v5490
  %v6493 = vsel %vm2621, %v6429, %v5492
  %v6494 = vsel %vm2621, %v6430, %v5494
  %v6495 = vsel %vm2621, %v6431, %v5496
  %v6496 = vsel %vm2621, %v6432, %v5498
  %v6497 = vsel %vm2621, %v6433, %v5500
  %v6498 = vsel %vm2621, %v6434, %v5502
  %v6499 = vsel %vm2621, %v6435, %v5504
  %v6500 = vsel %vm2621, %v6436, %v5506
  %v6501 = vsel %vm2621, %v6437, %v5508
  %v6502 = vsel %vm2621, %v6438, %v5510
  %v6503 = vsel %vm2621, %v6439, %v5512
  %v6504 = vsel %vm2621, %v6440, %v5514
  %v6505 = vsel %vm2621, %v6441, %v5516
  %v6506 = vsel %vm2621, %v6442, %v5518
  %v6507 = vsel %vm2621, %v6443, %v5520
  %v6508 = vsel %vm2621, %v6444, %v5522
  %v6509 = vsel %vm2686, %v6445, %v5592
  %v6510 = vsel %vm2686, %v6446, %v5594
  %v6511 = vsel %vm2686, %v6447, %v5596
  %v6512 = vsel %vm2686, %v6448, %v5598
  %v6513 = vsel %vm2686, %v6449, %v5600
  %v6514 = vsel %vm2686, %v6450, %v5602
  %v6515 = vsel %vm2686, %v6451, %v5604
  %v6516 = vsel %vm2686, %v6452, %v5606
  %v6517 = vsel %vm2686, %v6453, %v5608
  %v6518 = vsel %vm2686, %v6454, %v5610
  %v6519 = vsel %vm2686, %v6455, %v5612
  %v6520 = vsel %vm2686, %v6456, %v5614
  %v6521 = vsel %vm2686, %v6457, %v5616
  %v6522 = vsel %vm2686, %v6458, %v5618
  %v6523 = vsel %vm2686, %v6459, %v5620
  %v6524 = vsel %vm2686, %v6460, %v5622
  %v6525 = vsel %vm2686, %v6461, %v5624
  %v6526 = vsel %vm2686, %v6462, %v5626
  %v6527 = vsel %vm2686, %v6463, %v5628
  %v6528 = vsel %vm2686, %v6464, %v5630
  %v6529 = vsel %vm2686, %v6465, %v5632
  %v6530 = vsel %vm2686, %v6466, %v5634
  %v6531 = vsel %vm2686, %v6467, %v5636
  %v6532 = vsel %vm2686, %v6468, %v5638
  %v6533 = vsel %vm2686, %v6469, %v5640
  %v6534 = vsel %vm2686, %v6470, %v5642
  %v6535 = vsel %vm2686, %v6471, %v5644
  %v6536 = vsel %vm2686, %v6472, %v5646
  %v6537 = vsel %vm2686, %v6473, %v5648
  %v6538 = vsel %vm2686, %v6474, %v5650
  %v6539 = vsel %vm2686, %v6475, %v5652
  %v6540 = vsel %vm2686, %v6476, %v5654
  %v6541 = vsel %vm2686, %v6477, %v5656
  %v6542 = vsel %vm2686, %v6478, %v5658
  %v6543 = vsel %vm2686, %v6479, %v5660
  %v6544 = vsel %vm2686, %v6480, %v5662
  %v6545 = vsel %vm2686, %v6481, %v5664
  %v6546 = vsel %vm2686, %v6482, %v5666
  %v6547 = vsel %vm2686, %v6483, %v5668
  %v6548 = vsel %vm2686, %v6484, %v5670
  %v6549 = vsel %vm2686, %v6485, %v5672
  %v6550 = vsel %vm2686, %v6486, %v5674
  %v6551 = vsel %vm2686, %v6487, %v5676
  %v6552 = vsel %vm2686, %v6488, %v5678
  %v6553 = vsel %vm2686, %v6489, %v5680
  %v6554 = vsel %vm2686, %v6490, %v5682
  %v6555 = vsel %vm2686, %v6491, %v5684
  %v6556 = vsel %vm2686, %v6492, %v5686
  %v6557 = vsel %vm2686, %v6493, %v5688
  %v6558 = vsel %vm2686, %v6494, %v5690
  %v6559 = vsel %vm2686, %v6495, %v5692
  %v6560 = vsel %vm2686, %v6496, %v5694
  %v6561 = vsel %vm2686, %v6497, %v5696
  %v6562 = vsel %vm2686, %v6498, %v5698
  %v6563 = vsel %vm2686, %v6499, %v5700
  %v6564 = vsel %vm2686, %v6500, %v5702
  %v6565 = vsel %vm2686, %v6501, %v5704
  %v6566 = vsel %vm2686, %v6502, %v5706
  %v6567 = vsel %vm2686, %v6503, %v5708
  %v6568 = vsel %vm2686, %v6504, %v5710
  %v6569 = vsel %vm2686, %v6505, %v5712
  %v6570 = vsel %vm2686, %v6506, %v5714
  %v6571 = vsel %vm2686, %v6507, %v5716
  %v6572 = vsel %vm2686, %v6508, %v5718
  %v6573 = vsel %vm2751, %v6509, %v5796
  %v6574 = vsel %vm2751, %v6510, %v5798
  %v6575 = vsel %vm2751, %v6511, %v5800
  %v6576 = vsel %vm2751, %v6512, %v5802
  %v6577 = vsel %vm2751, %v6513, %v5804
  %v6578 = vsel %vm2751, %v6514, %v5806
  %v6579 = vsel %vm2751, %v6515, %v5808
  %v6580 = vsel %vm2751, %v6516, %v5810
  %v6581 = vsel %vm2751, %v6517, %v5812
  %v6582 = vsel %vm2751, %v6518, %v5814
  %v6583 = vsel %vm2751, %v6519, %v5816
  %v6584 = vsel %vm2751, %v6520, %v5818
  %v6585 = vsel %vm2751, %v6521, %v5820
  %v6586 = vsel %vm2751, %v6522, %v5822
  %v6587 = vsel %vm2751, %v6523, %v5824
  %v6588 = vsel %vm2751, %v6524, %v5826
  %v6589 = vsel %vm2751, %v6525, %v5828
  %v6590 = vsel %vm2751, %v6526, %v5830
  %v6591 = vsel %vm2751, %v6527, %v5832
  %v6592 = vsel %vm2751, %v6528, %v5834
  %v6593 = vsel %vm2751, %v6529, %v5836
  %v6594 = vsel %vm2751, %v6530, %v5838
  %v6595 = vsel %vm2751, %v6531, %v5840
  %v6596 = vsel %vm2751, %v6532, %v5842
  %v6597 = vsel %vm2751, %v6533, %v5844
  %v6598 = vsel %vm2751, %v6534, %v5846
  %v6599 = vsel %vm2751, %v6535, %v5848
  %v6600 = vsel %vm2751, %v6536, %v5850
  %v6601 = vsel %vm2751, %v6537, %v5852
  %v6602 = vsel %vm2751, %v6538, %v5854
  %v6603 = vsel %vm2751, %v6539, %v5856
  %v6604 = vsel %vm2751, %v6540, %v5858
  %v6605 = vsel %vm2751, %v6541, %v5860
  %v6606 = vsel %vm2751, %v6542, %v5862
  %v6607 = vsel %vm2751, %v6543, %v5864
  %v6608 = vsel %vm2751, %v6544, %v5866
  %v6609 = vsel %vm2751, %v6545, %v5868
  %v6610 = vsel %vm2751, %v6546, %v5870
  %v6611 = vsel %vm2751, %v6547, %v5872
  %v6612 = vsel %vm2751, %v6548, %v5874
  %v6613 = vsel %vm2751, %v6549, %v5876
  %v6614 = vsel %vm2751, %v6550, %v5878
  %v6615 = vsel %vm2751, %v6551, %v5880
  %v6616 = vsel %vm2751, %v6552, %v5882
  %v6617 = vsel %vm2751, %v6553, %v5884
  %v6618 = vsel %vm2751, %v6554, %v5886
  %v6619 = vsel %vm2751, %v6555, %v5888
  %v6620 = vsel %vm2751, %v6556, %v5890
  %v6621 = vsel %vm2751, %v6557, %v5892
  %v6622 = vsel %vm2751, %v6558, %v5894
  %v6623 = vsel %vm2751, %v6559, %v5896
  %v6624 = vsel %vm2751, %v6560, %v5898
  %v6625 = vsel %vm2751, %v6561, %v5900
  %v6626 = vsel %vm2751, %v6562, %v5902
  %v6627 = vsel %vm2751, %v6563, %v5904
  %v6628 = vsel %vm2751, %v6564, %v5906
  %v6629 = vsel %vm2751, %v6565, %v5908
  %v6630 = vsel %vm2751, %v6566, %v5910
  %v6631 = vsel %vm2751, %v6567, %v5912
  %v6632 = vsel %vm2751, %v6568, %v5914
  %v6633 = vsel %vm2751, %v6569, %v5916
  %v6634 = vsel %vm2751, %v6570, %v5918
  %v6635 = vsel %vm2751, %v6571, %v5920
  %v6636 = vsel %vm2751, %v6572, %v5922
  %v6637 = vsel %vm2816, %v6573, %v5998
  %v6638 = vsel %vm2816, %v6574, %v6000
  %v6639 = vsel %vm2816, %v6575, %v6002
  %v6640 = vsel %vm2816, %v6576, %v6004
  %v6641 = vsel %vm2816, %v6577, %v6006
  %v6642 = vsel %vm2816, %v6578, %v6008
  %v6643 = vsel %vm2816, %v6579, %v6010
  %v6644 = vsel %vm2816, %v6580, %v6012
  %v6645 = vsel %vm2816, %v6581, %v6014
  %v6646 = vsel %vm2816, %v6582, %v6016
  %v6647 = vsel %vm2816, %v6583, %v6018
  %v6648 = vsel %vm2816, %v6584, %v6020
  %v6649 = vsel %vm2816, %v6585, %v6022
  %v6650 = vsel %vm2816, %v6586, %v6024
  %v6651 = vsel %vm2816, %v6587, %v6026
  %v6652 = vsel %vm2816, %v6588, %v6028
  %v6653 = vsel %vm2816, %v6589, %v6030
  %v6654 = vsel %vm2816, %v6590, %v6032
  %v6655 = vsel %vm2816, %v6591, %v6034
  %v6656 = vsel %vm2816, %v6592, %v6036
  %v6657 = vsel %vm2816, %v6593, %v6038
  %v6658 = vsel %vm2816, %v6594, %v6040
  %v6659 = vsel %vm2816, %v6595, %v6042
  %v6660 = vsel %vm2816, %v6596, %v6044
  %v6661 = vsel %vm2816, %v6597, %v6046
  %v6662 = vsel %vm2816, %v6598, %v6048
  %v6663 = vsel %vm2816, %v6599, %v6050
  %v6664 = vsel %vm2816, %v6600, %v6052
  %v6665 = vsel %vm2816, %v6601, %v6054
  %v6666 = vsel %vm2816, %v6602, %v6056
  %v6667 = vsel %vm2816, %v6603, %v6058
  %v6668 = vsel %vm2816, %v6604, %v6060
  %v6669 = vsel %vm2816, %v6605, %v6062
  %v6670 = vsel %vm2816, %v6606, %v6064
  %v6671 = vsel %vm2816, %v6607, %v6066
  %v6672 = vsel %vm2816, %v6608, %v6068
  %v6673 = vsel %vm2816, %v6609, %v6070
  %v6674 = vsel %vm2816, %v6610, %v6072
  %v6675 = vsel %vm2816, %v6611, %v6074
  %v6676 = vsel %vm2816, %v6612, %v6076
  %v6677 = vsel %vm2816, %v6613, %v6078
  %v6678 = vsel %vm2816, %v6614, %v6080
  %v6679 = vsel %vm2816, %v6615, %v6082
  %v6680 = vsel %vm2816, %v6616, %v6084
  %v6681 = vsel %vm2816, %v6617, %v6086
  %v6682 = vsel %vm2816, %v6618, %v6088
  %v6683 = vsel %vm2816, %v6619, %v6090
  %v6684 = vsel %vm2816, %v6620, %v6092
  %v6685 = vsel %vm2816, %v6621, %v6094
  %v6686 = vsel %vm2816, %v6622, %v6096
  %v6687 = vsel %vm2816, %v6623, %v6098
  %v6688 = vsel %vm2816, %v6624, %v6100
  %v6689 = vsel %vm2816, %v6625, %v6102
  %v6690 = vsel %vm2816, %v6626, %v6104
  %v6691 = vsel %vm2816, %v6627, %v6106
  %v6692 = vsel %vm2816, %v6628, %v6108
  %v6693 = vsel %vm2816, %v6629, %v6110
  %v6694 = vsel %vm2816, %v6630, %v6112
  %v6695 = vsel %vm2816, %v6631, %v6114
  %v6696 = vsel %vm2816, %v6632, %v6116
  %v6697 = vsel %vm2816, %v6633, %v6118
  %v6698 = vsel %vm2816, %v6634, %v6120
  %v6699 = vsel %vm2816, %v6635, %v6122
  %v6700 = vsel %vm2816, %v6636, %v6124
  %v6702 = vsel %vm2881, %v6637, 0
  %v6705 = vsel %vm2881, %v6638, 0
  %v6708 = vsel %vm2881, %v6639, 0
  %v6711 = vsel %vm2881, %v6640, 0
  %v6714 = vsel %vm2881, %v6641, 0
  %v6717 = vsel %vm2881, %v6642, 0
  %v6720 = vsel %vm2881, %v6643, 0
  %v6723 = vsel %vm2881, %v6644, 0
  %v6726 = vsel %vm2881, %v6645, 0
  %v6729 = vsel %vm2881, %v6646, 0
  %v6732 = vsel %vm2881, %v6647, 0
  %v6735 = vsel %vm2881, %v6648, 0
  %v6738 = vsel %vm2881, %v6649, 0
  %v6741 = vsel %vm2881, %v6650, 0
  %v6744 = vsel %vm2881, %v6651, 0
  %v6747 = vsel %vm2881, %v6652, 0
  %v6750 = vsel %vm2881, %v6653, 0
  %v6753 = vsel %vm2881, %v6654, 0
  %v6756 = vsel %vm2881, %v6655, 0
  %v6759 = vsel %vm2881, %v6656, 0
  %v6762 = vsel %vm2881, %v6657, 0
  %v6765 = vsel %vm2881, %v6658, 0
  %v6768 = vsel %vm2881, %v6659, 0
  %v6771 = vsel %vm2881, %v6660, 0
  %v6774 = vsel %vm2881, %v6661, 0
  %v6777 = vsel %vm2881, %v6662, 0
  %v6780 = vsel %vm2881, %v6663, 0
  %v6783 = vsel %vm2881, %v6664, 0
  %v6786 = vsel %vm2881, %v6665, 0
  %v6789 = vsel %vm2881, %v6666, 0
  %v6792 = vsel %vm2881, %v6667, 0
  %v6795 = vsel %vm2881, %v6668, 0
  %v6798 = vsel %vm2881, %v6669, 0
  %v6801 = vsel %vm2881, %v6670, 0
  %v6804 = vsel %vm2881, %v6671, 0
  %v6807 = vsel %vm2881, %v6672, 0
  %v6810 = vsel %vm2881, %v6673, 0
  %v6813 = vsel %vm2881, %v6674, 0
  %v6816 = vsel %vm2881, %v6675, 0
  %v6819 = vsel %vm2881, %v6676, 0
  %v6822 = vsel %vm2881, %v6677, 0
  %v6825 = vsel %vm2881, %v6678, 0
  %v6828 = vsel %vm2881, %v6679, 0
  %v6831 = vsel %vm2881, %v6680, 0
  %v6834 = vsel %vm2881, %v6681, 0
  %v6837 = vsel %vm2881, %v6682, 0
  %v6840 = vsel %vm2881, %v6683, 0
  %v6843 = vsel %vm2881, %v6684, 0
  %v6846 = vsel %vm2881, %v6685, 0
  %v6849 = vsel %vm2881, %v6686, 0
  %v6852 = vsel %vm2881, %v6687, 0
  %v6855 = vsel %vm2881, %v6688, 0
  %v6858 = vsel %vm2881, %v6689, 0
  %v6861 = vsel %vm2881, %v6690, 0
  %v6864 = vsel %vm2881, %v6691, 0
  %v6867 = vsel %vm2881, %v6692, 0
  %v6870 = vsel %vm2881, %v6693, 0
  %v6873 = vsel %vm2881, %v6694, 0
  %v6876 = vsel %vm2881, %v6695, 0
  %v6879 = vsel %vm2881, %v6696, 0
  %v6882 = vsel %vm2881, %v6697, 0
  %v6885 = vsel %vm2881, %v6698, 0
  %v6888 = vsel %vm2881, %v6699, 0
  %v6891 = vsel %vm2881, %v6700, 0
  %v6894 = vsel %vm3074, %v4184, 0
  %6896 = vmatprep.subr.mxu0 0.0
  %6897 = vmatpush1.msra.mxu0 %v4180
  %6898 = vmatprep.subr.mxu0 0.0
  %6899 = vmatpush1.msra.mxu0 %v4181
  %6900 = vmatprep.subr.mxu0 0.0
  %6901 = vmatpush1.msra.mxu0 %v4182
  %6902 = vmatprep.subr.mxu0 0.0
  %6903 = vmatpush1.msra.mxu0 %v4183
  %6904 = vmatprep.subr.mxu0 0.0
  %6905 = vmatpush1.msra.mxu0 %v6894
  %6906 = vmatprep.subr.mxu0 0.0
  %6907 = vmatpush1.msra.mxu0 0.0
  %6908 = vmatprep.subr.mxu0 0.0
  %6909 = vmatpush1.msra.mxu0 0.0
  %6910 = vmatprep.subr.mxu0 0.0
  %6911 = vmatpush1.msra.mxu0 0.0
  %6912 = vmatprep.subr.mxu0 0.0
  %6913 = vmatpush1.msra.mxu0 0.0
  %6914 = vmatprep.subr.mxu0 0.0
  %6915 = vmatpush1.msra.mxu0 0.0
  %6916 = vmatprep.subr.mxu0 0.0
  %6917 = vmatpush1.msra.mxu0 0.0
  %6918 = vmatprep.subr.mxu0 0.0
  %6919 = vmatpush1.msra.mxu0 0.0
  %6920 = vmatprep.subr.mxu0 0.0
  %6921 = vmatpush1.msra.mxu0 0.0
  %6922 = vmatprep.subr.mxu0 0.0
  %6923 = vmatpush1.msra.mxu0 0.0
  %6924 = vmatprep.subr.mxu0 0.0
  %6925 = vmatpush1.msra.mxu0 0.0
  %6926 = vmatprep.subr.mxu0 0.0
  %6927 = vmatpush1.msra.mxu0 0.0
  %6928 = vmatprep.subr.mxu0 0.0
  %6929 = vmatpush1.msra.mxu0 0.0
  %6930 = vmatprep.subr.mxu0 0.0
  %6931 = vmatpush1.msra.mxu0 0.0
  %6932 = vmatprep.subr.mxu0 0.0
  %6933 = vmatpush1.msra.mxu0 0.0
  %6934 = vmatprep.subr.mxu0 0.0
  %6935 = vmatpush1.msra.mxu0 0.0
  %6936 = vmatprep.subr.mxu0 0.0
  %6937 = vmatpush1.msra.mxu0 0.0
  %6938 = vmatprep.subr.mxu0 0.0
  %6939 = vmatpush1.msra.mxu0 0.0
  %6940 = vmatprep.subr.mxu0 0.0
  %6941 = vmatpush1.msra.mxu0 0.0
  %6942 = vmatprep.subr.mxu0 0.0
  %6943 = vmatpush1.msra.mxu0 0.0
  %6944 = vmatprep.subr.mxu0 0.0
  %6945 = vmatpush1.msra.mxu0 0.0
  %6946 = vmatprep.subr.mxu0 0.0
  %6947 = vmatpush1.msra.mxu0 0.0
  %6948 = vmatprep.subr.mxu0 0.0
  %6949 = vmatpush1.msra.mxu0 0.0
  %6950 = vmatprep.subr.mxu0 0.0
  %6951 = vmatpush1.msra.mxu0 0.0
  %6952 = vmatprep.subr.mxu0 0.0
  %6953 = vmatpush1.msra.mxu0 0.0
  %6954 = vmatprep.subr.mxu0 0.0
  %6955 = vmatpush1.msra.mxu0 0.0
  %6956 = vmatprep.subr.mxu0 0.0
  %6957 = vmatpush1.msra.mxu0 0.0
  %6958 = vmatprep.subr.mxu0 0.0
  %6959 = vmatpush1.msra.mxu0 0.0
  %6960 = vmatprep.mubr.f32.mxu0 0.0
  %6961 = vmatmul.mubr.f32.gmra.mrb[0].mxu0 %v6702
  %v6962 = vpop.f32.mrb[0].mxu0
  %v6963 = vadd.f32 0.0, %v6962
  %v6964 = vpop.f32.mrb[0].mxu0
  %6965 = vmatprep.mubr.f32.mxu0 0.0
  %6966 = vmatmul.mubr.f32.gmra.mrb[0].mxu0 %v6705
  %v6967 = vpop.f32.mrb[0].mxu0
  %v6968 = vadd.f32 0.0, %v6967
  %v6969 = vpop.f32.mrb[0].mxu0
  %6970 = vmatprep.mubr.f32.mxu0 0.0
  %6971 = vmatmul.mubr.f32.gmra.mrb[0].mxu0 %v6708
  %v6972 = vpop.f32.mrb[0].mxu0
  %v6973 = vadd.f32 0.0, %v6972
  %v6974 = vpop.f32.mrb[0].mxu0
  %6975 = vmatprep.mubr.f32.mxu0 0.0
  %6976 = vmatmul.mubr.f32.gmra.mrb[0].mxu0 %v6711
  %v6977 = vpop.f32.mrb[0].mxu0
  %v6978 = vadd.f32 0.0, %v6977
  %v6979 = vpop.f32.mrb[0].mxu0
  %6980 = vmatprep.mubr.f32.mxu0 0.0
  %6981 = vmatmul.mubr.f32.gmra.mrb[0].mxu0 %v6714
  %v6982 = vpop.f32.mrb[0].mxu0
  %v6983 = vadd.f32 0.0, %v6982
  %v6984 = vpop.f32.mrb[0].mxu0
  %6985 = vmatprep.mubr.f32.mxu0 0.0
  %6986 = vmatmul.mubr.f32.gmra.mrb[0].mxu0 %v6717
  %v6987 = vpop.f32.mrb[0].mxu0
  %v6988 = vadd.f32 0.0, %v6987
  %v6989 = vpop.f32.mrb[0].mxu0
  %6990 = vmatprep.mubr.f32.mxu0 0.0
  %6991 = vmatmul.mubr.f32.gmra.mrb[0].mxu0 %v6720
  %v6992 = vpop.f32.mrb[0].mxu0
  %v6993 = vadd.f32 0.0, %v6992
  %v6994 = vpop.f32.mrb[0].mxu0
  %6995 = vmatprep.mubr.f32.mxu0 0.0
  %6996 = vmatmul.mubr.f32.gmra.mrb[0].mxu0 %v6723
  %v6997 = vpop.f32.mrb[0].mxu0
  %v6998 = vadd.f32 0.0, %v6997
  %v6999 = vpop.f32.mrb[0].mxu0
  %7000 = vmatprep.mubr.f32.mxu0 0.0
  %7001 = vmatmul.mubr.f32.gmra.mrb[0].mxu0 %v6726
  %v7002 = vpop.f32.mrb[0].mxu0
  %v7003 = vadd.f32 0.0, %v7002
  %v7004 = vpop.f32.mrb[0].mxu0
  %7005 = vmatprep.mubr.f32.mxu0 0.0
  %7006 = vmatmul.mubr.f32.gmra.mrb[0].mxu0 %v6729
  %v7007 = vpop.f32.mrb[0].mxu0
  %v7008 = vadd.f32 0.0, %v7007
  %v7009 = vpop.f32.mrb[0].mxu0
  %7010 = vmatprep.mubr.f32.mxu0 0.0
  %7011 = vmatmul.mubr.f32.gmra.mrb[0].mxu0 %v6732
  %v7012 = vpop.f32.mrb[0].mxu0
  %v7013 = vadd.f32 0.0, %v7012
  %v7014 = vpop.f32.mrb[0].mxu0
  %7015 = vmatprep.mubr.f32.mxu0 0.0
  %7016 = vmatmul.mubr.f32.gmra.mrb[0].mxu0 %v6735
  %v7017 = vpop.f32.mrb[0].mxu0
  %v7018 = vadd.f32 0.0, %v7017
  %v7019 = vpop.f32.mrb[0].mxu0
  %7020 = vmatprep.mubr.f32.mxu0 0.0
  %7021 = vmatmul.mubr.f32.gmra.mrb[0].mxu0 %v6738
  %v7022 = vpop.f32.mrb[0].mxu0
  %v7023 = vadd.f32 0.0, %v7022
  %v7024 = vpop.f32.mrb[0].mxu0
  %7025 = vmatprep.mubr.f32.mxu0 0.0
  %7026 = vmatmul.mubr.f32.gmra.mrb[0].mxu0 %v6741
  %v7027 = vpop.f32.mrb[0].mxu0
  %v7028 = vadd.f32 0.0, %v7027
  %v7029 = vpop.f32.mrb[0].mxu0
  %7030 = vmatprep.mubr.f32.mxu0 0.0
  %7031 = vmatmul.mubr.f32.gmra.mrb[0].mxu0 %v6744
  %v7032 = vpop.f32.mrb[0].mxu0
  %v7033 = vadd.f32 0.0, %v7032
  %v7034 = vpop.f32.mrb[0].mxu0
  %7035 = vmatprep.mubr.f32.mxu0 0.0
  %7036 = vmatmul.mubr.f32.gmra.mrb[0].mxu0 %v6747
  %v7037 = vpop.f32.mrb[0].mxu0
  %v7038 = vadd.f32 0.0, %v7037
  %v7039 = vpop.f32.mrb[0].mxu0
  %7040 = vmatprep.mubr.f32.mxu0 0.0
  %7041 = vmatmul.mubr.f32.gmra.mrb[0].mxu0 %v6750
  %v7042 = vpop.f32.mrb[0].mxu0
  %v7043 = vadd.f32 0.0, %v7042
  %v7044 = vpop.f32.mrb[0].mxu0
  %7045 = vmatprep.mubr.f32.mxu0 0.0
  %7046 = vmatmul.mubr.f32.gmra.mrb[0].mxu0 %v6753
  %v7047 = vpop.f32.mrb[0].mxu0
  %v7048 = vadd.f32 0.0, %v7047
  %v7049 = vpop.f32.mrb[0].mxu0
  %7050 = vmatprep.mubr.f32.mxu0 0.0
  %7051 = vmatmul.mubr.f32.gmra.mrb[0].mxu0 %v6756
  %v7052 = vpop.f32.mrb[0].mxu0
  %v7053 = vadd.f32 0.0, %v7052
  %v7054 = vpop.f32.mrb[0].mxu0
  %7055 = vmatprep.mubr.f32.mxu0 0.0
  %7056 = vmatmul.mubr.f32.gmra.mrb[0].mxu0 %v6759
  %v7057 = vpop.f32.mrb[0].mxu0
  %v7058 = vadd.f32 0.0, %v7057
  %v7059 = vpop.f32.mrb[0].mxu0
  %7060 = vmatprep.mubr.f32.mxu0 0.0
  %7061 = vmatmul.mubr.f32.gmra.mrb[0].mxu0 %v6762
  %v7062 = vpop.f32.mrb[0].mxu0
  %v7063 = vadd.f32 0.0, %v7062
  %v7064 = vpop.f32.mrb[0].mxu0
  %7065 = vmatprep.mubr.f32.mxu0 0.0
  %7066 = vmatmul.mubr.f32.gmra.mrb[0].mxu0 %v6765
  %v7067 = vpop.f32.mrb[0].mxu0
  %v7068 = vadd.f32 0.0, %v7067
  %v7069 = vpop.f32.mrb[0].mxu0
  %7070 = vmatprep.mubr.f32.mxu0 0.0
  %7071 = vmatmul.mubr.f32.gmra.mrb[0].mxu0 %v6768
  %v7072 = vpop.f32.mrb[0].mxu0
  %v7073 = vadd.f32 0.0, %v7072
  %v7074 = vpop.f32.mrb[0].mxu0
  %7075 = vmatprep.mubr.f32.mxu0 0.0
  %7076 = vmatmul.mubr.f32.gmra.mrb[0].mxu0 %v6771
  %v7077 = vpop.f32.mrb[0].mxu0
  %v7078 = vadd.f32 0.0, %v7077
  %v7079 = vpop.f32.mrb[0].mxu0
  %7080 = vmatprep.mubr.f32.mxu0 0.0
  %7081 = vmatmul.mubr.f32.gmra.mrb[0].mxu0 %v6774
  %v7082 = vpop.f32.mrb[0].mxu0
  %v7083 = vadd.f32 0.0, %v7082
  %v7084 = vpop.f32.mrb[0].mxu0
  %7085 = vmatprep.mubr.f32.mxu0 0.0
  %7086 = vmatmul.mubr.f32.gmra.mrb[0].mxu0 %v6777
  %v7087 = vpop.f32.mrb[0].mxu0
  %v7088 = vadd.f32 0.0, %v7087
  %v7089 = vpop.f32.mrb[0].mxu0
  %7090 = vmatprep.mubr.f32.mxu0 0.0
  %7091 = vmatmul.mubr.f32.gmra.mrb[0].mxu0 %v6780
  %v7092 = vpop.f32.mrb[0].mxu0
  %v7093 = vadd.f32 0.0, %v7092
  %v7094 = vpop.f32.mrb[0].mxu0
  %7095 = vmatprep.mubr.f32.mxu0 0.0
  %7096 = vmatmul.mubr.f32.gmra.mrb[0].mxu0 %v6783
  %v7097 = vpop.f32.mrb[0].mxu0
  %v7098 = vadd.f32 0.0, %v7097
  %v7099 = vpop.f32.mrb[0].mxu0
  %7100 = vmatprep.mubr.f32.mxu0 0.0
  %7101 = vmatmul.mubr.f32.gmra.mrb[0].mxu0 %v6786
  %v7102 = vpop.f32.mrb[0].mxu0
  %v7103 = vadd.f32 0.0, %v7102
  %v7104 = vpop.f32.mrb[0].mxu0
  %7105 = vmatprep.mubr.f32.mxu0 0.0
  %7106 = vmatmul.mubr.f32.gmra.mrb[0].mxu0 %v6789
  %v7107 = vpop.f32.mrb[0].mxu0
  %v7108 = vadd.f32 0.0, %v7107
  %v7109 = vpop.f32.mrb[0].mxu0
  %7110 = vmatprep.mubr.f32.mxu0 0.0
  %7111 = vmatmul.mubr.f32.gmra.mrb[0].mxu0 %v6792
  %v7112 = vpop.f32.mrb[0].mxu0
  %v7113 = vadd.f32 0.0, %v7112
  %v7114 = vpop.f32.mrb[0].mxu0
  %7115 = vmatprep.mubr.f32.mxu0 0.0
  %7116 = vmatmul.mubr.f32.gmra.mrb[0].mxu0 %v6795
  %v7117 = vpop.f32.mrb[0].mxu0
  %v7118 = vadd.f32 0.0, %v7117
  %v7119 = vpop.f32.mrb[0].mxu0
  %7120 = vmatprep.mubr.f32.mxu0 0.0
  %7121 = vmatmul.mubr.f32.gmra.mrb[0].mxu0 %v6798
  %v7122 = vpop.f32.mrb[0].mxu0
  %v7123 = vadd.f32 0.0, %v7122
  %v7124 = vpop.f32.mrb[0].mxu0
  %7125 = vmatprep.mubr.f32.mxu0 0.0
  %7126 = vmatmul.mubr.f32.gmra.mrb[0].mxu0 %v6801
  %v7127 = vpop.f32.mrb[0].mxu0
  %v7128 = vadd.f32 0.0, %v7127
  %v7129 = vpop.f32.mrb[0].mxu0
  %7130 = vmatprep.mubr.f32.mxu0 0.0
  %7131 = vmatmul.mubr.f32.gmra.mrb[0].mxu0 %v6804
  %v7132 = vpop.f32.mrb[0].mxu0
  %v7133 = vadd.f32 0.0, %v7132
  %v7134 = vpop.f32.mrb[0].mxu0
  %7135 = vmatprep.mubr.f32.mxu0 0.0
  %7136 = vmatmul.mubr.f32.gmra.mrb[0].mxu0 %v6807
  %v7137 = vpop.f32.mrb[0].mxu0
  %v7138 = vadd.f32 0.0, %v7137
  %v7139 = vpop.f32.mrb[0].mxu0
  %7140 = vmatprep.mubr.f32.mxu0 0.0
  %7141 = vmatmul.mubr.f32.gmra.mrb[0].mxu0 %v6810
  %v7142 = vpop.f32.mrb[0].mxu0
  %v7143 = vadd.f32 0.0, %v7142
  %v7144 = vpop.f32.mrb[0].mxu0
  %7145 = vmatprep.mubr.f32.mxu0 0.0
  %7146 = vmatmul.mubr.f32.gmra.mrb[0].mxu0 %v6813
  %v7147 = vpop.f32.mrb[0].mxu0
  %v7148 = vadd.f32 0.0, %v7147
  %v7149 = vpop.f32.mrb[0].mxu0
  %7150 = vmatprep.mubr.f32.mxu0 0.0
  %7151 = vmatmul.mubr.f32.gmra.mrb[0].mxu0 %v6816
  %v7152 = vpop.f32.mrb[0].mxu0
  %v7153 = vadd.f32 0.0, %v7152
  %v7154 = vpop.f32.mrb[0].mxu0
  %7155 = vmatprep.mubr.f32.mxu0 0.0
  %7156 = vmatmul.mubr.f32.gmra.mrb[0].mxu0 %v6819
  %v7157 = vpop.f32.mrb[0].mxu0
  %v7158 = vadd.f32 0.0, %v7157
  %v7159 = vpop.f32.mrb[0].mxu0
  %7160 = vmatprep.mubr.f32.mxu0 0.0
  %7161 = vmatmul.mubr.f32.gmra.mrb[0].mxu0 %v6822
  %v7162 = vpop.f32.mrb[0].mxu0
  %v7163 = vadd.f32 0.0, %v7162
  %v7164 = vpop.f32.mrb[0].mxu0
  %7165 = vmatprep.mubr.f32.mxu0 0.0
  %7166 = vmatmul.mubr.f32.gmra.mrb[0].mxu0 %v6825
  %v7167 = vpop.f32.mrb[0].mxu0
  %v7168 = vadd.f32 0.0, %v7167
  %v7169 = vpop.f32.mrb[0].mxu0
  %7170 = vmatprep.mubr.f32.mxu0 0.0
  %7171 = vmatmul.mubr.f32.gmra.mrb[0].mxu0 %v6828
  %v7172 = vpop.f32.mrb[0].mxu0
  %v7173 = vadd.f32 0.0, %v7172
  %v7174 = vpop.f32.mrb[0].mxu0
  %7175 = vmatprep.mubr.f32.mxu0 0.0
  %7176 = vmatmul.mubr.f32.gmra.mrb[0].mxu0 %v6831
  %v7177 = vpop.f32.mrb[0].mxu0
  %v7178 = vadd.f32 0.0, %v7177
  %v7179 = vpop.f32.mrb[0].mxu0
  %7180 = vmatprep.mubr.f32.mxu0 0.0
  %7181 = vmatmul.mubr.f32.gmra.mrb[0].mxu0 %v6834
  %v7182 = vpop.f32.mrb[0].mxu0
  %v7183 = vadd.f32 0.0, %v7182
  %v7184 = vpop.f32.mrb[0].mxu0
  %7185 = vmatprep.mubr.f32.mxu0 0.0
  %7186 = vmatmul.mubr.f32.gmra.mrb[0].mxu0 %v6837
  %v7187 = vpop.f32.mrb[0].mxu0
  %v7188 = vadd.f32 0.0, %v7187
  %v7189 = vpop.f32.mrb[0].mxu0
  %7190 = vmatprep.mubr.f32.mxu0 0.0
  %7191 = vmatmul.mubr.f32.gmra.mrb[0].mxu0 %v6840
  %v7192 = vpop.f32.mrb[0].mxu0
  %v7193 = vadd.f32 0.0, %v7192
  %v7194 = vpop.f32.mrb[0].mxu0
  %7195 = vmatprep.mubr.f32.mxu0 0.0
  %7196 = vmatmul.mubr.f32.gmra.mrb[0].mxu0 %v6843
  %v7197 = vpop.f32.mrb[0].mxu0
  %v7198 = vadd.f32 0.0, %v7197
  %v7199 = vpop.f32.mrb[0].mxu0
  %7200 = vmatprep.mubr.f32.mxu0 0.0
  %7201 = vmatmul.mubr.f32.gmra.mrb[0].mxu0 %v6846
  %v7202 = vpop.f32.mrb[0].mxu0
  %v7203 = vadd.f32 0.0, %v7202
  %v7204 = vpop.f32.mrb[0].mxu0
  %7205 = vmatprep.mubr.f32.mxu0 0.0
  %7206 = vmatmul.mubr.f32.gmra.mrb[0].mxu0 %v6849
  %v7207 = vpop.f32.mrb[0].mxu0
  %v7208 = vadd.f32 0.0, %v7207
  %v7209 = vpop.f32.mrb[0].mxu0
  %7210 = vmatprep.mubr.f32.mxu0 0.0
  %7211 = vmatmul.mubr.f32.gmra.mrb[0].mxu0 %v6852
  %v7212 = vpop.f32.mrb[0].mxu0
  %v7213 = vadd.f32 0.0, %v7212
  %v7214 = vpop.f32.mrb[0].mxu0
  %7215 = vmatprep.mubr.f32.mxu0 0.0
  %7216 = vmatmul.mubr.f32.gmra.mrb[0].mxu0 %v6855
  %v7217 = vpop.f32.mrb[0].mxu0
  %v7218 = vadd.f32 0.0, %v7217
  %v7219 = vpop.f32.mrb[0].mxu0
  %7220 = vmatprep.mubr.f32.mxu0 0.0
  %7221 = vmatmul.mubr.f32.gmra.mrb[0].mxu0 %v6858
  %v7222 = vpop.f32.mrb[0].mxu0
  %v7223 = vadd.f32 0.0, %v7222
  %v7224 = vpop.f32.mrb[0].mxu0
  %7225 = vmatprep.mubr.f32.mxu0 0.0
  %7226 = vmatmul.mubr.f32.gmra.mrb[0].mxu0 %v6861
  %v7227 = vpop.f32.mrb[0].mxu0
  %v7228 = vadd.f32 0.0, %v7227
  %v7229 = vpop.f32.mrb[0].mxu0
  %7230 = vmatprep.mubr.f32.mxu0 0.0
  %7231 = vmatmul.mubr.f32.gmra.mrb[0].mxu0 %v6864
  %v7232 = vpop.f32.mrb[0].mxu0
  %v7233 = vadd.f32 0.0, %v7232
  %v7234 = vpop.f32.mrb[0].mxu0
  %7235 = vmatprep.mubr.f32.mxu0 0.0
  %7236 = vmatmul.mubr.f32.gmra.mrb[0].mxu0 %v6867
  %v7237 = vpop.f32.mrb[0].mxu0
  %v7238 = vadd.f32 0.0, %v7237
  %v7239 = vpop.f32.mrb[0].mxu0
  %7240 = vmatprep.mubr.f32.mxu0 0.0
  %7241 = vmatmul.mubr.f32.gmra.mrb[0].mxu0 %v6870
  %v7242 = vpop.f32.mrb[0].mxu0
  %v7243 = vadd.f32 0.0, %v7242
  %v7244 = vpop.f32.mrb[0].mxu0
  %7245 = vmatprep.mubr.f32.mxu0 0.0
  %7246 = vmatmul.mubr.f32.gmra.mrb[0].mxu0 %v6873
  %v7247 = vpop.f32.mrb[0].mxu0
  %v7248 = vadd.f32 0.0, %v7247
  %v7249 = vpop.f32.mrb[0].mxu0
  %7250 = vmatprep.mubr.f32.mxu0 0.0
  %7251 = vmatmul.mubr.f32.gmra.mrb[0].mxu0 %v6876
  %v7252 = vpop.f32.mrb[0].mxu0
  %v7253 = vadd.f32 0.0, %v7252
  %v7254 = vpop.f32.mrb[0].mxu0
  %7255 = vmatprep.mubr.f32.mxu0 0.0
  %7256 = vmatmul.mubr.f32.gmra.mrb[0].mxu0 %v6879
  %v7257 = vpop.f32.mrb[0].mxu0
  %v7258 = vadd.f32 0.0, %v7257
  %v7259 = vpop.f32.mrb[0].mxu0
  %7260 = vmatprep.mubr.f32.mxu0 0.0
  %7261 = vmatmul.mubr.f32.gmra.mrb[0].mxu0 %v6882
  %v7262 = vpop.f32.mrb[0].mxu0
  %v7263 = vadd.f32 0.0, %v7262
  %v7264 = vpop.f32.mrb[0].mxu0
  %7265 = vmatprep.mubr.f32.mxu0 0.0
  %7266 = vmatmul.mubr.f32.gmra.mrb[0].mxu0 %v6885
  %v7267 = vpop.f32.mrb[0].mxu0
  %v7268 = vadd.f32 0.0, %v7267
  %v7269 = vpop.f32.mrb[0].mxu0
  %7270 = vmatprep.mubr.f32.mxu0 0.0
  %7271 = vmatmul.mubr.f32.gmra.mrb[0].mxu0 %v6888
  %v7272 = vpop.f32.mrb[0].mxu0
  %v7273 = vadd.f32 0.0, %v7272
  %v7274 = vpop.f32.mrb[0].mxu0
  %7275 = vmatprep.mubr.f32.mxu0 0.0
  %7276 = vmatmul.mubr.f32.gmra.mrb[0].mxu0 %v6891
  %v7277 = vpop.f32.mrb[0].mxu0
  %v7278 = vadd.f32 0.0, %v7277
  %v7279 = vpop.f32.mrb[0].mxu0
  %7280 = vdwg.mxu0
  %v7281 = vld [vmem:[%s5] sm:$0x1]
  %v7282 = vld [vmem:[%s6] sm:$0x1]
  %v7283 = vsel %vm26, %v6963, 0.0
  %v7284 = vsel %vm26, %v6968, 0.0
  %v7285 = vadd.f32 %v7283, %v7284
  %v7286 = vsel %vm26, %v6973, 0.0
  %v7287 = vadd.f32 %v7285, %v7286
  %v7288 = vsel %vm26, %v6978, 0.0
  %v7289 = vadd.f32 %v7287, %v7288
  %v7290 = vsel %vm26, %v6983, 0.0
  %v7291 = vadd.f32 %v7289, %v7290
  %v7292 = vsel %vm26, %v6988, 0.0
  %v7293 = vadd.f32 %v7291, %v7292
  %v7294 = vsel %vm26, %v6993, 0.0
  %v7295 = vadd.f32 %v7293, %v7294
  %v7296 = vsel %vm26, %v6998, 0.0
  %v7297 = vadd.f32 %v7295, %v7296
  %v7298 = vsel %vm26, %v7003, 0.0
  %v7299 = vadd.f32 %v7297, %v7298
  %v7300 = vsel %vm26, %v7008, 0.0
  %v7301 = vadd.f32 %v7299, %v7300
  %v7302 = vsel %vm26, %v7013, 0.0
  %v7303 = vadd.f32 %v7301, %v7302
  %v7304 = vsel %vm26, %v7018, 0.0
  %v7305 = vadd.f32 %v7303, %v7304
  %v7306 = vsel %vm26, %v7023, 0.0
  %v7307 = vadd.f32 %v7305, %v7306
  %v7308 = vsel %vm26, %v7028, 0.0
  %v7309 = vadd.f32 %v7307, %v7308
  %v7310 = vsel %vm26, %v7033, 0.0
  %v7311 = vadd.f32 %v7309, %v7310
  %v7312 = vsel %vm26, %v7038, 0.0
  %v7313 = vadd.f32 %v7311, %v7312
  %v7314 = vsel %vm26, %v7043, 0.0
  %v7315 = vadd.f32 %v7313, %v7314
  %v7316 = vsel %vm26, %v7048, 0.0
  %v7317 = vadd.f32 %v7315, %v7316
  %v7318 = vsel %vm26, %v7053, 0.0
  %v7319 = vadd.f32 %v7317, %v7318
  %v7320 = vsel %vm26, %v7058, 0.0
  %v7321 = vadd.f32 %v7319, %v7320
  %v7322 = vsel %vm26, %v7063, 0.0
  %v7323 = vadd.f32 %v7321, %v7322
  %v7324 = vsel %vm26, %v7068, 0.0
  %v7325 = vadd.f32 %v7323, %v7324
  %v7326 = vsel %vm26, %v7073, 0.0
  %v7327 = vadd.f32 %v7325, %v7326
  %v7328 = vsel %vm26, %v7078, 0.0
  %v7329 = vadd.f32 %v7327, %v7328
  %v7330 = vsel %vm26, %v7083, 0.0
  %v7331 = vadd.f32 %v7329, %v7330
  %v7332 = vsel %vm26, %v7088, 0.0
  %v7333 = vadd.f32 %v7331, %v7332
  %v7334 = vsel %vm26, %v7093, 0.0
  %v7335 = vadd.f32 %v7333, %v7334
  %v7336 = vsel %vm26, %v7098, 0.0
  %v7337 = vadd.f32 %v7335, %v7336
  %v7338 = vsel %vm26, %v7103, 0.0
  %v7339 = vadd.f32 %v7337, %v7338
  %v7340 = vsel %vm26, %v7108, 0.0
  %v7341 = vadd.f32 %v7339, %v7340
  %v7342 = vsel %vm26, %v7113, 0.0
  %v7343 = vadd.f32 %v7341, %v7342
  %v7344 = vsel %vm26, %v7118, 0.0
  %v7345 = vadd.f32 %v7343, %v7344
  %v7346 = vsel %vm26, %v7123, 0.0
  %v7347 = vadd.f32 %v7345, %v7346
  %v7348 = vsel %vm26, %v7128, 0.0
  %v7349 = vadd.f32 %v7347, %v7348
  %v7350 = vsel %vm26, %v7133, 0.0
  %v7351 = vadd.f32 %v7349, %v7350
  %v7352 = vsel %vm26, %v7138, 0.0
  %v7353 = vadd.f32 %v7351, %v7352
  %v7354 = vsel %vm26, %v7143, 0.0
  %v7355 = vadd.f32 %v7353, %v7354
  %v7356 = vsel %vm26, %v7148, 0.0
  %v7357 = vadd.f32 %v7355, %v7356
  %v7358 = vsel %vm26, %v7153, 0.0
  %v7359 = vadd.f32 %v7357, %v7358
  %v7360 = vsel %vm26, %v7158, 0.0
  %v7361 = vadd.f32 %v7359, %v7360
  %v7362 = vsel %vm26, %v7163, 0.0
  %v7363 = vadd.f32 %v7361, %v7362
  %v7364 = vsel %vm26, %v7168, 0.0
  %v7365 = vadd.f32 %v7363, %v7364
  %v7366 = vsel %vm26, %v7173, 0.0
  %v7367 = vadd.f32 %v7365, %v7366
  %v7368 = vsel %vm26, %v7178, 0.0
  %v7369 = vadd.f32 %v7367, %v7368
  %v7370 = vsel %vm26, %v7183, 0.0
  %v7371 = vadd.f32 %v7369, %v7370
  %v7372 = vsel %vm26, %v7188, 0.0
  %v7373 = vadd.f32 %v7371, %v7372
  %v7374 = vsel %vm26, %v7193, 0.0
  %v7375 = vadd.f32 %v7373, %v7374
  %v7376 = vsel %vm26, %v7198, 0.0
  %v7377 = vadd.f32 %v7375, %v7376
  %v7378 = vsel %vm26, %v7203, 0.0
  %v7379 = vadd.f32 %v7377, %v7378
  %v7380 = vsel %vm26, %v7208, 0.0
  %v7381 = vadd.f32 %v7379, %v7380
  %v7382 = vsel %vm26, %v7213, 0.0
  %v7383 = vadd.f32 %v7381, %v7382
  %v7384 = vsel %vm26, %v7218, 0.0
  %v7385 = vadd.f32 %v7383, %v7384
  %v7386 = vsel %vm26, %v7223, 0.0
  %v7387 = vadd.f32 %v7385, %v7386
  %v7388 = vsel %vm26, %v7228, 0.0
  %v7389 = vadd.f32 %v7387, %v7388
  %v7390 = vsel %vm26, %v7233, 0.0
  %v7391 = vadd.f32 %v7389, %v7390
  %v7392 = vsel %vm26, %v7238, 0.0
  %v7393 = vadd.f32 %v7391, %v7392
  %v7394 = vsel %vm26, %v7243, 0.0
  %v7395 = vadd.f32 %v7393, %v7394
  %v7396 = vsel %vm26, %v7248, 0.0
  %v7397 = vadd.f32 %v7395, %v7396
  %v7398 = vsel %vm26, %v7253, 0.0
  %v7399 = vadd.f32 %v7397, %v7398
  %v7400 = vsel %vm26, %v7258, 0.0
  %v7401 = vadd.f32 %v7399, %v7400
  %v7402 = vsel %vm26, %v7263, 0.0
  %v7403 = vadd.f32 %v7401, %v7402
  %v7404 = vsel %vm26, %v7268, 0.0
  %v7405 = vadd.f32 %v7403, %v7404
  %v7406 = vsel %vm26, %v7273, 0.0
  %v7407 = vadd.f32 %v7405, %v7406
  %v7408 = vsel %vm26, %v7278, 0.0
  %v7409 = vadd.f32 %v7407, %v7408
  %v7410 = vrot.slane %v7409, 4
  %v7411 = vadd.f32 %v7409, %v7410
  %v7412 = vrot.slane %v7411, 2
  %v7413 = vadd.f32 %v7411, %v7412
  %v7414 = vrot.slane %v7413, 1
  %v7415 = vadd.f32 %v7413, %v7414
  %v7416 = vmul.f32 %v6963, %v6963
  %v7417 = vmul.f32 %v6968, %v6968
  %v7418 = vmul.f32 %v6973, %v6973
  %v7419 = vmul.f32 %v6978, %v6978
  %v7420 = vmul.f32 %v6983, %v6983
  %v7421 = vmul.f32 %v6988, %v6988
  %v7422 = vmul.f32 %v6993, %v6993
  %v7423 = vmul.f32 %v6998, %v6998
  %v7424 = vmul.f32 %v7003, %v7003
  %v7425 = vmul.f32 %v7008, %v7008
  %v7426 = vmul.f32 %v7013, %v7013
  %v7427 = vmul.f32 %v7018, %v7018
  %v7428 = vmul.f32 %v7023, %v7023
  %v7429 = vmul.f32 %v7028, %v7028
  %v7430 = vmul.f32 %v7033, %v7033
  %v7431 = vmul.f32 %v7038, %v7038
  %v7432 = vmul.f32 %v7043, %v7043
  %v7433 = vmul.f32 %v7048, %v7048
  %v7434 = vmul.f32 %v7053, %v7053
  %v7435 = vmul.f32 %v7058, %v7058
  %v7436 = vmul.f32 %v7063, %v7063
  %v7437 = vmul.f32 %v7068, %v7068
  %v7438 = vmul.f32 %v7073, %v7073
  %v7439 = vmul.f32 %v7078, %v7078
  %v7440 = vmul.f32 %v7083, %v7083
  %v7441 = vmul.f32 %v7088, %v7088
  %v7442 = vmul.f32 %v7093, %v7093
  %v7443 = vmul.f32 %v7098, %v7098
  %v7444 = vmul.f32 %v7103, %v7103
  %v7445 = vmul.f32 %v7108, %v7108
  %v7446 = vmul.f32 %v7113, %v7113
  %v7447 = vmul.f32 %v7118, %v7118
  %v7448 = vmul.f32 %v7123, %v7123
  %v7449 = vmul.f32 %v7128, %v7128
  %v7450 = vmul.f32 %v7133, %v7133
  %v7451 = vmul.f32 %v7138, %v7138
  %v7452 = vmul.f32 %v7143, %v7143
  %v7453 = vmul.f32 %v7148, %v7148
  %v7454 = vmul.f32 %v7153, %v7153
  %v7455 = vmul.f32 %v7158, %v7158
  %v7456 = vmul.f32 %v7163, %v7163
  %v7457 = vmul.f32 %v7168, %v7168
  %v7458 = vmul.f32 %v7173, %v7173
  %v7459 = vmul.f32 %v7178, %v7178
  %v7460 = vmul.f32 %v7183, %v7183
  %v7461 = vmul.f32 %v7188, %v7188
  %v7462 = vmul.f32 %v7193, %v7193
  %v7463 = vmul.f32 %v7198, %v7198
  %v7464 = vmul.f32 %v7203, %v7203
  %v7465 = vmul.f32 %v7208, %v7208
  %v7466 = vmul.f32 %v7213, %v7213
  %v7467 = vmul.f32 %v7218, %v7218
  %v7468 = vmul.f32 %v7223, %v7223
  %v7469 = vmul.f32 %v7228, %v7228
  %v7470 = vmul.f32 %v7233, %v7233
  %v7471 = vmul.f32 %v7238, %v7238
  %v7472 = vmul.f32 %v7243, %v7243
  %v7473 = vmul.f32 %v7248, %v7248
  %v7474 = vmul.f32 %v7253, %v7253
  %v7475 = vmul.f32 %v7258, %v7258
  %v7476 = vmul.f32 %v7263, %v7263
  %v7477 = vmul.f32 %v7268, %v7268
  %v7478 = vmul.f32 %v7273, %v7273
  %v7479 = vmul.f32 %v7278, %v7278
  %v7480 = vsel %vm26, %v7416, 0.0
  %v7481 = vsel %vm26, %v7417, 0.0
  %v7482 = vadd.f32 %v7480, %v7481
  %v7483 = vsel %vm26, %v7418, 0.0
  %v7484 = vadd.f32 %v7482, %v7483
  %v7485 = vsel %vm26, %v7419, 0.0
  %v7486 = vadd.f32 %v7484, %v7485
  %v7487 = vsel %vm26, %v7420, 0.0
  %v7488 = vadd.f32 %v7486, %v7487
  %v7489 = vsel %vm26, %v7421, 0.0
  %v7490 = vadd.f32 %v7488, %v7489
  %v7491 = vsel %vm26, %v7422, 0.0
  %v7492 = vadd.f32 %v7490, %v7491
  %v7493 = vsel %vm26, %v7423, 0.0
  %v7494 = vadd.f32 %v7492, %v7493
  %v7495 = vsel %vm26, %v7424, 0.0
  %v7496 = vadd.f32 %v7494, %v7495
  %v7497 = vsel %vm26, %v7425, 0.0
  %v7498 = vadd.f32 %v7496, %v7497
  %v7499 = vsel %vm26, %v7426, 0.0
  %v7500 = vadd.f32 %v7498, %v7499
  %v7501 = vsel %vm26, %v7427, 0.0
  %v7502 = vadd.f32 %v7500, %v7501
  %v7503 = vsel %vm26, %v7428, 0.0
  %v7504 = vadd.f32 %v7502, %v7503
  %v7505 = vsel %vm26, %v7429, 0.0
  %v7506 = vadd.f32 %v7504, %v7505
  %v7507 = vsel %vm26, %v7430, 0.0
  %v7508 = vadd.f32 %v7506, %v7507
  %v7509 = vsel %vm26, %v7431, 0.0
  %v7510 = vadd.f32 %v7508, %v7509
  %v7511 = vsel %vm26, %v7432, 0.0
  %v7512 = vadd.f32 %v7510, %v7511
  %v7513 = vsel %vm26, %v7433, 0.0
  %v7514 = vadd.f32 %v7512, %v7513
  %v7515 = vsel %vm26, %v7434, 0.0
  %v7516 = vadd.f32 %v7514, %v7515
  %v7517 = vsel %vm26, %v7435, 0.0
  %v7518 = vadd.f32 %v7516, %v7517
  %v7519 = vsel %vm26, %v7436, 0.0
  %v7520 = vadd.f32 %v7518, %v7519
  %v7521 = vsel %vm26, %v7437, 0.0
  %v7522 = vadd.f32 %v7520, %v7521
  %v7523 = vsel %vm26, %v7438, 0.0
  %v7524 = vadd.f32 %v7522, %v7523
  %v7525 = vsel %vm26, %v7439, 0.0
  %v7526 = vadd.f32 %v7524, %v7525
  %v7527 = vsel %vm26, %v7440, 0.0
  %v7528 = vadd.f32 %v7526, %v7527
  %v7529 = vsel %vm26, %v7441, 0.0
  %v7530 = vadd.f32 %v7528, %v7529
  %v7531 = vsel %vm26, %v7442, 0.0
  %v7532 = vadd.f32 %v7530, %v7531
  %v7533 = vsel %vm26, %v7443, 0.0
  %v7534 = vadd.f32 %v7532, %v7533
  %v7535 = vsel %vm26, %v7444, 0.0
  %v7536 = vadd.f32 %v7534, %v7535
  %v7537 = vsel %vm26, %v7445, 0.0
  %v7538 = vadd.f32 %v7536, %v7537
  %v7539 = vsel %vm26, %v7446, 0.0
  %v7540 = vadd.f32 %v7538, %v7539
  %v7541 = vsel %vm26, %v7447, 0.0
  %v7542 = vadd.f32 %v7540, %v7541
  %v7543 = vsel %vm26, %v7448, 0.0
  %v7544 = vadd.f32 %v7542, %v7543
  %v7545 = vsel %vm26, %v7449, 0.0
  %v7546 = vadd.f32 %v7544, %v7545
  %v7547 = vsel %vm26, %v7450, 0.0
  %v7548 = vadd.f32 %v7546, %v7547
  %v7549 = vsel %vm26, %v7451, 0.0
  %v7550 = vadd.f32 %v7548, %v7549
  %v7551 = vsel %vm26, %v7452, 0.0
  %v7552 = vadd.f32 %v7550, %v7551
  %v7553 = vsel %vm26, %v7453, 0.0
  %v7554 = vadd.f32 %v7552, %v7553
  %v7555 = vsel %vm26, %v7454, 0.0
  %v7556 = vadd.f32 %v7554, %v7555
  %v7557 = vsel %vm26, %v7455, 0.0
  %v7558 = vadd.f32 %v7556, %v7557
  %v7559 = vsel %vm26, %v7456, 0.0
  %v7560 = vadd.f32 %v7558, %v7559
  %v7561 = vsel %vm26, %v7457, 0.0
  %v7562 = vadd.f32 %v7560, %v7561
  %v7563 = vsel %vm26, %v7458, 0.0
  %v7564 = vadd.f32 %v7562, %v7563
  %v7565 = vsel %vm26, %v7459, 0.0
  %v7566 = vadd.f32 %v7564, %v7565
  %v7567 = vsel %vm26, %v7460, 0.0
  %v7568 = vadd.f32 %v7566, %v7567
  %v7569 = vsel %vm26, %v7461, 0.0
  %v7570 = vadd.f32 %v7568, %v7569
  %v7571 = vsel %vm26, %v7462, 0.0
  %v7572 = vadd.f32 %v7570, %v7571
  %v7573 = vsel %vm26, %v7463, 0.0
  %v7574 = vadd.f32 %v7572, %v7573
  %v7575 = vsel %vm26, %v7464, 0.0
  %v7576 = vadd.f32 %v7574, %v7575
  %v7577 = vsel %vm26, %v7465, 0.0
  %v7578 = vadd.f32 %v7576, %v7577
  %v7579 = vsel %vm26, %v7466, 0.0
  %v7580 = vadd.f32 %v7578, %v7579
  %v7581 = vsel %vm26, %v7467, 0.0
  %v7582 = vadd.f32 %v7580, %v7581
  %v7583 = vsel %vm26, %v7468, 0.0
  %v7584 = vadd.f32 %v7582, %v7583
  %v7585 = vsel %vm26, %v7469, 0.0
  %v7586 = vadd.f32 %v7584, %v7585
  %v7587 = vsel %vm26, %v7470, 0.0
  %v7588 = vadd.f32 %v7586, %v7587
  %v7589 = vsel %vm26, %v7471, 0.0
  %v7590 = vadd.f32 %v7588, %v7589
  %v7591 = vsel %vm26, %v7472, 0.0
  %v7592 = vadd.f32 %v7590, %v7591
  %v7593 = vsel %vm26, %v7473, 0.0
  %v7594 = vadd.f32 %v7592, %v7593
  %v7595 = vsel %vm26, %v7474, 0.0
  %v7596 = vadd.f32 %v7594, %v7595
  %v7597 = vsel %vm26, %v7475, 0.0
  %v7598 = vadd.f32 %v7596, %v7597
  %v7599 = vsel %vm26, %v7476, 0.0
  %v7600 = vadd.f32 %v7598, %v7599
  %v7601 = vsel %vm26, %v7477, 0.0
  %v7602 = vadd.f32 %v7600, %v7601
  %v7603 = vsel %vm26, %v7478, 0.0
  %v7604 = vadd.f32 %v7602, %v7603
  %v7605 = vsel %vm26, %v7479, 0.0
  %v7606 = vadd.f32 %v7604, %v7605
  %v7607 = vrot.slane %v7606, 4
  %v7608 = vadd.f32 %v7606, %v7607
  %v7609 = vrot.slane %v7608, 2
  %v7610 = vadd.f32 %v7608, %v7609
  %v7611 = vrot.slane %v7610, 1
  %v7612 = vadd.f32 %v7610, %v7611
  %v7613 = vmul.f32 %v7415, 0.001953125
  %v7614 = vmul.f32 %v7612, 0.001953125
  %v7615 = vmul.f32 %v7613, %v7613
  %v7616 = vsub.f32 %v7614, %v7615
  %v7617 = vadd.f32 %v7616, 1e-05
  %v7618 = vrsqrt.pop %v7617
  %v7619 = vmul.f32 %v7281, %v7618
  %v7620 = vmul.f32 %v7613, %v7619
  %v7621 = vsub.f32 %v7282, %v7620
  %v7623 = vlaneseq
  %v7624 = vshrl.u32 %v7623, 7
  %v7625 = vsub.s32 0, %v7624
  %v7626 = vrot.slane %v7619, %v7625
  %v7628 = vmul.f32 %v6963, %v7626
  %v7629 = vmul.f32 %v6968, %v7626
  %v7630 = vmul.f32 %v6973, %v7626
  %v7631 = vmul.f32 %v6978, %v7626
  %v7632 = vmul.f32 %v6983, %v7626
  %v7633 = vmul.f32 %v6988, %v7626
  %v7634 = vmul.f32 %v6993, %v7626
  %v7635 = vmul.f32 %v6998, %v7626
  %v7636 = vmul.f32 %v7003, %v7626
  %v7637 = vmul.f32 %v7008, %v7626
  %v7638 = vmul.f32 %v7013, %v7626
  %v7639 = vmul.f32 %v7018, %v7626
  %v7640 = vmul.f32 %v7023, %v7626
  %v7641 = vmul.f32 %v7028, %v7626
  %v7642 = vmul.f32 %v7033, %v7626
  %v7643 = vmul.f32 %v7038, %v7626
  %v7644 = vmul.f32 %v7043, %v7626
  %v7645 = vmul.f32 %v7048, %v7626
  %v7646 = vmul.f32 %v7053, %v7626
  %v7647 = vmul.f32 %v7058, %v7626
  %v7648 = vmul.f32 %v7063, %v7626
  %v7649 = vmul.f32 %v7068, %v7626
  %v7650 = vmul.f32 %v7073, %v7626
  %v7651 = vmul.f32 %v7078, %v7626
  %v7652 = vmul.f32 %v7083, %v7626
  %v7653 = vmul.f32 %v7088, %v7626
  %v7654 = vmul.f32 %v7093, %v7626
  %v7655 = vmul.f32 %v7098, %v7626
  %v7656 = vmul.f32 %v7103, %v7626
  %v7657 = vmul.f32 %v7108, %v7626
  %v7658 = vmul.f32 %v7113, %v7626
  %v7659 = vmul.f32 %v7118, %v7626
  %v7660 = vmul.f32 %v7123, %v7626
  %v7661 = vmul.f32 %v7128, %v7626
  %v7662 = vmul.f32 %v7133, %v7626
  %v7663 = vmul.f32 %v7138, %v7626
  %v7664 = vmul.f32 %v7143, %v7626
  %v7665 = vmul.f32 %v7148, %v7626
  %v7666 = vmul.f32 %v7153, %v7626
  %v7667 = vmul.f32 %v7158, %v7626
  %v7668 = vmul.f32 %v7163, %v7626
  %v7669 = vmul.f32 %v7168, %v7626
  %v7670 = vmul.f32 %v7173, %v7626
  %v7671 = vmul.f32 %v7178, %v7626
  %v7672 = vmul.f32 %v7183, %v7626
  %v7673 = vmul.f32 %v7188, %v7626
  %v7674 = vmul.f32 %v7193, %v7626
  %v7675 = vmul.f32 %v7198, %v7626
  %v7676 = vmul.f32 %v7203, %v7626
  %v7677 = vmul.f32 %v7208, %v7626
  %v7678 = vmul.f32 %v7213, %v7626
  %v7679 = vmul.f32 %v7218, %v7626
  %v7680 = vmul.f32 %v7223, %v7626
  %v7681 = vmul.f32 %v7228, %v7626
  %v7682 = vmul.f32 %v7233, %v7626
  %v7683 = vmul.f32 %v7238, %v7626
  %v7684 = vmul.f32 %v7243, %v7626
  %v7685 = vmul.f32 %v7248, %v7626
  %v7686 = vmul.f32 %v7253, %v7626
  %v7687 = vmul.f32 %v7258, %v7626
  %v7688 = vmul.f32 %v7263, %v7626
  %v7689 = vmul.f32 %v7268, %v7626
  %v7690 = vmul.f32 %v7273, %v7626
  %v7691 = vmul.f32 %v7278, %v7626
  %v7693 = vlaneseq
  %v7694 = vshrl.u32 %v7693, 7
  %v7695 = vsub.s32 0, %v7694
  %v7696 = vrot.slane %v7621, %v7695
  %v7698 = vadd.f32 %v7628, %v7696
  %v7699 = vadd.f32 %v7629, %v7696
  %v7700 = vadd.f32 %v7630, %v7696
  %v7701 = vadd.f32 %v7631, %v7696
  %v7702 = vadd.f32 %v7632, %v7696
  %v7703 = vadd.f32 %v7633, %v7696
  %v7704 = vadd.f32 %v7634, %v7696
  %v7705 = vadd.f32 %v7635, %v7696
  %v7706 = vadd.f32 %v7636, %v7696
  %v7707 = vadd.f32 %v7637, %v7696
  %v7708 = vadd.f32 %v7638, %v7696
  %v7709 = vadd.f32 %v7639, %v7696
  %v7710 = vadd.f32 %v7640, %v7696
  %v7711 = vadd.f32 %v7641, %v7696
  %v7712 = vadd.f32 %v7642, %v7696
  %v7713 = vadd.f32 %v7643, %v7696
  %v7714 = vadd.f32 %v7644, %v7696
  %v7715 = vadd.f32 %v7645, %v7696
  %v7716 = vadd.f32 %v7646, %v7696
  %v7717 = vadd.f32 %v7647, %v7696
  %v7718 = vadd.f32 %v7648, %v7696
  %v7719 = vadd.f32 %v7649, %v7696
  %v7720 = vadd.f32 %v7650, %v7696
  %v7721 = vadd.f32 %v7651, %v7696
  %v7722 = vadd.f32 %v7652, %v7696
  %v7723 = vadd.f32 %v7653, %v7696
  %v7724 = vadd.f32 %v7654, %v7696
  %v7725 = vadd.f32 %v7655, %v7696
  %v7726 = vadd.f32 %v7656, %v7696
  %v7727 = vadd.f32 %v7657, %v7696
  %v7728 = vadd.f32 %v7658, %v7696
  %v7729 = vadd.f32 %v7659, %v7696
  %v7730 = vadd.f32 %v7660, %v7696
  %v7731 = vadd.f32 %v7661, %v7696
  %v7732 = vadd.f32 %v7662, %v7696
  %v7733 = vadd.f32 %v7663, %v7696
  %v7734 = vadd.f32 %v7664, %v7696
  %v7735 = vadd.f32 %v7665, %v7696
  %v7736 = vadd.f32 %v7666, %v7696
  %v7737 = vadd.f32 %v7667, %v7696
  %v7738 = vadd.f32 %v7668, %v7696
  %v7739 = vadd.f32 %v7669, %v7696
  %v7740 = vadd.f32 %v7670, %v7696
  %v7741 = vadd.f32 %v7671, %v7696
  %v7742 = vadd.f32 %v7672, %v7696
  %v7743 = vadd.f32 %v7673, %v7696
  %v7744 = vadd.f32 %v7674, %v7696
  %v7745 = vadd.f32 %v7675, %v7696
  %v7746 = vadd.f32 %v7676, %v7696
  %v7747 = vadd.f32 %v7677, %v7696
  %v7748 = vadd.f32 %v7678, %v7696
  %v7749 = vadd.f32 %v7679, %v7696
  %v7750 = vadd.f32 %v7680, %v7696
  %v7751 = vadd.f32 %v7681, %v7696
  %v7752 = vadd.f32 %v7682, %v7696
  %v7753 = vadd.f32 %v7683, %v7696
  %v7754 = vadd.f32 %v7684, %v7696
  %v7755 = vadd.f32 %v7685, %v7696
  %v7756 = vadd.f32 %v7686, %v7696
  %v7757 = vadd.f32 %v7687, %v7696
  %v7758 = vadd.f32 %v7688, %v7696
  %v7759 = vadd.f32 %v7689, %v7696
  %v7760 = vadd.f32 %v7690, %v7696
  %v7761 = vadd.f32 %v7691, %v7696
  %v7762 = vadd.f32 %v3944, %v7698
  %v7763 = vadd.f32 %v3945, %v7699
  %v7764 = vadd.f32 %v3946, %v7700
  %v7765 = vadd.f32 %v3947, %v7701
  %v7766 = vadd.f32 %v3948, %v7702
  %v7767 = vadd.f32 %v3949, %v7703
  %v7768 = vadd.f32 %v3950, %v7704
  %v7769 = vadd.f32 %v3951, %v7705
  %v7770 = vadd.f32 %v3952, %v7706
  %v7771 = vadd.f32 %v3953, %v7707
  %v7772 = vadd.f32 %v3954, %v7708
  %v7773 = vadd.f32 %v3955, %v7709
  %v7774 = vadd.f32 %v3956, %v7710
  %v7775 = vadd.f32 %v3957, %v7711
  %v7776 = vadd.f32 %v3958, %v7712
  %v7777 = vadd.f32 %v3959, %v7713
  %v7778 = vadd.f32 %v3960, %v7714
  %v7779 = vadd.f32 %v3961, %v7715
  %v7780 = vadd.f32 %v3962, %v7716
  %v7781 = vadd.f32 %v3963, %v7717
  %v7782 = vadd.f32 %v3964, %v7718
  %v7783 = vadd.f32 %v3965, %v7719
  %v7784 = vadd.f32 %v3966, %v7720
  %v7785 = vadd.f32 %v3967, %v7721
  %v7786 = vadd.f32 %v3968, %v7722
  %v7787 = vadd.f32 %v3969, %v7723
  %v7788 = vadd.f32 %v3970, %v7724
  %v7789 = vadd.f32 %v3971, %v7725
  %v7790 = vadd.f32 %v3972, %v7726
  %v7791 = vadd.f32 %v3973, %v7727
  %v7792 = vadd.f32 %v3974, %v7728
  %v7793 = vadd.f32 %v3975, %v7729
  %v7794 = vadd.f32 %v3976, %v7730
  %v7795 = vadd.f32 %v3977, %v7731
  %v7796 = vadd.f32 %v3978, %v7732
  %v7797 = vadd.f32 %v3979, %v7733
  %v7798 = vadd.f32 %v3980, %v7734
  %v7799 = vadd.f32 %v3981, %v7735
  %v7800 = vadd.f32 %v3982, %v7736
  %v7801 = vadd.f32 %v3983, %v7737
  %v7802 = vadd.f32 %v3984, %v7738
  %v7803 = vadd.f32 %v3985, %v7739
  %v7804 = vadd.f32 %v3986, %v7740
  %v7805 = vadd.f32 %v3987, %v7741
  %v7806 = vadd.f32 %v3988, %v7742
  %v7807 = vadd.f32 %v3989, %v7743
  %v7808 = vadd.f32 %v3990, %v7744
  %v7809 = vadd.f32 %v3991, %v7745
  %v7810 = vadd.f32 %v3992, %v7746
  %v7811 = vadd.f32 %v3993, %v7747
  %v7812 = vadd.f32 %v3994, %v7748
  %v7813 = vadd.f32 %v3995, %v7749
  %v7814 = vadd.f32 %v3996, %v7750
  %v7815 = vadd.f32 %v3997, %v7751
  %v7816 = vadd.f32 %v3998, %v7752
  %v7817 = vadd.f32 %v3999, %v7753
  %v7818 = vadd.f32 %v4000, %v7754
  %v7819 = vadd.f32 %v4001, %v7755
  %v7820 = vadd.f32 %v4002, %v7756
  %v7821 = vadd.f32 %v4003, %v7757
  %v7822 = vadd.f32 %v4004, %v7758
  %v7823 = vadd.f32 %v4005, %v7759
  %v7824 = vadd.f32 %v4006, %v7760
  %v7825 = vadd.f32 %v4007, %v7761
  %v7826 = vmax.f32 %v7762, 0.0
  %v7827 = vmax.f32 %v7763, 0.0
  %v7828 = vmax.f32 %v7764, 0.0
  %v7829 = vmax.f32 %v7765, 0.0
  %v7830 = vmax.f32 %v7766, 0.0
  %v7831 = vmax.f32 %v7767, 0.0
  %v7832 = vmax.f32 %v7768, 0.0
  %v7833 = vmax.f32 %v7769, 0.0
  %v7834 = vmax.f32 %v7770, 0.0
  %v7835 = vmax.f32 %v7771, 0.0
  %v7836 = vmax.f32 %v7772, 0.0
  %v7837 = vmax.f32 %v7773, 0.0
  %v7838 = vmax.f32 %v7774, 0.0
  %v7839 = vmax.f32 %v7775, 0.0
  %v7840 = vmax.f32 %v7776, 0.0
  %v7841 = vmax.f32 %v7777, 0.0
  %v7842 = vmax.f32 %v7778, 0.0
  %v7843 = vmax.f32 %v7779, 0.0
  %v7844 = vmax.f32 %v7780, 0.0
  %v7845 = vmax.f32 %v7781, 0.0
  %v7846 = vmax.f32 %v7782, 0.0
  %v7847 = vmax.f32 %v7783, 0.0
  %v7848 = vmax.f32 %v7784, 0.0
  %v7849 = vmax.f32 %v7785, 0.0
  %v7850 = vmax.f32 %v7786, 0.0
  %v7851 = vmax.f32 %v7787, 0.0
  %v7852 = vmax.f32 %v7788, 0.0
  %v7853 = vmax.f32 %v7789, 0.0
  %v7854 = vmax.f32 %v7790, 0.0
  %v7855 = vmax.f32 %v7791, 0.0
  %v7856 = vmax.f32 %v7792, 0.0
  %v7857 = vmax.f32 %v7793, 0.0
  %v7858 = vmax.f32 %v7794, 0.0
  %v7859 = vmax.f32 %v7795, 0.0
  %v7860 = vmax.f32 %v7796, 0.0
  %v7861 = vmax.f32 %v7797, 0.0
  %v7862 = vmax.f32 %v7798, 0.0
  %v7863 = vmax.f32 %v7799, 0.0
  %v7864 = vmax.f32 %v7800, 0.0
  %v7865 = vmax.f32 %v7801, 0.0
  %v7866 = vmax.f32 %v7802, 0.0
  %v7867 = vmax.f32 %v7803, 0.0
  %v7868 = vmax.f32 %v7804, 0.0
  %v7869 = vmax.f32 %v7805, 0.0
  %v7870 = vmax.f32 %v7806, 0.0
  %v7871 = vmax.f32 %v7807, 0.0
  %v7872 = vmax.f32 %v7808, 0.0
  %v7873 = vmax.f32 %v7809, 0.0
  %v7874 = vmax.f32 %v7810, 0.0
  %v7875 = vmax.f32 %v7811, 0.0
  %v7876 = vmax.f32 %v7812, 0.0
  %v7877 = vmax.f32 %v7813, 0.0
  %v7878 = vmax.f32 %v7814, 0.0
  %v7879 = vmax.f32 %v7815, 0.0
  %v7880 = vmax.f32 %v7816, 0.0
  %v7881 = vmax.f32 %v7817, 0.0
  %v7882 = vmax.f32 %v7818, 0.0
  %v7883 = vmax.f32 %v7819, 0.0
  %v7884 = vmax.f32 %v7820, 0.0
  %v7885 = vmax.f32 %v7821, 0.0
  %v7886 = vmax.f32 %v7822, 0.0
  %v7887 = vmax.f32 %v7823, 0.0
  %v7888 = vmax.f32 %v7824, 0.0
  %v7889 = vmax.f32 %v7825, 0.0
  %7890 = vst.msk [vmem:[%s7] sm:$0xff] %vm26, %v7826
  %7891 = vst.msk [vmem:[%s7 + $0x8] sm:$0xff] %vm26, %v7827
  %7892 = vst.msk [vmem:[%s7 + $0x10] sm:$0xff] %vm26, %v7828
  %7893 = vst.msk [vmem:[%s7 + $0x18] sm:$0xff] %vm26, %v7829
  %7894 = vst.msk [vmem:[%s7 + $0x20] sm:$0xff] %vm26, %v7830
  %7895 = vst.msk [vmem:[%s7 + $0x28] sm:$0xff] %vm26, %v7831
  %7896 = vst.msk [vmem:[%s7 + $0x30] sm:$0xff] %vm26, %v7832
  %7897 = vst.msk [vmem:[%s7 + $0x38] sm:$0xff] %vm26, %v7833
  %7898 = vst.msk [vmem:[%s7 + $0x40] sm:$0xff] %vm26, %v7834
  %7899 = vst.msk [vmem:[%s7 + $0x48] sm:$0xff] %vm26, %v7835
  %7900 = vst.msk [vmem:[%s7 + $0x50] sm:$0xff] %vm26, %v7836
  %7901 = vst.msk [vmem:[%s7 + $0x58] sm:$0xff] %vm26, %v7837
  %7902 = vst.msk [vmem:[%s7 + $0x60] sm:$0xff] %vm26, %v7838
  %7903 = vst.msk [vmem:[%s7 + $0x68] sm:$0xff] %vm26, %v7839
  %7904 = vst.msk [vmem:[%s7 + $0x70] sm:$0xff] %vm26, %v7840
  %7905 = vst.msk [vmem:[%s7 + $0x78] sm:$0xff] %vm26, %v7841
  %7906 = vst.msk [vmem:[%s7 + $0x80] sm:$0xff] %vm26, %v7842
  %7907 = vst.msk [vmem:[%s7 + $0x88] sm:$0xff] %vm26, %v7843
  %7908 = vst.msk [vmem:[%s7 + $0x90] sm:$0xff] %vm26, %v7844
  %7909 = vst.msk [vmem:[%s7 + $0x98] sm:$0xff] %vm26, %v7845
  %7910 = vst.msk [vmem:[%s7 + $0xa0] sm:$0xff] %vm26, %v7846
  %7911 = vst.msk [vmem:[%s7 + $0xa8] sm:$0xff] %vm26, %v7847
  %7912 = vst.msk [vmem:[%s7 + $0xb0] sm:$0xff] %vm26, %v7848
  %7913 = vst.msk [vmem:[%s7 + $0xb8] sm:$0xff] %vm26, %v7849
  %7914 = vst.msk [vmem:[%s7 + $0xc0] sm:$0xff] %vm26, %v7850
  %7915 = vst.msk [vmem:[%s7 + $0xc8] sm:$0xff] %vm26, %v7851
  %7916 = vst.msk [vmem:[%s7 + $0xd0] sm:$0xff] %vm26, %v7852
  %7917 = vst.msk [vmem:[%s7 + $0xd8] sm:$0xff] %vm26, %v7853
  %7918 = vst.msk [vmem:[%s7 + $0xe0] sm:$0xff] %vm26, %v7854
  %7919 = vst.msk [vmem:[%s7 + $0xe8] sm:$0xff] %vm26, %v7855
  %7920 = vst.msk [vmem:[%s7 + $0xf0] sm:$0xff] %vm26, %v7856
  %7921 = vst.msk [vmem:[%s7 + $0xf8] sm:$0xff] %vm26, %v7857
  %7922 = vst.msk [vmem:[%s7 + $0x100] sm:$0xff] %vm26, %v7858
  %7923 = vst.msk [vmem:[%s7 + $0x108] sm:$0xff] %vm26, %v7859
  %7924 = vst.msk [vmem:[%s7 + $0x110] sm:$0xff] %vm26, %v7860
  %7925 = vst.msk [vmem:[%s7 + $0x118] sm:$0xff] %vm26, %v7861
  %7926 = vst.msk [vmem:[%s7 + $0x120] sm:$0xff] %vm26, %v7862
  %7927 = vst.msk [vmem:[%s7 + $0x128] sm:$0xff] %vm26, %v7863
  %7928 = vst.msk [vmem:[%s7 + $0x130] sm:$0xff] %vm26, %v7864
  %7929 = vst.msk [vmem:[%s7 + $0x138] sm:$0xff] %vm26, %v7865
  %7930 = vst.msk [vmem:[%s7 + $0x140] sm:$0xff] %vm26, %v7866
  %7931 = vst.msk [vmem:[%s7 + $0x148] sm:$0xff] %vm26, %v7867
  %7932 = vst.msk [vmem:[%s7 + $0x150] sm:$0xff] %vm26, %v7868
  %7933 = vst.msk [vmem:[%s7 + $0x158] sm:$0xff] %vm26, %v7869
  %7934 = vst.msk [vmem:[%s7 + $0x160] sm:$0xff] %vm26, %v7870
  %7935 = vst.msk [vmem:[%s7 + $0x168] sm:$0xff] %vm26, %v7871
  %7936 = vst.msk [vmem:[%s7 + $0x170] sm:$0xff] %vm26, %v7872
  %7937 = vst.msk [vmem:[%s7 + $0x178] sm:$0xff] %vm26, %v7873
  %7938 = vst.msk [vmem:[%s7 + $0x180] sm:$0xff] %vm26, %v7874
  %7939 = vst.msk [vmem:[%s7 + $0x188] sm:$0xff] %vm26, %v7875
  %7940 = vst.msk [vmem:[%s7 + $0x190] sm:$0xff] %vm26, %v7876
  %7941 = vst.msk [vmem:[%s7 + $0x198] sm:$0xff] %vm26, %v7877
  %7942 = vst.msk [vmem:[%s7 + $0x1a0] sm:$0xff] %vm26, %v7878
  %7943 = vst.msk [vmem:[%s7 + $0x1a8] sm:$0xff] %vm26, %v7879
  %7944 = vst.msk [vmem:[%s7 + $0x1b0] sm:$0xff] %vm26, %v7880
  %7945 = vst.msk [vmem:[%s7 + $0x1b8] sm:$0xff] %vm26, %v7881
  %7946 = vst.msk [vmem:[%s7 + $0x1c0] sm:$0xff] %vm26, %v7882
  %7947 = vst.msk [vmem:[%s7 + $0x1c8] sm:$0xff] %vm26, %v7883
  %7948 = vst.msk [vmem:[%s7 + $0x1d0] sm:$0xff] %vm26, %v7884
  %7949 = vst.msk [vmem:[%s7 + $0x1d8] sm:$0xff] %vm26, %v7885
  %7950 = vst.msk [vmem:[%s7 + $0x1e0] sm:$0xff] %vm26, %v7886
  %7951 = vst.msk [vmem:[%s7 + $0x1e8] sm:$0xff] %vm26, %v7887
  %7952 = vst.msk [vmem:[%s7 + $0x1f0] sm:$0xff] %vm26, %v7888
  %7953 = vst.msk [vmem:[%s7 + $0x1f8] sm:$0xff] %vm26, %v7889
  // Predicated region
  $region30: #{tpu_custom_call.1} parent=0 // pred_check
    _
  $region31: #{tpu_custom_call.1} parent=0 // pred_check_branch
    %7955 = sbr.rel (0) target = $region33
  $region32: #{tpu_custom_call.1} parent=0 // pred_region
    _
  $region33: #{tpu_custom_call.1} parent=0 // pred_fallthru
    _
  // Predicated region
  $region34: #{tpu_custom_call.1} parent=0 // pred_check
    _
  $region35: #{tpu_custom_call.1} parent=0 // pred_check_branch
    %7957 = sbr.rel (0) target = $region37
  $region36: #{tpu_custom_call.1} parent=0 // pred_region
    _
  $region37: #{tpu_custom_call.1} parent=0 // pred_fallthru
    _

</llo_original>
